<compile_context>
chip_gen: v6e
topology: v6e:2x2x1
jax: 0.10.0
libtpu: 0.0.40
codegen_flags: <defaults>
</compile_context>

<pallas_src>
import functools

import jax
import jax.numpy as jnp
from jax import lax
from jax.experimental import pallas as pl

BN_EPS = 1e-5
HID = 4          # GRU hidden size
N_CLASSES = 6    # Linear out_features
C1 = 128         # conv1 out channels
C2 = 8           # conv2 out channels
OUT_PAD = 128    # lane-dense padded output width


# ----------------------------------------------------------------------------
# Fused kernel: conv1 + conv2 + GRU-L0 input projection + 2-layer GRU + Linear
# ----------------------------------------------------------------------------
def _crnn_fused_kernel(xe_ref, xo_ref, w1a_ref, w1b_ref, b1_ref,
                       w2_ref, b2_ref, wih0_ref, g0c_ref,
                       whh0_ref, bhh0_ref, wih1_ref, bih1_ref,
                       whh1_ref, bhh1_ref, wl_ref, bl_ref,
                       o_ref, *, t_steps, bsz, wo):
    n_rows = t_steps * bsz
    g_dim = 3 * HID

    # ---- Hoisted invariant loads (done exactly once; JAX does not CSE these) ----
    xe = xe_ref[...]                      # (N, Wo)  even conv1 taps
    xo = xo_ref[...]                      # (N, Wo)  odd conv1 taps
    w1a = w1a_ref[...]                    # (1, 128)
    w1b = w1b_ref[...]                    # (1, 128)
    b1 = b1_ref[...]                      # (1, 128)
    w2 = w2_ref[...]                      # (128, 8)  BN1 scale folded
    b2 = b2_ref[...]                      # (1, 8)    BN1 shift folded
    wih0 = wih0_ref[...]                  # (Wo*8, 12) BN2 scale folded
    g0c = g0c_ref[...]                    # (1, 12)   all constant terms folded
    whh0 = whh0_ref[...]; bhh0 = bhh0_ref[...]
    wih1 = wih1_ref[...]; bih1 = bih1_ref[...]
    whh1 = whh1_ref[...]; bhh1 = bhh1_ref[...]
    wl = wl_ref[...]                      # (4, 128) zero-padded Linear weight
    bl = bl_ref[...]                      # (1, 128) zero-padded Linear bias

    # ---- Stages 1-3 fused, per conv-output width position w ----
    # conv1 (VPU lane-broadcast FMA, ReLU) -> conv2 1x1 (MXU, K=128, ReLU) ->
    # partial sum of the GRU layer-0 input projection.  Never materializes the
    # (N, Wo*128) activation slab or any block-diagonal weight.
    gi0 = jnp.zeros((n_rows, g_dim), jnp.float32)
    for w in range(wo):
        c1w = jnp.maximum(
            xe[:, w:w + 1] * w1a + xo[:, w:w + 1] * w1b + b1, 0.0)       # (N, 128)
        qw = jnp.maximum(
            jnp.dot(c1w, w2, preferred_element_type=jnp.float32) + b2,
            0.0)                                                          # (N, 8)
        gi0 = gi0 + jnp.dot(qw, wih0[w * C2:(w + 1) * C2, :],
                            preferred_element_type=jnp.float32)           # (N, 12)
    gi0 = gi0 + g0c                                                       # (N, 12)

    def small_mm(h, w):
        # (bsz, HID) @ (HID, K) on the VPU as HID broadcast FMAs (no MXU FIFO
        # latency on the serial recurrence chain).
        acc = h[:, 0:1] * w[0:1, :]
        for k in range(1, HID):
            acc = acc + h[:, k:k + 1] * w[k:k + 1, :]
        return acc

    def cell(gi, h_prev, whh, bhh):
        # PyTorch GRU gate order: r, z, n;  n = tanh(gi_n + r * (W_hn h + b_hn)).
        gh = small_mm(h_prev, whh) + bhh
        r = jax.nn.sigmoid(gi[:, 0:HID] + gh[:, 0:HID])
        z = jax.nn.sigmoid(gi[:, HID:2 * HID] + gh[:, HID:2 * HID])
        n = jnp.tanh(gi[:, 2 * HID:3 * HID] + r * gh[:, 2 * HID:3 * HID])
        return (1.0 - z) * n + z * h_prev

    # ---- Stage 4: 2-layer GRU recurrence, fully unrolled; state stays in vregs ----
    h0 = jnp.zeros((bsz, HID), jnp.float32)
    h1 = jnp.zeros((bsz, HID), jnp.float32)
    for t in range(t_steps):
        gi0_t = gi0[t * bsz:(t + 1) * bsz, :]
        h0 = cell(gi0_t, h0, whh0, bhh0)
        gi1 = small_mm(h0, wih1) + bih1
        h1 = cell(gi1, h1, whh1, bhh1)
        # Stage 5: Linear(4, 6) applied per timestep into the lane-dense padded
        # output slab; never reloaded in-kernel.
        o_ref[t * bsz:(t + 1) * bsz, :] = small_mm(h1, wl) + bl


# ----------------------------------------------------------------------------
# One-time parameter folding (hoisted out of the per-call forward)
# ----------------------------------------------------------------------------
def prepare_params(p):
    """Fold eval-mode BatchNorms / conv2 pad columns / biases into kernel operands."""
    s1 = p['bn1_g'] * lax.rsqrt(p['bn1_v'] + BN_EPS)
    t1 = p['bn1_b'] - p['bn1_m'] * s1
    s2 = p['bn2_g'] * lax.rsqrt(p['bn2_v'] + BN_EPS)
    t2 = p['bn2_b'] - p['bn2_m'] * s2

    wih0 = p['wih0']                                   # ((Wo+2)*8, 12)
    wo = wih0.shape[0] // C2 - 2                       # conv1 output width (static)
    k2 = wo * C2

    # BN1 folded into conv2 weight/bias.
    w2_eff = p['w2'] * s1[:, None]                     # (128, 8)
    b2_eff = (p['b2'] + t1 @ p['w2'])[None, :]         # (1, 8)

    # BN2 scale folded into the GRU-L0 input projection for interior width cols;
    # BN2 shift, conv2 zero-pad columns and b_ih0 folded into a single constant.
    wih0_int = wih0[C2:C2 + k2, :]                     # (Wo*8, 12)
    wih0_eff = wih0_int * jnp.tile(s2, wo)[:, None]    # (Wo*8, 12)
    feat_pad = s2 * jnp.maximum(p['b2'], 0.0) + t2     # conv2 zero-pad columns
    g0c = (p['bih0']
           + (jnp.tile(t2, wo) @ wih0_int)[None, :]
           + (feat_pad @ (wih0[0:C2, :] + wih0[C2 + k2:, :]))[None, :])   # (1, 12)

    # Lane-dense padded Linear(4, 6).
    wl_pad = jnp.zeros((HID, OUT_PAD), jnp.float32).at[:, :N_CLASSES].set(p['wl'])
    bl_pad = jnp.zeros((1, OUT_PAD), jnp.float32).at[:, :N_CLASSES].set(p['bl'])

    return {
        'w1a': p['w1'][0][None, :], 'w1b': p['w1'][1][None, :],
        'b1': p['b1'][None, :],
        'w2': w2_eff, 'b2': b2_eff,
        'wih0': wih0_eff, 'g0c': g0c,
        'whh0': p['whh0'], 'bhh0': p['bhh0'],
        'wih1': p['wih1'], 'bih1': p['bih1'],
        'whh1': p['whh1'], 'bhh1': p['bhh1'],
        'wl': wl_pad, 'bl': bl_pad,
    }


# ----------------------------------------------------------------------------
# Per-call wrapper: build conv1 taps + one pallas_call
# ----------------------------------------------------------------------------
def crnn_forward(X, fp):
    """Forward pass of MyCRNNSystem (inference) -> (B, T, 6)."""
    X = X.astype(jnp.float32)
    x = X[:, 0] if X.ndim == 4 else X                 # (B, H, W)
    B, H, W = x.shape
    assert W % 2 == 0, "even input width expected (GRU input_size=184 implies W=40)"
    T = H
    Wo = W // 2 + 1                                    # conv1 output width
    NR = T * B
    G = 3 * HID
    assert fp['wih0'].shape[0] == Wo * C2, "input width inconsistent with GRU input_size"

    # conv1 receptive-field taps: padded[2j] (even tap) and padded[2j+1] (odd tap),
    # as compact (T*B, Wo) slabs (no x128 channel replication -- done in-kernel).
    zc = jnp.zeros((B, H, 1), jnp.float32)
    x_even = jnp.concatenate([zc, x[:, :, 1::2]], axis=-1)         # (B, H, Wo)
    x_odd = jnp.concatenate([x[:, :, 0::2], zc], axis=-1)          # (B, H, Wo)
    rows = lambda a: jnp.transpose(a, (1, 0, 2)).reshape(NR, Wo)   # (t, b) row order
    xe = rows(x_even)
    xo = rows(x_odd)

    spec = lambda shape: pl.BlockSpec(shape, lambda i: (0, 0))
    kernel = functools.partial(_crnn_fused_kernel, t_steps=T, bsz=B, wo=Wo)
    # Everything fits trivially in VMEM (~0.1 MB); grid=(1,) whole-array blocks.
    # For large batch, grid the batch axis (keep the T loop inside the block) with
    # dimension_semantics=("parallel",) so v7x's 2 TCs split it and DMA pipelines.
    out = pl.pallas_call(
        kernel,
        grid=(1,),
        in_specs=[spec((NR, Wo)), spec((NR, Wo)),
                  spec((1, C1)), spec((1, C1)), spec((1, C1)),
                  spec((C1, C2)), spec((1, C2)),
                  spec((Wo * C2, G)), spec((1, G)),
                  spec((HID, G)), spec((1, G)),
                  spec((HID, G)), spec((1, G)),
                  spec((HID, G)), spec((1, G)),
                  spec((HID, OUT_PAD)), spec((1, OUT_PAD))],
        out_specs=spec((NR, OUT_PAD)),
        out_shape=jax.ShapeDtypeStruct((NR, OUT_PAD), jnp.float32),
    )(xe, xo, fp['w1a'], fp['w1b'], fp['b1'], fp['w2'], fp['b2'],
      fp['wih0'], fp['g0c'], fp['whh0'], fp['bhh0'], fp['wih1'], fp['bih1'],
      fp['whh1'], fp['bhh1'], fp['wl'], fp['bl'])

    y = out[:, :N_CLASSES].reshape(T, B, N_CLASSES)
    return jnp.transpose(y, (1, 0, 2))                             # (B, T, 6)


# ----------------------------------------------------------------------------
# Parameters (deterministic synthetic init; shapes follow the PyTorch module)
# ----------------------------------------------------------------------------
def init_params(key):
    ks = jax.random.split(key, 24)
    n = lambda i, shape, s=0.1: s * jax.random.normal(ks[i], shape, jnp.float32)
    p = {}
    # cnn_block_1: Conv2d(1,128,(1,2),(1,2),(0,1)) -> weight[co,0,0,kw].T as (2,128)
    p['w1'] = n(0, (2, 128), 0.3)
    p['b1'] = n(1, (128,))
    p['bn1_g'] = 1.0 + n(2, (128,))
    p['bn1_b'] = n(3, (128,))
    p['bn1_m'] = n(4, (128,))
    p['bn1_v'] = 0.5 + jax.random.uniform(ks[5], (128,), jnp.float32)
    # cnn_block_2: Conv2d(128,8,(1,1),(1,1),(0,1)) -> weight[co,ci,0,0].T as (128,8)
    p['w2'] = n(6, (128, 8))
    p['b2'] = n(7, (8,))
    p['bn2_g'] = 1.0 + n(8, (8,))
    p['bn2_b'] = n(9, (8,))
    p['bn2_m'] = n(10, (8,))
    p['bn2_v'] = 0.5 + jax.random.uniform(ks[11], (8,), jnp.float32)
    # GRU(input_size=184, hidden_size=4, num_layers=2) -- stored transposed
    p['wih0'] = n(12, (184, 3 * HID), 0.2)
    p['whh0'] = n(13, (HID, 3 * HID), 0.2)
    p['bih0'] = n(14, (1, 3 * HID))
    p['bhh0'] = n(15, (1, 3 * HID))
    p['wih1'] = n(16, (HID, 3 * HID), 0.2)
    p['whh1'] = n(17, (HID, 3 * HID), 0.2)
    p['bih1'] = n(18, (1, 3 * HID))
    p['bhh1'] = n(19, (1, 3 * HID))
    # Linear(4, 6) -- stored transposed
    p['wl'] = n(20, (HID, N_CLASSES), 0.3)
    p['bl'] = n(21, (1, N_CLASSES))
    return p


# ----------------------------------------------------------------------------
# Pure-JAX reference (unfused, no BN folding) for a correctness check
# ----------------------------------------------------------------------------
def _ref_conv_relu_bn(x, w, b, g, be, m, v):
    y = jnp.maximum(x @ w + b[None, :], 0.0)
    return g[None, :] * (y - m[None, :]) / jnp.sqrt(v[None, :] + BN_EPS) + be[None, :]


def crnn_reference(X, p):
    X = X.astype(jnp.float32)
    if X.ndim == 3:
        X = X[:, None, :, :]
    B, _, H, W = X.shape
    Wo = W // 2 + 1
    xw = jnp.pad(X[:, 0], ((0, 0), (0, 0), (1, 1)))[:, :, :2 * Wo]
    c1 = _ref_conv_relu_bn(xw.reshape(B * H * Wo, 2), p['w1'], p['b1'],
                           p['bn1_g'], p['bn1_b'], p['bn1_m'], p['bn1_v'])
    nhwc1p = jnp.pad(c1.reshape(B, H, Wo, 128), ((0, 0), (0, 0), (1, 1), (0, 0)))
    W2 = Wo + 2
    c2 = _ref_conv_relu_bn(nhwc1p.reshape(B * H * W2, 128), p['w2'], p['b2'],
                           p['bn2_g'], p['bn2_b'], p['bn2_m'], p['bn2_v'])
    feat = c2.reshape(B, H, W2 * 8)

    def cell(x_t, h, wih, whh, bih, bhh):
        gi = x_t @ wih + bih
        gh = h @ whh + bhh
        r = jax.nn.sigmoid(gi[:, :HID] + gh[:, :HID])
        z = jax.nn.sigmoid(gi[:, HID:2 * HID] + gh[:, HID:2 * HID])
        n_ = jnp.tanh(gi[:, 2 * HID:] + r * gh[:, 2 * HID:])
        return (1.0 - z) * n_ + z * h

    h0 = jnp.zeros((B, HID), jnp.float32)
    h1 = jnp.zeros((B, HID), jnp.float32)
    outs = []
    for t in range(H):
        h0 = cell(feat[:, t], h0, p['wih0'], p['whh0'], p['bih0'], p['bhh0'])
        h1 = cell(h0, h1, p['wih1'], p['whh1'], p['bih1'], p['bhh1'])
        outs.append(h1 @ p['wl'] + p['bl'])
    return jnp.stack(outs, axis=1)


if __name__ == "__main__":
    key = jax.random.PRNGKey(0)
    pkey, xkey = jax.random.split(key)
    params = init_params(pkey)

    # One-time parameter folding (reused across calls).
    folded = prepare_params(params)

    # Input (B, T, W) = (2, 8, 40): W=40 is what GRU input_size=184 implies
    # (conv1 width 40 -> 21, conv2 pad -> 23, 23 * 8 channels = 184).
    X = jax.random.normal(xkey, (2, 8, 40), jnp.float32)

    fwd = jax.jit(crnn_forward)
    y = jax.block_until_ready(fwd(X, folded))
    assert y.shape == (2, 8, 6), y.shape

    y_ref = crnn_reference(X, params)
    max_err = float(jnp.max(jnp.abs(y - y_ref)))
    assert max_err < 1e-3, f"mismatch vs reference: {max_err}"

    print("KERNEL_OK")
</pallas_src>

<mosaic_0001>
module attributes {stable_mosaic.version = 11 : i64} {
  func.func @_crnn_fused_kernel(%arg0: i32, %arg1: memref<16x21xf32, #tpu.memory_space<vmem>>, %arg2: memref<16x21xf32, #tpu.memory_space<vmem>>, %arg3: memref<1x128xf32, #tpu.memory_space<vmem>>, %arg4: memref<1x128xf32, #tpu.memory_space<vmem>>, %arg5: memref<1x128xf32, #tpu.memory_space<vmem>>, %arg6: memref<128x8xf32, #tpu.memory_space<vmem>>, %arg7: memref<1x8xf32, #tpu.memory_space<vmem>>, %arg8: memref<168x12xf32, #tpu.memory_space<vmem>>, %arg9: memref<1x12xf32, #tpu.memory_space<vmem>>, %arg10: memref<4x12xf32, #tpu.memory_space<vmem>>, %arg11: memref<1x12xf32, #tpu.memory_space<vmem>>, %arg12: memref<4x12xf32, #tpu.memory_space<vmem>>, %arg13: memref<1x12xf32, #tpu.memory_space<vmem>>, %arg14: memref<4x12xf32, #tpu.memory_space<vmem>>, %arg15: memref<1x12xf32, #tpu.memory_space<vmem>>, %arg16: memref<4x128xf32, #tpu.memory_space<vmem>>, %arg17: memref<1x128xf32, #tpu.memory_space<vmem>>, %arg18: memref<16x128xf32, #tpu.memory_space<vmem>>) attributes {dimension_semantics = [#tpu.dimension_semantics<arbitrary>], iteration_bounds = array<i64: 1>, scalar_prefetch = 0 : i64, scratch_operands = 0 : i64, tpu.core_type = #tpu.core_type<tc>, window_params = [{pipeline_mode = #tpu.pipeline_mode<synchronous>, transform_indices = @transform_0, window_bounds = array<i64: 16, 21>}, {pipeline_mode = #tpu.pipeline_mode<synchronous>, transform_indices = @transform_1, window_bounds = array<i64: 16, 21>}, {pipeline_mode = #tpu.pipeline_mode<synchronous>, transform_indices = @transform_2, window_bounds = array<i64: 1, 128>}, {pipeline_mode = #tpu.pipeline_mode<synchronous>, transform_indices = @transform_3, window_bounds = array<i64: 1, 128>}, {pipeline_mode = #tpu.pipeline_mode<synchronous>, transform_indices = @transform_4, window_bounds = array<i64: 1, 128>}, {pipeline_mode = #tpu.pipeline_mode<synchronous>, transform_indices = @transform_5, window_bounds = array<i64: 128, 8>}, {pipeline_mode = #tpu.pipeline_mode<synchronous>, transform_indices = @transform_6, window_bounds = array<i64: 1, 8>}, {pipeline_mode = #tpu.pipeline_mode<synchronous>, transform_indices = @transform_7, window_bounds = array<i64: 168, 12>}, {pipeline_mode = #tpu.pipeline_mode<synchronous>, transform_indices = @transform_8, window_bounds = array<i64: 1, 12>}, {pipeline_mode = #tpu.pipeline_mode<synchronous>, transform_indices = @transform_9, window_bounds = array<i64: 4, 12>}, {pipeline_mode = #tpu.pipeline_mode<synchronous>, transform_indices = @transform_10, window_bounds = array<i64: 1, 12>}, {pipeline_mode = #tpu.pipeline_mode<synchronous>, transform_indices = @transform_11, window_bounds = array<i64: 4, 12>}, {pipeline_mode = #tpu.pipeline_mode<synchronous>, transform_indices = @transform_12, window_bounds = array<i64: 1, 12>}, {pipeline_mode = #tpu.pipeline_mode<synchronous>, transform_indices = @transform_13, window_bounds = array<i64: 4, 12>}, {pipeline_mode = #tpu.pipeline_mode<synchronous>, transform_indices = @transform_14, window_bounds = array<i64: 1, 12>}, {pipeline_mode = #tpu.pipeline_mode<synchronous>, transform_indices = @transform_15, window_bounds = array<i64: 4, 128>}, {pipeline_mode = #tpu.pipeline_mode<synchronous>, transform_indices = @transform_16, window_bounds = array<i64: 1, 128>}, {pipeline_mode = #tpu.pipeline_mode<synchronous>, transform_indices = @transform_17, window_bounds = array<i64: 16, 128>}]} {
    %c0 = arith.constant 0 : index
    %c0_0 = arith.constant 0 : index
    %0 = vector.load %arg1[%c0, %c0_0] : memref<16x21xf32, #tpu.memory_space<vmem>>, vector<16x21xf32>
    %c0_1 = arith.constant 0 : index
    %c0_2 = arith.constant 0 : index
    %1 = vector.load %arg2[%c0_1, %c0_2] : memref<16x21xf32, #tpu.memory_space<vmem>>, vector<16x21xf32>
    %c0_3 = arith.constant 0 : index
    %c0_4 = arith.constant 0 : index
    %2 = vector.load %arg3[%c0_3, %c0_4] : memref<1x128xf32, #tpu.memory_space<vmem>>, vector<1x128xf32>
    %c0_5 = arith.constant 0 : index
    %c0_6 = arith.constant 0 : index
    %3 = vector.load %arg4[%c0_5, %c0_6] : memref<1x128xf32, #tpu.memory_space<vmem>>, vector<1x128xf32>
    %c0_7 = arith.constant 0 : index
    %c0_8 = arith.constant 0 : index
    %4 = vector.load %arg5[%c0_7, %c0_8] : memref<1x128xf32, #tpu.memory_space<vmem>>, vector<1x128xf32>
    %c0_9 = arith.constant 0 : index
    %c0_10 = arith.constant 0 : index
    %5 = vector.load %arg6[%c0_9, %c0_10] : memref<128x8xf32, #tpu.memory_space<vmem>>, vector<128x8xf32>
    %c0_11 = arith.constant 0 : index
    %c0_12 = arith.constant 0 : index
    %6 = vector.load %arg7[%c0_11, %c0_12] : memref<1x8xf32, #tpu.memory_space<vmem>>, vector<1x8xf32>
    %c0_13 = arith.constant 0 : index
    %c0_14 = arith.constant 0 : index
    %7 = vector.load %arg8[%c0_13, %c0_14] : memref<168x12xf32, #tpu.memory_space<vmem>>, vector<168x12xf32>
    %c0_15 = arith.constant 0 : index
    %c0_16 = arith.constant 0 : index
    %8 = vector.load %arg9[%c0_15, %c0_16] : memref<1x12xf32, #tpu.memory_space<vmem>>, vector<1x12xf32>
    %c0_17 = arith.constant 0 : index
    %c0_18 = arith.constant 0 : index
    %9 = vector.load %arg10[%c0_17, %c0_18] : memref<4x12xf32, #tpu.memory_space<vmem>>, vector<4x12xf32>
    %c0_19 = arith.constant 0 : index
    %c0_20 = arith.constant 0 : index
    %10 = vector.load %arg11[%c0_19, %c0_20] : memref<1x12xf32, #tpu.memory_space<vmem>>, vector<1x12xf32>
    %c0_21 = arith.constant 0 : index
    %c0_22 = arith.constant 0 : index
    %11 = vector.load %arg12[%c0_21, %c0_22] : memref<4x12xf32, #tpu.memory_space<vmem>>, vector<4x12xf32>
    %c0_23 = arith.constant 0 : index
    %c0_24 = arith.constant 0 : index
    %12 = vector.load %arg13[%c0_23, %c0_24] : memref<1x12xf32, #tpu.memory_space<vmem>>, vector<1x12xf32>
    %c0_25 = arith.constant 0 : index
    %c0_26 = arith.constant 0 : index
    %13 = vector.load %arg14[%c0_25, %c0_26] : memref<4x12xf32, #tpu.memory_space<vmem>>, vector<4x12xf32>
    %c0_27 = arith.constant 0 : index
    %c0_28 = arith.constant 0 : index
    %14 = vector.load %arg15[%c0_27, %c0_28] : memref<1x12xf32, #tpu.memory_space<vmem>>, vector<1x12xf32>
    %c0_29 = arith.constant 0 : index
    %c0_30 = arith.constant 0 : index
    %15 = vector.load %arg16[%c0_29, %c0_30] : memref<4x128xf32, #tpu.memory_space<vmem>>, vector<4x128xf32>
    %c0_31 = arith.constant 0 : index
    %c0_32 = arith.constant 0 : index
    %16 = vector.load %arg17[%c0_31, %c0_32] : memref<1x128xf32, #tpu.memory_space<vmem>>, vector<1x128xf32>
    %cst = arith.constant 0.000000e+00 : f32
    %17 = vector.broadcast %cst : f32 to vector<16x12xf32>
    %18 = vector.extract_strided_slice %0 {offsets = [0, 0], sizes = [16, 1], strides = [1, 1]} : vector<16x21xf32> to vector<16x1xf32>
    %19 = vector.broadcast %18 : vector<16x1xf32> to vector<16x128xf32>
    %20 = vector.broadcast %2 : vector<1x128xf32> to vector<16x128xf32>
    %21 = arith.mulf %19, %20 : vector<16x128xf32>
    %22 = vector.extract_strided_slice %1 {offsets = [0, 0], sizes = [16, 1], strides = [1, 1]} : vector<16x21xf32> to vector<16x1xf32>
    %23 = vector.broadcast %22 : vector<16x1xf32> to vector<16x128xf32>
    %24 = vector.broadcast %3 : vector<1x128xf32> to vector<16x128xf32>
    %25 = arith.mulf %23, %24 : vector<16x128xf32>
    %26 = arith.addf %21, %25 : vector<16x128xf32>
    %27 = vector.broadcast %4 : vector<1x128xf32> to vector<16x128xf32>
    %28 = arith.addf %26, %27 : vector<16x128xf32>
    %cst_33 = arith.constant 0.000000e+00 : f32
    %29 = vector.broadcast %cst_33 : f32 to vector<16x128xf32>
    %30 = arith.maximumf %28, %29 : vector<16x128xf32>
    %cst_34 = arith.constant dense<0.000000e+00> : vector<16x8xf32>
    %31 = tpu.matmul %30, %5, %cst_34 {dimension_numbers = #tpu.dot_dimension_numbers<[1], [0], [0], [1], [0, 0, 1, 1], [], []>} : vector<16x128xf32>, vector<128x8xf32>, vector<16x8xf32> -> vector<16x8xf32>
    %32 = vector.broadcast %6 : vector<1x8xf32> to vector<16x8xf32>
    %33 = arith.addf %31, %32 : vector<16x8xf32>
    %cst_35 = arith.constant 0.000000e+00 : f32
    %34 = vector.broadcast %cst_35 : f32 to vector<16x8xf32>
    %35 = arith.maximumf %33, %34 : vector<16x8xf32>
    %36 = vector.extract_strided_slice %7 {offsets = [0, 0], sizes = [8, 12], strides = [1, 1]} : vector<168x12xf32> to vector<8x12xf32>
    %cst_36 = arith.constant dense<0.000000e+00> : vector<16x12xf32>
    %37 = tpu.matmul %35, %36, %cst_36 {dimension_numbers = #tpu.dot_dimension_numbers<[1], [0], [0], [1], [0, 0, 1, 1], [], []>} : vector<16x8xf32>, vector<8x12xf32>, vector<16x12xf32> -> vector<16x12xf32>
    %38 = arith.addf %17, %37 : vector<16x12xf32>
    %39 = vector.extract_strided_slice %0 {offsets = [0, 1], sizes = [16, 1], strides = [1, 1]} : vector<16x21xf32> to vector<16x1xf32>
    %40 = vector.broadcast %39 : vector<16x1xf32> to vector<16x128xf32>
    %41 = vector.broadcast %2 : vector<1x128xf32> to vector<16x128xf32>
    %42 = arith.mulf %40, %41 : vector<16x128xf32>
    %43 = vector.extract_strided_slice %1 {offsets = [0, 1], sizes = [16, 1], strides = [1, 1]} : vector<16x21xf32> to vector<16x1xf32>
    %44 = vector.broadcast %43 : vector<16x1xf32> to vector<16x128xf32>
    %45 = vector.broadcast %3 : vector<1x128xf32> to vector<16x128xf32>
    %46 = arith.mulf %44, %45 : vector<16x128xf32>
    %47 = arith.addf %42, %46 : vector<16x128xf32>
    %48 = vector.broadcast %4 : vector<1x128xf32> to vector<16x128xf32>
    %49 = arith.addf %47, %48 : vector<16x128xf32>
    %cst_37 = arith.constant 0.000000e+00 : f32
    %50 = vector.broadcast %cst_37 : f32 to vector<16x128xf32>
    %51 = arith.maximumf %49, %50 : vector<16x128xf32>
    %cst_38 = arith.constant dense<0.000000e+00> : vector<16x8xf32>
    %52 = tpu.matmul %51, %5, %cst_38 {dimension_numbers = #tpu.dot_dimension_numbers<[1], [0], [0], [1], [0, 0, 1, 1], [], []>} : vector<16x128xf32>, vector<128x8xf32>, vector<16x8xf32> -> vector<16x8xf32>
    %53 = vector.broadcast %6 : vector<1x8xf32> to vector<16x8xf32>
    %54 = arith.addf %52, %53 : vector<16x8xf32>
    %cst_39 = arith.constant 0.000000e+00 : f32
    %55 = vector.broadcast %cst_39 : f32 to vector<16x8xf32>
    %56 = arith.maximumf %54, %55 : vector<16x8xf32>
    %57 = vector.extract_strided_slice %7 {offsets = [8, 0], sizes = [8, 12], strides = [1, 1]} : vector<168x12xf32> to vector<8x12xf32>
    %cst_40 = arith.constant dense<0.000000e+00> : vector<16x12xf32>
    %58 = tpu.matmul %56, %57, %cst_40 {dimension_numbers = #tpu.dot_dimension_numbers<[1], [0], [0], [1], [0, 0, 1, 1], [], []>} : vector<16x8xf32>, vector<8x12xf32>, vector<16x12xf32> -> vector<16x12xf32>
    %59 = arith.addf %38, %58 : vector<16x12xf32>
    %60 = vector.extract_strided_slice %0 {offsets = [0, 2], sizes = [16, 1], strides = [1, 1]} : vector<16x21xf32> to vector<16x1xf32>
    %61 = vector.broadcast %60 : vector<16x1xf32> to vector<16x128xf32>
    %62 = vector.broadcast %2 : vector<1x128xf32> to vector<16x128xf32>
    %63 = arith.mulf %61, %62 : vector<16x128xf32>
    %64 = vector.extract_strided_slice %1 {offsets = [0, 2], sizes = [16, 1], strides = [1, 1]} : vector<16x21xf32> to vector<16x1xf32>
    %65 = vector.broadcast %64 : vector<16x1xf32> to vector<16x128xf32>
    %66 = vector.broadcast %3 : vector<1x128xf32> to vector<16x128xf32>
    %67 = arith.mulf %65, %66 : vector<16x128xf32>
    %68 = arith.addf %63, %67 : vector<16x128xf32>
    %69 = vector.broadcast %4 : vector<1x128xf32> to vector<16x128xf32>
    %70 = arith.addf %68, %69 : vector<16x128xf32>
    %cst_41 = arith.constant 0.000000e+00 : f32
    %71 = vector.broadcast %cst_41 : f32 to vector<16x128xf32>
    %72 = arith.maximumf %70, %71 : vector<16x128xf32>
    %cst_42 = arith.constant dense<0.000000e+00> : vector<16x8xf32>
    %73 = tpu.matmul %72, %5, %cst_42 {dimension_numbers = #tpu.dot_dimension_numbers<[1], [0], [0], [1], [0, 0, 1, 1], [], []>} : vector<16x128xf32>, vector<128x8xf32>, vector<16x8xf32> -> vector<16x8xf32>
    %74 = vector.broadcast %6 : vector<1x8xf32> to vector<16x8xf32>
    %75 = arith.addf %73, %74 : vector<16x8xf32>
    %cst_43 = arith.constant 0.000000e+00 : f32
    %76 = vector.broadcast %cst_43 : f32 to vector<16x8xf32>
    %77 = arith.maximumf %75, %76 : vector<16x8xf32>
    %78 = vector.extract_strided_slice %7 {offsets = [16, 0], sizes = [8, 12], strides = [1, 1]} : vector<168x12xf32> to vector<8x12xf32>
    %cst_44 = arith.constant dense<0.000000e+00> : vector<16x12xf32>
    %79 = tpu.matmul %77, %78, %cst_44 {dimension_numbers = #tpu.dot_dimension_numbers<[1], [0], [0], [1], [0, 0, 1, 1], [], []>} : vector<16x8xf32>, vector<8x12xf32>, vector<16x12xf32> -> vector<16x12xf32>
    %80 = arith.addf %59, %79 : vector<16x12xf32>
    %81 = vector.extract_strided_slice %0 {offsets = [0, 3], sizes = [16, 1], strides = [1, 1]} : vector<16x21xf32> to vector<16x1xf32>
    %82 = vector.broadcast %81 : vector<16x1xf32> to vector<16x128xf32>
    %83 = vector.broadcast %2 : vector<1x128xf32> to vector<16x128xf32>
    %84 = arith.mulf %82, %83 : vector<16x128xf32>
    %85 = vector.extract_strided_slice %1 {offsets = [0, 3], sizes = [16, 1], strides = [1, 1]} : vector<16x21xf32> to vector<16x1xf32>
    %86 = vector.broadcast %85 : vector<16x1xf32> to vector<16x128xf32>
    %87 = vector.broadcast %3 : vector<1x128xf32> to vector<16x128xf32>
    %88 = arith.mulf %86, %87 : vector<16x128xf32>
    %89 = arith.addf %84, %88 : vector<16x128xf32>
    %90 = vector.broadcast %4 : vector<1x128xf32> to vector<16x128xf32>
    %91 = arith.addf %89, %90 : vector<16x128xf32>
    %cst_45 = arith.constant 0.000000e+00 : f32
    %92 = vector.broadcast %cst_45 : f32 to vector<16x128xf32>
    %93 = arith.maximumf %91, %92 : vector<16x128xf32>
    %cst_46 = arith.constant dense<0.000000e+00> : vector<16x8xf32>
    %94 = tpu.matmul %93, %5, %cst_46 {dimension_numbers = #tpu.dot_dimension_numbers<[1], [0], [0], [1], [0, 0, 1, 1], [], []>} : vector<16x128xf32>, vector<128x8xf32>, vector<16x8xf32> -> vector<16x8xf32>
    %95 = vector.broadcast %6 : vector<1x8xf32> to vector<16x8xf32>
    %96 = arith.addf %94, %95 : vector<16x8xf32>
    %cst_47 = arith.constant 0.000000e+00 : f32
    %97 = vector.broadcast %cst_47 : f32 to vector<16x8xf32>
    %98 = arith.maximumf %96, %97 : vector<16x8xf32>
    %99 = vector.extract_strided_slice %7 {offsets = [24, 0], sizes = [8, 12], strides = [1, 1]} : vector<168x12xf32> to vector<8x12xf32>
    %cst_48 = arith.constant dense<0.000000e+00> : vector<16x12xf32>
    %100 = tpu.matmul %98, %99, %cst_48 {dimension_numbers = #tpu.dot_dimension_numbers<[1], [0], [0], [1], [0, 0, 1, 1], [], []>} : vector<16x8xf32>, vector<8x12xf32>, vector<16x12xf32> -> vector<16x12xf32>
    %101 = arith.addf %80, %100 : vector<16x12xf32>
    %102 = vector.extract_strided_slice %0 {offsets = [0, 4], sizes = [16, 1], strides = [1, 1]} : vector<16x21xf32> to vector<16x1xf32>
    %103 = vector.broadcast %102 : vector<16x1xf32> to vector<16x128xf32>
    %104 = vector.broadcast %2 : vector<1x128xf32> to vector<16x128xf32>
    %105 = arith.mulf %103, %104 : vector<16x128xf32>
    %106 = vector.extract_strided_slice %1 {offsets = [0, 4], sizes = [16, 1], strides = [1, 1]} : vector<16x21xf32> to vector<16x1xf32>
    %107 = vector.broadcast %106 : vector<16x1xf32> to vector<16x128xf32>
    %108 = vector.broadcast %3 : vector<1x128xf32> to vector<16x128xf32>
    %109 = arith.mulf %107, %108 : vector<16x128xf32>
    %110 = arith.addf %105, %109 : vector<16x128xf32>
    %111 = vector.broadcast %4 : vector<1x128xf32> to vector<16x128xf32>
    %112 = arith.addf %110, %111 : vector<16x128xf32>
    %cst_49 = arith.constant 0.000000e+00 : f32
    %113 = vector.broadcast %cst_49 : f32 to vector<16x128xf32>
    %114 = arith.maximumf %112, %113 : vector<16x128xf32>
    %cst_50 = arith.constant dense<0.000000e+00> : vector<16x8xf32>
    %115 = tpu.matmul %114, %5, %cst_50 {dimension_numbers = #tpu.dot_dimension_numbers<[1], [0], [0], [1], [0, 0, 1, 1], [], []>} : vector<16x128xf32>, vector<128x8xf32>, vector<16x8xf32> -> vector<16x8xf32>
    %116 = vector.broadcast %6 : vector<1x8xf32> to vector<16x8xf32>
    %117 = arith.addf %115, %116 : vector<16x8xf32>
    %cst_51 = arith.constant 0.000000e+00 : f32
    %118 = vector.broadcast %cst_51 : f32 to vector<16x8xf32>
    %119 = arith.maximumf %117, %118 : vector<16x8xf32>
    %120 = vector.extract_strided_slice %7 {offsets = [32, 0], sizes = [8, 12], strides = [1, 1]} : vector<168x12xf32> to vector<8x12xf32>
    %cst_52 = arith.constant dense<0.000000e+00> : vector<16x12xf32>
    %121 = tpu.matmul %119, %120, %cst_52 {dimension_numbers = #tpu.dot_dimension_numbers<[1], [0], [0], [1], [0, 0, 1, 1], [], []>} : vector<16x8xf32>, vector<8x12xf32>, vector<16x12xf32> -> vector<16x12xf32>
    %122 = arith.addf %101, %121 : vector<16x12xf32>
    %123 = vector.extract_strided_slice %0 {offsets = [0, 5], sizes = [16, 1], strides = [1, 1]} : vector<16x21xf32> to vector<16x1xf32>
    %124 = vector.broadcast %123 : vector<16x1xf32> to vector<16x128xf32>
    %125 = vector.broadcast %2 : vector<1x128xf32> to vector<16x128xf32>
    %126 = arith.mulf %124, %125 : vector<16x128xf32>
    %127 = vector.extract_strided_slice %1 {offsets = [0, 5], sizes = [16, 1], strides = [1, 1]} : vector<16x21xf32> to vector<16x1xf32>
    %128 = vector.broadcast %127 : vector<16x1xf32> to vector<16x128xf32>
    %129 = vector.broadcast %3 : vector<1x128xf32> to vector<16x128xf32>
    %130 = arith.mulf %128, %129 : vector<16x128xf32>
    %131 = arith.addf %126, %130 : vector<16x128xf32>
    %132 = vector.broadcast %4 : vector<1x128xf32> to vector<16x128xf32>
    %133 = arith.addf %131, %132 : vector<16x128xf32>
    %cst_53 = arith.constant 0.000000e+00 : f32
    %134 = vector.broadcast %cst_53 : f32 to vector<16x128xf32>
    %135 = arith.maximumf %133, %134 : vector<16x128xf32>
    %cst_54 = arith.constant dense<0.000000e+00> : vector<16x8xf32>
    %136 = tpu.matmul %135, %5, %cst_54 {dimension_numbers = #tpu.dot_dimension_numbers<[1], [0], [0], [1], [0, 0, 1, 1], [], []>} : vector<16x128xf32>, vector<128x8xf32>, vector<16x8xf32> -> vector<16x8xf32>
    %137 = vector.broadcast %6 : vector<1x8xf32> to vector<16x8xf32>
    %138 = arith.addf %136, %137 : vector<16x8xf32>
    %cst_55 = arith.constant 0.000000e+00 : f32
    %139 = vector.broadcast %cst_55 : f32 to vector<16x8xf32>
    %140 = arith.maximumf %138, %139 : vector<16x8xf32>
    %141 = vector.extract_strided_slice %7 {offsets = [40, 0], sizes = [8, 12], strides = [1, 1]} : vector<168x12xf32> to vector<8x12xf32>
    %cst_56 = arith.constant dense<0.000000e+00> : vector<16x12xf32>
    %142 = tpu.matmul %140, %141, %cst_56 {dimension_numbers = #tpu.dot_dimension_numbers<[1], [0], [0], [1], [0, 0, 1, 1], [], []>} : vector<16x8xf32>, vector<8x12xf32>, vector<16x12xf32> -> vector<16x12xf32>
    %143 = arith.addf %122, %142 : vector<16x12xf32>
    %144 = vector.extract_strided_slice %0 {offsets = [0, 6], sizes = [16, 1], strides = [1, 1]} : vector<16x21xf32> to vector<16x1xf32>
    %145 = vector.broadcast %144 : vector<16x1xf32> to vector<16x128xf32>
    %146 = vector.broadcast %2 : vector<1x128xf32> to vector<16x128xf32>
    %147 = arith.mulf %145, %146 : vector<16x128xf32>
    %148 = vector.extract_strided_slice %1 {offsets = [0, 6], sizes = [16, 1], strides = [1, 1]} : vector<16x21xf32> to vector<16x1xf32>
    %149 = vector.broadcast %148 : vector<16x1xf32> to vector<16x128xf32>
    %150 = vector.broadcast %3 : vector<1x128xf32> to vector<16x128xf32>
    %151 = arith.mulf %149, %150 : vector<16x128xf32>
    %152 = arith.addf %147, %151 : vector<16x128xf32>
    %153 = vector.broadcast %4 : vector<1x128xf32> to vector<16x128xf32>
    %154 = arith.addf %152, %153 : vector<16x128xf32>
    %cst_57 = arith.constant 0.000000e+00 : f32
    %155 = vector.broadcast %cst_57 : f32 to vector<16x128xf32>
    %156 = arith.maximumf %154, %155 : vector<16x128xf32>
    %cst_58 = arith.constant dense<0.000000e+00> : vector<16x8xf32>
    %157 = tpu.matmul %156, %5, %cst_58 {dimension_numbers = #tpu.dot_dimension_numbers<[1], [0], [0], [1], [0, 0, 1, 1], [], []>} : vector<16x128xf32>, vector<128x8xf32>, vector<16x8xf32> -> vector<16x8xf32>
    %158 = vector.broadcast %6 : vector<1x8xf32> to vector<16x8xf32>
    %159 = arith.addf %157, %158 : vector<16x8xf32>
    %cst_59 = arith.constant 0.000000e+00 : f32
    %160 = vector.broadcast %cst_59 : f32 to vector<16x8xf32>
    %161 = arith.maximumf %159, %160 : vector<16x8xf32>
    %162 = vector.extract_strided_slice %7 {offsets = [48, 0], sizes = [8, 12], strides = [1, 1]} : vector<168x12xf32> to vector<8x12xf32>
    %cst_60 = arith.constant dense<0.000000e+00> : vector<16x12xf32>
    %163 = tpu.matmul %161, %162, %cst_60 {dimension_numbers = #tpu.dot_dimension_numbers<[1], [0], [0], [1], [0, 0, 1, 1], [], []>} : vector<16x8xf32>, vector<8x12xf32>, vector<16x12xf32> -> vector<16x12xf32>
    %164 = arith.addf %143, %163 : vector<16x12xf32>
    %165 = vector.extract_strided_slice %0 {offsets = [0, 7], sizes = [16, 1], strides = [1, 1]} : vector<16x21xf32> to vector<16x1xf32>
    %166 = vector.broadcast %165 : vector<16x1xf32> to vector<16x128xf32>
    %167 = vector.broadcast %2 : vector<1x128xf32> to vector<16x128xf32>
    %168 = arith.mulf %166, %167 : vector<16x128xf32>
    %169 = vector.extract_strided_slice %1 {offsets = [0, 7], sizes = [16, 1], strides = [1, 1]} : vector<16x21xf32> to vector<16x1xf32>
    %170 = vector.broadcast %169 : vector<16x1xf32> to vector<16x128xf32>
    %171 = vector.broadcast %3 : vector<1x128xf32> to vector<16x128xf32>
    %172 = arith.mulf %170, %171 : vector<16x128xf32>
    %173 = arith.addf %168, %172 : vector<16x128xf32>
    %174 = vector.broadcast %4 : vector<1x128xf32> to vector<16x128xf32>
    %175 = arith.addf %173, %174 : vector<16x128xf32>
    %cst_61 = arith.constant 0.000000e+00 : f32
    %176 = vector.broadcast %cst_61 : f32 to vector<16x128xf32>
    %177 = arith.maximumf %175, %176 : vector<16x128xf32>
    %cst_62 = arith.constant dense<0.000000e+00> : vector<16x8xf32>
    %178 = tpu.matmul %177, %5, %cst_62 {dimension_numbers = #tpu.dot_dimension_numbers<[1], [0], [0], [1], [0, 0, 1, 1], [], []>} : vector<16x128xf32>, vector<128x8xf32>, vector<16x8xf32> -> vector<16x8xf32>
    %179 = vector.broadcast %6 : vector<1x8xf32> to vector<16x8xf32>
    %180 = arith.addf %178, %179 : vector<16x8xf32>
    %cst_63 = arith.constant 0.000000e+00 : f32
    %181 = vector.broadcast %cst_63 : f32 to vector<16x8xf32>
    %182 = arith.maximumf %180, %181 : vector<16x8xf32>
    %183 = vector.extract_strided_slice %7 {offsets = [56, 0], sizes = [8, 12], strides = [1, 1]} : vector<168x12xf32> to vector<8x12xf32>
    %cst_64 = arith.constant dense<0.000000e+00> : vector<16x12xf32>
    %184 = tpu.matmul %182, %183, %cst_64 {dimension_numbers = #tpu.dot_dimension_numbers<[1], [0], [0], [1], [0, 0, 1, 1], [], []>} : vector<16x8xf32>, vector<8x12xf32>, vector<16x12xf32> -> vector<16x12xf32>
    %185 = arith.addf %164, %184 : vector<16x12xf32>
    %186 = vector.extract_strided_slice %0 {offsets = [0, 8], sizes = [16, 1], strides = [1, 1]} : vector<16x21xf32> to vector<16x1xf32>
    %187 = vector.broadcast %186 : vector<16x1xf32> to vector<16x128xf32>
    %188 = vector.broadcast %2 : vector<1x128xf32> to vector<16x128xf32>
    %189 = arith.mulf %187, %188 : vector<16x128xf32>
    %190 = vector.extract_strided_slice %1 {offsets = [0, 8], sizes = [16, 1], strides = [1, 1]} : vector<16x21xf32> to vector<16x1xf32>
    %191 = vector.broadcast %190 : vector<16x1xf32> to vector<16x128xf32>
    %192 = vector.broadcast %3 : vector<1x128xf32> to vector<16x128xf32>
    %193 = arith.mulf %191, %192 : vector<16x128xf32>
    %194 = arith.addf %189, %193 : vector<16x128xf32>
    %195 = vector.broadcast %4 : vector<1x128xf32> to vector<16x128xf32>
    %196 = arith.addf %194, %195 : vector<16x128xf32>
    %cst_65 = arith.constant 0.000000e+00 : f32
    %197 = vector.broadcast %cst_65 : f32 to vector<16x128xf32>
    %198 = arith.maximumf %196, %197 : vector<16x128xf32>
    %cst_66 = arith.constant dense<0.000000e+00> : vector<16x8xf32>
    %199 = tpu.matmul %198, %5, %cst_66 {dimension_numbers = #tpu.dot_dimension_numbers<[1], [0], [0], [1], [0, 0, 1, 1], [], []>} : vector<16x128xf32>, vector<128x8xf32>, vector<16x8xf32> -> vector<16x8xf32>
    %200 = vector.broadcast %6 : vector<1x8xf32> to vector<16x8xf32>
    %201 = arith.addf %199, %200 : vector<16x8xf32>
    %cst_67 = arith.constant 0.000000e+00 : f32
    %202 = vector.broadcast %cst_67 : f32 to vector<16x8xf32>
    %203 = arith.maximumf %201, %202 : vector<16x8xf32>
    %204 = vector.extract_strided_slice %7 {offsets = [64, 0], sizes = [8, 12], strides = [1, 1]} : vector<168x12xf32> to vector<8x12xf32>
    %cst_68 = arith.constant dense<0.000000e+00> : vector<16x12xf32>
    %205 = tpu.matmul %203, %204, %cst_68 {dimension_numbers = #tpu.dot_dimension_numbers<[1], [0], [0], [1], [0, 0, 1, 1], [], []>} : vector<16x8xf32>, vector<8x12xf32>, vector<16x12xf32> -> vector<16x12xf32>
    %206 = arith.addf %185, %205 : vector<16x12xf32>
    %207 = vector.extract_strided_slice %0 {offsets = [0, 9], sizes = [16, 1], strides = [1, 1]} : vector<16x21xf32> to vector<16x1xf32>
    %208 = vector.broadcast %207 : vector<16x1xf32> to vector<16x128xf32>
    %209 = vector.broadcast %2 : vector<1x128xf32> to vector<16x128xf32>
    %210 = arith.mulf %208, %209 : vector<16x128xf32>
    %211 = vector.extract_strided_slice %1 {offsets = [0, 9], sizes = [16, 1], strides = [1, 1]} : vector<16x21xf32> to vector<16x1xf32>
    %212 = vector.broadcast %211 : vector<16x1xf32> to vector<16x128xf32>
    %213 = vector.broadcast %3 : vector<1x128xf32> to vector<16x128xf32>
    %214 = arith.mulf %212, %213 : vector<16x128xf32>
    %215 = arith.addf %210, %214 : vector<16x128xf32>
    %216 = vector.broadcast %4 : vector<1x128xf32> to vector<16x128xf32>
    %217 = arith.addf %215, %216 : vector<16x128xf32>
    %cst_69 = arith.constant 0.000000e+00 : f32
    %218 = vector.broadcast %cst_69 : f32 to vector<16x128xf32>
    %219 = arith.maximumf %217, %218 : vector<16x128xf32>
    %cst_70 = arith.constant dense<0.000000e+00> : vector<16x8xf32>
    %220 = tpu.matmul %219, %5, %cst_70 {dimension_numbers = #tpu.dot_dimension_numbers<[1], [0], [0], [1], [0, 0, 1, 1], [], []>} : vector<16x128xf32>, vector<128x8xf32>, vector<16x8xf32> -> vector<16x8xf32>
    %221 = vector.broadcast %6 : vector<1x8xf32> to vector<16x8xf32>
    %222 = arith.addf %220, %221 : vector<16x8xf32>
    %cst_71 = arith.constant 0.000000e+00 : f32
    %223 = vector.broadcast %cst_71 : f32 to vector<16x8xf32>
    %224 = arith.maximumf %222, %223 : vector<16x8xf32>
    %225 = vector.extract_strided_slice %7 {offsets = [72, 0], sizes = [8, 12], strides = [1, 1]} : vector<168x12xf32> to vector<8x12xf32>
    %cst_72 = arith.constant dense<0.000000e+00> : vector<16x12xf32>
    %226 = tpu.matmul %224, %225, %cst_72 {dimension_numbers = #tpu.dot_dimension_numbers<[1], [0], [0], [1], [0, 0, 1, 1], [], []>} : vector<16x8xf32>, vector<8x12xf32>, vector<16x12xf32> -> vector<16x12xf32>
    %227 = arith.addf %206, %226 : vector<16x12xf32>
    %228 = vector.extract_strided_slice %0 {offsets = [0, 10], sizes = [16, 1], strides = [1, 1]} : vector<16x21xf32> to vector<16x1xf32>
    %229 = vector.broadcast %228 : vector<16x1xf32> to vector<16x128xf32>
    %230 = vector.broadcast %2 : vector<1x128xf32> to vector<16x128xf32>
    %231 = arith.mulf %229, %230 : vector<16x128xf32>
    %232 = vector.extract_strided_slice %1 {offsets = [0, 10], sizes = [16, 1], strides = [1, 1]} : vector<16x21xf32> to vector<16x1xf32>
    %233 = vector.broadcast %232 : vector<16x1xf32> to vector<16x128xf32>
    %234 = vector.broadcast %3 : vector<1x128xf32> to vector<16x128xf32>
    %235 = arith.mulf %233, %234 : vector<16x128xf32>
    %236 = arith.addf %231, %235 : vector<16x128xf32>
    %237 = vector.broadcast %4 : vector<1x128xf32> to vector<16x128xf32>
    %238 = arith.addf %236, %237 : vector<16x128xf32>
    %cst_73 = arith.constant 0.000000e+00 : f32
    %239 = vector.broadcast %cst_73 : f32 to vector<16x128xf32>
    %240 = arith.maximumf %238, %239 : vector<16x128xf32>
    %cst_74 = arith.constant dense<0.000000e+00> : vector<16x8xf32>
    %241 = tpu.matmul %240, %5, %cst_74 {dimension_numbers = #tpu.dot_dimension_numbers<[1], [0], [0], [1], [0, 0, 1, 1], [], []>} : vector<16x128xf32>, vector<128x8xf32>, vector<16x8xf32> -> vector<16x8xf32>
    %242 = vector.broadcast %6 : vector<1x8xf32> to vector<16x8xf32>
    %243 = arith.addf %241, %242 : vector<16x8xf32>
    %cst_75 = arith.constant 0.000000e+00 : f32
    %244 = vector.broadcast %cst_75 : f32 to vector<16x8xf32>
    %245 = arith.maximumf %243, %244 : vector<16x8xf32>
    %246 = vector.extract_strided_slice %7 {offsets = [80, 0], sizes = [8, 12], strides = [1, 1]} : vector<168x12xf32> to vector<8x12xf32>
    %cst_76 = arith.constant dense<0.000000e+00> : vector<16x12xf32>
    %247 = tpu.matmul %245, %246, %cst_76 {dimension_numbers = #tpu.dot_dimension_numbers<[1], [0], [0], [1], [0, 0, 1, 1], [], []>} : vector<16x8xf32>, vector<8x12xf32>, vector<16x12xf32> -> vector<16x12xf32>
    %248 = arith.addf %227, %247 : vector<16x12xf32>
    %249 = vector.extract_strided_slice %0 {offsets = [0, 11], sizes = [16, 1], strides = [1, 1]} : vector<16x21xf32> to vector<16x1xf32>
    %250 = vector.broadcast %249 : vector<16x1xf32> to vector<16x128xf32>
    %251 = vector.broadcast %2 : vector<1x128xf32> to vector<16x128xf32>
    %252 = arith.mulf %250, %251 : vector<16x128xf32>
    %253 = vector.extract_strided_slice %1 {offsets = [0, 11], sizes = [16, 1], strides = [1, 1]} : vector<16x21xf32> to vector<16x1xf32>
    %254 = vector.broadcast %253 : vector<16x1xf32> to vector<16x128xf32>
    %255 = vector.broadcast %3 : vector<1x128xf32> to vector<16x128xf32>
    %256 = arith.mulf %254, %255 : vector<16x128xf32>
    %257 = arith.addf %252, %256 : vector<16x128xf32>
    %258 = vector.broadcast %4 : vector<1x128xf32> to vector<16x128xf32>
    %259 = arith.addf %257, %258 : vector<16x128xf32>
    %cst_77 = arith.constant 0.000000e+00 : f32
    %260 = vector.broadcast %cst_77 : f32 to vector<16x128xf32>
    %261 = arith.maximumf %259, %260 : vector<16x128xf32>
    %cst_78 = arith.constant dense<0.000000e+00> : vector<16x8xf32>
    %262 = tpu.matmul %261, %5, %cst_78 {dimension_numbers = #tpu.dot_dimension_numbers<[1], [0], [0], [1], [0, 0, 1, 1], [], []>} : vector<16x128xf32>, vector<128x8xf32>, vector<16x8xf32> -> vector<16x8xf32>
    %263 = vector.broadcast %6 : vector<1x8xf32> to vector<16x8xf32>
    %264 = arith.addf %262, %263 : vector<16x8xf32>
    %cst_79 = arith.constant 0.000000e+00 : f32
    %265 = vector.broadcast %cst_79 : f32 to vector<16x8xf32>
    %266 = arith.maximumf %264, %265 : vector<16x8xf32>
    %267 = vector.extract_strided_slice %7 {offsets = [88, 0], sizes = [8, 12], strides = [1, 1]} : vector<168x12xf32> to vector<8x12xf32>
    %cst_80 = arith.constant dense<0.000000e+00> : vector<16x12xf32>
    %268 = tpu.matmul %266, %267, %cst_80 {dimension_numbers = #tpu.dot_dimension_numbers<[1], [0], [0], [1], [0, 0, 1, 1], [], []>} : vector<16x8xf32>, vector<8x12xf32>, vector<16x12xf32> -> vector<16x12xf32>
    %269 = arith.addf %248, %268 : vector<16x12xf32>
    %270 = vector.extract_strided_slice %0 {offsets = [0, 12], sizes = [16, 1], strides = [1, 1]} : vector<16x21xf32> to vector<16x1xf32>
    %271 = vector.broadcast %270 : vector<16x1xf32> to vector<16x128xf32>
    %272 = vector.broadcast %2 : vector<1x128xf32> to vector<16x128xf32>
    %273 = arith.mulf %271, %272 : vector<16x128xf32>
    %274 = vector.extract_strided_slice %1 {offsets = [0, 12], sizes = [16, 1], strides = [1, 1]} : vector<16x21xf32> to vector<16x1xf32>
    %275 = vector.broadcast %274 : vector<16x1xf32> to vector<16x128xf32>
    %276 = vector.broadcast %3 : vector<1x128xf32> to vector<16x128xf32>
    %277 = arith.mulf %275, %276 : vector<16x128xf32>
    %278 = arith.addf %273, %277 : vector<16x128xf32>
    %279 = vector.broadcast %4 : vector<1x128xf32> to vector<16x128xf32>
    %280 = arith.addf %278, %279 : vector<16x128xf32>
    %cst_81 = arith.constant 0.000000e+00 : f32
    %281 = vector.broadcast %cst_81 : f32 to vector<16x128xf32>
    %282 = arith.maximumf %280, %281 : vector<16x128xf32>
    %cst_82 = arith.constant dense<0.000000e+00> : vector<16x8xf32>
    %283 = tpu.matmul %282, %5, %cst_82 {dimension_numbers = #tpu.dot_dimension_numbers<[1], [0], [0], [1], [0, 0, 1, 1], [], []>} : vector<16x128xf32>, vector<128x8xf32>, vector<16x8xf32> -> vector<16x8xf32>
    %284 = vector.broadcast %6 : vector<1x8xf32> to vector<16x8xf32>
    %285 = arith.addf %283, %284 : vector<16x8xf32>
    %cst_83 = arith.constant 0.000000e+00 : f32
    %286 = vector.broadcast %cst_83 : f32 to vector<16x8xf32>
    %287 = arith.maximumf %285, %286 : vector<16x8xf32>
    %288 = vector.extract_strided_slice %7 {offsets = [96, 0], sizes = [8, 12], strides = [1, 1]} : vector<168x12xf32> to vector<8x12xf32>
    %cst_84 = arith.constant dense<0.000000e+00> : vector<16x12xf32>
    %289 = tpu.matmul %287, %288, %cst_84 {dimension_numbers = #tpu.dot_dimension_numbers<[1], [0], [0], [1], [0, 0, 1, 1], [], []>} : vector<16x8xf32>, vector<8x12xf32>, vector<16x12xf32> -> vector<16x12xf32>
    %290 = arith.addf %269, %289 : vector<16x12xf32>
    %291 = vector.extract_strided_slice %0 {offsets = [0, 13], sizes = [16, 1], strides = [1, 1]} : vector<16x21xf32> to vector<16x1xf32>
    %292 = vector.broadcast %291 : vector<16x1xf32> to vector<16x128xf32>
    %293 = vector.broadcast %2 : vector<1x128xf32> to vector<16x128xf32>
    %294 = arith.mulf %292, %293 : vector<16x128xf32>
    %295 = vector.extract_strided_slice %1 {offsets = [0, 13], sizes = [16, 1], strides = [1, 1]} : vector<16x21xf32> to vector<16x1xf32>
    %296 = vector.broadcast %295 : vector<16x1xf32> to vector<16x128xf32>
    %297 = vector.broadcast %3 : vector<1x128xf32> to vector<16x128xf32>
    %298 = arith.mulf %296, %297 : vector<16x128xf32>
    %299 = arith.addf %294, %298 : vector<16x128xf32>
    %300 = vector.broadcast %4 : vector<1x128xf32> to vector<16x128xf32>
    %301 = arith.addf %299, %300 : vector<16x128xf32>
    %cst_85 = arith.constant 0.000000e+00 : f32
    %302 = vector.broadcast %cst_85 : f32 to vector<16x128xf32>
    %303 = arith.maximumf %301, %302 : vector<16x128xf32>
    %cst_86 = arith.constant dense<0.000000e+00> : vector<16x8xf32>
    %304 = tpu.matmul %303, %5, %cst_86 {dimension_numbers = #tpu.dot_dimension_numbers<[1], [0], [0], [1], [0, 0, 1, 1], [], []>} : vector<16x128xf32>, vector<128x8xf32>, vector<16x8xf32> -> vector<16x8xf32>
    %305 = vector.broadcast %6 : vector<1x8xf32> to vector<16x8xf32>
    %306 = arith.addf %304, %305 : vector<16x8xf32>
    %cst_87 = arith.constant 0.000000e+00 : f32
    %307 = vector.broadcast %cst_87 : f32 to vector<16x8xf32>
    %308 = arith.maximumf %306, %307 : vector<16x8xf32>
    %309 = vector.extract_strided_slice %7 {offsets = [104, 0], sizes = [8, 12], strides = [1, 1]} : vector<168x12xf32> to vector<8x12xf32>
    %cst_88 = arith.constant dense<0.000000e+00> : vector<16x12xf32>
    %310 = tpu.matmul %308, %309, %cst_88 {dimension_numbers = #tpu.dot_dimension_numbers<[1], [0], [0], [1], [0, 0, 1, 1], [], []>} : vector<16x8xf32>, vector<8x12xf32>, vector<16x12xf32> -> vector<16x12xf32>
    %311 = arith.addf %290, %310 : vector<16x12xf32>
    %312 = vector.extract_strided_slice %0 {offsets = [0, 14], sizes = [16, 1], strides = [1, 1]} : vector<16x21xf32> to vector<16x1xf32>
    %313 = vector.broadcast %312 : vector<16x1xf32> to vector<16x128xf32>
    %314 = vector.broadcast %2 : vector<1x128xf32> to vector<16x128xf32>
    %315 = arith.mulf %313, %314 : vector<16x128xf32>
    %316 = vector.extract_strided_slice %1 {offsets = [0, 14], sizes = [16, 1], strides = [1, 1]} : vector<16x21xf32> to vector<16x1xf32>
    %317 = vector.broadcast %316 : vector<16x1xf32> to vector<16x128xf32>
    %318 = vector.broadcast %3 : vector<1x128xf32> to vector<16x128xf32>
    %319 = arith.mulf %317, %318 : vector<16x128xf32>
    %320 = arith.addf %315, %319 : vector<16x128xf32>
    %321 = vector.broadcast %4 : vector<1x128xf32> to vector<16x128xf32>
    %322 = arith.addf %320, %321 : vector<16x128xf32>
    %cst_89 = arith.constant 0.000000e+00 : f32
    %323 = vector.broadcast %cst_89 : f32 to vector<16x128xf32>
    %324 = arith.maximumf %322, %323 : vector<16x128xf32>
    %cst_90 = arith.constant dense<0.000000e+00> : vector<16x8xf32>
    %325 = tpu.matmul %324, %5, %cst_90 {dimension_numbers = #tpu.dot_dimension_numbers<[1], [0], [0], [1], [0, 0, 1, 1], [], []>} : vector<16x128xf32>, vector<128x8xf32>, vector<16x8xf32> -> vector<16x8xf32>
    %326 = vector.broadcast %6 : vector<1x8xf32> to vector<16x8xf32>
    %327 = arith.addf %325, %326 : vector<16x8xf32>
    %cst_91 = arith.constant 0.000000e+00 : f32
    %328 = vector.broadcast %cst_91 : f32 to vector<16x8xf32>
    %329 = arith.maximumf %327, %328 : vector<16x8xf32>
    %330 = vector.extract_strided_slice %7 {offsets = [112, 0], sizes = [8, 12], strides = [1, 1]} : vector<168x12xf32> to vector<8x12xf32>
    %cst_92 = arith.constant dense<0.000000e+00> : vector<16x12xf32>
    %331 = tpu.matmul %329, %330, %cst_92 {dimension_numbers = #tpu.dot_dimension_numbers<[1], [0], [0], [1], [0, 0, 1, 1], [], []>} : vector<16x8xf32>, vector<8x12xf32>, vector<16x12xf32> -> vector<16x12xf32>
    %332 = arith.addf %311, %331 : vector<16x12xf32>
    %333 = vector.extract_strided_slice %0 {offsets = [0, 15], sizes = [16, 1], strides = [1, 1]} : vector<16x21xf32> to vector<16x1xf32>
    %334 = vector.broadcast %333 : vector<16x1xf32> to vector<16x128xf32>
    %335 = vector.broadcast %2 : vector<1x128xf32> to vector<16x128xf32>
    %336 = arith.mulf %334, %335 : vector<16x128xf32>
    %337 = vector.extract_strided_slice %1 {offsets = [0, 15], sizes = [16, 1], strides = [1, 1]} : vector<16x21xf32> to vector<16x1xf32>
    %338 = vector.broadcast %337 : vector<16x1xf32> to vector<16x128xf32>
    %339 = vector.broadcast %3 : vector<1x128xf32> to vector<16x128xf32>
    %340 = arith.mulf %338, %339 : vector<16x128xf32>
    %341 = arith.addf %336, %340 : vector<16x128xf32>
    %342 = vector.broadcast %4 : vector<1x128xf32> to vector<16x128xf32>
    %343 = arith.addf %341, %342 : vector<16x128xf32>
    %cst_93 = arith.constant 0.000000e+00 : f32
    %344 = vector.broadcast %cst_93 : f32 to vector<16x128xf32>
    %345 = arith.maximumf %343, %344 : vector<16x128xf32>
    %cst_94 = arith.constant dense<0.000000e+00> : vector<16x8xf32>
    %346 = tpu.matmul %345, %5, %cst_94 {dimension_numbers = #tpu.dot_dimension_numbers<[1], [0], [0], [1], [0, 0, 1, 1], [], []>} : vector<16x128xf32>, vector<128x8xf32>, vector<16x8xf32> -> vector<16x8xf32>
    %347 = vector.broadcast %6 : vector<1x8xf32> to vector<16x8xf32>
    %348 = arith.addf %346, %347 : vector<16x8xf32>
    %cst_95 = arith.constant 0.000000e+00 : f32
    %349 = vector.broadcast %cst_95 : f32 to vector<16x8xf32>
    %350 = arith.maximumf %348, %349 : vector<16x8xf32>
    %351 = vector.extract_strided_slice %7 {offsets = [120, 0], sizes = [8, 12], strides = [1, 1]} : vector<168x12xf32> to vector<8x12xf32>
    %cst_96 = arith.constant dense<0.000000e+00> : vector<16x12xf32>
    %352 = tpu.matmul %350, %351, %cst_96 {dimension_numbers = #tpu.dot_dimension_numbers<[1], [0], [0], [1], [0, 0, 1, 1], [], []>} : vector<16x8xf32>, vector<8x12xf32>, vector<16x12xf32> -> vector<16x12xf32>
    %353 = arith.addf %332, %352 : vector<16x12xf32>
    %354 = vector.extract_strided_slice %0 {offsets = [0, 16], sizes = [16, 1], strides = [1, 1]} : vector<16x21xf32> to vector<16x1xf32>
    %355 = vector.broadcast %354 : vector<16x1xf32> to vector<16x128xf32>
    %356 = vector.broadcast %2 : vector<1x128xf32> to vector<16x128xf32>
    %357 = arith.mulf %355, %356 : vector<16x128xf32>
    %358 = vector.extract_strided_slice %1 {offsets = [0, 16], sizes = [16, 1], strides = [1, 1]} : vector<16x21xf32> to vector<16x1xf32>
    %359 = vector.broadcast %358 : vector<16x1xf32> to vector<16x128xf32>
    %360 = vector.broadcast %3 : vector<1x128xf32> to vector<16x128xf32>
    %361 = arith.mulf %359, %360 : vector<16x128xf32>
    %362 = arith.addf %357, %361 : vector<16x128xf32>
    %363 = vector.broadcast %4 : vector<1x128xf32> to vector<16x128xf32>
    %364 = arith.addf %362, %363 : vector<16x128xf32>
    %cst_97 = arith.constant 0.000000e+00 : f32
    %365 = vector.broadcast %cst_97 : f32 to vector<16x128xf32>
    %366 = arith.maximumf %364, %365 : vector<16x128xf32>
    %cst_98 = arith.constant dense<0.000000e+00> : vector<16x8xf32>
    %367 = tpu.matmul %366, %5, %cst_98 {dimension_numbers = #tpu.dot_dimension_numbers<[1], [0], [0], [1], [0, 0, 1, 1], [], []>} : vector<16x128xf32>, vector<128x8xf32>, vector<16x8xf32> -> vector<16x8xf32>
    %368 = vector.broadcast %6 : vector<1x8xf32> to vector<16x8xf32>
    %369 = arith.addf %367, %368 : vector<16x8xf32>
    %cst_99 = arith.constant 0.000000e+00 : f32
    %370 = vector.broadcast %cst_99 : f32 to vector<16x8xf32>
    %371 = arith.maximumf %369, %370 : vector<16x8xf32>
    %372 = vector.extract_strided_slice %7 {offsets = [128, 0], sizes = [8, 12], strides = [1, 1]} : vector<168x12xf32> to vector<8x12xf32>
    %cst_100 = arith.constant dense<0.000000e+00> : vector<16x12xf32>
    %373 = tpu.matmul %371, %372, %cst_100 {dimension_numbers = #tpu.dot_dimension_numbers<[1], [0], [0], [1], [0, 0, 1, 1], [], []>} : vector<16x8xf32>, vector<8x12xf32>, vector<16x12xf32> -> vector<16x12xf32>
    %374 = arith.addf %353, %373 : vector<16x12xf32>
    %375 = vector.extract_strided_slice %0 {offsets = [0, 17], sizes = [16, 1], strides = [1, 1]} : vector<16x21xf32> to vector<16x1xf32>
    %376 = vector.broadcast %375 : vector<16x1xf32> to vector<16x128xf32>
    %377 = vector.broadcast %2 : vector<1x128xf32> to vector<16x128xf32>
    %378 = arith.mulf %376, %377 : vector<16x128xf32>
    %379 = vector.extract_strided_slice %1 {offsets = [0, 17], sizes = [16, 1], strides = [1, 1]} : vector<16x21xf32> to vector<16x1xf32>
    %380 = vector.broadcast %379 : vector<16x1xf32> to vector<16x128xf32>
    %381 = vector.broadcast %3 : vector<1x128xf32> to vector<16x128xf32>
    %382 = arith.mulf %380, %381 : vector<16x128xf32>
    %383 = arith.addf %378, %382 : vector<16x128xf32>
    %384 = vector.broadcast %4 : vector<1x128xf32> to vector<16x128xf32>
    %385 = arith.addf %383, %384 : vector<16x128xf32>
    %cst_101 = arith.constant 0.000000e+00 : f32
    %386 = vector.broadcast %cst_101 : f32 to vector<16x128xf32>
    %387 = arith.maximumf %385, %386 : vector<16x128xf32>
    %cst_102 = arith.constant dense<0.000000e+00> : vector<16x8xf32>
    %388 = tpu.matmul %387, %5, %cst_102 {dimension_numbers = #tpu.dot_dimension_numbers<[1], [0], [0], [1], [0, 0, 1, 1], [], []>} : vector<16x128xf32>, vector<128x8xf32>, vector<16x8xf32> -> vector<16x8xf32>
    %389 = vector.broadcast %6 : vector<1x8xf32> to vector<16x8xf32>
    %390 = arith.addf %388, %389 : vector<16x8xf32>
    %cst_103 = arith.constant 0.000000e+00 : f32
    %391 = vector.broadcast %cst_103 : f32 to vector<16x8xf32>
    %392 = arith.maximumf %390, %391 : vector<16x8xf32>
    %393 = vector.extract_strided_slice %7 {offsets = [136, 0], sizes = [8, 12], strides = [1, 1]} : vector<168x12xf32> to vector<8x12xf32>
    %cst_104 = arith.constant dense<0.000000e+00> : vector<16x12xf32>
    %394 = tpu.matmul %392, %393, %cst_104 {dimension_numbers = #tpu.dot_dimension_numbers<[1], [0], [0], [1], [0, 0, 1, 1], [], []>} : vector<16x8xf32>, vector<8x12xf32>, vector<16x12xf32> -> vector<16x12xf32>
    %395 = arith.addf %374, %394 : vector<16x12xf32>
    %396 = vector.extract_strided_slice %0 {offsets = [0, 18], sizes = [16, 1], strides = [1, 1]} : vector<16x21xf32> to vector<16x1xf32>
    %397 = vector.broadcast %396 : vector<16x1xf32> to vector<16x128xf32>
    %398 = vector.broadcast %2 : vector<1x128xf32> to vector<16x128xf32>
    %399 = arith.mulf %397, %398 : vector<16x128xf32>
    %400 = vector.extract_strided_slice %1 {offsets = [0, 18], sizes = [16, 1], strides = [1, 1]} : vector<16x21xf32> to vector<16x1xf32>
    %401 = vector.broadcast %400 : vector<16x1xf32> to vector<16x128xf32>
    %402 = vector.broadcast %3 : vector<1x128xf32> to vector<16x128xf32>
    %403 = arith.mulf %401, %402 : vector<16x128xf32>
    %404 = arith.addf %399, %403 : vector<16x128xf32>
    %405 = vector.broadcast %4 : vector<1x128xf32> to vector<16x128xf32>
    %406 = arith.addf %404, %405 : vector<16x128xf32>
    %cst_105 = arith.constant 0.000000e+00 : f32
    %407 = vector.broadcast %cst_105 : f32 to vector<16x128xf32>
    %408 = arith.maximumf %406, %407 : vector<16x128xf32>
    %cst_106 = arith.constant dense<0.000000e+00> : vector<16x8xf32>
    %409 = tpu.matmul %408, %5, %cst_106 {dimension_numbers = #tpu.dot_dimension_numbers<[1], [0], [0], [1], [0, 0, 1, 1], [], []>} : vector<16x128xf32>, vector<128x8xf32>, vector<16x8xf32> -> vector<16x8xf32>
    %410 = vector.broadcast %6 : vector<1x8xf32> to vector<16x8xf32>
    %411 = arith.addf %409, %410 : vector<16x8xf32>
    %cst_107 = arith.constant 0.000000e+00 : f32
    %412 = vector.broadcast %cst_107 : f32 to vector<16x8xf32>
    %413 = arith.maximumf %411, %412 : vector<16x8xf32>
    %414 = vector.extract_strided_slice %7 {offsets = [144, 0], sizes = [8, 12], strides = [1, 1]} : vector<168x12xf32> to vector<8x12xf32>
    %cst_108 = arith.constant dense<0.000000e+00> : vector<16x12xf32>
    %415 = tpu.matmul %413, %414, %cst_108 {dimension_numbers = #tpu.dot_dimension_numbers<[1], [0], [0], [1], [0, 0, 1, 1], [], []>} : vector<16x8xf32>, vector<8x12xf32>, vector<16x12xf32> -> vector<16x12xf32>
    %416 = arith.addf %395, %415 : vector<16x12xf32>
    %417 = vector.extract_strided_slice %0 {offsets = [0, 19], sizes = [16, 1], strides = [1, 1]} : vector<16x21xf32> to vector<16x1xf32>
    %418 = vector.broadcast %417 : vector<16x1xf32> to vector<16x128xf32>
    %419 = vector.broadcast %2 : vector<1x128xf32> to vector<16x128xf32>
    %420 = arith.mulf %418, %419 : vector<16x128xf32>
    %421 = vector.extract_strided_slice %1 {offsets = [0, 19], sizes = [16, 1], strides = [1, 1]} : vector<16x21xf32> to vector<16x1xf32>
    %422 = vector.broadcast %421 : vector<16x1xf32> to vector<16x128xf32>
    %423 = vector.broadcast %3 : vector<1x128xf32> to vector<16x128xf32>
    %424 = arith.mulf %422, %423 : vector<16x128xf32>
    %425 = arith.addf %420, %424 : vector<16x128xf32>
    %426 = vector.broadcast %4 : vector<1x128xf32> to vector<16x128xf32>
    %427 = arith.addf %425, %426 : vector<16x128xf32>
    %cst_109 = arith.constant 0.000000e+00 : f32
    %428 = vector.broadcast %cst_109 : f32 to vector<16x128xf32>
    %429 = arith.maximumf %427, %428 : vector<16x128xf32>
    %cst_110 = arith.constant dense<0.000000e+00> : vector<16x8xf32>
    %430 = tpu.matmul %429, %5, %cst_110 {dimension_numbers = #tpu.dot_dimension_numbers<[1], [0], [0], [1], [0, 0, 1, 1], [], []>} : vector<16x128xf32>, vector<128x8xf32>, vector<16x8xf32> -> vector<16x8xf32>
    %431 = vector.broadcast %6 : vector<1x8xf32> to vector<16x8xf32>
    %432 = arith.addf %430, %431 : vector<16x8xf32>
    %cst_111 = arith.constant 0.000000e+00 : f32
    %433 = vector.broadcast %cst_111 : f32 to vector<16x8xf32>
    %434 = arith.maximumf %432, %433 : vector<16x8xf32>
    %435 = vector.extract_strided_slice %7 {offsets = [152, 0], sizes = [8, 12], strides = [1, 1]} : vector<168x12xf32> to vector<8x12xf32>
    %cst_112 = arith.constant dense<0.000000e+00> : vector<16x12xf32>
    %436 = tpu.matmul %434, %435, %cst_112 {dimension_numbers = #tpu.dot_dimension_numbers<[1], [0], [0], [1], [0, 0, 1, 1], [], []>} : vector<16x8xf32>, vector<8x12xf32>, vector<16x12xf32> -> vector<16x12xf32>
    %437 = arith.addf %416, %436 : vector<16x12xf32>
    %438 = vector.extract_strided_slice %0 {offsets = [0, 20], sizes = [16, 1], strides = [1, 1]} : vector<16x21xf32> to vector<16x1xf32>
    %439 = vector.broadcast %438 : vector<16x1xf32> to vector<16x128xf32>
    %440 = vector.broadcast %2 : vector<1x128xf32> to vector<16x128xf32>
    %441 = arith.mulf %439, %440 : vector<16x128xf32>
    %442 = vector.extract_strided_slice %1 {offsets = [0, 20], sizes = [16, 1], strides = [1, 1]} : vector<16x21xf32> to vector<16x1xf32>
    %443 = vector.broadcast %442 : vector<16x1xf32> to vector<16x128xf32>
    %444 = vector.broadcast %3 : vector<1x128xf32> to vector<16x128xf32>
    %445 = arith.mulf %443, %444 : vector<16x128xf32>
    %446 = arith.addf %441, %445 : vector<16x128xf32>
    %447 = vector.broadcast %4 : vector<1x128xf32> to vector<16x128xf32>
    %448 = arith.addf %446, %447 : vector<16x128xf32>
    %cst_113 = arith.constant 0.000000e+00 : f32
    %449 = vector.broadcast %cst_113 : f32 to vector<16x128xf32>
    %450 = arith.maximumf %448, %449 : vector<16x128xf32>
    %cst_114 = arith.constant dense<0.000000e+00> : vector<16x8xf32>
    %451 = tpu.matmul %450, %5, %cst_114 {dimension_numbers = #tpu.dot_dimension_numbers<[1], [0], [0], [1], [0, 0, 1, 1], [], []>} : vector<16x128xf32>, vector<128x8xf32>, vector<16x8xf32> -> vector<16x8xf32>
    %452 = vector.broadcast %6 : vector<1x8xf32> to vector<16x8xf32>
    %453 = arith.addf %451, %452 : vector<16x8xf32>
    %cst_115 = arith.constant 0.000000e+00 : f32
    %454 = vector.broadcast %cst_115 : f32 to vector<16x8xf32>
    %455 = arith.maximumf %453, %454 : vector<16x8xf32>
    %456 = vector.extract_strided_slice %7 {offsets = [160, 0], sizes = [8, 12], strides = [1, 1]} : vector<168x12xf32> to vector<8x12xf32>
    %cst_116 = arith.constant dense<0.000000e+00> : vector<16x12xf32>
    %457 = tpu.matmul %455, %456, %cst_116 {dimension_numbers = #tpu.dot_dimension_numbers<[1], [0], [0], [1], [0, 0, 1, 1], [], []>} : vector<16x8xf32>, vector<8x12xf32>, vector<16x12xf32> -> vector<16x12xf32>
    %458 = arith.addf %437, %457 : vector<16x12xf32>
    %459 = vector.broadcast %8 : vector<1x12xf32> to vector<16x12xf32>
    %460 = arith.addf %458, %459 : vector<16x12xf32>
    %cst_117 = arith.constant 0.000000e+00 : f32
    %461 = vector.broadcast %cst_117 : f32 to vector<2x4xf32>
    %cst_118 = arith.constant 0.000000e+00 : f32
    %462 = vector.broadcast %cst_118 : f32 to vector<2x4xf32>
    %463 = vector.extract_strided_slice %460 {offsets = [0, 0], sizes = [2, 12], strides = [1, 1]} : vector<16x12xf32> to vector<2x12xf32>
    %464 = vector.extract_strided_slice %461 {offsets = [0, 0], sizes = [2, 1], strides = [1, 1]} : vector<2x4xf32> to vector<2x1xf32>
    %465 = vector.extract_strided_slice %9 {offsets = [0, 0], sizes = [1, 12], strides = [1, 1]} : vector<4x12xf32> to vector<1x12xf32>
    %466 = vector.broadcast %464 : vector<2x1xf32> to vector<2x12xf32>
    %467 = vector.broadcast %465 : vector<1x12xf32> to vector<2x12xf32>
    %468 = arith.mulf %466, %467 : vector<2x12xf32>
    %469 = vector.extract_strided_slice %461 {offsets = [0, 1], sizes = [2, 1], strides = [1, 1]} : vector<2x4xf32> to vector<2x1xf32>
    %470 = vector.extract_strided_slice %9 {offsets = [1, 0], sizes = [1, 12], strides = [1, 1]} : vector<4x12xf32> to vector<1x12xf32>
    %471 = vector.broadcast %469 : vector<2x1xf32> to vector<2x12xf32>
    %472 = vector.broadcast %470 : vector<1x12xf32> to vector<2x12xf32>
    %473 = arith.mulf %471, %472 : vector<2x12xf32>
    %474 = arith.addf %468, %473 : vector<2x12xf32>
    %475 = vector.extract_strided_slice %461 {offsets = [0, 2], sizes = [2, 1], strides = [1, 1]} : vector<2x4xf32> to vector<2x1xf32>
    %476 = vector.extract_strided_slice %9 {offsets = [2, 0], sizes = [1, 12], strides = [1, 1]} : vector<4x12xf32> to vector<1x12xf32>
    %477 = vector.broadcast %475 : vector<2x1xf32> to vector<2x12xf32>
    %478 = vector.broadcast %476 : vector<1x12xf32> to vector<2x12xf32>
    %479 = arith.mulf %477, %478 : vector<2x12xf32>
    %480 = arith.addf %474, %479 : vector<2x12xf32>
    %481 = vector.extract_strided_slice %461 {offsets = [0, 3], sizes = [2, 1], strides = [1, 1]} : vector<2x4xf32> to vector<2x1xf32>
    %482 = vector.extract_strided_slice %9 {offsets = [3, 0], sizes = [1, 12], strides = [1, 1]} : vector<4x12xf32> to vector<1x12xf32>
    %483 = vector.broadcast %481 : vector<2x1xf32> to vector<2x12xf32>
    %484 = vector.broadcast %482 : vector<1x12xf32> to vector<2x12xf32>
    %485 = arith.mulf %483, %484 : vector<2x12xf32>
    %486 = arith.addf %480, %485 : vector<2x12xf32>
    %487 = vector.broadcast %10 : vector<1x12xf32> to vector<2x12xf32>
    %488 = arith.addf %486, %487 : vector<2x12xf32>
    %489 = vector.extract_strided_slice %463 {offsets = [0, 0], sizes = [2, 4], strides = [1, 1]} : vector<2x12xf32> to vector<2x4xf32>
    %490 = vector.extract_strided_slice %488 {offsets = [0, 0], sizes = [2, 4], strides = [1, 1]} : vector<2x12xf32> to vector<2x4xf32>
    %491 = arith.addf %489, %490 : vector<2x4xf32>
    %492 = arith.negf %491 : vector<2x4xf32>
    %493 = math.exp %492 : vector<2x4xf32>
    %cst_119 = arith.constant 1.000000e+00 : f32
    %494 = vector.broadcast %cst_119 : f32 to vector<2x4xf32>
    %495 = arith.addf %494, %493 : vector<2x4xf32>
    %496 = arith.divf %494, %495 : vector<2x4xf32>
    %497 = vector.extract_strided_slice %463 {offsets = [0, 4], sizes = [2, 4], strides = [1, 1]} : vector<2x12xf32> to vector<2x4xf32>
    %498 = vector.extract_strided_slice %488 {offsets = [0, 4], sizes = [2, 4], strides = [1, 1]} : vector<2x12xf32> to vector<2x4xf32>
    %499 = arith.addf %497, %498 : vector<2x4xf32>
    %500 = arith.negf %499 : vector<2x4xf32>
    %501 = math.exp %500 : vector<2x4xf32>
    %cst_120 = arith.constant 1.000000e+00 : f32
    %502 = vector.broadcast %cst_120 : f32 to vector<2x4xf32>
    %503 = arith.addf %502, %501 : vector<2x4xf32>
    %504 = arith.divf %502, %503 : vector<2x4xf32>
    %505 = vector.extract_strided_slice %463 {offsets = [0, 8], sizes = [2, 4], strides = [1, 1]} : vector<2x12xf32> to vector<2x4xf32>
    %506 = vector.extract_strided_slice %488 {offsets = [0, 8], sizes = [2, 4], strides = [1, 1]} : vector<2x12xf32> to vector<2x4xf32>
    %507 = arith.mulf %496, %506 : vector<2x4xf32>
    %508 = arith.addf %505, %507 : vector<2x4xf32>
    %509 = math.tanh %508 : vector<2x4xf32>
    %cst_121 = arith.constant 1.000000e+00 : f32
    %510 = vector.broadcast %cst_121 : f32 to vector<2x4xf32>
    %511 = arith.subf %510, %504 : vector<2x4xf32>
    %512 = arith.mulf %511, %509 : vector<2x4xf32>
    %513 = arith.mulf %504, %461 : vector<2x4xf32>
    %514 = arith.addf %512, %513 : vector<2x4xf32>
    %515 = vector.extract_strided_slice %514 {offsets = [0, 0], sizes = [2, 1], strides = [1, 1]} : vector<2x4xf32> to vector<2x1xf32>
    %516 = vector.extract_strided_slice %11 {offsets = [0, 0], sizes = [1, 12], strides = [1, 1]} : vector<4x12xf32> to vector<1x12xf32>
    %517 = vector.broadcast %515 : vector<2x1xf32> to vector<2x12xf32>
    %518 = vector.broadcast %516 : vector<1x12xf32> to vector<2x12xf32>
    %519 = arith.mulf %517, %518 : vector<2x12xf32>
    %520 = vector.extract_strided_slice %514 {offsets = [0, 1], sizes = [2, 1], strides = [1, 1]} : vector<2x4xf32> to vector<2x1xf32>
    %521 = vector.extract_strided_slice %11 {offsets = [1, 0], sizes = [1, 12], strides = [1, 1]} : vector<4x12xf32> to vector<1x12xf32>
    %522 = vector.broadcast %520 : vector<2x1xf32> to vector<2x12xf32>
    %523 = vector.broadcast %521 : vector<1x12xf32> to vector<2x12xf32>
    %524 = arith.mulf %522, %523 : vector<2x12xf32>
    %525 = arith.addf %519, %524 : vector<2x12xf32>
    %526 = vector.extract_strided_slice %514 {offsets = [0, 2], sizes = [2, 1], strides = [1, 1]} : vector<2x4xf32> to vector<2x1xf32>
    %527 = vector.extract_strided_slice %11 {offsets = [2, 0], sizes = [1, 12], strides = [1, 1]} : vector<4x12xf32> to vector<1x12xf32>
    %528 = vector.broadcast %526 : vector<2x1xf32> to vector<2x12xf32>
    %529 = vector.broadcast %527 : vector<1x12xf32> to vector<2x12xf32>
    %530 = arith.mulf %528, %529 : vector<2x12xf32>
    %531 = arith.addf %525, %530 : vector<2x12xf32>
    %532 = vector.extract_strided_slice %514 {offsets = [0, 3], sizes = [2, 1], strides = [1, 1]} : vector<2x4xf32> to vector<2x1xf32>
    %533 = vector.extract_strided_slice %11 {offsets = [3, 0], sizes = [1, 12], strides = [1, 1]} : vector<4x12xf32> to vector<1x12xf32>
    %534 = vector.broadcast %532 : vector<2x1xf32> to vector<2x12xf32>
    %535 = vector.broadcast %533 : vector<1x12xf32> to vector<2x12xf32>
    %536 = arith.mulf %534, %535 : vector<2x12xf32>
    %537 = arith.addf %531, %536 : vector<2x12xf32>
    %538 = vector.broadcast %12 : vector<1x12xf32> to vector<2x12xf32>
    %539 = arith.addf %537, %538 : vector<2x12xf32>
    %540 = vector.extract_strided_slice %462 {offsets = [0, 0], sizes = [2, 1], strides = [1, 1]} : vector<2x4xf32> to vector<2x1xf32>
    %541 = vector.extract_strided_slice %13 {offsets = [0, 0], sizes = [1, 12], strides = [1, 1]} : vector<4x12xf32> to vector<1x12xf32>
    %542 = vector.broadcast %540 : vector<2x1xf32> to vector<2x12xf32>
    %543 = vector.broadcast %541 : vector<1x12xf32> to vector<2x12xf32>
    %544 = arith.mulf %542, %543 : vector<2x12xf32>
    %545 = vector.extract_strided_slice %462 {offsets = [0, 1], sizes = [2, 1], strides = [1, 1]} : vector<2x4xf32> to vector<2x1xf32>
    %546 = vector.extract_strided_slice %13 {offsets = [1, 0], sizes = [1, 12], strides = [1, 1]} : vector<4x12xf32> to vector<1x12xf32>
    %547 = vector.broadcast %545 : vector<2x1xf32> to vector<2x12xf32>
    %548 = vector.broadcast %546 : vector<1x12xf32> to vector<2x12xf32>
    %549 = arith.mulf %547, %548 : vector<2x12xf32>
    %550 = arith.addf %544, %549 : vector<2x12xf32>
    %551 = vector.extract_strided_slice %462 {offsets = [0, 2], sizes = [2, 1], strides = [1, 1]} : vector<2x4xf32> to vector<2x1xf32>
    %552 = vector.extract_strided_slice %13 {offsets = [2, 0], sizes = [1, 12], strides = [1, 1]} : vector<4x12xf32> to vector<1x12xf32>
    %553 = vector.broadcast %551 : vector<2x1xf32> to vector<2x12xf32>
    %554 = vector.broadcast %552 : vector<1x12xf32> to vector<2x12xf32>
    %555 = arith.mulf %553, %554 : vector<2x12xf32>
    %556 = arith.addf %550, %555 : vector<2x12xf32>
    %557 = vector.extract_strided_slice %462 {offsets = [0, 3], sizes = [2, 1], strides = [1, 1]} : vector<2x4xf32> to vector<2x1xf32>
    %558 = vector.extract_strided_slice %13 {offsets = [3, 0], sizes = [1, 12], strides = [1, 1]} : vector<4x12xf32> to vector<1x12xf32>
    %559 = vector.broadcast %557 : vector<2x1xf32> to vector<2x12xf32>
    %560 = vector.broadcast %558 : vector<1x12xf32> to vector<2x12xf32>
    %561 = arith.mulf %559, %560 : vector<2x12xf32>
    %562 = arith.addf %556, %561 : vector<2x12xf32>
    %563 = vector.broadcast %14 : vector<1x12xf32> to vector<2x12xf32>
    %564 = arith.addf %562, %563 : vector<2x12xf32>
    %565 = vector.extract_strided_slice %539 {offsets = [0, 0], sizes = [2, 4], strides = [1, 1]} : vector<2x12xf32> to vector<2x4xf32>
    %566 = vector.extract_strided_slice %564 {offsets = [0, 0], sizes = [2, 4], strides = [1, 1]} : vector<2x12xf32> to vector<2x4xf32>
    %567 = arith.addf %565, %566 : vector<2x4xf32>
    %568 = arith.negf %567 : vector<2x4xf32>
    %569 = math.exp %568 : vector<2x4xf32>
    %cst_122 = arith.constant 1.000000e+00 : f32
    %570 = vector.broadcast %cst_122 : f32 to vector<2x4xf32>
    %571 = arith.addf %570, %569 : vector<2x4xf32>
    %572 = arith.divf %570, %571 : vector<2x4xf32>
    %573 = vector.extract_strided_slice %539 {offsets = [0, 4], sizes = [2, 4], strides = [1, 1]} : vector<2x12xf32> to vector<2x4xf32>
    %574 = vector.extract_strided_slice %564 {offsets = [0, 4], sizes = [2, 4], strides = [1, 1]} : vector<2x12xf32> to vector<2x4xf32>
    %575 = arith.addf %573, %574 : vector<2x4xf32>
    %576 = arith.negf %575 : vector<2x4xf32>
    %577 = math.exp %576 : vector<2x4xf32>
    %cst_123 = arith.constant 1.000000e+00 : f32
    %578 = vector.broadcast %cst_123 : f32 to vector<2x4xf32>
    %579 = arith.addf %578, %577 : vector<2x4xf32>
    %580 = arith.divf %578, %579 : vector<2x4xf32>
    %581 = vector.extract_strided_slice %539 {offsets = [0, 8], sizes = [2, 4], strides = [1, 1]} : vector<2x12xf32> to vector<2x4xf32>
    %582 = vector.extract_strided_slice %564 {offsets = [0, 8], sizes = [2, 4], strides = [1, 1]} : vector<2x12xf32> to vector<2x4xf32>
    %583 = arith.mulf %572, %582 : vector<2x4xf32>
    %584 = arith.addf %581, %583 : vector<2x4xf32>
    %585 = math.tanh %584 : vector<2x4xf32>
    %cst_124 = arith.constant 1.000000e+00 : f32
    %586 = vector.broadcast %cst_124 : f32 to vector<2x4xf32>
    %587 = arith.subf %586, %580 : vector<2x4xf32>
    %588 = arith.mulf %587, %585 : vector<2x4xf32>
    %589 = arith.mulf %580, %462 : vector<2x4xf32>
    %590 = arith.addf %588, %589 : vector<2x4xf32>
    %591 = vector.extract_strided_slice %590 {offsets = [0, 0], sizes = [2, 1], strides = [1, 1]} : vector<2x4xf32> to vector<2x1xf32>
    %592 = vector.extract_strided_slice %15 {offsets = [0, 0], sizes = [1, 128], strides = [1, 1]} : vector<4x128xf32> to vector<1x128xf32>
    %593 = vector.broadcast %591 : vector<2x1xf32> to vector<2x128xf32>
    %594 = vector.broadcast %592 : vector<1x128xf32> to vector<2x128xf32>
    %595 = arith.mulf %593, %594 : vector<2x128xf32>
    %596 = vector.extract_strided_slice %590 {offsets = [0, 1], sizes = [2, 1], strides = [1, 1]} : vector<2x4xf32> to vector<2x1xf32>
    %597 = vector.extract_strided_slice %15 {offsets = [1, 0], sizes = [1, 128], strides = [1, 1]} : vector<4x128xf32> to vector<1x128xf32>
    %598 = vector.broadcast %596 : vector<2x1xf32> to vector<2x128xf32>
    %599 = vector.broadcast %597 : vector<1x128xf32> to vector<2x128xf32>
    %600 = arith.mulf %598, %599 : vector<2x128xf32>
    %601 = arith.addf %595, %600 : vector<2x128xf32>
    %602 = vector.extract_strided_slice %590 {offsets = [0, 2], sizes = [2, 1], strides = [1, 1]} : vector<2x4xf32> to vector<2x1xf32>
    %603 = vector.extract_strided_slice %15 {offsets = [2, 0], sizes = [1, 128], strides = [1, 1]} : vector<4x128xf32> to vector<1x128xf32>
    %604 = vector.broadcast %602 : vector<2x1xf32> to vector<2x128xf32>
    %605 = vector.broadcast %603 : vector<1x128xf32> to vector<2x128xf32>
    %606 = arith.mulf %604, %605 : vector<2x128xf32>
    %607 = arith.addf %601, %606 : vector<2x128xf32>
    %608 = vector.extract_strided_slice %590 {offsets = [0, 3], sizes = [2, 1], strides = [1, 1]} : vector<2x4xf32> to vector<2x1xf32>
    %609 = vector.extract_strided_slice %15 {offsets = [3, 0], sizes = [1, 128], strides = [1, 1]} : vector<4x128xf32> to vector<1x128xf32>
    %610 = vector.broadcast %608 : vector<2x1xf32> to vector<2x128xf32>
    %611 = vector.broadcast %609 : vector<1x128xf32> to vector<2x128xf32>
    %612 = arith.mulf %610, %611 : vector<2x128xf32>
    %613 = arith.addf %607, %612 : vector<2x128xf32>
    %614 = vector.broadcast %16 : vector<1x128xf32> to vector<2x128xf32>
    %615 = arith.addf %613, %614 : vector<2x128xf32>
    %c0_125 = arith.constant 0 : index
    %c0_126 = arith.constant 0 : index
    %616 = vector.load %arg18[%c0_125, %c0_126] : memref<16x128xf32, #tpu.memory_space<vmem>>, vector<2x128xf32>
    tpu.vector_store %arg18[%c0_125, %c0_126], %615 {strides = array<i32>} : memref<16x128xf32, #tpu.memory_space<vmem>>, vector<2x128xf32>,
    %617 = vector.extract_strided_slice %460 {offsets = [2, 0], sizes = [2, 12], strides = [1, 1]} : vector<16x12xf32> to vector<2x12xf32>
    %618 = vector.extract_strided_slice %514 {offsets = [0, 0], sizes = [2, 1], strides = [1, 1]} : vector<2x4xf32> to vector<2x1xf32>
    %619 = vector.extract_strided_slice %9 {offsets = [0, 0], sizes = [1, 12], strides = [1, 1]} : vector<4x12xf32> to vector<1x12xf32>
    %620 = vector.broadcast %618 : vector<2x1xf32> to vector<2x12xf32>
    %621 = vector.broadcast %619 : vector<1x12xf32> to vector<2x12xf32>
    %622 = arith.mulf %620, %621 : vector<2x12xf32>
    %623 = vector.extract_strided_slice %514 {offsets = [0, 1], sizes = [2, 1], strides = [1, 1]} : vector<2x4xf32> to vector<2x1xf32>
    %624 = vector.extract_strided_slice %9 {offsets = [1, 0], sizes = [1, 12], strides = [1, 1]} : vector<4x12xf32> to vector<1x12xf32>
    %625 = vector.broadcast %623 : vector<2x1xf32> to vector<2x12xf32>
    %626 = vector.broadcast %624 : vector<1x12xf32> to vector<2x12xf32>
    %627 = arith.mulf %625, %626 : vector<2x12xf32>
    %628 = arith.addf %622, %627 : vector<2x12xf32>
    %629 = vector.extract_strided_slice %514 {offsets = [0, 2], sizes = [2, 1], strides = [1, 1]} : vector<2x4xf32> to vector<2x1xf32>
    %630 = vector.extract_strided_slice %9 {offsets = [2, 0], sizes = [1, 12], strides = [1, 1]} : vector<4x12xf32> to vector<1x12xf32>
    %631 = vector.broadcast %629 : vector<2x1xf32> to vector<2x12xf32>
    %632 = vector.broadcast %630 : vector<1x12xf32> to vector<2x12xf32>
    %633 = arith.mulf %631, %632 : vector<2x12xf32>
    %634 = arith.addf %628, %633 : vector<2x12xf32>
    %635 = vector.extract_strided_slice %514 {offsets = [0, 3], sizes = [2, 1], strides = [1, 1]} : vector<2x4xf32> to vector<2x1xf32>
    %636 = vector.extract_strided_slice %9 {offsets = [3, 0], sizes = [1, 12], strides = [1, 1]} : vector<4x12xf32> to vector<1x12xf32>
    %637 = vector.broadcast %635 : vector<2x1xf32> to vector<2x12xf32>
    %638 = vector.broadcast %636 : vector<1x12xf32> to vector<2x12xf32>
    %639 = arith.mulf %637, %638 : vector<2x12xf32>
    %640 = arith.addf %634, %639 : vector<2x12xf32>
    %641 = vector.broadcast %10 : vector<1x12xf32> to vector<2x12xf32>
    %642 = arith.addf %640, %641 : vector<2x12xf32>
    %643 = vector.extract_strided_slice %617 {offsets = [0, 0], sizes = [2, 4], strides = [1, 1]} : vector<2x12xf32> to vector<2x4xf32>
    %644 = vector.extract_strided_slice %642 {offsets = [0, 0], sizes = [2, 4], strides = [1, 1]} : vector<2x12xf32> to vector<2x4xf32>
    %645 = arith.addf %643, %644 : vector<2x4xf32>
    %646 = arith.negf %645 : vector<2x4xf32>
    %647 = math.exp %646 : vector<2x4xf32>
    %cst_127 = arith.constant 1.000000e+00 : f32
    %648 = vector.broadcast %cst_127 : f32 to vector<2x4xf32>
    %649 = arith.addf %648, %647 : vector<2x4xf32>
    %650 = arith.divf %648, %649 : vector<2x4xf32>
    %651 = vector.extract_strided_slice %617 {offsets = [0, 4], sizes = [2, 4], strides = [1, 1]} : vector<2x12xf32> to vector<2x4xf32>
    %652 = vector.extract_strided_slice %642 {offsets = [0, 4], sizes = [2, 4], strides = [1, 1]} : vector<2x12xf32> to vector<2x4xf32>
    %653 = arith.addf %651, %652 : vector<2x4xf32>
    %654 = arith.negf %653 : vector<2x4xf32>
    %655 = math.exp %654 : vector<2x4xf32>
    %cst_128 = arith.constant 1.000000e+00 : f32
    %656 = vector.broadcast %cst_128 : f32 to vector<2x4xf32>
    %657 = arith.addf %656, %655 : vector<2x4xf32>
    %658 = arith.divf %656, %657 : vector<2x4xf32>
    %659 = vector.extract_strided_slice %617 {offsets = [0, 8], sizes = [2, 4], strides = [1, 1]} : vector<2x12xf32> to vector<2x4xf32>
    %660 = vector.extract_strided_slice %642 {offsets = [0, 8], sizes = [2, 4], strides = [1, 1]} : vector<2x12xf32> to vector<2x4xf32>
    %661 = arith.mulf %650, %660 : vector<2x4xf32>
    %662 = arith.addf %659, %661 : vector<2x4xf32>
    %663 = math.tanh %662 : vector<2x4xf32>
    %cst_129 = arith.constant 1.000000e+00 : f32
    %664 = vector.broadcast %cst_129 : f32 to vector<2x4xf32>
    %665 = arith.subf %664, %658 : vector<2x4xf32>
    %666 = arith.mulf %665, %663 : vector<2x4xf32>
    %667 = arith.mulf %658, %514 : vector<2x4xf32>
    %668 = arith.addf %666, %667 : vector<2x4xf32>
    %669 = vector.extract_strided_slice %668 {offsets = [0, 0], sizes = [2, 1], strides = [1, 1]} : vector<2x4xf32> to vector<2x1xf32>
    %670 = vector.extract_strided_slice %11 {offsets = [0, 0], sizes = [1, 12], strides = [1, 1]} : vector<4x12xf32> to vector<1x12xf32>
    %671 = vector.broadcast %669 : vector<2x1xf32> to vector<2x12xf32>
    %672 = vector.broadcast %670 : vector<1x12xf32> to vector<2x12xf32>
    %673 = arith.mulf %671, %672 : vector<2x12xf32>
    %674 = vector.extract_strided_slice %668 {offsets = [0, 1], sizes = [2, 1], strides = [1, 1]} : vector<2x4xf32> to vector<2x1xf32>
    %675 = vector.extract_strided_slice %11 {offsets = [1, 0], sizes = [1, 12], strides = [1, 1]} : vector<4x12xf32> to vector<1x12xf32>
    %676 = vector.broadcast %674 : vector<2x1xf32> to vector<2x12xf32>
    %677 = vector.broadcast %675 : vector<1x12xf32> to vector<2x12xf32>
    %678 = arith.mulf %676, %677 : vector<2x12xf32>
    %679 = arith.addf %673, %678 : vector<2x12xf32>
    %680 = vector.extract_strided_slice %668 {offsets = [0, 2], sizes = [2, 1], strides = [1, 1]} : vector<2x4xf32> to vector<2x1xf32>
    %681 = vector.extract_strided_slice %11 {offsets = [2, 0], sizes = [1, 12], strides = [1, 1]} : vector<4x12xf32> to vector<1x12xf32>
    %682 = vector.broadcast %680 : vector<2x1xf32> to vector<2x12xf32>
    %683 = vector.broadcast %681 : vector<1x12xf32> to vector<2x12xf32>
    %684 = arith.mulf %682, %683 : vector<2x12xf32>
    %685 = arith.addf %679, %684 : vector<2x12xf32>
    %686 = vector.extract_strided_slice %668 {offsets = [0, 3], sizes = [2, 1], strides = [1, 1]} : vector<2x4xf32> to vector<2x1xf32>
    %687 = vector.extract_strided_slice %11 {offsets = [3, 0], sizes = [1, 12], strides = [1, 1]} : vector<4x12xf32> to vector<1x12xf32>
    %688 = vector.broadcast %686 : vector<2x1xf32> to vector<2x12xf32>
    %689 = vector.broadcast %687 : vector<1x12xf32> to vector<2x12xf32>
    %690 = arith.mulf %688, %689 : vector<2x12xf32>
    %691 = arith.addf %685, %690 : vector<2x12xf32>
    %692 = vector.broadcast %12 : vector<1x12xf32> to vector<2x12xf32>
    %693 = arith.addf %691, %692 : vector<2x12xf32>
    %694 = vector.extract_strided_slice %590 {offsets = [0, 0], sizes = [2, 1], strides = [1, 1]} : vector<2x4xf32> to vector<2x1xf32>
    %695 = vector.extract_strided_slice %13 {offsets = [0, 0], sizes = [1, 12], strides = [1, 1]} : vector<4x12xf32> to vector<1x12xf32>
    %696 = vector.broadcast %694 : vector<2x1xf32> to vector<2x12xf32>
    %697 = vector.broadcast %695 : vector<1x12xf32> to vector<2x12xf32>
    %698 = arith.mulf %696, %697 : vector<2x12xf32>
    %699 = vector.extract_strided_slice %590 {offsets = [0, 1], sizes = [2, 1], strides = [1, 1]} : vector<2x4xf32> to vector<2x1xf32>
    %700 = vector.extract_strided_slice %13 {offsets = [1, 0], sizes = [1, 12], strides = [1, 1]} : vector<4x12xf32> to vector<1x12xf32>
    %701 = vector.broadcast %699 : vector<2x1xf32> to vector<2x12xf32>
    %702 = vector.broadcast %700 : vector<1x12xf32> to vector<2x12xf32>
    %703 = arith.mulf %701, %702 : vector<2x12xf32>
    %704 = arith.addf %698, %703 : vector<2x12xf32>
    %705 = vector.extract_strided_slice %590 {offsets = [0, 2], sizes = [2, 1], strides = [1, 1]} : vector<2x4xf32> to vector<2x1xf32>
    %706 = vector.extract_strided_slice %13 {offsets = [2, 0], sizes = [1, 12], strides = [1, 1]} : vector<4x12xf32> to vector<1x12xf32>
    %707 = vector.broadcast %705 : vector<2x1xf32> to vector<2x12xf32>
    %708 = vector.broadcast %706 : vector<1x12xf32> to vector<2x12xf32>
    %709 = arith.mulf %707, %708 : vector<2x12xf32>
    %710 = arith.addf %704, %709 : vector<2x12xf32>
    %711 = vector.extract_strided_slice %590 {offsets = [0, 3], sizes = [2, 1], strides = [1, 1]} : vector<2x4xf32> to vector<2x1xf32>
    %712 = vector.extract_strided_slice %13 {offsets = [3, 0], sizes = [1, 12], strides = [1, 1]} : vector<4x12xf32> to vector<1x12xf32>
    %713 = vector.broadcast %711 : vector<2x1xf32> to vector<2x12xf32>
    %714 = vector.broadcast %712 : vector<1x12xf32> to vector<2x12xf32>
    %715 = arith.mulf %713, %714 : vector<2x12xf32>
    %716 = arith.addf %710, %715 : vector<2x12xf32>
    %717 = vector.broadcast %14 : vector<1x12xf32> to vector<2x12xf32>
    %718 = arith.addf %716, %717 : vector<2x12xf32>
    %719 = vector.extract_strided_slice %693 {offsets = [0, 0], sizes = [2, 4], strides = [1, 1]} : vector<2x12xf32> to vector<2x4xf32>
    %720 = vector.extract_strided_slice %718 {offsets = [0, 0], sizes = [2, 4], strides = [1, 1]} : vector<2x12xf32> to vector<2x4xf32>
    %721 = arith.addf %719, %720 : vector<2x4xf32>
    %722 = arith.negf %721 : vector<2x4xf32>
    %723 = math.exp %722 : vector<2x4xf32>
    %cst_130 = arith.constant 1.000000e+00 : f32
    %724 = vector.broadcast %cst_130 : f32 to vector<2x4xf32>
    %725 = arith.addf %724, %723 : vector<2x4xf32>
    %726 = arith.divf %724, %725 : vector<2x4xf32>
    %727 = vector.extract_strided_slice %693 {offsets = [0, 4], sizes = [2, 4], strides = [1, 1]} : vector<2x12xf32> to vector<2x4xf32>
    %728 = vector.extract_strided_slice %718 {offsets = [0, 4], sizes = [2, 4], strides = [1, 1]} : vector<2x12xf32> to vector<2x4xf32>
    %729 = arith.addf %727, %728 : vector<2x4xf32>
    %730 = arith.negf %729 : vector<2x4xf32>
    %731 = math.exp %730 : vector<2x4xf32>
    %cst_131 = arith.constant 1.000000e+00 : f32
    %732 = vector.broadcast %cst_131 : f32 to vector<2x4xf32>
    %733 = arith.addf %732, %731 : vector<2x4xf32>
    %734 = arith.divf %732, %733 : vector<2x4xf32>
    %735 = vector.extract_strided_slice %693 {offsets = [0, 8], sizes = [2, 4], strides = [1, 1]} : vector<2x12xf32> to vector<2x4xf32>
    %736 = vector.extract_strided_slice %718 {offsets = [0, 8], sizes = [2, 4], strides = [1, 1]} : vector<2x12xf32> to vector<2x4xf32>
    %737 = arith.mulf %726, %736 : vector<2x4xf32>
    %738 = arith.addf %735, %737 : vector<2x4xf32>
    %739 = math.tanh %738 : vector<2x4xf32>
    %cst_132 = arith.constant 1.000000e+00 : f32
    %740 = vector.broadcast %cst_132 : f32 to vector<2x4xf32>
    %741 = arith.subf %740, %734 : vector<2x4xf32>
    %742 = arith.mulf %741, %739 : vector<2x4xf32>
    %743 = arith.mulf %734, %590 : vector<2x4xf32>
    %744 = arith.addf %742, %743 : vector<2x4xf32>
    %745 = vector.extract_strided_slice %744 {offsets = [0, 0], sizes = [2, 1], strides = [1, 1]} : vector<2x4xf32> to vector<2x1xf32>
    %746 = vector.extract_strided_slice %15 {offsets = [0, 0], sizes = [1, 128], strides = [1, 1]} : vector<4x128xf32> to vector<1x128xf32>
    %747 = vector.broadcast %745 : vector<2x1xf32> to vector<2x128xf32>
    %748 = vector.broadcast %746 : vector<1x128xf32> to vector<2x128xf32>
    %749 = arith.mulf %747, %748 : vector<2x128xf32>
    %750 = vector.extract_strided_slice %744 {offsets = [0, 1], sizes = [2, 1], strides = [1, 1]} : vector<2x4xf32> to vector<2x1xf32>
    %751 = vector.extract_strided_slice %15 {offsets = [1, 0], sizes = [1, 128], strides = [1, 1]} : vector<4x128xf32> to vector<1x128xf32>
    %752 = vector.broadcast %750 : vector<2x1xf32> to vector<2x128xf32>
    %753 = vector.broadcast %751 : vector<1x128xf32> to vector<2x128xf32>
    %754 = arith.mulf %752, %753 : vector<2x128xf32>
    %755 = arith.addf %749, %754 : vector<2x128xf32>
    %756 = vector.extract_strided_slice %744 {offsets = [0, 2], sizes = [2, 1], strides = [1, 1]} : vector<2x4xf32> to vector<2x1xf32>
    %757 = vector.extract_strided_slice %15 {offsets = [2, 0], sizes = [1, 128], strides = [1, 1]} : vector<4x128xf32> to vector<1x128xf32>
    %758 = vector.broadcast %756 : vector<2x1xf32> to vector<2x128xf32>
    %759 = vector.broadcast %757 : vector<1x128xf32> to vector<2x128xf32>
    %760 = arith.mulf %758, %759 : vector<2x128xf32>
    %761 = arith.addf %755, %760 : vector<2x128xf32>
    %762 = vector.extract_strided_slice %744 {offsets = [0, 3], sizes = [2, 1], strides = [1, 1]} : vector<2x4xf32> to vector<2x1xf32>
    %763 = vector.extract_strided_slice %15 {offsets = [3, 0], sizes = [1, 128], strides = [1, 1]} : vector<4x128xf32> to vector<1x128xf32>
    %764 = vector.broadcast %762 : vector<2x1xf32> to vector<2x128xf32>
    %765 = vector.broadcast %763 : vector<1x128xf32> to vector<2x128xf32>
    %766 = arith.mulf %764, %765 : vector<2x128xf32>
    %767 = arith.addf %761, %766 : vector<2x128xf32>
    %768 = vector.broadcast %16 : vector<1x128xf32> to vector<2x128xf32>
    %769 = arith.addf %767, %768 : vector<2x128xf32>
    %c2 = arith.constant 2 : index
    %c0_133 = arith.constant 0 : index
    %770 = vector.load %arg18[%c2, %c0_133] : memref<16x128xf32, #tpu.memory_space<vmem>>, vector<2x128xf32>
    tpu.vector_store %arg18[%c2, %c0_133], %769 {strides = array<i32>} : memref<16x128xf32, #tpu.memory_space<vmem>>, vector<2x128xf32>,
    %771 = vector.extract_strided_slice %460 {offsets = [4, 0], sizes = [2, 12], strides = [1, 1]} : vector<16x12xf32> to vector<2x12xf32>
    %772 = vector.extract_strided_slice %668 {offsets = [0, 0], sizes = [2, 1], strides = [1, 1]} : vector<2x4xf32> to vector<2x1xf32>
    %773 = vector.extract_strided_slice %9 {offsets = [0, 0], sizes = [1, 12], strides = [1, 1]} : vector<4x12xf32> to vector<1x12xf32>
    %774 = vector.broadcast %772 : vector<2x1xf32> to vector<2x12xf32>
    %775 = vector.broadcast %773 : vector<1x12xf32> to vector<2x12xf32>
    %776 = arith.mulf %774, %775 : vector<2x12xf32>
    %777 = vector.extract_strided_slice %668 {offsets = [0, 1], sizes = [2, 1], strides = [1, 1]} : vector<2x4xf32> to vector<2x1xf32>
    %778 = vector.extract_strided_slice %9 {offsets = [1, 0], sizes = [1, 12], strides = [1, 1]} : vector<4x12xf32> to vector<1x12xf32>
    %779 = vector.broadcast %777 : vector<2x1xf32> to vector<2x12xf32>
    %780 = vector.broadcast %778 : vector<1x12xf32> to vector<2x12xf32>
    %781 = arith.mulf %779, %780 : vector<2x12xf32>
    %782 = arith.addf %776, %781 : vector<2x12xf32>
    %783 = vector.extract_strided_slice %668 {offsets = [0, 2], sizes = [2, 1], strides = [1, 1]} : vector<2x4xf32> to vector<2x1xf32>
    %784 = vector.extract_strided_slice %9 {offsets = [2, 0], sizes = [1, 12], strides = [1, 1]} : vector<4x12xf32> to vector<1x12xf32>
    %785 = vector.broadcast %783 : vector<2x1xf32> to vector<2x12xf32>
    %786 = vector.broadcast %784 : vector<1x12xf32> to vector<2x12xf32>
    %787 = arith.mulf %785, %786 : vector<2x12xf32>
    %788 = arith.addf %782, %787 : vector<2x12xf32>
    %789 = vector.extract_strided_slice %668 {offsets = [0, 3], sizes = [2, 1], strides = [1, 1]} : vector<2x4xf32> to vector<2x1xf32>
    %790 = vector.extract_strided_slice %9 {offsets = [3, 0], sizes = [1, 12], strides = [1, 1]} : vector<4x12xf32> to vector<1x12xf32>
    %791 = vector.broadcast %789 : vector<2x1xf32> to vector<2x12xf32>
    %792 = vector.broadcast %790 : vector<1x12xf32> to vector<2x12xf32>
    %793 = arith.mulf %791, %792 : vector<2x12xf32>
    %794 = arith.addf %788, %793 : vector<2x12xf32>
    %795 = vector.broadcast %10 : vector<1x12xf32> to vector<2x12xf32>
    %796 = arith.addf %794, %795 : vector<2x12xf32>
    %797 = vector.extract_strided_slice %771 {offsets = [0, 0], sizes = [2, 4], strides = [1, 1]} : vector<2x12xf32> to vector<2x4xf32>
    %798 = vector.extract_strided_slice %796 {offsets = [0, 0], sizes = [2, 4], strides = [1, 1]} : vector<2x12xf32> to vector<2x4xf32>
    %799 = arith.addf %797, %798 : vector<2x4xf32>
    %800 = arith.negf %799 : vector<2x4xf32>
    %801 = math.exp %800 : vector<2x4xf32>
    %cst_134 = arith.constant 1.000000e+00 : f32
    %802 = vector.broadcast %cst_134 : f32 to vector<2x4xf32>
    %803 = arith.addf %802, %801 : vector<2x4xf32>
    %804 = arith.divf %802, %803 : vector<2x4xf32>
    %805 = vector.extract_strided_slice %771 {offsets = [0, 4], sizes = [2, 4], strides = [1, 1]} : vector<2x12xf32> to vector<2x4xf32>
    %806 = vector.extract_strided_slice %796 {offsets = [0, 4], sizes = [2, 4], strides = [1, 1]} : vector<2x12xf32> to vector<2x4xf32>
    %807 = arith.addf %805, %806 : vector<2x4xf32>
    %808 = arith.negf %807 : vector<2x4xf32>
    %809 = math.exp %808 : vector<2x4xf32>
    %cst_135 = arith.constant 1.000000e+00 : f32
    %810 = vector.broadcast %cst_135 : f32 to vector<2x4xf32>
    %811 = arith.addf %810, %809 : vector<2x4xf32>
    %812 = arith.divf %810, %811 : vector<2x4xf32>
    %813 = vector.extract_strided_slice %771 {offsets = [0, 8], sizes = [2, 4], strides = [1, 1]} : vector<2x12xf32> to vector<2x4xf32>
    %814 = vector.extract_strided_slice %796 {offsets = [0, 8], sizes = [2, 4], strides = [1, 1]} : vector<2x12xf32> to vector<2x4xf32>
    %815 = arith.mulf %804, %814 : vector<2x4xf32>
    %816 = arith.addf %813, %815 : vector<2x4xf32>
    %817 = math.tanh %816 : vector<2x4xf32>
    %cst_136 = arith.constant 1.000000e+00 : f32
    %818 = vector.broadcast %cst_136 : f32 to vector<2x4xf32>
    %819 = arith.subf %818, %812 : vector<2x4xf32>
    %820 = arith.mulf %819, %817 : vector<2x4xf32>
    %821 = arith.mulf %812, %668 : vector<2x4xf32>
    %822 = arith.addf %820, %821 : vector<2x4xf32>
    %823 = vector.extract_strided_slice %822 {offsets = [0, 0], sizes = [2, 1], strides = [1, 1]} : vector<2x4xf32> to vector<2x1xf32>
    %824 = vector.extract_strided_slice %11 {offsets = [0, 0], sizes = [1, 12], strides = [1, 1]} : vector<4x12xf32> to vector<1x12xf32>
    %825 = vector.broadcast %823 : vector<2x1xf32> to vector<2x12xf32>
    %826 = vector.broadcast %824 : vector<1x12xf32> to vector<2x12xf32>
    %827 = arith.mulf %825, %826 : vector<2x12xf32>
    %828 = vector.extract_strided_slice %822 {offsets = [0, 1], sizes = [2, 1], strides = [1, 1]} : vector<2x4xf32> to vector<2x1xf32>
    %829 = vector.extract_strided_slice %11 {offsets = [1, 0], sizes = [1, 12], strides = [1, 1]} : vector<4x12xf32> to vector<1x12xf32>
    %830 = vector.broadcast %828 : vector<2x1xf32> to vector<2x12xf32>
    %831 = vector.broadcast %829 : vector<1x12xf32> to vector<2x12xf32>
    %832 = arith.mulf %830, %831 : vector<2x12xf32>
    %833 = arith.addf %827, %832 : vector<2x12xf32>
    %834 = vector.extract_strided_slice %822 {offsets = [0, 2], sizes = [2, 1], strides = [1, 1]} : vector<2x4xf32> to vector<2x1xf32>
    %835 = vector.extract_strided_slice %11 {offsets = [2, 0], sizes = [1, 12], strides = [1, 1]} : vector<4x12xf32> to vector<1x12xf32>
    %836 = vector.broadcast %834 : vector<2x1xf32> to vector<2x12xf32>
    %837 = vector.broadcast %835 : vector<1x12xf32> to vector<2x12xf32>
    %838 = arith.mulf %836, %837 : vector<2x12xf32>
    %839 = arith.addf %833, %838 : vector<2x12xf32>
    %840 = vector.extract_strided_slice %822 {offsets = [0, 3], sizes = [2, 1], strides = [1, 1]} : vector<2x4xf32> to vector<2x1xf32>
    %841 = vector.extract_strided_slice %11 {offsets = [3, 0], sizes = [1, 12], strides = [1, 1]} : vector<4x12xf32> to vector<1x12xf32>
    %842 = vector.broadcast %840 : vector<2x1xf32> to vector<2x12xf32>
    %843 = vector.broadcast %841 : vector<1x12xf32> to vector<2x12xf32>
    %844 = arith.mulf %842, %843 : vector<2x12xf32>
    %845 = arith.addf %839, %844 : vector<2x12xf32>
    %846 = vector.broadcast %12 : vector<1x12xf32> to vector<2x12xf32>
    %847 = arith.addf %845, %846 : vector<2x12xf32>
    %848 = vector.extract_strided_slice %744 {offsets = [0, 0], sizes = [2, 1], strides = [1, 1]} : vector<2x4xf32> to vector<2x1xf32>
    %849 = vector.extract_strided_slice %13 {offsets = [0, 0], sizes = [1, 12], strides = [1, 1]} : vector<4x12xf32> to vector<1x12xf32>
    %850 = vector.broadcast %848 : vector<2x1xf32> to vector<2x12xf32>
    %851 = vector.broadcast %849 : vector<1x12xf32> to vector<2x12xf32>
    %852 = arith.mulf %850, %851 : vector<2x12xf32>
    %853 = vector.extract_strided_slice %744 {offsets = [0, 1], sizes = [2, 1], strides = [1, 1]} : vector<2x4xf32> to vector<2x1xf32>
    %854 = vector.extract_strided_slice %13 {offsets = [1, 0], sizes = [1, 12], strides = [1, 1]} : vector<4x12xf32> to vector<1x12xf32>
    %855 = vector.broadcast %853 : vector<2x1xf32> to vector<2x12xf32>
    %856 = vector.broadcast %854 : vector<1x12xf32> to vector<2x12xf32>
    %857 = arith.mulf %855, %856 : vector<2x12xf32>
    %858 = arith.addf %852, %857 : vector<2x12xf32>
    %859 = vector.extract_strided_slice %744 {offsets = [0, 2], sizes = [2, 1], strides = [1, 1]} : vector<2x4xf32> to vector<2x1xf32>
    %860 = vector.extract_strided_slice %13 {offsets = [2, 0], sizes = [1, 12], strides = [1, 1]} : vector<4x12xf32> to vector<1x12xf32>
    %861 = vector.broadcast %859 : vector<2x1xf32> to vector<2x12xf32>
    %862 = vector.broadcast %860 : vector<1x12xf32> to vector<2x12xf32>
    %863 = arith.mulf %861, %862 : vector<2x12xf32>
    %864 = arith.addf %858, %863 : vector<2x12xf32>
    %865 = vector.extract_strided_slice %744 {offsets = [0, 3], sizes = [2, 1], strides = [1, 1]} : vector<2x4xf32> to vector<2x1xf32>
    %866 = vector.extract_strided_slice %13 {offsets = [3, 0], sizes = [1, 12], strides = [1, 1]} : vector<4x12xf32> to vector<1x12xf32>
    %867 = vector.broadcast %865 : vector<2x1xf32> to vector<2x12xf32>
    %868 = vector.broadcast %866 : vector<1x12xf32> to vector<2x12xf32>
    %869 = arith.mulf %867, %868 : vector<2x12xf32>
    %870 = arith.addf %864, %869 : vector<2x12xf32>
    %871 = vector.broadcast %14 : vector<1x12xf32> to vector<2x12xf32>
    %872 = arith.addf %870, %871 : vector<2x12xf32>
    %873 = vector.extract_strided_slice %847 {offsets = [0, 0], sizes = [2, 4], strides = [1, 1]} : vector<2x12xf32> to vector<2x4xf32>
    %874 = vector.extract_strided_slice %872 {offsets = [0, 0], sizes = [2, 4], strides = [1, 1]} : vector<2x12xf32> to vector<2x4xf32>
    %875 = arith.addf %873, %874 : vector<2x4xf32>
    %876 = arith.negf %875 : vector<2x4xf32>
    %877 = math.exp %876 : vector<2x4xf32>
    %cst_137 = arith.constant 1.000000e+00 : f32
    %878 = vector.broadcast %cst_137 : f32 to vector<2x4xf32>
    %879 = arith.addf %878, %877 : vector<2x4xf32>
    %880 = arith.divf %878, %879 : vector<2x4xf32>
    %881 = vector.extract_strided_slice %847 {offsets = [0, 4], sizes = [2, 4], strides = [1, 1]} : vector<2x12xf32> to vector<2x4xf32>
    %882 = vector.extract_strided_slice %872 {offsets = [0, 4], sizes = [2, 4], strides = [1, 1]} : vector<2x12xf32> to vector<2x4xf32>
    %883 = arith.addf %881, %882 : vector<2x4xf32>
    %884 = arith.negf %883 : vector<2x4xf32>
    %885 = math.exp %884 : vector<2x4xf32>
    %cst_138 = arith.constant 1.000000e+00 : f32
    %886 = vector.broadcast %cst_138 : f32 to vector<2x4xf32>
    %887 = arith.addf %886, %885 : vector<2x4xf32>
    %888 = arith.divf %886, %887 : vector<2x4xf32>
    %889 = vector.extract_strided_slice %847 {offsets = [0, 8], sizes = [2, 4], strides = [1, 1]} : vector<2x12xf32> to vector<2x4xf32>
    %890 = vector.extract_strided_slice %872 {offsets = [0, 8], sizes = [2, 4], strides = [1, 1]} : vector<2x12xf32> to vector<2x4xf32>
    %891 = arith.mulf %880, %890 : vector<2x4xf32>
    %892 = arith.addf %889, %891 : vector<2x4xf32>
    %893 = math.tanh %892 : vector<2x4xf32>
    %cst_139 = arith.constant 1.000000e+00 : f32
    %894 = vector.broadcast %cst_139 : f32 to vector<2x4xf32>
    %895 = arith.subf %894, %888 : vector<2x4xf32>
    %896 = arith.mulf %895, %893 : vector<2x4xf32>
    %897 = arith.mulf %888, %744 : vector<2x4xf32>
    %898 = arith.addf %896, %897 : vector<2x4xf32>
    %899 = vector.extract_strided_slice %898 {offsets = [0, 0], sizes = [2, 1], strides = [1, 1]} : vector<2x4xf32> to vector<2x1xf32>
    %900 = vector.extract_strided_slice %15 {offsets = [0, 0], sizes = [1, 128], strides = [1, 1]} : vector<4x128xf32> to vector<1x128xf32>
    %901 = vector.broadcast %899 : vector<2x1xf32> to vector<2x128xf32>
    %902 = vector.broadcast %900 : vector<1x128xf32> to vector<2x128xf32>
    %903 = arith.mulf %901, %902 : vector<2x128xf32>
    %904 = vector.extract_strided_slice %898 {offsets = [0, 1], sizes = [2, 1], strides = [1, 1]} : vector<2x4xf32> to vector<2x1xf32>
    %905 = vector.extract_strided_slice %15 {offsets = [1, 0], sizes = [1, 128], strides = [1, 1]} : vector<4x128xf32> to vector<1x128xf32>
    %906 = vector.broadcast %904 : vector<2x1xf32> to vector<2x128xf32>
    %907 = vector.broadcast %905 : vector<1x128xf32> to vector<2x128xf32>
    %908 = arith.mulf %906, %907 : vector<2x128xf32>
    %909 = arith.addf %903, %908 : vector<2x128xf32>
    %910 = vector.extract_strided_slice %898 {offsets = [0, 2], sizes = [2, 1], strides = [1, 1]} : vector<2x4xf32> to vector<2x1xf32>
    %911 = vector.extract_strided_slice %15 {offsets = [2, 0], sizes = [1, 128], strides = [1, 1]} : vector<4x128xf32> to vector<1x128xf32>
    %912 = vector.broadcast %910 : vector<2x1xf32> to vector<2x128xf32>
    %913 = vector.broadcast %911 : vector<1x128xf32> to vector<2x128xf32>
    %914 = arith.mulf %912, %913 : vector<2x128xf32>
    %915 = arith.addf %909, %914 : vector<2x128xf32>
    %916 = vector.extract_strided_slice %898 {offsets = [0, 3], sizes = [2, 1], strides = [1, 1]} : vector<2x4xf32> to vector<2x1xf32>
    %917 = vector.extract_strided_slice %15 {offsets = [3, 0], sizes = [1, 128], strides = [1, 1]} : vector<4x128xf32> to vector<1x128xf32>
    %918 = vector.broadcast %916 : vector<2x1xf32> to vector<2x128xf32>
    %919 = vector.broadcast %917 : vector<1x128xf32> to vector<2x128xf32>
    %920 = arith.mulf %918, %919 : vector<2x128xf32>
    %921 = arith.addf %915, %920 : vector<2x128xf32>
    %922 = vector.broadcast %16 : vector<1x128xf32> to vector<2x128xf32>
    %923 = arith.addf %921, %922 : vector<2x128xf32>
    %c4 = arith.constant 4 : index
    %c0_140 = arith.constant 0 : index
    %924 = vector.load %arg18[%c4, %c0_140] : memref<16x128xf32, #tpu.memory_space<vmem>>, vector<2x128xf32>
    tpu.vector_store %arg18[%c4, %c0_140], %923 {strides = array<i32>} : memref<16x128xf32, #tpu.memory_space<vmem>>, vector<2x128xf32>,
    %925 = vector.extract_strided_slice %460 {offsets = [6, 0], sizes = [2, 12], strides = [1, 1]} : vector<16x12xf32> to vector<2x12xf32>
    %926 = vector.extract_strided_slice %822 {offsets = [0, 0], sizes = [2, 1], strides = [1, 1]} : vector<2x4xf32> to vector<2x1xf32>
    %927 = vector.extract_strided_slice %9 {offsets = [0, 0], sizes = [1, 12], strides = [1, 1]} : vector<4x12xf32> to vector<1x12xf32>
    %928 = vector.broadcast %926 : vector<2x1xf32> to vector<2x12xf32>
    %929 = vector.broadcast %927 : vector<1x12xf32> to vector<2x12xf32>
    %930 = arith.mulf %928, %929 : vector<2x12xf32>
    %931 = vector.extract_strided_slice %822 {offsets = [0, 1], sizes = [2, 1], strides = [1, 1]} : vector<2x4xf32> to vector<2x1xf32>
    %932 = vector.extract_strided_slice %9 {offsets = [1, 0], sizes = [1, 12], strides = [1, 1]} : vector<4x12xf32> to vector<1x12xf32>
    %933 = vector.broadcast %931 : vector<2x1xf32> to vector<2x12xf32>
    %934 = vector.broadcast %932 : vector<1x12xf32> to vector<2x12xf32>
    %935 = arith.mulf %933, %934 : vector<2x12xf32>
    %936 = arith.addf %930, %935 : vector<2x12xf32>
    %937 = vector.extract_strided_slice %822 {offsets = [0, 2], sizes = [2, 1], strides = [1, 1]} : vector<2x4xf32> to vector<2x1xf32>
    %938 = vector.extract_strided_slice %9 {offsets = [2, 0], sizes = [1, 12], strides = [1, 1]} : vector<4x12xf32> to vector<1x12xf32>
    %939 = vector.broadcast %937 : vector<2x1xf32> to vector<2x12xf32>
    %940 = vector.broadcast %938 : vector<1x12xf32> to vector<2x12xf32>
    %941 = arith.mulf %939, %940 : vector<2x12xf32>
    %942 = arith.addf %936, %941 : vector<2x12xf32>
    %943 = vector.extract_strided_slice %822 {offsets = [0, 3], sizes = [2, 1], strides = [1, 1]} : vector<2x4xf32> to vector<2x1xf32>
    %944 = vector.extract_strided_slice %9 {offsets = [3, 0], sizes = [1, 12], strides = [1, 1]} : vector<4x12xf32> to vector<1x12xf32>
    %945 = vector.broadcast %943 : vector<2x1xf32> to vector<2x12xf32>
    %946 = vector.broadcast %944 : vector<1x12xf32> to vector<2x12xf32>
    %947 = arith.mulf %945, %946 : vector<2x12xf32>
    %948 = arith.addf %942, %947 : vector<2x12xf32>
    %949 = vector.broadcast %10 : vector<1x12xf32> to vector<2x12xf32>
    %950 = arith.addf %948, %949 : vector<2x12xf32>
    %951 = vector.extract_strided_slice %925 {offsets = [0, 0], sizes = [2, 4], strides = [1, 1]} : vector<2x12xf32> to vector<2x4xf32>
    %952 = vector.extract_strided_slice %950 {offsets = [0, 0], sizes = [2, 4], strides = [1, 1]} : vector<2x12xf32> to vector<2x4xf32>
    %953 = arith.addf %951, %952 : vector<2x4xf32>
    %954 = arith.negf %953 : vector<2x4xf32>
    %955 = math.exp %954 : vector<2x4xf32>
    %cst_141 = arith.constant 1.000000e+00 : f32
    %956 = vector.broadcast %cst_141 : f32 to vector<2x4xf32>
    %957 = arith.addf %956, %955 : vector<2x4xf32>
    %958 = arith.divf %956, %957 : vector<2x4xf32>
    %959 = vector.extract_strided_slice %925 {offsets = [0, 4], sizes = [2, 4], strides = [1, 1]} : vector<2x12xf32> to vector<2x4xf32>
    %960 = vector.extract_strided_slice %950 {offsets = [0, 4], sizes = [2, 4], strides = [1, 1]} : vector<2x12xf32> to vector<2x4xf32>
    %961 = arith.addf %959, %960 : vector<2x4xf32>
    %962 = arith.negf %961 : vector<2x4xf32>
    %963 = math.exp %962 : vector<2x4xf32>
    %cst_142 = arith.constant 1.000000e+00 : f32
    %964 = vector.broadcast %cst_142 : f32 to vector<2x4xf32>
    %965 = arith.addf %964, %963 : vector<2x4xf32>
    %966 = arith.divf %964, %965 : vector<2x4xf32>
    %967 = vector.extract_strided_slice %925 {offsets = [0, 8], sizes = [2, 4], strides = [1, 1]} : vector<2x12xf32> to vector<2x4xf32>
    %968 = vector.extract_strided_slice %950 {offsets = [0, 8], sizes = [2, 4], strides = [1, 1]} : vector<2x12xf32> to vector<2x4xf32>
    %969 = arith.mulf %958, %968 : vector<2x4xf32>
    %970 = arith.addf %967, %969 : vector<2x4xf32>
    %971 = math.tanh %970 : vector<2x4xf32>
    %cst_143 = arith.constant 1.000000e+00 : f32
    %972 = vector.broadcast %cst_143 : f32 to vector<2x4xf32>
    %973 = arith.subf %972, %966 : vector<2x4xf32>
    %974 = arith.mulf %973, %971 : vector<2x4xf32>
    %975 = arith.mulf %966, %822 : vector<2x4xf32>
    %976 = arith.addf %974, %975 : vector<2x4xf32>
    %977 = vector.extract_strided_slice %976 {offsets = [0, 0], sizes = [2, 1], strides = [1, 1]} : vector<2x4xf32> to vector<2x1xf32>
    %978 = vector.extract_strided_slice %11 {offsets = [0, 0], sizes = [1, 12], strides = [1, 1]} : vector<4x12xf32> to vector<1x12xf32>
    %979 = vector.broadcast %977 : vector<2x1xf32> to vector<2x12xf32>
    %980 = vector.broadcast %978 : vector<1x12xf32> to vector<2x12xf32>
    %981 = arith.mulf %979, %980 : vector<2x12xf32>
    %982 = vector.extract_strided_slice %976 {offsets = [0, 1], sizes = [2, 1], strides = [1, 1]} : vector<2x4xf32> to vector<2x1xf32>
    %983 = vector.extract_strided_slice %11 {offsets = [1, 0], sizes = [1, 12], strides = [1, 1]} : vector<4x12xf32> to vector<1x12xf32>
    %984 = vector.broadcast %982 : vector<2x1xf32> to vector<2x12xf32>
    %985 = vector.broadcast %983 : vector<1x12xf32> to vector<2x12xf32>
    %986 = arith.mulf %984, %985 : vector<2x12xf32>
    %987 = arith.addf %981, %986 : vector<2x12xf32>
    %988 = vector.extract_strided_slice %976 {offsets = [0, 2], sizes = [2, 1], strides = [1, 1]} : vector<2x4xf32> to vector<2x1xf32>
    %989 = vector.extract_strided_slice %11 {offsets = [2, 0], sizes = [1, 12], strides = [1, 1]} : vector<4x12xf32> to vector<1x12xf32>
    %990 = vector.broadcast %988 : vector<2x1xf32> to vector<2x12xf32>
    %991 = vector.broadcast %989 : vector<1x12xf32> to vector<2x12xf32>
    %992 = arith.mulf %990, %991 : vector<2x12xf32>
    %993 = arith.addf %987, %992 : vector<2x12xf32>
    %994 = vector.extract_strided_slice %976 {offsets = [0, 3], sizes = [2, 1], strides = [1, 1]} : vector<2x4xf32> to vector<2x1xf32>
    %995 = vector.extract_strided_slice %11 {offsets = [3, 0], sizes = [1, 12], strides = [1, 1]} : vector<4x12xf32> to vector<1x12xf32>
    %996 = vector.broadcast %994 : vector<2x1xf32> to vector<2x12xf32>
    %997 = vector.broadcast %995 : vector<1x12xf32> to vector<2x12xf32>
    %998 = arith.mulf %996, %997 : vector<2x12xf32>
    %999 = arith.addf %993, %998 : vector<2x12xf32>
    %1000 = vector.broadcast %12 : vector<1x12xf32> to vector<2x12xf32>
    %1001 = arith.addf %999, %1000 : vector<2x12xf32>
    %1002 = vector.extract_strided_slice %898 {offsets = [0, 0], sizes = [2, 1], strides = [1, 1]} : vector<2x4xf32> to vector<2x1xf32>
    %1003 = vector.extract_strided_slice %13 {offsets = [0, 0], sizes = [1, 12], strides = [1, 1]} : vector<4x12xf32> to vector<1x12xf32>
    %1004 = vector.broadcast %1002 : vector<2x1xf32> to vector<2x12xf32>
    %1005 = vector.broadcast %1003 : vector<1x12xf32> to vector<2x12xf32>
    %1006 = arith.mulf %1004, %1005 : vector<2x12xf32>
    %1007 = vector.extract_strided_slice %898 {offsets = [0, 1], sizes = [2, 1], strides = [1, 1]} : vector<2x4xf32> to vector<2x1xf32>
    %1008 = vector.extract_strided_slice %13 {offsets = [1, 0], sizes = [1, 12], strides = [1, 1]} : vector<4x12xf32> to vector<1x12xf32>
    %1009 = vector.broadcast %1007 : vector<2x1xf32> to vector<2x12xf32>
    %1010 = vector.broadcast %1008 : vector<1x12xf32> to vector<2x12xf32>
    %1011 = arith.mulf %1009, %1010 : vector<2x12xf32>
    %1012 = arith.addf %1006, %1011 : vector<2x12xf32>
    %1013 = vector.extract_strided_slice %898 {offsets = [0, 2], sizes = [2, 1], strides = [1, 1]} : vector<2x4xf32> to vector<2x1xf32>
    %1014 = vector.extract_strided_slice %13 {offsets = [2, 0], sizes = [1, 12], strides = [1, 1]} : vector<4x12xf32> to vector<1x12xf32>
    %1015 = vector.broadcast %1013 : vector<2x1xf32> to vector<2x12xf32>
    %1016 = vector.broadcast %1014 : vector<1x12xf32> to vector<2x12xf32>
    %1017 = arith.mulf %1015, %1016 : vector<2x12xf32>
    %1018 = arith.addf %1012, %1017 : vector<2x12xf32>
    %1019 = vector.extract_strided_slice %898 {offsets = [0, 3], sizes = [2, 1], strides = [1, 1]} : vector<2x4xf32> to vector<2x1xf32>
    %1020 = vector.extract_strided_slice %13 {offsets = [3, 0], sizes = [1, 12], strides = [1, 1]} : vector<4x12xf32> to vector<1x12xf32>
    %1021 = vector.broadcast %1019 : vector<2x1xf32> to vector<2x12xf32>
    %1022 = vector.broadcast %1020 : vector<1x12xf32> to vector<2x12xf32>
    %1023 = arith.mulf %1021, %1022 : vector<2x12xf32>
    %1024 = arith.addf %1018, %1023 : vector<2x12xf32>
    %1025 = vector.broadcast %14 : vector<1x12xf32> to vector<2x12xf32>
    %1026 = arith.addf %1024, %1025 : vector<2x12xf32>
    %1027 = vector.extract_strided_slice %1001 {offsets = [0, 0], sizes = [2, 4], strides = [1, 1]} : vector<2x12xf32> to vector<2x4xf32>
    %1028 = vector.extract_strided_slice %1026 {offsets = [0, 0], sizes = [2, 4], strides = [1, 1]} : vector<2x12xf32> to vector<2x4xf32>
    %1029 = arith.addf %1027, %1028 : vector<2x4xf32>
    %1030 = arith.negf %1029 : vector<2x4xf32>
    %1031 = math.exp %1030 : vector<2x4xf32>
    %cst_144 = arith.constant 1.000000e+00 : f32
    %1032 = vector.broadcast %cst_144 : f32 to vector<2x4xf32>
    %1033 = arith.addf %1032, %1031 : vector<2x4xf32>
    %1034 = arith.divf %1032, %1033 : vector<2x4xf32>
    %1035 = vector.extract_strided_slice %1001 {offsets = [0, 4], sizes = [2, 4], strides = [1, 1]} : vector<2x12xf32> to vector<2x4xf32>
    %1036 = vector.extract_strided_slice %1026 {offsets = [0, 4], sizes = [2, 4], strides = [1, 1]} : vector<2x12xf32> to vector<2x4xf32>
    %1037 = arith.addf %1035, %1036 : vector<2x4xf32>
    %1038 = arith.negf %1037 : vector<2x4xf32>
    %1039 = math.exp %1038 : vector<2x4xf32>
    %cst_145 = arith.constant 1.000000e+00 : f32
    %1040 = vector.broadcast %cst_145 : f32 to vector<2x4xf32>
    %1041 = arith.addf %1040, %1039 : vector<2x4xf32>
    %1042 = arith.divf %1040, %1041 : vector<2x4xf32>
    %1043 = vector.extract_strided_slice %1001 {offsets = [0, 8], sizes = [2, 4], strides = [1, 1]} : vector<2x12xf32> to vector<2x4xf32>
    %1044 = vector.extract_strided_slice %1026 {offsets = [0, 8], sizes = [2, 4], strides = [1, 1]} : vector<2x12xf32> to vector<2x4xf32>
    %1045 = arith.mulf %1034, %1044 : vector<2x4xf32>
    %1046 = arith.addf %1043, %1045 : vector<2x4xf32>
    %1047 = math.tanh %1046 : vector<2x4xf32>
    %cst_146 = arith.constant 1.000000e+00 : f32
    %1048 = vector.broadcast %cst_146 : f32 to vector<2x4xf32>
    %1049 = arith.subf %1048, %1042 : vector<2x4xf32>
    %1050 = arith.mulf %1049, %1047 : vector<2x4xf32>
    %1051 = arith.mulf %1042, %898 : vector<2x4xf32>
    %1052 = arith.addf %1050, %1051 : vector<2x4xf32>
    %1053 = vector.extract_strided_slice %1052 {offsets = [0, 0], sizes = [2, 1], strides = [1, 1]} : vector<2x4xf32> to vector<2x1xf32>
    %1054 = vector.extract_strided_slice %15 {offsets = [0, 0], sizes = [1, 128], strides = [1, 1]} : vector<4x128xf32> to vector<1x128xf32>
    %1055 = vector.broadcast %1053 : vector<2x1xf32> to vector<2x128xf32>
    %1056 = vector.broadcast %1054 : vector<1x128xf32> to vector<2x128xf32>
    %1057 = arith.mulf %1055, %1056 : vector<2x128xf32>
    %1058 = vector.extract_strided_slice %1052 {offsets = [0, 1], sizes = [2, 1], strides = [1, 1]} : vector<2x4xf32> to vector<2x1xf32>
    %1059 = vector.extract_strided_slice %15 {offsets = [1, 0], sizes = [1, 128], strides = [1, 1]} : vector<4x128xf32> to vector<1x128xf32>
    %1060 = vector.broadcast %1058 : vector<2x1xf32> to vector<2x128xf32>
    %1061 = vector.broadcast %1059 : vector<1x128xf32> to vector<2x128xf32>
    %1062 = arith.mulf %1060, %1061 : vector<2x128xf32>
    %1063 = arith.addf %1057, %1062 : vector<2x128xf32>
    %1064 = vector.extract_strided_slice %1052 {offsets = [0, 2], sizes = [2, 1], strides = [1, 1]} : vector<2x4xf32> to vector<2x1xf32>
    %1065 = vector.extract_strided_slice %15 {offsets = [2, 0], sizes = [1, 128], strides = [1, 1]} : vector<4x128xf32> to vector<1x128xf32>
    %1066 = vector.broadcast %1064 : vector<2x1xf32> to vector<2x128xf32>
    %1067 = vector.broadcast %1065 : vector<1x128xf32> to vector<2x128xf32>
    %1068 = arith.mulf %1066, %1067 : vector<2x128xf32>
    %1069 = arith.addf %1063, %1068 : vector<2x128xf32>
    %1070 = vector.extract_strided_slice %1052 {offsets = [0, 3], sizes = [2, 1], strides = [1, 1]} : vector<2x4xf32> to vector<2x1xf32>
    %1071 = vector.extract_strided_slice %15 {offsets = [3, 0], sizes = [1, 128], strides = [1, 1]} : vector<4x128xf32> to vector<1x128xf32>
    %1072 = vector.broadcast %1070 : vector<2x1xf32> to vector<2x128xf32>
    %1073 = vector.broadcast %1071 : vector<1x128xf32> to vector<2x128xf32>
    %1074 = arith.mulf %1072, %1073 : vector<2x128xf32>
    %1075 = arith.addf %1069, %1074 : vector<2x128xf32>
    %1076 = vector.broadcast %16 : vector<1x128xf32> to vector<2x128xf32>
    %1077 = arith.addf %1075, %1076 : vector<2x128xf32>
    %c6 = arith.constant 6 : index
    %c0_147 = arith.constant 0 : index
    %1078 = vector.load %arg18[%c6, %c0_147] : memref<16x128xf32, #tpu.memory_space<vmem>>, vector<2x128xf32>
    tpu.vector_store %arg18[%c6, %c0_147], %1077 {strides = array<i32>} : memref<16x128xf32, #tpu.memory_space<vmem>>, vector<2x128xf32>,
    %1079 = vector.extract_strided_slice %460 {offsets = [8, 0], sizes = [2, 12], strides = [1, 1]} : vector<16x12xf32> to vector<2x12xf32>
    %1080 = vector.extract_strided_slice %976 {offsets = [0, 0], sizes = [2, 1], strides = [1, 1]} : vector<2x4xf32> to vector<2x1xf32>
    %1081 = vector.extract_strided_slice %9 {offsets = [0, 0], sizes = [1, 12], strides = [1, 1]} : vector<4x12xf32> to vector<1x12xf32>
    %1082 = vector.broadcast %1080 : vector<2x1xf32> to vector<2x12xf32>
    %1083 = vector.broadcast %1081 : vector<1x12xf32> to vector<2x12xf32>
    %1084 = arith.mulf %1082, %1083 : vector<2x12xf32>
    %1085 = vector.extract_strided_slice %976 {offsets = [0, 1], sizes = [2, 1], strides = [1, 1]} : vector<2x4xf32> to vector<2x1xf32>
    %1086 = vector.extract_strided_slice %9 {offsets = [1, 0], sizes = [1, 12], strides = [1, 1]} : vector<4x12xf32> to vector<1x12xf32>
    %1087 = vector.broadcast %1085 : vector<2x1xf32> to vector<2x12xf32>
    %1088 = vector.broadcast %1086 : vector<1x12xf32> to vector<2x12xf32>
    %1089 = arith.mulf %1087, %1088 : vector<2x12xf32>
    %1090 = arith.addf %1084, %1089 : vector<2x12xf32>
    %1091 = vector.extract_strided_slice %976 {offsets = [0, 2], sizes = [2, 1], strides = [1, 1]} : vector<2x4xf32> to vector<2x1xf32>
    %1092 = vector.extract_strided_slice %9 {offsets = [2, 0], sizes = [1, 12], strides = [1, 1]} : vector<4x12xf32> to vector<1x12xf32>
    %1093 = vector.broadcast %1091 : vector<2x1xf32> to vector<2x12xf32>
    %1094 = vector.broadcast %1092 : vector<1x12xf32> to vector<2x12xf32>
    %1095 = arith.mulf %1093, %1094 : vector<2x12xf32>
    %1096 = arith.addf %1090, %1095 : vector<2x12xf32>
    %1097 = vector.extract_strided_slice %976 {offsets = [0, 3], sizes = [2, 1], strides = [1, 1]} : vector<2x4xf32> to vector<2x1xf32>
    %1098 = vector.extract_strided_slice %9 {offsets = [3, 0], sizes = [1, 12], strides = [1, 1]} : vector<4x12xf32> to vector<1x12xf32>
    %1099 = vector.broadcast %1097 : vector<2x1xf32> to vector<2x12xf32>
    %1100 = vector.broadcast %1098 : vector<1x12xf32> to vector<2x12xf32>
    %1101 = arith.mulf %1099, %1100 : vector<2x12xf32>
    %1102 = arith.addf %1096, %1101 : vector<2x12xf32>
    %1103 = vector.broadcast %10 : vector<1x12xf32> to vector<2x12xf32>
    %1104 = arith.addf %1102, %1103 : vector<2x12xf32>
    %1105 = vector.extract_strided_slice %1079 {offsets = [0, 0], sizes = [2, 4], strides = [1, 1]} : vector<2x12xf32> to vector<2x4xf32>
    %1106 = vector.extract_strided_slice %1104 {offsets = [0, 0], sizes = [2, 4], strides = [1, 1]} : vector<2x12xf32> to vector<2x4xf32>
    %1107 = arith.addf %1105, %1106 : vector<2x4xf32>
    %1108 = arith.negf %1107 : vector<2x4xf32>
    %1109 = math.exp %1108 : vector<2x4xf32>
    %cst_148 = arith.constant 1.000000e+00 : f32
    %1110 = vector.broadcast %cst_148 : f32 to vector<2x4xf32>
    %1111 = arith.addf %1110, %1109 : vector<2x4xf32>
    %1112 = arith.divf %1110, %1111 : vector<2x4xf32>
    %1113 = vector.extract_strided_slice %1079 {offsets = [0, 4], sizes = [2, 4], strides = [1, 1]} : vector<2x12xf32> to vector<2x4xf32>
    %1114 = vector.extract_strided_slice %1104 {offsets = [0, 4], sizes = [2, 4], strides = [1, 1]} : vector<2x12xf32> to vector<2x4xf32>
    %1115 = arith.addf %1113, %1114 : vector<2x4xf32>
    %1116 = arith.negf %1115 : vector<2x4xf32>
    %1117 = math.exp %1116 : vector<2x4xf32>
    %cst_149 = arith.constant 1.000000e+00 : f32
    %1118 = vector.broadcast %cst_149 : f32 to vector<2x4xf32>
    %1119 = arith.addf %1118, %1117 : vector<2x4xf32>
    %1120 = arith.divf %1118, %1119 : vector<2x4xf32>
    %1121 = vector.extract_strided_slice %1079 {offsets = [0, 8], sizes = [2, 4], strides = [1, 1]} : vector<2x12xf32> to vector<2x4xf32>
    %1122 = vector.extract_strided_slice %1104 {offsets = [0, 8], sizes = [2, 4], strides = [1, 1]} : vector<2x12xf32> to vector<2x4xf32>
    %1123 = arith.mulf %1112, %1122 : vector<2x4xf32>
    %1124 = arith.addf %1121, %1123 : vector<2x4xf32>
    %1125 = math.tanh %1124 : vector<2x4xf32>
    %cst_150 = arith.constant 1.000000e+00 : f32
    %1126 = vector.broadcast %cst_150 : f32 to vector<2x4xf32>
    %1127 = arith.subf %1126, %1120 : vector<2x4xf32>
    %1128 = arith.mulf %1127, %1125 : vector<2x4xf32>
    %1129 = arith.mulf %1120, %976 : vector<2x4xf32>
    %1130 = arith.addf %1128, %1129 : vector<2x4xf32>
    %1131 = vector.extract_strided_slice %1130 {offsets = [0, 0], sizes = [2, 1], strides = [1, 1]} : vector<2x4xf32> to vector<2x1xf32>
    %1132 = vector.extract_strided_slice %11 {offsets = [0, 0], sizes = [1, 12], strides = [1, 1]} : vector<4x12xf32> to vector<1x12xf32>
    %1133 = vector.broadcast %1131 : vector<2x1xf32> to vector<2x12xf32>
    %1134 = vector.broadcast %1132 : vector<1x12xf32> to vector<2x12xf32>
    %1135 = arith.mulf %1133, %1134 : vector<2x12xf32>
    %1136 = vector.extract_strided_slice %1130 {offsets = [0, 1], sizes = [2, 1], strides = [1, 1]} : vector<2x4xf32> to vector<2x1xf32>
    %1137 = vector.extract_strided_slice %11 {offsets = [1, 0], sizes = [1, 12], strides = [1, 1]} : vector<4x12xf32> to vector<1x12xf32>
    %1138 = vector.broadcast %1136 : vector<2x1xf32> to vector<2x12xf32>
    %1139 = vector.broadcast %1137 : vector<1x12xf32> to vector<2x12xf32>
    %1140 = arith.mulf %1138, %1139 : vector<2x12xf32>
    %1141 = arith.addf %1135, %1140 : vector<2x12xf32>
    %1142 = vector.extract_strided_slice %1130 {offsets = [0, 2], sizes = [2, 1], strides = [1, 1]} : vector<2x4xf32> to vector<2x1xf32>
    %1143 = vector.extract_strided_slice %11 {offsets = [2, 0], sizes = [1, 12], strides = [1, 1]} : vector<4x12xf32> to vector<1x12xf32>
    %1144 = vector.broadcast %1142 : vector<2x1xf32> to vector<2x12xf32>
    %1145 = vector.broadcast %1143 : vector<1x12xf32> to vector<2x12xf32>
    %1146 = arith.mulf %1144, %1145 : vector<2x12xf32>
    %1147 = arith.addf %1141, %1146 : vector<2x12xf32>
    %1148 = vector.extract_strided_slice %1130 {offsets = [0, 3], sizes = [2, 1], strides = [1, 1]} : vector<2x4xf32> to vector<2x1xf32>
    %1149 = vector.extract_strided_slice %11 {offsets = [3, 0], sizes = [1, 12], strides = [1, 1]} : vector<4x12xf32> to vector<1x12xf32>
    %1150 = vector.broadcast %1148 : vector<2x1xf32> to vector<2x12xf32>
    %1151 = vector.broadcast %1149 : vector<1x12xf32> to vector<2x12xf32>
    %1152 = arith.mulf %1150, %1151 : vector<2x12xf32>
    %1153 = arith.addf %1147, %1152 : vector<2x12xf32>
    %1154 = vector.broadcast %12 : vector<1x12xf32> to vector<2x12xf32>
    %1155 = arith.addf %1153, %1154 : vector<2x12xf32>
    %1156 = vector.extract_strided_slice %1052 {offsets = [0, 0], sizes = [2, 1], strides = [1, 1]} : vector<2x4xf32> to vector<2x1xf32>
    %1157 = vector.extract_strided_slice %13 {offsets = [0, 0], sizes = [1, 12], strides = [1, 1]} : vector<4x12xf32> to vector<1x12xf32>
    %1158 = vector.broadcast %1156 : vector<2x1xf32> to vector<2x12xf32>
    %1159 = vector.broadcast %1157 : vector<1x12xf32> to vector<2x12xf32>
    %1160 = arith.mulf %1158, %1159 : vector<2x12xf32>
    %1161 = vector.extract_strided_slice %1052 {offsets = [0, 1], sizes = [2, 1], strides = [1, 1]} : vector<2x4xf32> to vector<2x1xf32>
    %1162 = vector.extract_strided_slice %13 {offsets = [1, 0], sizes = [1, 12], strides = [1, 1]} : vector<4x12xf32> to vector<1x12xf32>
    %1163 = vector.broadcast %1161 : vector<2x1xf32> to vector<2x12xf32>
    %1164 = vector.broadcast %1162 : vector<1x12xf32> to vector<2x12xf32>
    %1165 = arith.mulf %1163, %1164 : vector<2x12xf32>
    %1166 = arith.addf %1160, %1165 : vector<2x12xf32>
    %1167 = vector.extract_strided_slice %1052 {offsets = [0, 2], sizes = [2, 1], strides = [1, 1]} : vector<2x4xf32> to vector<2x1xf32>
    %1168 = vector.extract_strided_slice %13 {offsets = [2, 0], sizes = [1, 12], strides = [1, 1]} : vector<4x12xf32> to vector<1x12xf32>
    %1169 = vector.broadcast %1167 : vector<2x1xf32> to vector<2x12xf32>
    %1170 = vector.broadcast %1168 : vector<1x12xf32> to vector<2x12xf32>
    %1171 = arith.mulf %1169, %1170 : vector<2x12xf32>
    %1172 = arith.addf %1166, %1171 : vector<2x12xf32>
    %1173 = vector.extract_strided_slice %1052 {offsets = [0, 3], sizes = [2, 1], strides = [1, 1]} : vector<2x4xf32> to vector<2x1xf32>
    %1174 = vector.extract_strided_slice %13 {offsets = [3, 0], sizes = [1, 12], strides = [1, 1]} : vector<4x12xf32> to vector<1x12xf32>
    %1175 = vector.broadcast %1173 : vector<2x1xf32> to vector<2x12xf32>
    %1176 = vector.broadcast %1174 : vector<1x12xf32> to vector<2x12xf32>
    %1177 = arith.mulf %1175, %1176 : vector<2x12xf32>
    %1178 = arith.addf %1172, %1177 : vector<2x12xf32>
    %1179 = vector.broadcast %14 : vector<1x12xf32> to vector<2x12xf32>
    %1180 = arith.addf %1178, %1179 : vector<2x12xf32>
    %1181 = vector.extract_strided_slice %1155 {offsets = [0, 0], sizes = [2, 4], strides = [1, 1]} : vector<2x12xf32> to vector<2x4xf32>
    %1182 = vector.extract_strided_slice %1180 {offsets = [0, 0], sizes = [2, 4], strides = [1, 1]} : vector<2x12xf32> to vector<2x4xf32>
    %1183 = arith.addf %1181, %1182 : vector<2x4xf32>
    %1184 = arith.negf %1183 : vector<2x4xf32>
    %1185 = math.exp %1184 : vector<2x4xf32>
    %cst_151 = arith.constant 1.000000e+00 : f32
    %1186 = vector.broadcast %cst_151 : f32 to vector<2x4xf32>
    %1187 = arith.addf %1186, %1185 : vector<2x4xf32>
    %1188 = arith.divf %1186, %1187 : vector<2x4xf32>
    %1189 = vector.extract_strided_slice %1155 {offsets = [0, 4], sizes = [2, 4], strides = [1, 1]} : vector<2x12xf32> to vector<2x4xf32>
    %1190 = vector.extract_strided_slice %1180 {offsets = [0, 4], sizes = [2, 4], strides = [1, 1]} : vector<2x12xf32> to vector<2x4xf32>
    %1191 = arith.addf %1189, %1190 : vector<2x4xf32>
    %1192 = arith.negf %1191 : vector<2x4xf32>
    %1193 = math.exp %1192 : vector<2x4xf32>
    %cst_152 = arith.constant 1.000000e+00 : f32
    %1194 = vector.broadcast %cst_152 : f32 to vector<2x4xf32>
    %1195 = arith.addf %1194, %1193 : vector<2x4xf32>
    %1196 = arith.divf %1194, %1195 : vector<2x4xf32>
    %1197 = vector.extract_strided_slice %1155 {offsets = [0, 8], sizes = [2, 4], strides = [1, 1]} : vector<2x12xf32> to vector<2x4xf32>
    %1198 = vector.extract_strided_slice %1180 {offsets = [0, 8], sizes = [2, 4], strides = [1, 1]} : vector<2x12xf32> to vector<2x4xf32>
    %1199 = arith.mulf %1188, %1198 : vector<2x4xf32>
    %1200 = arith.addf %1197, %1199 : vector<2x4xf32>
    %1201 = math.tanh %1200 : vector<2x4xf32>
    %cst_153 = arith.constant 1.000000e+00 : f32
    %1202 = vector.broadcast %cst_153 : f32 to vector<2x4xf32>
    %1203 = arith.subf %1202, %1196 : vector<2x4xf32>
    %1204 = arith.mulf %1203, %1201 : vector<2x4xf32>
    %1205 = arith.mulf %1196, %1052 : vector<2x4xf32>
    %1206 = arith.addf %1204, %1205 : vector<2x4xf32>
    %1207 = vector.extract_strided_slice %1206 {offsets = [0, 0], sizes = [2, 1], strides = [1, 1]} : vector<2x4xf32> to vector<2x1xf32>
    %1208 = vector.extract_strided_slice %15 {offsets = [0, 0], sizes = [1, 128], strides = [1, 1]} : vector<4x128xf32> to vector<1x128xf32>
    %1209 = vector.broadcast %1207 : vector<2x1xf32> to vector<2x128xf32>
    %1210 = vector.broadcast %1208 : vector<1x128xf32> to vector<2x128xf32>
    %1211 = arith.mulf %1209, %1210 : vector<2x128xf32>
    %1212 = vector.extract_strided_slice %1206 {offsets = [0, 1], sizes = [2, 1], strides = [1, 1]} : vector<2x4xf32> to vector<2x1xf32>
    %1213 = vector.extract_strided_slice %15 {offsets = [1, 0], sizes = [1, 128], strides = [1, 1]} : vector<4x128xf32> to vector<1x128xf32>
    %1214 = vector.broadcast %1212 : vector<2x1xf32> to vector<2x128xf32>
    %1215 = vector.broadcast %1213 : vector<1x128xf32> to vector<2x128xf32>
    %1216 = arith.mulf %1214, %1215 : vector<2x128xf32>
    %1217 = arith.addf %1211, %1216 : vector<2x128xf32>
    %1218 = vector.extract_strided_slice %1206 {offsets = [0, 2], sizes = [2, 1], strides = [1, 1]} : vector<2x4xf32> to vector<2x1xf32>
    %1219 = vector.extract_strided_slice %15 {offsets = [2, 0], sizes = [1, 128], strides = [1, 1]} : vector<4x128xf32> to vector<1x128xf32>
    %1220 = vector.broadcast %1218 : vector<2x1xf32> to vector<2x128xf32>
    %1221 = vector.broadcast %1219 : vector<1x128xf32> to vector<2x128xf32>
    %1222 = arith.mulf %1220, %1221 : vector<2x128xf32>
    %1223 = arith.addf %1217, %1222 : vector<2x128xf32>
    %1224 = vector.extract_strided_slice %1206 {offsets = [0, 3], sizes = [2, 1], strides = [1, 1]} : vector<2x4xf32> to vector<2x1xf32>
    %1225 = vector.extract_strided_slice %15 {offsets = [3, 0], sizes = [1, 128], strides = [1, 1]} : vector<4x128xf32> to vector<1x128xf32>
    %1226 = vector.broadcast %1224 : vector<2x1xf32> to vector<2x128xf32>
    %1227 = vector.broadcast %1225 : vector<1x128xf32> to vector<2x128xf32>
    %1228 = arith.mulf %1226, %1227 : vector<2x128xf32>
    %1229 = arith.addf %1223, %1228 : vector<2x128xf32>
    %1230 = vector.broadcast %16 : vector<1x128xf32> to vector<2x128xf32>
    %1231 = arith.addf %1229, %1230 : vector<2x128xf32>
    %c8 = arith.constant 8 : index
    %c0_154 = arith.constant 0 : index
    %1232 = vector.load %arg18[%c8, %c0_154] : memref<16x128xf32, #tpu.memory_space<vmem>>, vector<2x128xf32>
    tpu.vector_store %arg18[%c8, %c0_154], %1231 {strides = array<i32>} : memref<16x128xf32, #tpu.memory_space<vmem>>, vector<2x128xf32>,
    %1233 = vector.extract_strided_slice %460 {offsets = [10, 0], sizes = [2, 12], strides = [1, 1]} : vector<16x12xf32> to vector<2x12xf32>
    %1234 = vector.extract_strided_slice %1130 {offsets = [0, 0], sizes = [2, 1], strides = [1, 1]} : vector<2x4xf32> to vector<2x1xf32>
    %1235 = vector.extract_strided_slice %9 {offsets = [0, 0], sizes = [1, 12], strides = [1, 1]} : vector<4x12xf32> to vector<1x12xf32>
    %1236 = vector.broadcast %1234 : vector<2x1xf32> to vector<2x12xf32>
    %1237 = vector.broadcast %1235 : vector<1x12xf32> to vector<2x12xf32>
    %1238 = arith.mulf %1236, %1237 : vector<2x12xf32>
    %1239 = vector.extract_strided_slice %1130 {offsets = [0, 1], sizes = [2, 1], strides = [1, 1]} : vector<2x4xf32> to vector<2x1xf32>
    %1240 = vector.extract_strided_slice %9 {offsets = [1, 0], sizes = [1, 12], strides = [1, 1]} : vector<4x12xf32> to vector<1x12xf32>
    %1241 = vector.broadcast %1239 : vector<2x1xf32> to vector<2x12xf32>
    %1242 = vector.broadcast %1240 : vector<1x12xf32> to vector<2x12xf32>
    %1243 = arith.mulf %1241, %1242 : vector<2x12xf32>
    %1244 = arith.addf %1238, %1243 : vector<2x12xf32>
    %1245 = vector.extract_strided_slice %1130 {offsets = [0, 2], sizes = [2, 1], strides = [1, 1]} : vector<2x4xf32> to vector<2x1xf32>
    %1246 = vector.extract_strided_slice %9 {offsets = [2, 0], sizes = [1, 12], strides = [1, 1]} : vector<4x12xf32> to vector<1x12xf32>
    %1247 = vector.broadcast %1245 : vector<2x1xf32> to vector<2x12xf32>
    %1248 = vector.broadcast %1246 : vector<1x12xf32> to vector<2x12xf32>
    %1249 = arith.mulf %1247, %1248 : vector<2x12xf32>
    %1250 = arith.addf %1244, %1249 : vector<2x12xf32>
    %1251 = vector.extract_strided_slice %1130 {offsets = [0, 3], sizes = [2, 1], strides = [1, 1]} : vector<2x4xf32> to vector<2x1xf32>
    %1252 = vector.extract_strided_slice %9 {offsets = [3, 0], sizes = [1, 12], strides = [1, 1]} : vector<4x12xf32> to vector<1x12xf32>
    %1253 = vector.broadcast %1251 : vector<2x1xf32> to vector<2x12xf32>
    %1254 = vector.broadcast %1252 : vector<1x12xf32> to vector<2x12xf32>
    %1255 = arith.mulf %1253, %1254 : vector<2x12xf32>
    %1256 = arith.addf %1250, %1255 : vector<2x12xf32>
    %1257 = vector.broadcast %10 : vector<1x12xf32> to vector<2x12xf32>
    %1258 = arith.addf %1256, %1257 : vector<2x12xf32>
    %1259 = vector.extract_strided_slice %1233 {offsets = [0, 0], sizes = [2, 4], strides = [1, 1]} : vector<2x12xf32> to vector<2x4xf32>
    %1260 = vector.extract_strided_slice %1258 {offsets = [0, 0], sizes = [2, 4], strides = [1, 1]} : vector<2x12xf32> to vector<2x4xf32>
    %1261 = arith.addf %1259, %1260 : vector<2x4xf32>
    %1262 = arith.negf %1261 : vector<2x4xf32>
    %1263 = math.exp %1262 : vector<2x4xf32>
    %cst_155 = arith.constant 1.000000e+00 : f32
    %1264 = vector.broadcast %cst_155 : f32 to vector<2x4xf32>
    %1265 = arith.addf %1264, %1263 : vector<2x4xf32>
    %1266 = arith.divf %1264, %1265 : vector<2x4xf32>
    %1267 = vector.extract_strided_slice %1233 {offsets = [0, 4], sizes = [2, 4], strides = [1, 1]} : vector<2x12xf32> to vector<2x4xf32>
    %1268 = vector.extract_strided_slice %1258 {offsets = [0, 4], sizes = [2, 4], strides = [1, 1]} : vector<2x12xf32> to vector<2x4xf32>
    %1269 = arith.addf %1267, %1268 : vector<2x4xf32>
    %1270 = arith.negf %1269 : vector<2x4xf32>
    %1271 = math.exp %1270 : vector<2x4xf32>
    %cst_156 = arith.constant 1.000000e+00 : f32
    %1272 = vector.broadcast %cst_156 : f32 to vector<2x4xf32>
    %1273 = arith.addf %1272, %1271 : vector<2x4xf32>
    %1274 = arith.divf %1272, %1273 : vector<2x4xf32>
    %1275 = vector.extract_strided_slice %1233 {offsets = [0, 8], sizes = [2, 4], strides = [1, 1]} : vector<2x12xf32> to vector<2x4xf32>
    %1276 = vector.extract_strided_slice %1258 {offsets = [0, 8], sizes = [2, 4], strides = [1, 1]} : vector<2x12xf32> to vector<2x4xf32>
    %1277 = arith.mulf %1266, %1276 : vector<2x4xf32>
    %1278 = arith.addf %1275, %1277 : vector<2x4xf32>
    %1279 = math.tanh %1278 : vector<2x4xf32>
    %cst_157 = arith.constant 1.000000e+00 : f32
    %1280 = vector.broadcast %cst_157 : f32 to vector<2x4xf32>
    %1281 = arith.subf %1280, %1274 : vector<2x4xf32>
    %1282 = arith.mulf %1281, %1279 : vector<2x4xf32>
    %1283 = arith.mulf %1274, %1130 : vector<2x4xf32>
    %1284 = arith.addf %1282, %1283 : vector<2x4xf32>
    %1285 = vector.extract_strided_slice %1284 {offsets = [0, 0], sizes = [2, 1], strides = [1, 1]} : vector<2x4xf32> to vector<2x1xf32>
    %1286 = vector.extract_strided_slice %11 {offsets = [0, 0], sizes = [1, 12], strides = [1, 1]} : vector<4x12xf32> to vector<1x12xf32>
    %1287 = vector.broadcast %1285 : vector<2x1xf32> to vector<2x12xf32>
    %1288 = vector.broadcast %1286 : vector<1x12xf32> to vector<2x12xf32>
    %1289 = arith.mulf %1287, %1288 : vector<2x12xf32>
    %1290 = vector.extract_strided_slice %1284 {offsets = [0, 1], sizes = [2, 1], strides = [1, 1]} : vector<2x4xf32> to vector<2x1xf32>
    %1291 = vector.extract_strided_slice %11 {offsets = [1, 0], sizes = [1, 12], strides = [1, 1]} : vector<4x12xf32> to vector<1x12xf32>
    %1292 = vector.broadcast %1290 : vector<2x1xf32> to vector<2x12xf32>
    %1293 = vector.broadcast %1291 : vector<1x12xf32> to vector<2x12xf32>
    %1294 = arith.mulf %1292, %1293 : vector<2x12xf32>
    %1295 = arith.addf %1289, %1294 : vector<2x12xf32>
    %1296 = vector.extract_strided_slice %1284 {offsets = [0, 2], sizes = [2, 1], strides = [1, 1]} : vector<2x4xf32> to vector<2x1xf32>
    %1297 = vector.extract_strided_slice %11 {offsets = [2, 0], sizes = [1, 12], strides = [1, 1]} : vector<4x12xf32> to vector<1x12xf32>
    %1298 = vector.broadcast %1296 : vector<2x1xf32> to vector<2x12xf32>
    %1299 = vector.broadcast %1297 : vector<1x12xf32> to vector<2x12xf32>
    %1300 = arith.mulf %1298, %1299 : vector<2x12xf32>
    %1301 = arith.addf %1295, %1300 : vector<2x12xf32>
    %1302 = vector.extract_strided_slice %1284 {offsets = [0, 3], sizes = [2, 1], strides = [1, 1]} : vector<2x4xf32> to vector<2x1xf32>
    %1303 = vector.extract_strided_slice %11 {offsets = [3, 0], sizes = [1, 12], strides = [1, 1]} : vector<4x12xf32> to vector<1x12xf32>
    %1304 = vector.broadcast %1302 : vector<2x1xf32> to vector<2x12xf32>
    %1305 = vector.broadcast %1303 : vector<1x12xf32> to vector<2x12xf32>
    %1306 = arith.mulf %1304, %1305 : vector<2x12xf32>
    %1307 = arith.addf %1301, %1306 : vector<2x12xf32>
    %1308 = vector.broadcast %12 : vector<1x12xf32> to vector<2x12xf32>
    %1309 = arith.addf %1307, %1308 : vector<2x12xf32>
    %1310 = vector.extract_strided_slice %1206 {offsets = [0, 0], sizes = [2, 1], strides = [1, 1]} : vector<2x4xf32> to vector<2x1xf32>
    %1311 = vector.extract_strided_slice %13 {offsets = [0, 0], sizes = [1, 12], strides = [1, 1]} : vector<4x12xf32> to vector<1x12xf32>
    %1312 = vector.broadcast %1310 : vector<2x1xf32> to vector<2x12xf32>
    %1313 = vector.broadcast %1311 : vector<1x12xf32> to vector<2x12xf32>
    %1314 = arith.mulf %1312, %1313 : vector<2x12xf32>
    %1315 = vector.extract_strided_slice %1206 {offsets = [0, 1], sizes = [2, 1], strides = [1, 1]} : vector<2x4xf32> to vector<2x1xf32>
    %1316 = vector.extract_strided_slice %13 {offsets = [1, 0], sizes = [1, 12], strides = [1, 1]} : vector<4x12xf32> to vector<1x12xf32>
    %1317 = vector.broadcast %1315 : vector<2x1xf32> to vector<2x12xf32>
    %1318 = vector.broadcast %1316 : vector<1x12xf32> to vector<2x12xf32>
    %1319 = arith.mulf %1317, %1318 : vector<2x12xf32>
    %1320 = arith.addf %1314, %1319 : vector<2x12xf32>
    %1321 = vector.extract_strided_slice %1206 {offsets = [0, 2], sizes = [2, 1], strides = [1, 1]} : vector<2x4xf32> to vector<2x1xf32>
    %1322 = vector.extract_strided_slice %13 {offsets = [2, 0], sizes = [1, 12], strides = [1, 1]} : vector<4x12xf32> to vector<1x12xf32>
    %1323 = vector.broadcast %1321 : vector<2x1xf32> to vector<2x12xf32>
    %1324 = vector.broadcast %1322 : vector<1x12xf32> to vector<2x12xf32>
    %1325 = arith.mulf %1323, %1324 : vector<2x12xf32>
    %1326 = arith.addf %1320, %1325 : vector<2x12xf32>
    %1327 = vector.extract_strided_slice %1206 {offsets = [0, 3], sizes = [2, 1], strides = [1, 1]} : vector<2x4xf32> to vector<2x1xf32>
    %1328 = vector.extract_strided_slice %13 {offsets = [3, 0], sizes = [1, 12], strides = [1, 1]} : vector<4x12xf32> to vector<1x12xf32>
    %1329 = vector.broadcast %1327 : vector<2x1xf32> to vector<2x12xf32>
    %1330 = vector.broadcast %1328 : vector<1x12xf32> to vector<2x12xf32>
    %1331 = arith.mulf %1329, %1330 : vector<2x12xf32>
    %1332 = arith.addf %1326, %1331 : vector<2x12xf32>
    %1333 = vector.broadcast %14 : vector<1x12xf32> to vector<2x12xf32>
    %1334 = arith.addf %1332, %1333 : vector<2x12xf32>
    %1335 = vector.extract_strided_slice %1309 {offsets = [0, 0], sizes = [2, 4], strides = [1, 1]} : vector<2x12xf32> to vector<2x4xf32>
    %1336 = vector.extract_strided_slice %1334 {offsets = [0, 0], sizes = [2, 4], strides = [1, 1]} : vector<2x12xf32> to vector<2x4xf32>
    %1337 = arith.addf %1335, %1336 : vector<2x4xf32>
    %1338 = arith.negf %1337 : vector<2x4xf32>
    %1339 = math.exp %1338 : vector<2x4xf32>
    %cst_158 = arith.constant 1.000000e+00 : f32
    %1340 = vector.broadcast %cst_158 : f32 to vector<2x4xf32>
    %1341 = arith.addf %1340, %1339 : vector<2x4xf32>
    %1342 = arith.divf %1340, %1341 : vector<2x4xf32>
    %1343 = vector.extract_strided_slice %1309 {offsets = [0, 4], sizes = [2, 4], strides = [1, 1]} : vector<2x12xf32> to vector<2x4xf32>
    %1344 = vector.extract_strided_slice %1334 {offsets = [0, 4], sizes = [2, 4], strides = [1, 1]} : vector<2x12xf32> to vector<2x4xf32>
    %1345 = arith.addf %1343, %1344 : vector<2x4xf32>
    %1346 = arith.negf %1345 : vector<2x4xf32>
    %1347 = math.exp %1346 : vector<2x4xf32>
    %cst_159 = arith.constant 1.000000e+00 : f32
    %1348 = vector.broadcast %cst_159 : f32 to vector<2x4xf32>
    %1349 = arith.addf %1348, %1347 : vector<2x4xf32>
    %1350 = arith.divf %1348, %1349 : vector<2x4xf32>
    %1351 = vector.extract_strided_slice %1309 {offsets = [0, 8], sizes = [2, 4], strides = [1, 1]} : vector<2x12xf32> to vector<2x4xf32>
    %1352 = vector.extract_strided_slice %1334 {offsets = [0, 8], sizes = [2, 4], strides = [1, 1]} : vector<2x12xf32> to vector<2x4xf32>
    %1353 = arith.mulf %1342, %1352 : vector<2x4xf32>
    %1354 = arith.addf %1351, %1353 : vector<2x4xf32>
    %1355 = math.tanh %1354 : vector<2x4xf32>
    %cst_160 = arith.constant 1.000000e+00 : f32
    %1356 = vector.broadcast %cst_160 : f32 to vector<2x4xf32>
    %1357 = arith.subf %1356, %1350 : vector<2x4xf32>
    %1358 = arith.mulf %1357, %1355 : vector<2x4xf32>
    %1359 = arith.mulf %1350, %1206 : vector<2x4xf32>
    %1360 = arith.addf %1358, %1359 : vector<2x4xf32>
    %1361 = vector.extract_strided_slice %1360 {offsets = [0, 0], sizes = [2, 1], strides = [1, 1]} : vector<2x4xf32> to vector<2x1xf32>
    %1362 = vector.extract_strided_slice %15 {offsets = [0, 0], sizes = [1, 128], strides = [1, 1]} : vector<4x128xf32> to vector<1x128xf32>
    %1363 = vector.broadcast %1361 : vector<2x1xf32> to vector<2x128xf32>
    %1364 = vector.broadcast %1362 : vector<1x128xf32> to vector<2x128xf32>
    %1365 = arith.mulf %1363, %1364 : vector<2x128xf32>
    %1366 = vector.extract_strided_slice %1360 {offsets = [0, 1], sizes = [2, 1], strides = [1, 1]} : vector<2x4xf32> to vector<2x1xf32>
    %1367 = vector.extract_strided_slice %15 {offsets = [1, 0], sizes = [1, 128], strides = [1, 1]} : vector<4x128xf32> to vector<1x128xf32>
    %1368 = vector.broadcast %1366 : vector<2x1xf32> to vector<2x128xf32>
    %1369 = vector.broadcast %1367 : vector<1x128xf32> to vector<2x128xf32>
    %1370 = arith.mulf %1368, %1369 : vector<2x128xf32>
    %1371 = arith.addf %1365, %1370 : vector<2x128xf32>
    %1372 = vector.extract_strided_slice %1360 {offsets = [0, 2], sizes = [2, 1], strides = [1, 1]} : vector<2x4xf32> to vector<2x1xf32>
    %1373 = vector.extract_strided_slice %15 {offsets = [2, 0], sizes = [1, 128], strides = [1, 1]} : vector<4x128xf32> to vector<1x128xf32>
    %1374 = vector.broadcast %1372 : vector<2x1xf32> to vector<2x128xf32>
    %1375 = vector.broadcast %1373 : vector<1x128xf32> to vector<2x128xf32>
    %1376 = arith.mulf %1374, %1375 : vector<2x128xf32>
    %1377 = arith.addf %1371, %1376 : vector<2x128xf32>
    %1378 = vector.extract_strided_slice %1360 {offsets = [0, 3], sizes = [2, 1], strides = [1, 1]} : vector<2x4xf32> to vector<2x1xf32>
    %1379 = vector.extract_strided_slice %15 {offsets = [3, 0], sizes = [1, 128], strides = [1, 1]} : vector<4x128xf32> to vector<1x128xf32>
    %1380 = vector.broadcast %1378 : vector<2x1xf32> to vector<2x128xf32>
    %1381 = vector.broadcast %1379 : vector<1x128xf32> to vector<2x128xf32>
    %1382 = arith.mulf %1380, %1381 : vector<2x128xf32>
    %1383 = arith.addf %1377, %1382 : vector<2x128xf32>
    %1384 = vector.broadcast %16 : vector<1x128xf32> to vector<2x128xf32>
    %1385 = arith.addf %1383, %1384 : vector<2x128xf32>
    %c10 = arith.constant 10 : index
    %c0_161 = arith.constant 0 : index
    %1386 = vector.load %arg18[%c10, %c0_161] : memref<16x128xf32, #tpu.memory_space<vmem>>, vector<2x128xf32>
    tpu.vector_store %arg18[%c10, %c0_161], %1385 {strides = array<i32>} : memref<16x128xf32, #tpu.memory_space<vmem>>, vector<2x128xf32>,
    %1387 = vector.extract_strided_slice %460 {offsets = [12, 0], sizes = [2, 12], strides = [1, 1]} : vector<16x12xf32> to vector<2x12xf32>
    %1388 = vector.extract_strided_slice %1284 {offsets = [0, 0], sizes = [2, 1], strides = [1, 1]} : vector<2x4xf32> to vector<2x1xf32>
    %1389 = vector.extract_strided_slice %9 {offsets = [0, 0], sizes = [1, 12], strides = [1, 1]} : vector<4x12xf32> to vector<1x12xf32>
    %1390 = vector.broadcast %1388 : vector<2x1xf32> to vector<2x12xf32>
    %1391 = vector.broadcast %1389 : vector<1x12xf32> to vector<2x12xf32>
    %1392 = arith.mulf %1390, %1391 : vector<2x12xf32>
    %1393 = vector.extract_strided_slice %1284 {offsets = [0, 1], sizes = [2, 1], strides = [1, 1]} : vector<2x4xf32> to vector<2x1xf32>
    %1394 = vector.extract_strided_slice %9 {offsets = [1, 0], sizes = [1, 12], strides = [1, 1]} : vector<4x12xf32> to vector<1x12xf32>
    %1395 = vector.broadcast %1393 : vector<2x1xf32> to vector<2x12xf32>
    %1396 = vector.broadcast %1394 : vector<1x12xf32> to vector<2x12xf32>
    %1397 = arith.mulf %1395, %1396 : vector<2x12xf32>
    %1398 = arith.addf %1392, %1397 : vector<2x12xf32>
    %1399 = vector.extract_strided_slice %1284 {offsets = [0, 2], sizes = [2, 1], strides = [1, 1]} : vector<2x4xf32> to vector<2x1xf32>
    %1400 = vector.extract_strided_slice %9 {offsets = [2, 0], sizes = [1, 12], strides = [1, 1]} : vector<4x12xf32> to vector<1x12xf32>
    %1401 = vector.broadcast %1399 : vector<2x1xf32> to vector<2x12xf32>
    %1402 = vector.broadcast %1400 : vector<1x12xf32> to vector<2x12xf32>
    %1403 = arith.mulf %1401, %1402 : vector<2x12xf32>
    %1404 = arith.addf %1398, %1403 : vector<2x12xf32>
    %1405 = vector.extract_strided_slice %1284 {offsets = [0, 3], sizes = [2, 1], strides = [1, 1]} : vector<2x4xf32> to vector<2x1xf32>
    %1406 = vector.extract_strided_slice %9 {offsets = [3, 0], sizes = [1, 12], strides = [1, 1]} : vector<4x12xf32> to vector<1x12xf32>
    %1407 = vector.broadcast %1405 : vector<2x1xf32> to vector<2x12xf32>
    %1408 = vector.broadcast %1406 : vector<1x12xf32> to vector<2x12xf32>
    %1409 = arith.mulf %1407, %1408 : vector<2x12xf32>
    %1410 = arith.addf %1404, %1409 : vector<2x12xf32>
    %1411 = vector.broadcast %10 : vector<1x12xf32> to vector<2x12xf32>
    %1412 = arith.addf %1410, %1411 : vector<2x12xf32>
    %1413 = vector.extract_strided_slice %1387 {offsets = [0, 0], sizes = [2, 4], strides = [1, 1]} : vector<2x12xf32> to vector<2x4xf32>
    %1414 = vector.extract_strided_slice %1412 {offsets = [0, 0], sizes = [2, 4], strides = [1, 1]} : vector<2x12xf32> to vector<2x4xf32>
    %1415 = arith.addf %1413, %1414 : vector<2x4xf32>
    %1416 = arith.negf %1415 : vector<2x4xf32>
    %1417 = math.exp %1416 : vector<2x4xf32>
    %cst_162 = arith.constant 1.000000e+00 : f32
    %1418 = vector.broadcast %cst_162 : f32 to vector<2x4xf32>
    %1419 = arith.addf %1418, %1417 : vector<2x4xf32>
    %1420 = arith.divf %1418, %1419 : vector<2x4xf32>
    %1421 = vector.extract_strided_slice %1387 {offsets = [0, 4], sizes = [2, 4], strides = [1, 1]} : vector<2x12xf32> to vector<2x4xf32>
    %1422 = vector.extract_strided_slice %1412 {offsets = [0, 4], sizes = [2, 4], strides = [1, 1]} : vector<2x12xf32> to vector<2x4xf32>
    %1423 = arith.addf %1421, %1422 : vector<2x4xf32>
    %1424 = arith.negf %1423 : vector<2x4xf32>
    %1425 = math.exp %1424 : vector<2x4xf32>
    %cst_163 = arith.constant 1.000000e+00 : f32
    %1426 = vector.broadcast %cst_163 : f32 to vector<2x4xf32>
    %1427 = arith.addf %1426, %1425 : vector<2x4xf32>
    %1428 = arith.divf %1426, %1427 : vector<2x4xf32>
    %1429 = vector.extract_strided_slice %1387 {offsets = [0, 8], sizes = [2, 4], strides = [1, 1]} : vector<2x12xf32> to vector<2x4xf32>
    %1430 = vector.extract_strided_slice %1412 {offsets = [0, 8], sizes = [2, 4], strides = [1, 1]} : vector<2x12xf32> to vector<2x4xf32>
    %1431 = arith.mulf %1420, %1430 : vector<2x4xf32>
    %1432 = arith.addf %1429, %1431 : vector<2x4xf32>
    %1433 = math.tanh %1432 : vector<2x4xf32>
    %cst_164 = arith.constant 1.000000e+00 : f32
    %1434 = vector.broadcast %cst_164 : f32 to vector<2x4xf32>
    %1435 = arith.subf %1434, %1428 : vector<2x4xf32>
    %1436 = arith.mulf %1435, %1433 : vector<2x4xf32>
    %1437 = arith.mulf %1428, %1284 : vector<2x4xf32>
    %1438 = arith.addf %1436, %1437 : vector<2x4xf32>
    %1439 = vector.extract_strided_slice %1438 {offsets = [0, 0], sizes = [2, 1], strides = [1, 1]} : vector<2x4xf32> to vector<2x1xf32>
    %1440 = vector.extract_strided_slice %11 {offsets = [0, 0], sizes = [1, 12], strides = [1, 1]} : vector<4x12xf32> to vector<1x12xf32>
    %1441 = vector.broadcast %1439 : vector<2x1xf32> to vector<2x12xf32>
    %1442 = vector.broadcast %1440 : vector<1x12xf32> to vector<2x12xf32>
    %1443 = arith.mulf %1441, %1442 : vector<2x12xf32>
    %1444 = vector.extract_strided_slice %1438 {offsets = [0, 1], sizes = [2, 1], strides = [1, 1]} : vector<2x4xf32> to vector<2x1xf32>
    %1445 = vector.extract_strided_slice %11 {offsets = [1, 0], sizes = [1, 12], strides = [1, 1]} : vector<4x12xf32> to vector<1x12xf32>
    %1446 = vector.broadcast %1444 : vector<2x1xf32> to vector<2x12xf32>
    %1447 = vector.broadcast %1445 : vector<1x12xf32> to vector<2x12xf32>
    %1448 = arith.mulf %1446, %1447 : vector<2x12xf32>
    %1449 = arith.addf %1443, %1448 : vector<2x12xf32>
    %1450 = vector.extract_strided_slice %1438 {offsets = [0, 2], sizes = [2, 1], strides = [1, 1]} : vector<2x4xf32> to vector<2x1xf32>
    %1451 = vector.extract_strided_slice %11 {offsets = [2, 0], sizes = [1, 12], strides = [1, 1]} : vector<4x12xf32> to vector<1x12xf32>
    %1452 = vector.broadcast %1450 : vector<2x1xf32> to vector<2x12xf32>
    %1453 = vector.broadcast %1451 : vector<1x12xf32> to vector<2x12xf32>
    %1454 = arith.mulf %1452, %1453 : vector<2x12xf32>
    %1455 = arith.addf %1449, %1454 : vector<2x12xf32>
    %1456 = vector.extract_strided_slice %1438 {offsets = [0, 3], sizes = [2, 1], strides = [1, 1]} : vector<2x4xf32> to vector<2x1xf32>
    %1457 = vector.extract_strided_slice %11 {offsets = [3, 0], sizes = [1, 12], strides = [1, 1]} : vector<4x12xf32> to vector<1x12xf32>
    %1458 = vector.broadcast %1456 : vector<2x1xf32> to vector<2x12xf32>
    %1459 = vector.broadcast %1457 : vector<1x12xf32> to vector<2x12xf32>
    %1460 = arith.mulf %1458, %1459 : vector<2x12xf32>
    %1461 = arith.addf %1455, %1460 : vector<2x12xf32>
    %1462 = vector.broadcast %12 : vector<1x12xf32> to vector<2x12xf32>
    %1463 = arith.addf %1461, %1462 : vector<2x12xf32>
    %1464 = vector.extract_strided_slice %1360 {offsets = [0, 0], sizes = [2, 1], strides = [1, 1]} : vector<2x4xf32> to vector<2x1xf32>
    %1465 = vector.extract_strided_slice %13 {offsets = [0, 0], sizes = [1, 12], strides = [1, 1]} : vector<4x12xf32> to vector<1x12xf32>
    %1466 = vector.broadcast %1464 : vector<2x1xf32> to vector<2x12xf32>
    %1467 = vector.broadcast %1465 : vector<1x12xf32> to vector<2x12xf32>
    %1468 = arith.mulf %1466, %1467 : vector<2x12xf32>
    %1469 = vector.extract_strided_slice %1360 {offsets = [0, 1], sizes = [2, 1], strides = [1, 1]} : vector<2x4xf32> to vector<2x1xf32>
    %1470 = vector.extract_strided_slice %13 {offsets = [1, 0], sizes = [1, 12], strides = [1, 1]} : vector<4x12xf32> to vector<1x12xf32>
    %1471 = vector.broadcast %1469 : vector<2x1xf32> to vector<2x12xf32>
    %1472 = vector.broadcast %1470 : vector<1x12xf32> to vector<2x12xf32>
    %1473 = arith.mulf %1471, %1472 : vector<2x12xf32>
    %1474 = arith.addf %1468, %1473 : vector<2x12xf32>
    %1475 = vector.extract_strided_slice %1360 {offsets = [0, 2], sizes = [2, 1], strides = [1, 1]} : vector<2x4xf32> to vector<2x1xf32>
    %1476 = vector.extract_strided_slice %13 {offsets = [2, 0], sizes = [1, 12], strides = [1, 1]} : vector<4x12xf32> to vector<1x12xf32>
    %1477 = vector.broadcast %1475 : vector<2x1xf32> to vector<2x12xf32>
    %1478 = vector.broadcast %1476 : vector<1x12xf32> to vector<2x12xf32>
    %1479 = arith.mulf %1477, %1478 : vector<2x12xf32>
    %1480 = arith.addf %1474, %1479 : vector<2x12xf32>
    %1481 = vector.extract_strided_slice %1360 {offsets = [0, 3], sizes = [2, 1], strides = [1, 1]} : vector<2x4xf32> to vector<2x1xf32>
    %1482 = vector.extract_strided_slice %13 {offsets = [3, 0], sizes = [1, 12], strides = [1, 1]} : vector<4x12xf32> to vector<1x12xf32>
    %1483 = vector.broadcast %1481 : vector<2x1xf32> to vector<2x12xf32>
    %1484 = vector.broadcast %1482 : vector<1x12xf32> to vector<2x12xf32>
    %1485 = arith.mulf %1483, %1484 : vector<2x12xf32>
    %1486 = arith.addf %1480, %1485 : vector<2x12xf32>
    %1487 = vector.broadcast %14 : vector<1x12xf32> to vector<2x12xf32>
    %1488 = arith.addf %1486, %1487 : vector<2x12xf32>
    %1489 = vector.extract_strided_slice %1463 {offsets = [0, 0], sizes = [2, 4], strides = [1, 1]} : vector<2x12xf32> to vector<2x4xf32>
    %1490 = vector.extract_strided_slice %1488 {offsets = [0, 0], sizes = [2, 4], strides = [1, 1]} : vector<2x12xf32> to vector<2x4xf32>
    %1491 = arith.addf %1489, %1490 : vector<2x4xf32>
    %1492 = arith.negf %1491 : vector<2x4xf32>
    %1493 = math.exp %1492 : vector<2x4xf32>
    %cst_165 = arith.constant 1.000000e+00 : f32
    %1494 = vector.broadcast %cst_165 : f32 to vector<2x4xf32>
    %1495 = arith.addf %1494, %1493 : vector<2x4xf32>
    %1496 = arith.divf %1494, %1495 : vector<2x4xf32>
    %1497 = vector.extract_strided_slice %1463 {offsets = [0, 4], sizes = [2, 4], strides = [1, 1]} : vector<2x12xf32> to vector<2x4xf32>
    %1498 = vector.extract_strided_slice %1488 {offsets = [0, 4], sizes = [2, 4], strides = [1, 1]} : vector<2x12xf32> to vector<2x4xf32>
    %1499 = arith.addf %1497, %1498 : vector<2x4xf32>
    %1500 = arith.negf %1499 : vector<2x4xf32>
    %1501 = math.exp %1500 : vector<2x4xf32>
    %cst_166 = arith.constant 1.000000e+00 : f32
    %1502 = vector.broadcast %cst_166 : f32 to vector<2x4xf32>
    %1503 = arith.addf %1502, %1501 : vector<2x4xf32>
    %1504 = arith.divf %1502, %1503 : vector<2x4xf32>
    %1505 = vector.extract_strided_slice %1463 {offsets = [0, 8], sizes = [2, 4], strides = [1, 1]} : vector<2x12xf32> to vector<2x4xf32>
    %1506 = vector.extract_strided_slice %1488 {offsets = [0, 8], sizes = [2, 4], strides = [1, 1]} : vector<2x12xf32> to vector<2x4xf32>
    %1507 = arith.mulf %1496, %1506 : vector<2x4xf32>
    %1508 = arith.addf %1505, %1507 : vector<2x4xf32>
    %1509 = math.tanh %1508 : vector<2x4xf32>
    %cst_167 = arith.constant 1.000000e+00 : f32
    %1510 = vector.broadcast %cst_167 : f32 to vector<2x4xf32>
    %1511 = arith.subf %1510, %1504 : vector<2x4xf32>
    %1512 = arith.mulf %1511, %1509 : vector<2x4xf32>
    %1513 = arith.mulf %1504, %1360 : vector<2x4xf32>
    %1514 = arith.addf %1512, %1513 : vector<2x4xf32>
    %1515 = vector.extract_strided_slice %1514 {offsets = [0, 0], sizes = [2, 1], strides = [1, 1]} : vector<2x4xf32> to vector<2x1xf32>
    %1516 = vector.extract_strided_slice %15 {offsets = [0, 0], sizes = [1, 128], strides = [1, 1]} : vector<4x128xf32> to vector<1x128xf32>
    %1517 = vector.broadcast %1515 : vector<2x1xf32> to vector<2x128xf32>
    %1518 = vector.broadcast %1516 : vector<1x128xf32> to vector<2x128xf32>
    %1519 = arith.mulf %1517, %1518 : vector<2x128xf32>
    %1520 = vector.extract_strided_slice %1514 {offsets = [0, 1], sizes = [2, 1], strides = [1, 1]} : vector<2x4xf32> to vector<2x1xf32>
    %1521 = vector.extract_strided_slice %15 {offsets = [1, 0], sizes = [1, 128], strides = [1, 1]} : vector<4x128xf32> to vector<1x128xf32>
    %1522 = vector.broadcast %1520 : vector<2x1xf32> to vector<2x128xf32>
    %1523 = vector.broadcast %1521 : vector<1x128xf32> to vector<2x128xf32>
    %1524 = arith.mulf %1522, %1523 : vector<2x128xf32>
    %1525 = arith.addf %1519, %1524 : vector<2x128xf32>
    %1526 = vector.extract_strided_slice %1514 {offsets = [0, 2], sizes = [2, 1], strides = [1, 1]} : vector<2x4xf32> to vector<2x1xf32>
    %1527 = vector.extract_strided_slice %15 {offsets = [2, 0], sizes = [1, 128], strides = [1, 1]} : vector<4x128xf32> to vector<1x128xf32>
    %1528 = vector.broadcast %1526 : vector<2x1xf32> to vector<2x128xf32>
    %1529 = vector.broadcast %1527 : vector<1x128xf32> to vector<2x128xf32>
    %1530 = arith.mulf %1528, %1529 : vector<2x128xf32>
    %1531 = arith.addf %1525, %1530 : vector<2x128xf32>
    %1532 = vector.extract_strided_slice %1514 {offsets = [0, 3], sizes = [2, 1], strides = [1, 1]} : vector<2x4xf32> to vector<2x1xf32>
    %1533 = vector.extract_strided_slice %15 {offsets = [3, 0], sizes = [1, 128], strides = [1, 1]} : vector<4x128xf32> to vector<1x128xf32>
    %1534 = vector.broadcast %1532 : vector<2x1xf32> to vector<2x128xf32>
    %1535 = vector.broadcast %1533 : vector<1x128xf32> to vector<2x128xf32>
    %1536 = arith.mulf %1534, %1535 : vector<2x128xf32>
    %1537 = arith.addf %1531, %1536 : vector<2x128xf32>
    %1538 = vector.broadcast %16 : vector<1x128xf32> to vector<2x128xf32>
    %1539 = arith.addf %1537, %1538 : vector<2x128xf32>
    %c12 = arith.constant 12 : index
    %c0_168 = arith.constant 0 : index
    %1540 = vector.load %arg18[%c12, %c0_168] : memref<16x128xf32, #tpu.memory_space<vmem>>, vector<2x128xf32>
    tpu.vector_store %arg18[%c12, %c0_168], %1539 {strides = array<i32>} : memref<16x128xf32, #tpu.memory_space<vmem>>, vector<2x128xf32>,
    %1541 = vector.extract_strided_slice %460 {offsets = [14, 0], sizes = [2, 12], strides = [1, 1]} : vector<16x12xf32> to vector<2x12xf32>
    %1542 = vector.extract_strided_slice %1438 {offsets = [0, 0], sizes = [2, 1], strides = [1, 1]} : vector<2x4xf32> to vector<2x1xf32>
    %1543 = vector.extract_strided_slice %9 {offsets = [0, 0], sizes = [1, 12], strides = [1, 1]} : vector<4x12xf32> to vector<1x12xf32>
    %1544 = vector.broadcast %1542 : vector<2x1xf32> to vector<2x12xf32>
    %1545 = vector.broadcast %1543 : vector<1x12xf32> to vector<2x12xf32>
    %1546 = arith.mulf %1544, %1545 : vector<2x12xf32>
    %1547 = vector.extract_strided_slice %1438 {offsets = [0, 1], sizes = [2, 1], strides = [1, 1]} : vector<2x4xf32> to vector<2x1xf32>
    %1548 = vector.extract_strided_slice %9 {offsets = [1, 0], sizes = [1, 12], strides = [1, 1]} : vector<4x12xf32> to vector<1x12xf32>
    %1549 = vector.broadcast %1547 : vector<2x1xf32> to vector<2x12xf32>
    %1550 = vector.broadcast %1548 : vector<1x12xf32> to vector<2x12xf32>
    %1551 = arith.mulf %1549, %1550 : vector<2x12xf32>
    %1552 = arith.addf %1546, %1551 : vector<2x12xf32>
    %1553 = vector.extract_strided_slice %1438 {offsets = [0, 2], sizes = [2, 1], strides = [1, 1]} : vector<2x4xf32> to vector<2x1xf32>
    %1554 = vector.extract_strided_slice %9 {offsets = [2, 0], sizes = [1, 12], strides = [1, 1]} : vector<4x12xf32> to vector<1x12xf32>
    %1555 = vector.broadcast %1553 : vector<2x1xf32> to vector<2x12xf32>
    %1556 = vector.broadcast %1554 : vector<1x12xf32> to vector<2x12xf32>
    %1557 = arith.mulf %1555, %1556 : vector<2x12xf32>
    %1558 = arith.addf %1552, %1557 : vector<2x12xf32>
    %1559 = vector.extract_strided_slice %1438 {offsets = [0, 3], sizes = [2, 1], strides = [1, 1]} : vector<2x4xf32> to vector<2x1xf32>
    %1560 = vector.extract_strided_slice %9 {offsets = [3, 0], sizes = [1, 12], strides = [1, 1]} : vector<4x12xf32> to vector<1x12xf32>
    %1561 = vector.broadcast %1559 : vector<2x1xf32> to vector<2x12xf32>
    %1562 = vector.broadcast %1560 : vector<1x12xf32> to vector<2x12xf32>
    %1563 = arith.mulf %1561, %1562 : vector<2x12xf32>
    %1564 = arith.addf %1558, %1563 : vector<2x12xf32>
    %1565 = vector.broadcast %10 : vector<1x12xf32> to vector<2x12xf32>
    %1566 = arith.addf %1564, %1565 : vector<2x12xf32>
    %1567 = vector.extract_strided_slice %1541 {offsets = [0, 0], sizes = [2, 4], strides = [1, 1]} : vector<2x12xf32> to vector<2x4xf32>
    %1568 = vector.extract_strided_slice %1566 {offsets = [0, 0], sizes = [2, 4], strides = [1, 1]} : vector<2x12xf32> to vector<2x4xf32>
    %1569 = arith.addf %1567, %1568 : vector<2x4xf32>
    %1570 = arith.negf %1569 : vector<2x4xf32>
    %1571 = math.exp %1570 : vector<2x4xf32>
    %cst_169 = arith.constant 1.000000e+00 : f32
    %1572 = vector.broadcast %cst_169 : f32 to vector<2x4xf32>
    %1573 = arith.addf %1572, %1571 : vector<2x4xf32>
    %1574 = arith.divf %1572, %1573 : vector<2x4xf32>
    %1575 = vector.extract_strided_slice %1541 {offsets = [0, 4], sizes = [2, 4], strides = [1, 1]} : vector<2x12xf32> to vector<2x4xf32>
    %1576 = vector.extract_strided_slice %1566 {offsets = [0, 4], sizes = [2, 4], strides = [1, 1]} : vector<2x12xf32> to vector<2x4xf32>
    %1577 = arith.addf %1575, %1576 : vector<2x4xf32>
    %1578 = arith.negf %1577 : vector<2x4xf32>
    %1579 = math.exp %1578 : vector<2x4xf32>
    %cst_170 = arith.constant 1.000000e+00 : f32
    %1580 = vector.broadcast %cst_170 : f32 to vector<2x4xf32>
    %1581 = arith.addf %1580, %1579 : vector<2x4xf32>
    %1582 = arith.divf %1580, %1581 : vector<2x4xf32>
    %1583 = vector.extract_strided_slice %1541 {offsets = [0, 8], sizes = [2, 4], strides = [1, 1]} : vector<2x12xf32> to vector<2x4xf32>
    %1584 = vector.extract_strided_slice %1566 {offsets = [0, 8], sizes = [2, 4], strides = [1, 1]} : vector<2x12xf32> to vector<2x4xf32>
    %1585 = arith.mulf %1574, %1584 : vector<2x4xf32>
    %1586 = arith.addf %1583, %1585 : vector<2x4xf32>
    %1587 = math.tanh %1586 : vector<2x4xf32>
    %cst_171 = arith.constant 1.000000e+00 : f32
    %1588 = vector.broadcast %cst_171 : f32 to vector<2x4xf32>
    %1589 = arith.subf %1588, %1582 : vector<2x4xf32>
    %1590 = arith.mulf %1589, %1587 : vector<2x4xf32>
    %1591 = arith.mulf %1582, %1438 : vector<2x4xf32>
    %1592 = arith.addf %1590, %1591 : vector<2x4xf32>
    %1593 = vector.extract_strided_slice %1592 {offsets = [0, 0], sizes = [2, 1], strides = [1, 1]} : vector<2x4xf32> to vector<2x1xf32>
    %1594 = vector.extract_strided_slice %11 {offsets = [0, 0], sizes = [1, 12], strides = [1, 1]} : vector<4x12xf32> to vector<1x12xf32>
    %1595 = vector.broadcast %1593 : vector<2x1xf32> to vector<2x12xf32>
    %1596 = vector.broadcast %1594 : vector<1x12xf32> to vector<2x12xf32>
    %1597 = arith.mulf %1595, %1596 : vector<2x12xf32>
    %1598 = vector.extract_strided_slice %1592 {offsets = [0, 1], sizes = [2, 1], strides = [1, 1]} : vector<2x4xf32> to vector<2x1xf32>
    %1599 = vector.extract_strided_slice %11 {offsets = [1, 0], sizes = [1, 12], strides = [1, 1]} : vector<4x12xf32> to vector<1x12xf32>
    %1600 = vector.broadcast %1598 : vector<2x1xf32> to vector<2x12xf32>
    %1601 = vector.broadcast %1599 : vector<1x12xf32> to vector<2x12xf32>
    %1602 = arith.mulf %1600, %1601 : vector<2x12xf32>
    %1603 = arith.addf %1597, %1602 : vector<2x12xf32>
    %1604 = vector.extract_strided_slice %1592 {offsets = [0, 2], sizes = [2, 1], strides = [1, 1]} : vector<2x4xf32> to vector<2x1xf32>
    %1605 = vector.extract_strided_slice %11 {offsets = [2, 0], sizes = [1, 12], strides = [1, 1]} : vector<4x12xf32> to vector<1x12xf32>
    %1606 = vector.broadcast %1604 : vector<2x1xf32> to vector<2x12xf32>
    %1607 = vector.broadcast %1605 : vector<1x12xf32> to vector<2x12xf32>
    %1608 = arith.mulf %1606, %1607 : vector<2x12xf32>
    %1609 = arith.addf %1603, %1608 : vector<2x12xf32>
    %1610 = vector.extract_strided_slice %1592 {offsets = [0, 3], sizes = [2, 1], strides = [1, 1]} : vector<2x4xf32> to vector<2x1xf32>
    %1611 = vector.extract_strided_slice %11 {offsets = [3, 0], sizes = [1, 12], strides = [1, 1]} : vector<4x12xf32> to vector<1x12xf32>
    %1612 = vector.broadcast %1610 : vector<2x1xf32> to vector<2x12xf32>
    %1613 = vector.broadcast %1611 : vector<1x12xf32> to vector<2x12xf32>
    %1614 = arith.mulf %1612, %1613 : vector<2x12xf32>
    %1615 = arith.addf %1609, %1614 : vector<2x12xf32>
    %1616 = vector.broadcast %12 : vector<1x12xf32> to vector<2x12xf32>
    %1617 = arith.addf %1615, %1616 : vector<2x12xf32>
    %1618 = vector.extract_strided_slice %1514 {offsets = [0, 0], sizes = [2, 1], strides = [1, 1]} : vector<2x4xf32> to vector<2x1xf32>
    %1619 = vector.extract_strided_slice %13 {offsets = [0, 0], sizes = [1, 12], strides = [1, 1]} : vector<4x12xf32> to vector<1x12xf32>
    %1620 = vector.broadcast %1618 : vector<2x1xf32> to vector<2x12xf32>
    %1621 = vector.broadcast %1619 : vector<1x12xf32> to vector<2x12xf32>
    %1622 = arith.mulf %1620, %1621 : vector<2x12xf32>
    %1623 = vector.extract_strided_slice %1514 {offsets = [0, 1], sizes = [2, 1], strides = [1, 1]} : vector<2x4xf32> to vector<2x1xf32>
    %1624 = vector.extract_strided_slice %13 {offsets = [1, 0], sizes = [1, 12], strides = [1, 1]} : vector<4x12xf32> to vector<1x12xf32>
    %1625 = vector.broadcast %1623 : vector<2x1xf32> to vector<2x12xf32>
    %1626 = vector.broadcast %1624 : vector<1x12xf32> to vector<2x12xf32>
    %1627 = arith.mulf %1625, %1626 : vector<2x12xf32>
    %1628 = arith.addf %1622, %1627 : vector<2x12xf32>
    %1629 = vector.extract_strided_slice %1514 {offsets = [0, 2], sizes = [2, 1], strides = [1, 1]} : vector<2x4xf32> to vector<2x1xf32>
    %1630 = vector.extract_strided_slice %13 {offsets = [2, 0], sizes = [1, 12], strides = [1, 1]} : vector<4x12xf32> to vector<1x12xf32>
    %1631 = vector.broadcast %1629 : vector<2x1xf32> to vector<2x12xf32>
    %1632 = vector.broadcast %1630 : vector<1x12xf32> to vector<2x12xf32>
    %1633 = arith.mulf %1631, %1632 : vector<2x12xf32>
    %1634 = arith.addf %1628, %1633 : vector<2x12xf32>
    %1635 = vector.extract_strided_slice %1514 {offsets = [0, 3], sizes = [2, 1], strides = [1, 1]} : vector<2x4xf32> to vector<2x1xf32>
    %1636 = vector.extract_strided_slice %13 {offsets = [3, 0], sizes = [1, 12], strides = [1, 1]} : vector<4x12xf32> to vector<1x12xf32>
    %1637 = vector.broadcast %1635 : vector<2x1xf32> to vector<2x12xf32>
    %1638 = vector.broadcast %1636 : vector<1x12xf32> to vector<2x12xf32>
    %1639 = arith.mulf %1637, %1638 : vector<2x12xf32>
    %1640 = arith.addf %1634, %1639 : vector<2x12xf32>
    %1641 = vector.broadcast %14 : vector<1x12xf32> to vector<2x12xf32>
    %1642 = arith.addf %1640, %1641 : vector<2x12xf32>
    %1643 = vector.extract_strided_slice %1617 {offsets = [0, 0], sizes = [2, 4], strides = [1, 1]} : vector<2x12xf32> to vector<2x4xf32>
    %1644 = vector.extract_strided_slice %1642 {offsets = [0, 0], sizes = [2, 4], strides = [1, 1]} : vector<2x12xf32> to vector<2x4xf32>
    %1645 = arith.addf %1643, %1644 : vector<2x4xf32>
    %1646 = arith.negf %1645 : vector<2x4xf32>
    %1647 = math.exp %1646 : vector<2x4xf32>
    %cst_172 = arith.constant 1.000000e+00 : f32
    %1648 = vector.broadcast %cst_172 : f32 to vector<2x4xf32>
    %1649 = arith.addf %1648, %1647 : vector<2x4xf32>
    %1650 = arith.divf %1648, %1649 : vector<2x4xf32>
    %1651 = vector.extract_strided_slice %1617 {offsets = [0, 4], sizes = [2, 4], strides = [1, 1]} : vector<2x12xf32> to vector<2x4xf32>
    %1652 = vector.extract_strided_slice %1642 {offsets = [0, 4], sizes = [2, 4], strides = [1, 1]} : vector<2x12xf32> to vector<2x4xf32>
    %1653 = arith.addf %1651, %1652 : vector<2x4xf32>
    %1654 = arith.negf %1653 : vector<2x4xf32>
    %1655 = math.exp %1654 : vector<2x4xf32>
    %cst_173 = arith.constant 1.000000e+00 : f32
    %1656 = vector.broadcast %cst_173 : f32 to vector<2x4xf32>
    %1657 = arith.addf %1656, %1655 : vector<2x4xf32>
    %1658 = arith.divf %1656, %1657 : vector<2x4xf32>
    %1659 = vector.extract_strided_slice %1617 {offsets = [0, 8], sizes = [2, 4], strides = [1, 1]} : vector<2x12xf32> to vector<2x4xf32>
    %1660 = vector.extract_strided_slice %1642 {offsets = [0, 8], sizes = [2, 4], strides = [1, 1]} : vector<2x12xf32> to vector<2x4xf32>
    %1661 = arith.mulf %1650, %1660 : vector<2x4xf32>
    %1662 = arith.addf %1659, %1661 : vector<2x4xf32>
    %1663 = math.tanh %1662 : vector<2x4xf32>
    %cst_174 = arith.constant 1.000000e+00 : f32
    %1664 = vector.broadcast %cst_174 : f32 to vector<2x4xf32>
    %1665 = arith.subf %1664, %1658 : vector<2x4xf32>
    %1666 = arith.mulf %1665, %1663 : vector<2x4xf32>
    %1667 = arith.mulf %1658, %1514 : vector<2x4xf32>
    %1668 = arith.addf %1666, %1667 : vector<2x4xf32>
    %1669 = vector.extract_strided_slice %1668 {offsets = [0, 0], sizes = [2, 1], strides = [1, 1]} : vector<2x4xf32> to vector<2x1xf32>
    %1670 = vector.extract_strided_slice %15 {offsets = [0, 0], sizes = [1, 128], strides = [1, 1]} : vector<4x128xf32> to vector<1x128xf32>
    %1671 = vector.broadcast %1669 : vector<2x1xf32> to vector<2x128xf32>
    %1672 = vector.broadcast %1670 : vector<1x128xf32> to vector<2x128xf32>
    %1673 = arith.mulf %1671, %1672 : vector<2x128xf32>
    %1674 = vector.extract_strided_slice %1668 {offsets = [0, 1], sizes = [2, 1], strides = [1, 1]} : vector<2x4xf32> to vector<2x1xf32>
    %1675 = vector.extract_strided_slice %15 {offsets = [1, 0], sizes = [1, 128], strides = [1, 1]} : vector<4x128xf32> to vector<1x128xf32>
    %1676 = vector.broadcast %1674 : vector<2x1xf32> to vector<2x128xf32>
    %1677 = vector.broadcast %1675 : vector<1x128xf32> to vector<2x128xf32>
    %1678 = arith.mulf %1676, %1677 : vector<2x128xf32>
    %1679 = arith.addf %1673, %1678 : vector<2x128xf32>
    %1680 = vector.extract_strided_slice %1668 {offsets = [0, 2], sizes = [2, 1], strides = [1, 1]} : vector<2x4xf32> to vector<2x1xf32>
    %1681 = vector.extract_strided_slice %15 {offsets = [2, 0], sizes = [1, 128], strides = [1, 1]} : vector<4x128xf32> to vector<1x128xf32>
    %1682 = vector.broadcast %1680 : vector<2x1xf32> to vector<2x128xf32>
    %1683 = vector.broadcast %1681 : vector<1x128xf32> to vector<2x128xf32>
    %1684 = arith.mulf %1682, %1683 : vector<2x128xf32>
    %1685 = arith.addf %1679, %1684 : vector<2x128xf32>
    %1686 = vector.extract_strided_slice %1668 {offsets = [0, 3], sizes = [2, 1], strides = [1, 1]} : vector<2x4xf32> to vector<2x1xf32>
    %1687 = vector.extract_strided_slice %15 {offsets = [3, 0], sizes = [1, 128], strides = [1, 1]} : vector<4x128xf32> to vector<1x128xf32>
    %1688 = vector.broadcast %1686 : vector<2x1xf32> to vector<2x128xf32>
    %1689 = vector.broadcast %1687 : vector<1x128xf32> to vector<2x128xf32>
    %1690 = arith.mulf %1688, %1689 : vector<2x128xf32>
    %1691 = arith.addf %1685, %1690 : vector<2x128xf32>
    %1692 = vector.broadcast %16 : vector<1x128xf32> to vector<2x128xf32>
    %1693 = arith.addf %1691, %1692 : vector<2x128xf32>
    %c14 = arith.constant 14 : index
    %c0_175 = arith.constant 0 : index
    %1694 = vector.load %arg18[%c14, %c0_175] : memref<16x128xf32, #tpu.memory_space<vmem>>, vector<2x128xf32>
    tpu.vector_store %arg18[%c14, %c0_175], %1693 {strides = array<i32>} : memref<16x128xf32, #tpu.memory_space<vmem>>, vector<2x128xf32>,
    return
  }
  func.func @transform_0(%arg0: i32) -> (i32, i32) {
    %c0_i32 = arith.constant 0 : i32
    %c0_i32_0 = arith.constant 0 : i32
    %c0_i32_1 = arith.constant 0 : i32
    return %c0_i32, %c0_i32_0 : i32, i32
  }
  func.func @transform_1(%arg0: i32) -> (i32, i32) {
    %c0_i32 = arith.constant 0 : i32
    %c0_i32_0 = arith.constant 0 : i32
    %c0_i32_1 = arith.constant 0 : i32
    return %c0_i32, %c0_i32_0 : i32, i32
  }
  func.func @transform_2(%arg0: i32) -> (i32, i32) {
    %c0_i32 = arith.constant 0 : i32
    %c0_i32_0 = arith.constant 0 : i32
    %c0_i32_1 = arith.constant 0 : i32
    return %c0_i32, %c0_i32_0 : i32, i32
  }
  func.func @transform_3(%arg0: i32) -> (i32, i32) {
    %c0_i32 = arith.constant 0 : i32
    %c0_i32_0 = arith.constant 0 : i32
    %c0_i32_1 = arith.constant 0 : i32
    return %c0_i32, %c0_i32_0 : i32, i32
  }
  func.func @transform_4(%arg0: i32) -> (i32, i32) {
    %c0_i32 = arith.constant 0 : i32
    %c0_i32_0 = arith.constant 0 : i32
    %c0_i32_1 = arith.constant 0 : i32
    return %c0_i32, %c0_i32_0 : i32, i32
  }
  func.func @transform_5(%arg0: i32) -> (i32, i32) {
    %c0_i32 = arith.constant 0 : i32
    %c0_i32_0 = arith.constant 0 : i32
    %c0_i32_1 = arith.constant 0 : i32
    return %c0_i32, %c0_i32_0 : i32, i32
  }
  func.func @transform_6(%arg0: i32) -> (i32, i32) {
    %c0_i32 = arith.constant 0 : i32
    %c0_i32_0 = arith.constant 0 : i32
    %c0_i32_1 = arith.constant 0 : i32
    return %c0_i32, %c0_i32_0 : i32, i32
  }
  func.func @transform_7(%arg0: i32) -> (i32, i32) {
    %c0_i32 = arith.constant 0 : i32
    %c0_i32_0 = arith.constant 0 : i32
    %c0_i32_1 = arith.constant 0 : i32
    return %c0_i32, %c0_i32_0 : i32, i32
  }
  func.func @transform_8(%arg0: i32) -> (i32, i32) {
    %c0_i32 = arith.constant 0 : i32
    %c0_i32_0 = arith.constant 0 : i32
    %c0_i32_1 = arith.constant 0 : i32
    return %c0_i32, %c0_i32_0 : i32, i32
  }
  func.func @transform_9(%arg0: i32) -> (i32, i32) {
    %c0_i32 = arith.constant 0 : i32
    %c0_i32_0 = arith.constant 0 : i32
    %c0_i32_1 = arith.constant 0 : i32
    return %c0_i32, %c0_i32_0 : i32, i32
  }
  func.func @transform_10(%arg0: i32) -> (i32, i32) {
    %c0_i32 = arith.constant 0 : i32
    %c0_i32_0 = arith.constant 0 : i32
    %c0_i32_1 = arith.constant 0 : i32
    return %c0_i32, %c0_i32_0 : i32, i32
  }
  func.func @transform_11(%arg0: i32) -> (i32, i32) {
    %c0_i32 = arith.constant 0 : i32
    %c0_i32_0 = arith.constant 0 : i32
    %c0_i32_1 = arith.constant 0 : i32
    return %c0_i32, %c0_i32_0 : i32, i32
  }
  func.func @transform_12(%arg0: i32) -> (i32, i32) {
    %c0_i32 = arith.constant 0 : i32
    %c0_i32_0 = arith.constant 0 : i32
    %c0_i32_1 = arith.constant 0 : i32
    return %c0_i32, %c0_i32_0 : i32, i32
  }
  func.func @transform_13(%arg0: i32) -> (i32, i32) {
    %c0_i32 = arith.constant 0 : i32
    %c0_i32_0 = arith.constant 0 : i32
    %c0_i32_1 = arith.constant 0 : i32
    return %c0_i32, %c0_i32_0 : i32, i32
  }
  func.func @transform_14(%arg0: i32) -> (i32, i32) {
    %c0_i32 = arith.constant 0 : i32
    %c0_i32_0 = arith.constant 0 : i32
    %c0_i32_1 = arith.constant 0 : i32
    return %c0_i32, %c0_i32_0 : i32, i32
  }
  func.func @transform_15(%arg0: i32) -> (i32, i32) {
    %c0_i32 = arith.constant 0 : i32
    %c0_i32_0 = arith.constant 0 : i32
    %c0_i32_1 = arith.constant 0 : i32
    return %c0_i32, %c0_i32_0 : i32, i32
  }
  func.func @transform_16(%arg0: i32) -> (i32, i32) {
    %c0_i32 = arith.constant 0 : i32
    %c0_i32_0 = arith.constant 0 : i32
    %c0_i32_1 = arith.constant 0 : i32
    return %c0_i32, %c0_i32_0 : i32, i32
  }
  func.func @transform_17(%arg0: i32) -> (i32, i32) {
    %c0_i32 = arith.constant 0 : i32
    %c0_i32_0 = arith.constant 0 : i32
    %c0_i32_1 = arith.constant 0 : i32
    return %c0_i32, %c0_i32_0 : i32, i32
  }
}

</mosaic_0001>

<llo_original>
// kernel: crnn_forward.1
$region0: #{crnn_forward.1}
  #allocation0 [shape = 'u32[]', space=smem, size = 0x4, offset = 0x4, fixed_abs, tag = 'smem constant byte address 0x4 - core index']
  #allocation1 [shape = 'u32[144,128]{1,0:T(1,128)}', space=vmem, size = 0x12000, scoped, tag = 'internal scratch']
  %s0 = inlined_call_operand.vmem [shape: f32[16,21], index: 0, kind: input, shape index: {}]
  %s1 = inlined_call_operand.vmem [shape: f32[16,21], index: 1, kind: input, shape index: {}]
  %s2 = inlined_call_operand.vmem [shape: f32[1,128], index: 2, kind: input, shape index: {}]
  %s3 = inlined_call_operand.vmem [shape: f32[1,128], index: 3, kind: input, shape index: {}]
  %s4 = inlined_call_operand.vmem [shape: f32[1,128], index: 4, kind: input, shape index: {}]
  %s5 = inlined_call_operand.vmem [shape: f32[128,8], index: 5, kind: input, shape index: {}]
  %s6 = inlined_call_operand.vmem [shape: f32[1,8], index: 6, kind: input, shape index: {}]
  %s7 = inlined_call_operand.vmem [shape: f32[168,12], index: 7, kind: input, shape index: {}]
  %s8 = inlined_call_operand.vmem [shape: f32[1,12], index: 8, kind: input, shape index: {}]
  %s9 = inlined_call_operand.vmem [shape: f32[4,12], index: 9, kind: input, shape index: {}]
  %s10 = inlined_call_operand.vmem [shape: f32[1,12], index: 10, kind: input, shape index: {}]
  %s11 = inlined_call_operand.vmem [shape: f32[4,12], index: 11, kind: input, shape index: {}]
  %s12 = inlined_call_operand.vmem [shape: f32[1,12], index: 12, kind: input, shape index: {}]
  %s13 = inlined_call_operand.vmem [shape: f32[4,12], index: 13, kind: input, shape index: {}]
  %s14 = inlined_call_operand.vmem [shape: f32[1,12], index: 14, kind: input, shape index: {}]
  %s15 = inlined_call_operand.vmem [shape: f32[4,128], index: 15, kind: input, shape index: {}]
  %s16 = inlined_call_operand.vmem [shape: f32[1,128], index: 16, kind: input, shape index: {}]
  %s17 = inlined_call_operand.vmem [shape: f32[16,128], index: 17, kind: output, shape index: {}]
  %s18 = sld [smem:[#allocation0]]
  $region78: #{crnn_forward.1} parent=0
    _
  %s20 = ssub.s32 1, %s18
  %s21 = scalar_select 0, %s20, %s18
  // Predicated region
  $region2: #{crnn_forward.1} parent=0 // pred_check
    _
  $region3: #{crnn_forward.1} parent=0 // pred_check_branch
    %23 = sbr.rel (0) target = $region5
  $region4: #{crnn_forward.1} parent=0 // pred_region
    _
  $region5: #{crnn_forward.1} parent=0 // pred_fallthru
    _
  // Predicated region
  $region6: #{crnn_forward.1} parent=0 // pred_check
    _
  $region7: #{crnn_forward.1} parent=0 // pred_check_branch
    %25 = sbr.rel (0) target = $region9
  $region8: #{crnn_forward.1} parent=0 // pred_region
    _
  $region9: #{crnn_forward.1} parent=0 // pred_fallthru
    _
  // Predicated region
  $region10: #{crnn_forward.1} parent=0 // pred_check
    _
  $region11: #{crnn_forward.1} parent=0 // pred_check_branch
    %27 = sbr.rel (0) target = $region13
  $region12: #{crnn_forward.1} parent=0 // pred_region
    _
  $region13: #{crnn_forward.1} parent=0 // pred_fallthru
    _
  // Predicated region
  $region14: #{crnn_forward.1} parent=0 // pred_check
    _
  $region15: #{crnn_forward.1} parent=0 // pred_check_branch
    %29 = sbr.rel (0) target = $region17
  $region16: #{crnn_forward.1} parent=0 // pred_region
    _
  $region17: #{crnn_forward.1} parent=0 // pred_fallthru
    _
  // Predicated region
  $region18: #{crnn_forward.1} parent=0 // pred_check
    _
  $region19: #{crnn_forward.1} parent=0 // pred_check_branch
    %31 = sbr.rel (0) target = $region21
  $region20: #{crnn_forward.1} parent=0 // pred_region
    _
  $region21: #{crnn_forward.1} parent=0 // pred_fallthru
    _
  // Predicated region
  $region22: #{crnn_forward.1} parent=0 // pred_check
    _
  $region23: #{crnn_forward.1} parent=0 // pred_check_branch
    %33 = sbr.rel (0) target = $region25
  $region24: #{crnn_forward.1} parent=0 // pred_region
    _
  $region25: #{crnn_forward.1} parent=0 // pred_fallthru
    _
  // Predicated region
  $region26: #{crnn_forward.1} parent=0 // pred_check
    _
  $region27: #{crnn_forward.1} parent=0 // pred_check_branch
    %35 = sbr.rel (0) target = $region29
  $region28: #{crnn_forward.1} parent=0 // pred_region
    _
  $region29: #{crnn_forward.1} parent=0 // pred_fallthru
    _
  // Predicated region
  $region30: #{crnn_forward.1} parent=0 // pred_check
    _
  $region31: #{crnn_forward.1} parent=0 // pred_check_branch
    %37 = sbr.rel (0) target = $region33
  $region32: #{crnn_forward.1} parent=0 // pred_region
    _
  $region33: #{crnn_forward.1} parent=0 // pred_fallthru
    _
  // Predicated region
  $region34: #{crnn_forward.1} parent=0 // pred_check
    _
  $region35: #{crnn_forward.1} parent=0 // pred_check_branch
    %39 = sbr.rel (0) target = $region37
  $region36: #{crnn_forward.1} parent=0 // pred_region
    _
  $region37: #{crnn_forward.1} parent=0 // pred_fallthru
    _
  // Predicated region
  $region38: #{crnn_forward.1} parent=0 // pred_check
    _
  $region39: #{crnn_forward.1} parent=0 // pred_check_branch
    %41 = sbr.rel (0) target = $region41
  $region40: #{crnn_forward.1} parent=0 // pred_region
    _
  $region41: #{crnn_forward.1} parent=0 // pred_fallthru
    _
  // Predicated region
  $region42: #{crnn_forward.1} parent=0 // pred_check
    _
  $region43: #{crnn_forward.1} parent=0 // pred_check_branch
    %43 = sbr.rel (0) target = $region45
  $region44: #{crnn_forward.1} parent=0 // pred_region
    _
  $region45: #{crnn_forward.1} parent=0 // pred_fallthru
    _
  // Predicated region
  $region46: #{crnn_forward.1} parent=0 // pred_check
    _
  $region47: #{crnn_forward.1} parent=0 // pred_check_branch
    %45 = sbr.rel (0) target = $region49
  $region48: #{crnn_forward.1} parent=0 // pred_region
    _
  $region49: #{crnn_forward.1} parent=0 // pred_fallthru
    _
  // Predicated region
  $region50: #{crnn_forward.1} parent=0 // pred_check
    _
  $region51: #{crnn_forward.1} parent=0 // pred_check_branch
    %47 = sbr.rel (0) target = $region53
  $region52: #{crnn_forward.1} parent=0 // pred_region
    _
  $region53: #{crnn_forward.1} parent=0 // pred_fallthru
    _
  // Predicated region
  $region54: #{crnn_forward.1} parent=0 // pred_check
    _
  $region55: #{crnn_forward.1} parent=0 // pred_check_branch
    %49 = sbr.rel (0) target = $region57
  $region56: #{crnn_forward.1} parent=0 // pred_region
    _
  $region57: #{crnn_forward.1} parent=0 // pred_fallthru
    _
  // Predicated region
  $region58: #{crnn_forward.1} parent=0 // pred_check
    _
  $region59: #{crnn_forward.1} parent=0 // pred_check_branch
    %51 = sbr.rel (0) target = $region61
  $region60: #{crnn_forward.1} parent=0 // pred_region
    _
  $region61: #{crnn_forward.1} parent=0 // pred_fallthru
    _
  // Predicated region
  $region62: #{crnn_forward.1} parent=0 // pred_check
    _
  $region63: #{crnn_forward.1} parent=0 // pred_check_branch
    %53 = sbr.rel (0) target = $region65
  $region64: #{crnn_forward.1} parent=0 // pred_region
    _
  $region65: #{crnn_forward.1} parent=0 // pred_fallthru
    _
  // Predicated region
  $region66: #{crnn_forward.1} parent=0 // pred_check
    _
  $region67: #{crnn_forward.1} parent=0 // pred_check_branch
    %55 = sbr.rel (0) target = $region69
  $region68: #{crnn_forward.1} parent=0 // pred_region
    _
  $region69: #{crnn_forward.1} parent=0 // pred_fallthru
    _
  %v56 = vld [vmem:[%s0] sm:$0xff]
  %v57 = vld [vmem:[%s0 + $0x8] sm:$0xff]
  %v58 = vld [vmem:[%s1] sm:$0xff]
  %v59 = vld [vmem:[%s1 + $0x8] sm:$0xff]
  %v60 = vld [vmem:[%s2] sm:$0x1]
  %v61 = vld [vmem:[%s3] sm:$0x1]
  %v62 = vld [vmem:[%s4] sm:$0x1]
  %v63 = vld [vmem:[%s5] sm:$0xff]
  %v64 = vld [vmem:[%s5 + $0x8] sm:$0xff]
  %v65 = vld [vmem:[%s5 + $0x10] sm:$0xff]
  %v66 = vld [vmem:[%s5 + $0x18] sm:$0xff]
  %v67 = vld [vmem:[%s5 + $0x20] sm:$0xff]
  %v68 = vld [vmem:[%s5 + $0x28] sm:$0xff]
  %v69 = vld [vmem:[%s5 + $0x30] sm:$0xff]
  %v70 = vld [vmem:[%s5 + $0x38] sm:$0xff]
  %v71 = vld [vmem:[%s5 + $0x40] sm:$0xff]
  %v72 = vld [vmem:[%s5 + $0x48] sm:$0xff]
  %v73 = vld [vmem:[%s5 + $0x50] sm:$0xff]
  %v74 = vld [vmem:[%s5 + $0x58] sm:$0xff]
  %v75 = vld [vmem:[%s5 + $0x60] sm:$0xff]
  %v76 = vld [vmem:[%s5 + $0x68] sm:$0xff]
  %v77 = vld [vmem:[%s5 + $0x70] sm:$0xff]
  %v78 = vld [vmem:[%s5 + $0x78] sm:$0xff]
  %v79 = vld [vmem:[%s6] sm:$0x1]
  %v80 = vld [vmem:[%s7] sm:$0xff]
  %v81 = vld [vmem:[%s7 + $0x8] sm:$0xff]
  %v82 = vld [vmem:[%s7 + $0x10] sm:$0xff]
  %v83 = vld [vmem:[%s7 + $0x18] sm:$0xff]
  %v84 = vld [vmem:[%s7 + $0x20] sm:$0xff]
  %v85 = vld [vmem:[%s7 + $0x28] sm:$0xff]
  %v86 = vld [vmem:[%s7 + $0x30] sm:$0xff]
  %v87 = vld [vmem:[%s7 + $0x38] sm:$0xff]
  %v88 = vld [vmem:[%s7 + $0x40] sm:$0xff]
  %v89 = vld [vmem:[%s7 + $0x48] sm:$0xff]
  %v90 = vld [vmem:[%s7 + $0x50] sm:$0xff]
  %v91 = vld [vmem:[%s7 + $0x58] sm:$0xff]
  %v92 = vld [vmem:[%s7 + $0x60] sm:$0xff]
  %v93 = vld [vmem:[%s7 + $0x68] sm:$0xff]
  %v94 = vld [vmem:[%s7 + $0x70] sm:$0xff]
  %v95 = vld [vmem:[%s7 + $0x78] sm:$0xff]
  %v96 = vld [vmem:[%s7 + $0x80] sm:$0xff]
  %v97 = vld [vmem:[%s7 + $0x88] sm:$0xff]
  %v98 = vld [vmem:[%s7 + $0x90] sm:$0xff]
  %v99 = vld [vmem:[%s7 + $0x98] sm:$0xff]
  %v100 = vld [vmem:[%s7 + $0xa0] sm:$0xff]
  %v101 = vld [vmem:[%s8] sm:$0x1]
  %v102 = vld [vmem:[%s9] sm:$0xf]
  %v103 = vld [vmem:[%s10] sm:$0x1]
  %v104 = vld [vmem:[%s11] sm:$0xf]
  %v105 = vld [vmem:[%s12] sm:$0x1]
  %v106 = vld [vmem:[%s13] sm:$0xf]
  %v107 = vld [vmem:[%s14] sm:$0x1]
  %v108 = vld [vmem:[%s15] sm:$0xf]
  %v109 = vld [vmem:[%s16] sm:$0x1]
  %111 = vset.pattern.permute.xlu0 0
  %112 = vperm.xlu0 %111, %v56
  %v113 = vpop.permute.xlu0 %112
  %116 = vset.pattern.permute.xlu0 0
  %117 = vperm.xlu0 %116, %v57
  %v118 = vpop.permute.xlu0 %117
  %v121 = vlaneseq
  %v122 = vshrl.u32 %v121, 7
  %v123 = vsub.s32 0, %v122
  %v124 = vrot.slane %v60, %v123
  %v126 = vmul.f32 %v113, %v124
  %v127 = vmul.f32 %v118, %v124
  %129 = vset.pattern.permute.xlu0 0
  %130 = vperm.xlu0 %129, %v58
  %v131 = vpop.permute.xlu0 %130
  %134 = vset.pattern.permute.xlu0 0
  %135 = vperm.xlu0 %134, %v59
  %v136 = vpop.permute.xlu0 %135
  %v139 = vlaneseq
  %v140 = vshrl.u32 %v139, 7
  %v141 = vsub.s32 0, %v140
  %v142 = vrot.slane %v61, %v141
  %v144 = vmul.f32 %v131, %v142
  %v145 = vmul.f32 %v136, %v142
  %v146 = vadd.f32 %v126, %v144
  %v147 = vadd.f32 %v127, %v145
  %v149 = vlaneseq
  %v150 = vshrl.u32 %v149, 7
  %v151 = vsub.s32 0, %v150
  %v152 = vrot.slane %v62, %v151
  %v154 = vadd.f32 %v146, %v152
  %v155 = vadd.f32 %v147, %v152
  %v156 = vmax.f32 %v154, 0.0
  %v157 = vmax.f32 %v155, 0.0
  %v159 = vlaneseq
  %v160 = vshrl.u32 %v159, 7
  %v161 = vsub.s32 0, %v160
  %v162 = vrot.slane %v79, %v161
  %164 = vmatprep.subr.mxu0 0.0
  %165 = vmatpush1.msra.mxu0 %v78
  %166 = vmatprep.subr.mxu0 0.0
  %167 = vmatpush1.msra.mxu0 %v77
  %168 = vmatprep.subr.mxu0 0.0
  %169 = vmatpush1.msra.mxu0 %v76
  %170 = vmatprep.subr.mxu0 0.0
  %171 = vmatpush1.msra.mxu0 %v75
  %172 = vmatprep.subr.mxu0 0.0
  %173 = vmatpush1.msra.mxu0 %v74
  %174 = vmatprep.subr.mxu0 0.0
  %175 = vmatpush1.msra.mxu0 %v73
  %176 = vmatprep.subr.mxu0 0.0
  %177 = vmatpush1.msra.mxu0 %v72
  %178 = vmatprep.subr.mxu0 0.0
  %179 = vmatpush1.msra.mxu0 %v71
  %180 = vmatprep.subr.mxu0 0.0
  %181 = vmatpush1.msra.mxu0 %v70
  %182 = vmatprep.subr.mxu0 0.0
  %183 = vmatpush1.msra.mxu0 %v69
  %184 = vmatprep.subr.mxu0 0.0
  %185 = vmatpush1.msra.mxu0 %v68
  %186 = vmatprep.subr.mxu0 0.0
  %187 = vmatpush1.msra.mxu0 %v67
  %188 = vmatprep.subr.mxu0 0.0
  %189 = vmatpush1.msra.mxu0 %v66
  %190 = vmatprep.subr.mxu0 0.0
  %191 = vmatpush1.msra.mxu0 %v65
  %192 = vmatprep.subr.mxu0 0.0
  %193 = vmatpush1.msra.mxu0 %v64
  %194 = vmatprep.subr.mxu0 0.0
  %195 = vmatpush1.msra.mxu0 %v63
  %196 = vmatprep.subr.mxu0 0.0
  %197 = vmatpush2.msra.mxu0 0.0
  %198 = vmatprep.subr.mxu0 0.0
  %199 = vmatpush2.msra.mxu0 0.0
  %200 = vmatprep.subr.mxu0 0.0
  %201 = vmatpush2.msra.mxu0 0.0
  %202 = vmatprep.subr.mxu0 0.0
  %203 = vmatpush2.msra.mxu0 0.0
  %204 = vmatprep.subr.mxu0 0.0
  %205 = vmatpush2.msra.mxu0 0.0
  %206 = vmatprep.subr.mxu0 0.0
  %207 = vmatpush2.msra.mxu0 0.0
  %208 = vmatprep.subr.mxu0 0.0
  %209 = vmatpush2.msra.mxu0 0.0
  %210 = vmatprep.subr.mxu0 0.0
  %211 = vmatpush2.msra.mxu0 0.0
  %212 = vmatprep.subr.mxu0 0.0
  %213 = vmatpush2.msra.mxu0 0.0
  %214 = vmatprep.subr.mxu0 0.0
  %215 = vmatpush2.msra.mxu0 0.0
  %216 = vmatprep.subr.mxu0 0.0
  %217 = vmatpush2.msra.mxu0 0.0
  %218 = vmatprep.subr.mxu0 0.0
  %219 = vmatpush2.msra.mxu0 0.0
  %220 = vmatprep.subr.mxu0 0.0
  %221 = vmatpush2.msra.mxu0 0.0
  %222 = vmatprep.subr.mxu0 0.0
  %223 = vmatpush2.msra.mxu0 0.0
  %224 = vmatprep.subr.mxu0 0.0
  %225 = vmatpush2.msra.mxu0 0.0
  %226 = vmatprep.subr.mxu0 0.0
  %227 = vmatpush2.msra.mxu0 0.0
  %228 = vmatprep.mubr.f32.mxu0 0.0
  %229 = vmatmul.mubr.f32.gmra.mxu0 %v156
  %v230 = vpop.f32.mrf.mxu0
  %v231 = vadd.f32 %v162, %v230
  %v232 = vpop.f32.mrf.mxu0
  %233 = vmatprep.mubr.f32.mxu0 0.0
  %234 = vmatmul.mubr.f32.gmra.mxu0 %v157
  %v235 = vpop.f32.mrf.mxu0
  %v236 = vadd.f32 %v162, %v235
  %v237 = vpop.f32.mrf.mxu0
  %238 = vdwg.mxu0
  %v239 = vmax.f32 %v231, 0.0
  %v240 = vmax.f32 %v236, 0.0
  %241 = vset.pattern.permute.xlu0 1
  %242 = vperm.xlu0 %241, %v56
  %v243 = vpop.permute.xlu0 %242
  %245 = vset.pattern.permute.xlu0 1
  %246 = vperm.xlu0 %245, %v57
  %v247 = vpop.permute.xlu0 %246
  %v249 = vmul.f32 %v243, %v124
  %v250 = vmul.f32 %v247, %v124
  %251 = vset.pattern.permute.xlu0 1
  %252 = vperm.xlu0 %251, %v58
  %v253 = vpop.permute.xlu0 %252
  %255 = vset.pattern.permute.xlu0 1
  %256 = vperm.xlu0 %255, %v59
  %v257 = vpop.permute.xlu0 %256
  %v259 = vmul.f32 %v253, %v142
  %v260 = vmul.f32 %v257, %v142
  %v261 = vadd.f32 %v249, %v259
  %v262 = vadd.f32 %v250, %v260
  %v263 = vadd.f32 %v261, %v152
  %v264 = vadd.f32 %v262, %v152
  %v265 = vmax.f32 %v263, 0.0
  %v266 = vmax.f32 %v264, 0.0
  %267 = vmatprep.subr.mxu0 0.0
  %268 = vmatpush1.msra.mxu0 %v78
  %269 = vmatprep.subr.mxu0 0.0
  %270 = vmatpush1.msra.mxu0 %v77
  %271 = vmatprep.subr.mxu0 0.0
  %272 = vmatpush1.msra.mxu0 %v76
  %273 = vmatprep.subr.mxu0 0.0
  %274 = vmatpush1.msra.mxu0 %v75
  %275 = vmatprep.subr.mxu0 0.0
  %276 = vmatpush1.msra.mxu0 %v74
  %277 = vmatprep.subr.mxu0 0.0
  %278 = vmatpush1.msra.mxu0 %v73
  %279 = vmatprep.subr.mxu0 0.0
  %280 = vmatpush1.msra.mxu0 %v72
  %281 = vmatprep.subr.mxu0 0.0
  %282 = vmatpush1.msra.mxu0 %v71
  %283 = vmatprep.subr.mxu0 0.0
  %284 = vmatpush1.msra.mxu0 %v70
  %285 = vmatprep.subr.mxu0 0.0
  %286 = vmatpush1.msra.mxu0 %v69
  %287 = vmatprep.subr.mxu0 0.0
  %288 = vmatpush1.msra.mxu0 %v68
  %289 = vmatprep.subr.mxu0 0.0
  %290 = vmatpush1.msra.mxu0 %v67
  %291 = vmatprep.subr.mxu0 0.0
  %292 = vmatpush1.msra.mxu0 %v66
  %293 = vmatprep.subr.mxu0 0.0
  %294 = vmatpush1.msra.mxu0 %v65
  %295 = vmatprep.subr.mxu0 0.0
  %296 = vmatpush1.msra.mxu0 %v64
  %297 = vmatprep.subr.mxu0 0.0
  %298 = vmatpush1.msra.mxu0 %v63
  %299 = vmatprep.subr.mxu0 0.0
  %300 = vmatpush2.msra.mxu0 0.0
  %301 = vmatprep.subr.mxu0 0.0
  %302 = vmatpush2.msra.mxu0 0.0
  %303 = vmatprep.subr.mxu0 0.0
  %304 = vmatpush2.msra.mxu0 0.0
  %305 = vmatprep.subr.mxu0 0.0
  %306 = vmatpush2.msra.mxu0 0.0
  %307 = vmatprep.subr.mxu0 0.0
  %308 = vmatpush2.msra.mxu0 0.0
  %309 = vmatprep.subr.mxu0 0.0
  %310 = vmatpush2.msra.mxu0 0.0
  %311 = vmatprep.subr.mxu0 0.0
  %312 = vmatpush2.msra.mxu0 0.0
  %313 = vmatprep.subr.mxu0 0.0
  %314 = vmatpush2.msra.mxu0 0.0
  %315 = vmatprep.subr.mxu0 0.0
  %316 = vmatpush2.msra.mxu0 0.0
  %317 = vmatprep.subr.mxu0 0.0
  %318 = vmatpush2.msra.mxu0 0.0
  %319 = vmatprep.subr.mxu0 0.0
  %320 = vmatpush2.msra.mxu0 0.0
  %321 = vmatprep.subr.mxu0 0.0
  %322 = vmatpush2.msra.mxu0 0.0
  %323 = vmatprep.subr.mxu0 0.0
  %324 = vmatpush2.msra.mxu0 0.0
  %325 = vmatprep.subr.mxu0 0.0
  %326 = vmatpush2.msra.mxu0 0.0
  %327 = vmatprep.subr.mxu0 0.0
  %328 = vmatpush2.msra.mxu0 0.0
  %329 = vmatprep.subr.mxu0 0.0
  %330 = vmatpush2.msra.mxu0 0.0
  %331 = vmatprep.mubr.f32.mxu0 0.0
  %332 = vmatmul.mubr.f32.gmra.mxu0 %v265
  %v333 = vpop.f32.mrf.mxu0
  %v334 = vadd.f32 %v162, %v333
  %v335 = vpop.f32.mrf.mxu0
  %336 = vmatprep.mubr.f32.mxu0 0.0
  %337 = vmatmul.mubr.f32.gmra.mxu0 %v266
  %v338 = vpop.f32.mrf.mxu0
  %v339 = vadd.f32 %v162, %v338
  %v340 = vpop.f32.mrf.mxu0
  %341 = vdwg.mxu0
  %v342 = vmax.f32 %v334, 0.0
  %v343 = vmax.f32 %v339, 0.0
  %vm344 = vcmask 64512
  %v346 = vsel %vm344, %v342, 0
  %v349 = vsel %vm344, %v343, 0
  %351 = vmatprep.subr.mxu0 0.0
  %352 = vmatpush1.msra.mxu0 0.0
  %353 = vmatprep.subr.mxu0 0.0
  %354 = vmatpush1.msra.mxu0 0.0
  %355 = vmatprep.subr.mxu0 0.0
  %356 = vmatpush1.msra.mxu0 0.0
  %357 = vmatprep.subr.mxu0 0.0
  %358 = vmatpush1.msra.mxu0 0.0
  %359 = vmatprep.subr.mxu0 0.0
  %360 = vmatpush1.msra.mxu0 0.0
  %361 = vmatprep.subr.mxu0 0.0
  %362 = vmatpush1.msra.mxu0 0.0
  %363 = vmatprep.subr.mxu0 0.0
  %364 = vmatpush1.msra.mxu0 0.0
  %365 = vmatprep.subr.mxu0 0.0
  %366 = vmatpush1.msra.mxu0 0.0
  %367 = vmatprep.subr.mxu0 0.0
  %368 = vmatpush1.msra.mxu0 0.0
  %369 = vmatprep.subr.mxu0 0.0
  %370 = vmatpush1.msra.mxu0 0.0
  %371 = vmatprep.subr.mxu0 0.0
  %372 = vmatpush1.msra.mxu0 0.0
  %373 = vmatprep.subr.mxu0 0.0
  %374 = vmatpush1.msra.mxu0 0.0
  %375 = vmatprep.subr.mxu0 0.0
  %376 = vmatpush1.msra.mxu0 0.0
  %377 = vmatprep.subr.mxu0 0.0
  %378 = vmatpush1.msra.mxu0 0.0
  %379 = vmatprep.subr.mxu0 0.0
  %380 = vmatpush1.msra.mxu0 0.0
  %381 = vmatprep.subr.mxu0 0.0
  %382 = vmatpush1.msra.mxu0 %v81
  %383 = vmatprep.subr.mxu0 0.0
  %384 = vmatpush2.msra.mxu0 0.0
  %385 = vmatprep.subr.mxu0 0.0
  %386 = vmatpush2.msra.mxu0 0.0
  %387 = vmatprep.subr.mxu0 0.0
  %388 = vmatpush2.msra.mxu0 0.0
  %389 = vmatprep.subr.mxu0 0.0
  %390 = vmatpush2.msra.mxu0 0.0
  %391 = vmatprep.subr.mxu0 0.0
  %392 = vmatpush2.msra.mxu0 0.0
  %393 = vmatprep.subr.mxu0 0.0
  %394 = vmatpush2.msra.mxu0 0.0
  %395 = vmatprep.subr.mxu0 0.0
  %396 = vmatpush2.msra.mxu0 0.0
  %397 = vmatprep.subr.mxu0 0.0
  %398 = vmatpush2.msra.mxu0 0.0
  %399 = vmatprep.subr.mxu0 0.0
  %400 = vmatpush2.msra.mxu0 0.0
  %401 = vmatprep.subr.mxu0 0.0
  %402 = vmatpush2.msra.mxu0 0.0
  %403 = vmatprep.subr.mxu0 0.0
  %404 = vmatpush2.msra.mxu0 0.0
  %405 = vmatprep.subr.mxu0 0.0
  %406 = vmatpush2.msra.mxu0 0.0
  %407 = vmatprep.subr.mxu0 0.0
  %408 = vmatpush2.msra.mxu0 0.0
  %409 = vmatprep.subr.mxu0 0.0
  %410 = vmatpush2.msra.mxu0 0.0
  %411 = vmatprep.subr.mxu0 0.0
  %412 = vmatpush2.msra.mxu0 0.0
  %413 = vmatprep.subr.mxu0 0.0
  %414 = vmatpush2.msra.mxu0 0.0
  %415 = vmatprep.mubr.f32.mxu0 0.0
  %416 = vmatmul.mubr.f32.gmra.mxu0 %v346
  %v417 = vpop.f32.mrf.mxu0
  %v418 = vadd.f32 0.0, %v417
  %v419 = vpop.f32.mrf.mxu0
  %420 = vmatprep.mubr.f32.mxu0 0.0
  %421 = vmatmul.mubr.f32.gmra.mxu0 %v349
  %v422 = vpop.f32.mrf.mxu0
  %v423 = vadd.f32 0.0, %v422
  %v424 = vpop.f32.mrf.mxu0
  %425 = vdwg.mxu0
  %v427 = vsel %vm344, %v239, 0
  %v430 = vsel %vm344, %v240, 0
  %432 = vmatprep.subr.mxu0 0.0
  %433 = vmatpush1.msra.mxu0 0.0
  %434 = vmatprep.subr.mxu0 0.0
  %435 = vmatpush1.msra.mxu0 0.0
  %436 = vmatprep.subr.mxu0 0.0
  %437 = vmatpush1.msra.mxu0 0.0
  %438 = vmatprep.subr.mxu0 0.0
  %439 = vmatpush1.msra.mxu0 0.0
  %440 = vmatprep.subr.mxu0 0.0
  %441 = vmatpush1.msra.mxu0 0.0
  %442 = vmatprep.subr.mxu0 0.0
  %443 = vmatpush1.msra.mxu0 0.0
  %444 = vmatprep.subr.mxu0 0.0
  %445 = vmatpush1.msra.mxu0 0.0
  %446 = vmatprep.subr.mxu0 0.0
  %447 = vmatpush1.msra.mxu0 0.0
  %448 = vmatprep.subr.mxu0 0.0
  %449 = vmatpush1.msra.mxu0 0.0
  %450 = vmatprep.subr.mxu0 0.0
  %451 = vmatpush1.msra.mxu0 0.0
  %452 = vmatprep.subr.mxu0 0.0
  %453 = vmatpush1.msra.mxu0 0.0
  %454 = vmatprep.subr.mxu0 0.0
  %455 = vmatpush1.msra.mxu0 0.0
  %456 = vmatprep.subr.mxu0 0.0
  %457 = vmatpush1.msra.mxu0 0.0
  %458 = vmatprep.subr.mxu0 0.0
  %459 = vmatpush1.msra.mxu0 0.0
  %460 = vmatprep.subr.mxu0 0.0
  %461 = vmatpush1.msra.mxu0 0.0
  %462 = vmatprep.subr.mxu0 0.0
  %463 = vmatpush1.msra.mxu0 %v80
  %464 = vmatprep.subr.mxu0 0.0
  %465 = vmatpush2.msra.mxu0 0.0
  %466 = vmatprep.subr.mxu0 0.0
  %467 = vmatpush2.msra.mxu0 0.0
  %468 = vmatprep.subr.mxu0 0.0
  %469 = vmatpush2.msra.mxu0 0.0
  %470 = vmatprep.subr.mxu0 0.0
  %471 = vmatpush2.msra.mxu0 0.0
  %472 = vmatprep.subr.mxu0 0.0
  %473 = vmatpush2.msra.mxu0 0.0
  %474 = vmatprep.subr.mxu0 0.0
  %475 = vmatpush2.msra.mxu0 0.0
  %476 = vmatprep.subr.mxu0 0.0
  %477 = vmatpush2.msra.mxu0 0.0
  %478 = vmatprep.subr.mxu0 0.0
  %479 = vmatpush2.msra.mxu0 0.0
  %480 = vmatprep.subr.mxu0 0.0
  %481 = vmatpush2.msra.mxu0 0.0
  %482 = vmatprep.subr.mxu0 0.0
  %483 = vmatpush2.msra.mxu0 0.0
  %484 = vmatprep.subr.mxu0 0.0
  %485 = vmatpush2.msra.mxu0 0.0
  %486 = vmatprep.subr.mxu0 0.0
  %487 = vmatpush2.msra.mxu0 0.0
  %488 = vmatprep.subr.mxu0 0.0
  %489 = vmatpush2.msra.mxu0 0.0
  %490 = vmatprep.subr.mxu0 0.0
  %491 = vmatpush2.msra.mxu0 0.0
  %492 = vmatprep.subr.mxu0 0.0
  %493 = vmatpush2.msra.mxu0 0.0
  %494 = vmatprep.subr.mxu0 0.0
  %495 = vmatpush2.msra.mxu0 0.0
  %496 = vmatprep.mubr.f32.mxu0 0.0
  %497 = vmatmul.mubr.f32.gmra.mxu0 %v427
  %v498 = vpop.f32.mrf.mxu0
  %v499 = vadd.f32 %v418, %v498
  %v500 = vpop.f32.mrf.mxu0
  %501 = vmatprep.mubr.f32.mxu0 0.0
  %502 = vmatmul.mubr.f32.gmra.mxu0 %v430
  %v503 = vpop.f32.mrf.mxu0
  %v504 = vadd.f32 %v423, %v503
  %v505 = vpop.f32.mrf.mxu0
  %506 = vdwg.mxu0
  %507 = vset.pattern.permute.xlu0 2
  %508 = vperm.xlu0 %507, %v56
  %v509 = vpop.permute.xlu0 %508
  %511 = vset.pattern.permute.xlu0 2
  %512 = vperm.xlu0 %511, %v57
  %v513 = vpop.permute.xlu0 %512
  %v515 = vmul.f32 %v509, %v124
  %v516 = vmul.f32 %v513, %v124
  %517 = vset.pattern.permute.xlu0 2
  %518 = vperm.xlu0 %517, %v58
  %v519 = vpop.permute.xlu0 %518
  %521 = vset.pattern.permute.xlu0 2
  %522 = vperm.xlu0 %521, %v59
  %v523 = vpop.permute.xlu0 %522
  %v525 = vmul.f32 %v519, %v142
  %v526 = vmul.f32 %v523, %v142
  %v527 = vadd.f32 %v515, %v525
  %v528 = vadd.f32 %v516, %v526
  %v529 = vadd.f32 %v527, %v152
  %v530 = vadd.f32 %v528, %v152
  %v531 = vmax.f32 %v529, 0.0
  %v532 = vmax.f32 %v530, 0.0
  %533 = vmatprep.subr.mxu0 0.0
  %534 = vmatpush1.msra.mxu0 %v78
  %535 = vmatprep.subr.mxu0 0.0
  %536 = vmatpush1.msra.mxu0 %v77
  %537 = vmatprep.subr.mxu0 0.0
  %538 = vmatpush1.msra.mxu0 %v76
  %539 = vmatprep.subr.mxu0 0.0
  %540 = vmatpush1.msra.mxu0 %v75
  %541 = vmatprep.subr.mxu0 0.0
  %542 = vmatpush1.msra.mxu0 %v74
  %543 = vmatprep.subr.mxu0 0.0
  %544 = vmatpush1.msra.mxu0 %v73
  %545 = vmatprep.subr.mxu0 0.0
  %546 = vmatpush1.msra.mxu0 %v72
  %547 = vmatprep.subr.mxu0 0.0
  %548 = vmatpush1.msra.mxu0 %v71
  %549 = vmatprep.subr.mxu0 0.0
  %550 = vmatpush1.msra.mxu0 %v70
  %551 = vmatprep.subr.mxu0 0.0
  %552 = vmatpush1.msra.mxu0 %v69
  %553 = vmatprep.subr.mxu0 0.0
  %554 = vmatpush1.msra.mxu0 %v68
  %555 = vmatprep.subr.mxu0 0.0
  %556 = vmatpush1.msra.mxu0 %v67
  %557 = vmatprep.subr.mxu0 0.0
  %558 = vmatpush1.msra.mxu0 %v66
  %559 = vmatprep.subr.mxu0 0.0
  %560 = vmatpush1.msra.mxu0 %v65
  %561 = vmatprep.subr.mxu0 0.0
  %562 = vmatpush1.msra.mxu0 %v64
  %563 = vmatprep.subr.mxu0 0.0
  %564 = vmatpush1.msra.mxu0 %v63
  %565 = vmatprep.subr.mxu0 0.0
  %566 = vmatpush2.msra.mxu0 0.0
  %567 = vmatprep.subr.mxu0 0.0
  %568 = vmatpush2.msra.mxu0 0.0
  %569 = vmatprep.subr.mxu0 0.0
  %570 = vmatpush2.msra.mxu0 0.0
  %571 = vmatprep.subr.mxu0 0.0
  %572 = vmatpush2.msra.mxu0 0.0
  %573 = vmatprep.subr.mxu0 0.0
  %574 = vmatpush2.msra.mxu0 0.0
  %575 = vmatprep.subr.mxu0 0.0
  %576 = vmatpush2.msra.mxu0 0.0
  %577 = vmatprep.subr.mxu0 0.0
  %578 = vmatpush2.msra.mxu0 0.0
  %579 = vmatprep.subr.mxu0 0.0
  %580 = vmatpush2.msra.mxu0 0.0
  %581 = vmatprep.subr.mxu0 0.0
  %582 = vmatpush2.msra.mxu0 0.0
  %583 = vmatprep.subr.mxu0 0.0
  %584 = vmatpush2.msra.mxu0 0.0
  %585 = vmatprep.subr.mxu0 0.0
  %586 = vmatpush2.msra.mxu0 0.0
  %587 = vmatprep.subr.mxu0 0.0
  %588 = vmatpush2.msra.mxu0 0.0
  %589 = vmatprep.subr.mxu0 0.0
  %590 = vmatpush2.msra.mxu0 0.0
  %591 = vmatprep.subr.mxu0 0.0
  %592 = vmatpush2.msra.mxu0 0.0
  %593 = vmatprep.subr.mxu0 0.0
  %594 = vmatpush2.msra.mxu0 0.0
  %595 = vmatprep.subr.mxu0 0.0
  %596 = vmatpush2.msra.mxu0 0.0
  %597 = vmatprep.mubr.f32.mxu0 0.0
  %598 = vmatmul.mubr.f32.gmra.mxu0 %v531
  %v599 = vpop.f32.mrf.mxu0
  %v600 = vadd.f32 %v162, %v599
  %v601 = vpop.f32.mrf.mxu0
  %602 = vmatprep.mubr.f32.mxu0 0.0
  %603 = vmatmul.mubr.f32.gmra.mxu0 %v532
  %v604 = vpop.f32.mrf.mxu0
  %v605 = vadd.f32 %v162, %v604
  %v606 = vpop.f32.mrf.mxu0
  %607 = vdwg.mxu0
  %v608 = vmax.f32 %v600, 0.0
  %v609 = vmax.f32 %v605, 0.0
  %v611 = vsel %vm344, %v608, 0
  %v614 = vsel %vm344, %v609, 0
  %616 = vmatprep.subr.mxu0 0.0
  %617 = vmatpush1.msra.mxu0 0.0
  %618 = vmatprep.subr.mxu0 0.0
  %619 = vmatpush1.msra.mxu0 0.0
  %620 = vmatprep.subr.mxu0 0.0
  %621 = vmatpush1.msra.mxu0 0.0
  %622 = vmatprep.subr.mxu0 0.0
  %623 = vmatpush1.msra.mxu0 0.0
  %624 = vmatprep.subr.mxu0 0.0
  %625 = vmatpush1.msra.mxu0 0.0
  %626 = vmatprep.subr.mxu0 0.0
  %627 = vmatpush1.msra.mxu0 0.0
  %628 = vmatprep.subr.mxu0 0.0
  %629 = vmatpush1.msra.mxu0 0.0
  %630 = vmatprep.subr.mxu0 0.0
  %631 = vmatpush1.msra.mxu0 0.0
  %632 = vmatprep.subr.mxu0 0.0
  %633 = vmatpush1.msra.mxu0 0.0
  %634 = vmatprep.subr.mxu0 0.0
  %635 = vmatpush1.msra.mxu0 0.0
  %636 = vmatprep.subr.mxu0 0.0
  %637 = vmatpush1.msra.mxu0 0.0
  %638 = vmatprep.subr.mxu0 0.0
  %639 = vmatpush1.msra.mxu0 0.0
  %640 = vmatprep.subr.mxu0 0.0
  %641 = vmatpush1.msra.mxu0 0.0
  %642 = vmatprep.subr.mxu0 0.0
  %643 = vmatpush1.msra.mxu0 0.0
  %644 = vmatprep.subr.mxu0 0.0
  %645 = vmatpush1.msra.mxu0 0.0
  %646 = vmatprep.subr.mxu0 0.0
  %647 = vmatpush1.msra.mxu0 %v82
  %648 = vmatprep.subr.mxu0 0.0
  %649 = vmatpush2.msra.mxu0 0.0
  %650 = vmatprep.subr.mxu0 0.0
  %651 = vmatpush2.msra.mxu0 0.0
  %652 = vmatprep.subr.mxu0 0.0
  %653 = vmatpush2.msra.mxu0 0.0
  %654 = vmatprep.subr.mxu0 0.0
  %655 = vmatpush2.msra.mxu0 0.0
  %656 = vmatprep.subr.mxu0 0.0
  %657 = vmatpush2.msra.mxu0 0.0
  %658 = vmatprep.subr.mxu0 0.0
  %659 = vmatpush2.msra.mxu0 0.0
  %660 = vmatprep.subr.mxu0 0.0
  %661 = vmatpush2.msra.mxu0 0.0
  %662 = vmatprep.subr.mxu0 0.0
  %663 = vmatpush2.msra.mxu0 0.0
  %664 = vmatprep.subr.mxu0 0.0
  %665 = vmatpush2.msra.mxu0 0.0
  %666 = vmatprep.subr.mxu0 0.0
  %667 = vmatpush2.msra.mxu0 0.0
  %668 = vmatprep.subr.mxu0 0.0
  %669 = vmatpush2.msra.mxu0 0.0
  %670 = vmatprep.subr.mxu0 0.0
  %671 = vmatpush2.msra.mxu0 0.0
  %672 = vmatprep.subr.mxu0 0.0
  %673 = vmatpush2.msra.mxu0 0.0
  %674 = vmatprep.subr.mxu0 0.0
  %675 = vmatpush2.msra.mxu0 0.0
  %676 = vmatprep.subr.mxu0 0.0
  %677 = vmatpush2.msra.mxu0 0.0
  %678 = vmatprep.subr.mxu0 0.0
  %679 = vmatpush2.msra.mxu0 0.0
  %680 = vmatprep.mubr.f32.mxu0 0.0
  %681 = vmatmul.mubr.f32.gmra.mxu0 %v611
  %v682 = vpop.f32.mrf.mxu0
  %v683 = vadd.f32 0.0, %v682
  %v684 = vpop.f32.mrf.mxu0
  %685 = vmatprep.mubr.f32.mxu0 0.0
  %686 = vmatmul.mubr.f32.gmra.mxu0 %v614
  %v687 = vpop.f32.mrf.mxu0
  %v688 = vadd.f32 0.0, %v687
  %v689 = vpop.f32.mrf.mxu0
  %690 = vdwg.mxu0
  %v691 = vadd.f32 %v499, %v683
  %v692 = vadd.f32 %v504, %v688
  %693 = vset.pattern.permute.xlu0 3
  %694 = vperm.xlu0 %693, %v56
  %v695 = vpop.permute.xlu0 %694
  %697 = vset.pattern.permute.xlu0 3
  %698 = vperm.xlu0 %697, %v57
  %v699 = vpop.permute.xlu0 %698
  %v701 = vmul.f32 %v695, %v124
  %v702 = vmul.f32 %v699, %v124
  %703 = vset.pattern.permute.xlu0 3
  %704 = vperm.xlu0 %703, %v58
  %v705 = vpop.permute.xlu0 %704
  %707 = vset.pattern.permute.xlu0 3
  %708 = vperm.xlu0 %707, %v59
  %v709 = vpop.permute.xlu0 %708
  %v711 = vmul.f32 %v705, %v142
  %v712 = vmul.f32 %v709, %v142
  %v713 = vadd.f32 %v701, %v711
  %v714 = vadd.f32 %v702, %v712
  %v715 = vadd.f32 %v713, %v152
  %v716 = vadd.f32 %v714, %v152
  %v717 = vmax.f32 %v715, 0.0
  %v718 = vmax.f32 %v716, 0.0
  %719 = vmatprep.subr.mxu0 0.0
  %720 = vmatpush1.msra.mxu0 %v78
  %721 = vmatprep.subr.mxu0 0.0
  %722 = vmatpush1.msra.mxu0 %v77
  %723 = vmatprep.subr.mxu0 0.0
  %724 = vmatpush1.msra.mxu0 %v76
  %725 = vmatprep.subr.mxu0 0.0
  %726 = vmatpush1.msra.mxu0 %v75
  %727 = vmatprep.subr.mxu0 0.0
  %728 = vmatpush1.msra.mxu0 %v74
  %729 = vmatprep.subr.mxu0 0.0
  %730 = vmatpush1.msra.mxu0 %v73
  %731 = vmatprep.subr.mxu0 0.0
  %732 = vmatpush1.msra.mxu0 %v72
  %733 = vmatprep.subr.mxu0 0.0
  %734 = vmatpush1.msra.mxu0 %v71
  %735 = vmatprep.subr.mxu0 0.0
  %736 = vmatpush1.msra.mxu0 %v70
  %737 = vmatprep.subr.mxu0 0.0
  %738 = vmatpush1.msra.mxu0 %v69
  %739 = vmatprep.subr.mxu0 0.0
  %740 = vmatpush1.msra.mxu0 %v68
  %741 = vmatprep.subr.mxu0 0.0
  %742 = vmatpush1.msra.mxu0 %v67
  %743 = vmatprep.subr.mxu0 0.0
  %744 = vmatpush1.msra.mxu0 %v66
  %745 = vmatprep.subr.mxu0 0.0
  %746 = vmatpush1.msra.mxu0 %v65
  %747 = vmatprep.subr.mxu0 0.0
  %748 = vmatpush1.msra.mxu0 %v64
  %749 = vmatprep.subr.mxu0 0.0
  %750 = vmatpush1.msra.mxu0 %v63
  %751 = vmatprep.subr.mxu0 0.0
  %752 = vmatpush2.msra.mxu0 0.0
  %753 = vmatprep.subr.mxu0 0.0
  %754 = vmatpush2.msra.mxu0 0.0
  %755 = vmatprep.subr.mxu0 0.0
  %756 = vmatpush2.msra.mxu0 0.0
  %757 = vmatprep.subr.mxu0 0.0
  %758 = vmatpush2.msra.mxu0 0.0
  %759 = vmatprep.subr.mxu0 0.0
  %760 = vmatpush2.msra.mxu0 0.0
  %761 = vmatprep.subr.mxu0 0.0
  %762 = vmatpush2.msra.mxu0 0.0
  %763 = vmatprep.subr.mxu0 0.0
  %764 = vmatpush2.msra.mxu0 0.0
  %765 = vmatprep.subr.mxu0 0.0
  %766 = vmatpush2.msra.mxu0 0.0
  %767 = vmatprep.subr.mxu0 0.0
  %768 = vmatpush2.msra.mxu0 0.0
  %769 = vmatprep.subr.mxu0 0.0
  %770 = vmatpush2.msra.mxu0 0.0
  %771 = vmatprep.subr.mxu0 0.0
  %772 = vmatpush2.msra.mxu0 0.0
  %773 = vmatprep.subr.mxu0 0.0
  %774 = vmatpush2.msra.mxu0 0.0
  %775 = vmatprep.subr.mxu0 0.0
  %776 = vmatpush2.msra.mxu0 0.0
  %777 = vmatprep.subr.mxu0 0.0
  %778 = vmatpush2.msra.mxu0 0.0
  %779 = vmatprep.subr.mxu0 0.0
  %780 = vmatpush2.msra.mxu0 0.0
  %781 = vmatprep.subr.mxu0 0.0
  %782 = vmatpush2.msra.mxu0 0.0
  %783 = vmatprep.mubr.f32.mxu0 0.0
  %784 = vmatmul.mubr.f32.gmra.mxu0 %v717
  %v785 = vpop.f32.mrf.mxu0
  %v786 = vadd.f32 %v162, %v785
  %v787 = vpop.f32.mrf.mxu0
  %788 = vmatprep.mubr.f32.mxu0 0.0
  %789 = vmatmul.mubr.f32.gmra.mxu0 %v718
  %v790 = vpop.f32.mrf.mxu0
  %v791 = vadd.f32 %v162, %v790
  %v792 = vpop.f32.mrf.mxu0
  %793 = vdwg.mxu0
  %v794 = vmax.f32 %v786, 0.0
  %v795 = vmax.f32 %v791, 0.0
  %v797 = vsel %vm344, %v794, 0
  %v800 = vsel %vm344, %v795, 0
  %802 = vmatprep.subr.mxu0 0.0
  %803 = vmatpush1.msra.mxu0 0.0
  %804 = vmatprep.subr.mxu0 0.0
  %805 = vmatpush1.msra.mxu0 0.0
  %806 = vmatprep.subr.mxu0 0.0
  %807 = vmatpush1.msra.mxu0 0.0
  %808 = vmatprep.subr.mxu0 0.0
  %809 = vmatpush1.msra.mxu0 0.0
  %810 = vmatprep.subr.mxu0 0.0
  %811 = vmatpush1.msra.mxu0 0.0
  %812 = vmatprep.subr.mxu0 0.0
  %813 = vmatpush1.msra.mxu0 0.0
  %814 = vmatprep.subr.mxu0 0.0
  %815 = vmatpush1.msra.mxu0 0.0
  %816 = vmatprep.subr.mxu0 0.0
  %817 = vmatpush1.msra.mxu0 0.0
  %818 = vmatprep.subr.mxu0 0.0
  %819 = vmatpush1.msra.mxu0 0.0
  %820 = vmatprep.subr.mxu0 0.0
  %821 = vmatpush1.msra.mxu0 0.0
  %822 = vmatprep.subr.mxu0 0.0
  %823 = vmatpush1.msra.mxu0 0.0
  %824 = vmatprep.subr.mxu0 0.0
  %825 = vmatpush1.msra.mxu0 0.0
  %826 = vmatprep.subr.mxu0 0.0
  %827 = vmatpush1.msra.mxu0 0.0
  %828 = vmatprep.subr.mxu0 0.0
  %829 = vmatpush1.msra.mxu0 0.0
  %830 = vmatprep.subr.mxu0 0.0
  %831 = vmatpush1.msra.mxu0 0.0
  %832 = vmatprep.subr.mxu0 0.0
  %833 = vmatpush1.msra.mxu0 %v83
  %834 = vmatprep.subr.mxu0 0.0
  %835 = vmatpush2.msra.mxu0 0.0
  %836 = vmatprep.subr.mxu0 0.0
  %837 = vmatpush2.msra.mxu0 0.0
  %838 = vmatprep.subr.mxu0 0.0
  %839 = vmatpush2.msra.mxu0 0.0
  %840 = vmatprep.subr.mxu0 0.0
  %841 = vmatpush2.msra.mxu0 0.0
  %842 = vmatprep.subr.mxu0 0.0
  %843 = vmatpush2.msra.mxu0 0.0
  %844 = vmatprep.subr.mxu0 0.0
  %845 = vmatpush2.msra.mxu0 0.0
  %846 = vmatprep.subr.mxu0 0.0
  %847 = vmatpush2.msra.mxu0 0.0
  %848 = vmatprep.subr.mxu0 0.0
  %849 = vmatpush2.msra.mxu0 0.0
  %850 = vmatprep.subr.mxu0 0.0
  %851 = vmatpush2.msra.mxu0 0.0
  %852 = vmatprep.subr.mxu0 0.0
  %853 = vmatpush2.msra.mxu0 0.0
  %854 = vmatprep.subr.mxu0 0.0
  %855 = vmatpush2.msra.mxu0 0.0
  %856 = vmatprep.subr.mxu0 0.0
  %857 = vmatpush2.msra.mxu0 0.0
  %858 = vmatprep.subr.mxu0 0.0
  %859 = vmatpush2.msra.mxu0 0.0
  %860 = vmatprep.subr.mxu0 0.0
  %861 = vmatpush2.msra.mxu0 0.0
  %862 = vmatprep.subr.mxu0 0.0
  %863 = vmatpush2.msra.mxu0 0.0
  %864 = vmatprep.subr.mxu0 0.0
  %865 = vmatpush2.msra.mxu0 0.0
  %866 = vmatprep.mubr.f32.mxu0 0.0
  %867 = vmatmul.mubr.f32.gmra.mxu0 %v797
  %v868 = vpop.f32.mrf.mxu0
  %v869 = vadd.f32 0.0, %v868
  %v870 = vpop.f32.mrf.mxu0
  %871 = vmatprep.mubr.f32.mxu0 0.0
  %872 = vmatmul.mubr.f32.gmra.mxu0 %v800
  %v873 = vpop.f32.mrf.mxu0
  %v874 = vadd.f32 0.0, %v873
  %v875 = vpop.f32.mrf.mxu0
  %876 = vdwg.mxu0
  %v877 = vadd.f32 %v691, %v869
  %v878 = vadd.f32 %v692, %v874
  %879 = vset.pattern.permute.xlu0 4
  %880 = vperm.xlu0 %879, %v56
  %v881 = vpop.permute.xlu0 %880
  %883 = vset.pattern.permute.xlu0 4
  %884 = vperm.xlu0 %883, %v57
  %v885 = vpop.permute.xlu0 %884
  %v887 = vmul.f32 %v881, %v124
  %v888 = vmul.f32 %v885, %v124
  %889 = vset.pattern.permute.xlu0 4
  %890 = vperm.xlu0 %889, %v58
  %v891 = vpop.permute.xlu0 %890
  %893 = vset.pattern.permute.xlu0 4
  %894 = vperm.xlu0 %893, %v59
  %v895 = vpop.permute.xlu0 %894
  %v897 = vmul.f32 %v891, %v142
  %v898 = vmul.f32 %v895, %v142
  %v899 = vadd.f32 %v887, %v897
  %v900 = vadd.f32 %v888, %v898
  %v901 = vadd.f32 %v899, %v152
  %v902 = vadd.f32 %v900, %v152
  %v903 = vmax.f32 %v901, 0.0
  %v904 = vmax.f32 %v902, 0.0
  %905 = vmatprep.subr.mxu0 0.0
  %906 = vmatpush1.msra.mxu0 %v78
  %907 = vmatprep.subr.mxu0 0.0
  %908 = vmatpush1.msra.mxu0 %v77
  %909 = vmatprep.subr.mxu0 0.0
  %910 = vmatpush1.msra.mxu0 %v76
  %911 = vmatprep.subr.mxu0 0.0
  %912 = vmatpush1.msra.mxu0 %v75
  %913 = vmatprep.subr.mxu0 0.0
  %914 = vmatpush1.msra.mxu0 %v74
  %915 = vmatprep.subr.mxu0 0.0
  %916 = vmatpush1.msra.mxu0 %v73
  %917 = vmatprep.subr.mxu0 0.0
  %918 = vmatpush1.msra.mxu0 %v72
  %919 = vmatprep.subr.mxu0 0.0
  %920 = vmatpush1.msra.mxu0 %v71
  %921 = vmatprep.subr.mxu0 0.0
  %922 = vmatpush1.msra.mxu0 %v70
  %923 = vmatprep.subr.mxu0 0.0
  %924 = vmatpush1.msra.mxu0 %v69
  %925 = vmatprep.subr.mxu0 0.0
  %926 = vmatpush1.msra.mxu0 %v68
  %927 = vmatprep.subr.mxu0 0.0
  %928 = vmatpush1.msra.mxu0 %v67
  %929 = vmatprep.subr.mxu0 0.0
  %930 = vmatpush1.msra.mxu0 %v66
  %931 = vmatprep.subr.mxu0 0.0
  %932 = vmatpush1.msra.mxu0 %v65
  %933 = vmatprep.subr.mxu0 0.0
  %934 = vmatpush1.msra.mxu0 %v64
  %935 = vmatprep.subr.mxu0 0.0
  %936 = vmatpush1.msra.mxu0 %v63
  %937 = vmatprep.subr.mxu0 0.0
  %938 = vmatpush2.msra.mxu0 0.0
  %939 = vmatprep.subr.mxu0 0.0
  %940 = vmatpush2.msra.mxu0 0.0
  %941 = vmatprep.subr.mxu0 0.0
  %942 = vmatpush2.msra.mxu0 0.0
  %943 = vmatprep.subr.mxu0 0.0
  %944 = vmatpush2.msra.mxu0 0.0
  %945 = vmatprep.subr.mxu0 0.0
  %946 = vmatpush2.msra.mxu0 0.0
  %947 = vmatprep.subr.mxu0 0.0
  %948 = vmatpush2.msra.mxu0 0.0
  %949 = vmatprep.subr.mxu0 0.0
  %950 = vmatpush2.msra.mxu0 0.0
  %951 = vmatprep.subr.mxu0 0.0
  %952 = vmatpush2.msra.mxu0 0.0
  %953 = vmatprep.subr.mxu0 0.0
  %954 = vmatpush2.msra.mxu0 0.0
  %955 = vmatprep.subr.mxu0 0.0
  %956 = vmatpush2.msra.mxu0 0.0
  %957 = vmatprep.subr.mxu0 0.0
  %958 = vmatpush2.msra.mxu0 0.0
  %959 = vmatprep.subr.mxu0 0.0
  %960 = vmatpush2.msra.mxu0 0.0
  %961 = vmatprep.subr.mxu0 0.0
  %962 = vmatpush2.msra.mxu0 0.0
  %963 = vmatprep.subr.mxu0 0.0
  %964 = vmatpush2.msra.mxu0 0.0
  %965 = vmatprep.subr.mxu0 0.0
  %966 = vmatpush2.msra.mxu0 0.0
  %967 = vmatprep.subr.mxu0 0.0
  %968 = vmatpush2.msra.mxu0 0.0
  %969 = vmatprep.mubr.f32.mxu0 0.0
  %970 = vmatmul.mubr.f32.gmra.mxu0 %v903
  %v971 = vpop.f32.mrf.mxu0
  %v972 = vadd.f32 %v162, %v971
  %v973 = vpop.f32.mrf.mxu0
  %974 = vmatprep.mubr.f32.mxu0 0.0
  %975 = vmatmul.mubr.f32.gmra.mxu0 %v904
  %v976 = vpop.f32.mrf.mxu0
  %v977 = vadd.f32 %v162, %v976
  %v978 = vpop.f32.mrf.mxu0
  %979 = vdwg.mxu0
  %v980 = vmax.f32 %v972, 0.0
  %v981 = vmax.f32 %v977, 0.0
  %v983 = vsel %vm344, %v980, 0
  %v986 = vsel %vm344, %v981, 0
  %988 = vmatprep.subr.mxu0 0.0
  %989 = vmatpush1.msra.mxu0 0.0
  %990 = vmatprep.subr.mxu0 0.0
  %991 = vmatpush1.msra.mxu0 0.0
  %992 = vmatprep.subr.mxu0 0.0
  %993 = vmatpush1.msra.mxu0 0.0
  %994 = vmatprep.subr.mxu0 0.0
  %995 = vmatpush1.msra.mxu0 0.0
  %996 = vmatprep.subr.mxu0 0.0
  %997 = vmatpush1.msra.mxu0 0.0
  %998 = vmatprep.subr.mxu0 0.0
  %999 = vmatpush1.msra.mxu0 0.0
  %1000 = vmatprep.subr.mxu0 0.0
  %1001 = vmatpush1.msra.mxu0 0.0
  %1002 = vmatprep.subr.mxu0 0.0
  %1003 = vmatpush1.msra.mxu0 0.0
  %1004 = vmatprep.subr.mxu0 0.0
  %1005 = vmatpush1.msra.mxu0 0.0
  %1006 = vmatprep.subr.mxu0 0.0
  %1007 = vmatpush1.msra.mxu0 0.0
  %1008 = vmatprep.subr.mxu0 0.0
  %1009 = vmatpush1.msra.mxu0 0.0
  %1010 = vmatprep.subr.mxu0 0.0
  %1011 = vmatpush1.msra.mxu0 0.0
  %1012 = vmatprep.subr.mxu0 0.0
  %1013 = vmatpush1.msra.mxu0 0.0
  %1014 = vmatprep.subr.mxu0 0.0
  %1015 = vmatpush1.msra.mxu0 0.0
  %1016 = vmatprep.subr.mxu0 0.0
  %1017 = vmatpush1.msra.mxu0 0.0
  %1018 = vmatprep.subr.mxu0 0.0
  %1019 = vmatpush1.msra.mxu0 %v84
  %1020 = vmatprep.subr.mxu0 0.0
  %1021 = vmatpush2.msra.mxu0 0.0
  %1022 = vmatprep.subr.mxu0 0.0
  %1023 = vmatpush2.msra.mxu0 0.0
  %1024 = vmatprep.subr.mxu0 0.0
  %1025 = vmatpush2.msra.mxu0 0.0
  %1026 = vmatprep.subr.mxu0 0.0
  %1027 = vmatpush2.msra.mxu0 0.0
  %1028 = vmatprep.subr.mxu0 0.0
  %1029 = vmatpush2.msra.mxu0 0.0
  %1030 = vmatprep.subr.mxu0 0.0
  %1031 = vmatpush2.msra.mxu0 0.0
  %1032 = vmatprep.subr.mxu0 0.0
  %1033 = vmatpush2.msra.mxu0 0.0
  %1034 = vmatprep.subr.mxu0 0.0
  %1035 = vmatpush2.msra.mxu0 0.0
  %1036 = vmatprep.subr.mxu0 0.0
  %1037 = vmatpush2.msra.mxu0 0.0
  %1038 = vmatprep.subr.mxu0 0.0
  %1039 = vmatpush2.msra.mxu0 0.0
  %1040 = vmatprep.subr.mxu0 0.0
  %1041 = vmatpush2.msra.mxu0 0.0
  %1042 = vmatprep.subr.mxu0 0.0
  %1043 = vmatpush2.msra.mxu0 0.0
  %1044 = vmatprep.subr.mxu0 0.0
  %1045 = vmatpush2.msra.mxu0 0.0
  %1046 = vmatprep.subr.mxu0 0.0
  %1047 = vmatpush2.msra.mxu0 0.0
  %1048 = vmatprep.subr.mxu0 0.0
  %1049 = vmatpush2.msra.mxu0 0.0
  %1050 = vmatprep.subr.mxu0 0.0
  %1051 = vmatpush2.msra.mxu0 0.0
  %1052 = vmatprep.mubr.f32.mxu0 0.0
  %1053 = vmatmul.mubr.f32.gmra.mxu0 %v983
  %v1054 = vpop.f32.mrf.mxu0
  %v1055 = vadd.f32 0.0, %v1054
  %v1056 = vpop.f32.mrf.mxu0
  %1057 = vmatprep.mubr.f32.mxu0 0.0
  %1058 = vmatmul.mubr.f32.gmra.mxu0 %v986
  %v1059 = vpop.f32.mrf.mxu0
  %v1060 = vadd.f32 0.0, %v1059
  %v1061 = vpop.f32.mrf.mxu0
  %1062 = vdwg.mxu0
  %v1063 = vadd.f32 %v877, %v1055
  %v1064 = vadd.f32 %v878, %v1060
  %1065 = vset.pattern.permute.xlu0 5
  %1066 = vperm.xlu0 %1065, %v56
  %v1067 = vpop.permute.xlu0 %1066
  %1069 = vset.pattern.permute.xlu0 5
  %1070 = vperm.xlu0 %1069, %v57
  %v1071 = vpop.permute.xlu0 %1070
  %v1073 = vmul.f32 %v1067, %v124
  %v1074 = vmul.f32 %v1071, %v124
  %1075 = vset.pattern.permute.xlu0 5
  %1076 = vperm.xlu0 %1075, %v58
  %v1077 = vpop.permute.xlu0 %1076
  %1079 = vset.pattern.permute.xlu0 5
  %1080 = vperm.xlu0 %1079, %v59
  %v1081 = vpop.permute.xlu0 %1080
  %v1083 = vmul.f32 %v1077, %v142
  %v1084 = vmul.f32 %v1081, %v142
  %v1085 = vadd.f32 %v1073, %v1083
  %v1086 = vadd.f32 %v1074, %v1084
  %v1087 = vadd.f32 %v1085, %v152
  %v1088 = vadd.f32 %v1086, %v152
  %v1089 = vmax.f32 %v1087, 0.0
  %v1090 = vmax.f32 %v1088, 0.0
  %1091 = vmatprep.subr.mxu0 0.0
  %1092 = vmatpush1.msra.mxu0 %v78
  %1093 = vmatprep.subr.mxu0 0.0
  %1094 = vmatpush1.msra.mxu0 %v77
  %1095 = vmatprep.subr.mxu0 0.0
  %1096 = vmatpush1.msra.mxu0 %v76
  %1097 = vmatprep.subr.mxu0 0.0
  %1098 = vmatpush1.msra.mxu0 %v75
  %1099 = vmatprep.subr.mxu0 0.0
  %1100 = vmatpush1.msra.mxu0 %v74
  %1101 = vmatprep.subr.mxu0 0.0
  %1102 = vmatpush1.msra.mxu0 %v73
  %1103 = vmatprep.subr.mxu0 0.0
  %1104 = vmatpush1.msra.mxu0 %v72
  %1105 = vmatprep.subr.mxu0 0.0
  %1106 = vmatpush1.msra.mxu0 %v71
  %1107 = vmatprep.subr.mxu0 0.0
  %1108 = vmatpush1.msra.mxu0 %v70
  %1109 = vmatprep.subr.mxu0 0.0
  %1110 = vmatpush1.msra.mxu0 %v69
  %1111 = vmatprep.subr.mxu0 0.0
  %1112 = vmatpush1.msra.mxu0 %v68
  %1113 = vmatprep.subr.mxu0 0.0
  %1114 = vmatpush1.msra.mxu0 %v67
  %1115 = vmatprep.subr.mxu0 0.0
  %1116 = vmatpush1.msra.mxu0 %v66
  %1117 = vmatprep.subr.mxu0 0.0
  %1118 = vmatpush1.msra.mxu0 %v65
  %1119 = vmatprep.subr.mxu0 0.0
  %1120 = vmatpush1.msra.mxu0 %v64
  %1121 = vmatprep.subr.mxu0 0.0
  %1122 = vmatpush1.msra.mxu0 %v63
  %1123 = vmatprep.subr.mxu0 0.0
  %1124 = vmatpush2.msra.mxu0 0.0
  %1125 = vmatprep.subr.mxu0 0.0
  %1126 = vmatpush2.msra.mxu0 0.0
  %1127 = vmatprep.subr.mxu0 0.0
  %1128 = vmatpush2.msra.mxu0 0.0
  %1129 = vmatprep.subr.mxu0 0.0
  %1130 = vmatpush2.msra.mxu0 0.0
  %1131 = vmatprep.subr.mxu0 0.0
  %1132 = vmatpush2.msra.mxu0 0.0
  %1133 = vmatprep.subr.mxu0 0.0
  %1134 = vmatpush2.msra.mxu0 0.0
  %1135 = vmatprep.subr.mxu0 0.0
  %1136 = vmatpush2.msra.mxu0 0.0
  %1137 = vmatprep.subr.mxu0 0.0
  %1138 = vmatpush2.msra.mxu0 0.0
  %1139 = vmatprep.subr.mxu0 0.0
  %1140 = vmatpush2.msra.mxu0 0.0
  %1141 = vmatprep.subr.mxu0 0.0
  %1142 = vmatpush2.msra.mxu0 0.0
  %1143 = vmatprep.subr.mxu0 0.0
  %1144 = vmatpush2.msra.mxu0 0.0
  %1145 = vmatprep.subr.mxu0 0.0
  %1146 = vmatpush2.msra.mxu0 0.0
  %1147 = vmatprep.subr.mxu0 0.0
  %1148 = vmatpush2.msra.mxu0 0.0
  %1149 = vmatprep.subr.mxu0 0.0
  %1150 = vmatpush2.msra.mxu0 0.0
  %1151 = vmatprep.subr.mxu0 0.0
  %1152 = vmatpush2.msra.mxu0 0.0
  %1153 = vmatprep.subr.mxu0 0.0
  %1154 = vmatpush2.msra.mxu0 0.0
  %1155 = vmatprep.mubr.f32.mxu0 0.0
  %1156 = vmatmul.mubr.f32.gmra.mxu0 %v1089
  %v1157 = vpop.f32.mrf.mxu0
  %v1158 = vadd.f32 %v162, %v1157
  %v1159 = vpop.f32.mrf.mxu0
  %1160 = vmatprep.mubr.f32.mxu0 0.0
  %1161 = vmatmul.mubr.f32.gmra.mxu0 %v1090
  %v1162 = vpop.f32.mrf.mxu0
  %v1163 = vadd.f32 %v162, %v1162
  %v1164 = vpop.f32.mrf.mxu0
  %1165 = vdwg.mxu0
  %v1166 = vmax.f32 %v1158, 0.0
  %v1167 = vmax.f32 %v1163, 0.0
  %v1169 = vsel %vm344, %v1166, 0
  %v1172 = vsel %vm344, %v1167, 0
  %1174 = vmatprep.subr.mxu0 0.0
  %1175 = vmatpush1.msra.mxu0 0.0
  %1176 = vmatprep.subr.mxu0 0.0
  %1177 = vmatpush1.msra.mxu0 0.0
  %1178 = vmatprep.subr.mxu0 0.0
  %1179 = vmatpush1.msra.mxu0 0.0
  %1180 = vmatprep.subr.mxu0 0.0
  %1181 = vmatpush1.msra.mxu0 0.0
  %1182 = vmatprep.subr.mxu0 0.0
  %1183 = vmatpush1.msra.mxu0 0.0
  %1184 = vmatprep.subr.mxu0 0.0
  %1185 = vmatpush1.msra.mxu0 0.0
  %1186 = vmatprep.subr.mxu0 0.0
  %1187 = vmatpush1.msra.mxu0 0.0
  %1188 = vmatprep.subr.mxu0 0.0
  %1189 = vmatpush1.msra.mxu0 0.0
  %1190 = vmatprep.subr.mxu0 0.0
  %1191 = vmatpush1.msra.mxu0 0.0
  %1192 = vmatprep.subr.mxu0 0.0
  %1193 = vmatpush1.msra.mxu0 0.0
  %1194 = vmatprep.subr.mxu0 0.0
  %1195 = vmatpush1.msra.mxu0 0.0
  %1196 = vmatprep.subr.mxu0 0.0
  %1197 = vmatpush1.msra.mxu0 0.0
  %1198 = vmatprep.subr.mxu0 0.0
  %1199 = vmatpush1.msra.mxu0 0.0
  %1200 = vmatprep.subr.mxu0 0.0
  %1201 = vmatpush1.msra.mxu0 0.0
  %1202 = vmatprep.subr.mxu0 0.0
  %1203 = vmatpush1.msra.mxu0 0.0
  %1204 = vmatprep.subr.mxu0 0.0
  %1205 = vmatpush1.msra.mxu0 %v85
  %1206 = vmatprep.subr.mxu0 0.0
  %1207 = vmatpush2.msra.mxu0 0.0
  %1208 = vmatprep.subr.mxu0 0.0
  %1209 = vmatpush2.msra.mxu0 0.0
  %1210 = vmatprep.subr.mxu0 0.0
  %1211 = vmatpush2.msra.mxu0 0.0
  %1212 = vmatprep.subr.mxu0 0.0
  %1213 = vmatpush2.msra.mxu0 0.0
  %1214 = vmatprep.subr.mxu0 0.0
  %1215 = vmatpush2.msra.mxu0 0.0
  %1216 = vmatprep.subr.mxu0 0.0
  %1217 = vmatpush2.msra.mxu0 0.0
  %1218 = vmatprep.subr.mxu0 0.0
  %1219 = vmatpush2.msra.mxu0 0.0
  %1220 = vmatprep.subr.mxu0 0.0
  %1221 = vmatpush2.msra.mxu0 0.0
  %1222 = vmatprep.subr.mxu0 0.0
  %1223 = vmatpush2.msra.mxu0 0.0
  %1224 = vmatprep.subr.mxu0 0.0
  %1225 = vmatpush2.msra.mxu0 0.0
  %1226 = vmatprep.subr.mxu0 0.0
  %1227 = vmatpush2.msra.mxu0 0.0
  %1228 = vmatprep.subr.mxu0 0.0
  %1229 = vmatpush2.msra.mxu0 0.0
  %1230 = vmatprep.subr.mxu0 0.0
  %1231 = vmatpush2.msra.mxu0 0.0
  %1232 = vmatprep.subr.mxu0 0.0
  %1233 = vmatpush2.msra.mxu0 0.0
  %1234 = vmatprep.subr.mxu0 0.0
  %1235 = vmatpush2.msra.mxu0 0.0
  %1236 = vmatprep.subr.mxu0 0.0
  %1237 = vmatpush2.msra.mxu0 0.0
  %1238 = vmatprep.mubr.f32.mxu0 0.0
  %1239 = vmatmul.mubr.f32.gmra.mxu0 %v1169
  %v1240 = vpop.f32.mrf.mxu0
  %v1241 = vadd.f32 0.0, %v1240
  %v1242 = vpop.f32.mrf.mxu0
  %1243 = vmatprep.mubr.f32.mxu0 0.0
  %1244 = vmatmul.mubr.f32.gmra.mxu0 %v1172
  %v1245 = vpop.f32.mrf.mxu0
  %v1246 = vadd.f32 0.0, %v1245
  %v1247 = vpop.f32.mrf.mxu0
  %1248 = vdwg.mxu0
  %v1249 = vadd.f32 %v1063, %v1241
  %v1250 = vadd.f32 %v1064, %v1246
  %1251 = vset.pattern.permute.xlu0 6
  %1252 = vperm.xlu0 %1251, %v56
  %v1253 = vpop.permute.xlu0 %1252
  %1255 = vset.pattern.permute.xlu0 6
  %1256 = vperm.xlu0 %1255, %v57
  %v1257 = vpop.permute.xlu0 %1256
  %v1259 = vmul.f32 %v1253, %v124
  %v1260 = vmul.f32 %v1257, %v124
  %1261 = vset.pattern.permute.xlu0 6
  %1262 = vperm.xlu0 %1261, %v58
  %v1263 = vpop.permute.xlu0 %1262
  %1265 = vset.pattern.permute.xlu0 6
  %1266 = vperm.xlu0 %1265, %v59
  %v1267 = vpop.permute.xlu0 %1266
  %v1269 = vmul.f32 %v1263, %v142
  %v1270 = vmul.f32 %v1267, %v142
  %v1271 = vadd.f32 %v1259, %v1269
  %v1272 = vadd.f32 %v1260, %v1270
  %v1273 = vadd.f32 %v1271, %v152
  %v1274 = vadd.f32 %v1272, %v152
  %v1275 = vmax.f32 %v1273, 0.0
  %v1276 = vmax.f32 %v1274, 0.0
  %1277 = vmatprep.subr.mxu0 0.0
  %1278 = vmatpush1.msra.mxu0 %v78
  %1279 = vmatprep.subr.mxu0 0.0
  %1280 = vmatpush1.msra.mxu0 %v77
  %1281 = vmatprep.subr.mxu0 0.0
  %1282 = vmatpush1.msra.mxu0 %v76
  %1283 = vmatprep.subr.mxu0 0.0
  %1284 = vmatpush1.msra.mxu0 %v75
  %1285 = vmatprep.subr.mxu0 0.0
  %1286 = vmatpush1.msra.mxu0 %v74
  %1287 = vmatprep.subr.mxu0 0.0
  %1288 = vmatpush1.msra.mxu0 %v73
  %1289 = vmatprep.subr.mxu0 0.0
  %1290 = vmatpush1.msra.mxu0 %v72
  %1291 = vmatprep.subr.mxu0 0.0
  %1292 = vmatpush1.msra.mxu0 %v71
  %1293 = vmatprep.subr.mxu0 0.0
  %1294 = vmatpush1.msra.mxu0 %v70
  %1295 = vmatprep.subr.mxu0 0.0
  %1296 = vmatpush1.msra.mxu0 %v69
  %1297 = vmatprep.subr.mxu0 0.0
  %1298 = vmatpush1.msra.mxu0 %v68
  %1299 = vmatprep.subr.mxu0 0.0
  %1300 = vmatpush1.msra.mxu0 %v67
  %1301 = vmatprep.subr.mxu0 0.0
  %1302 = vmatpush1.msra.mxu0 %v66
  %1303 = vmatprep.subr.mxu0 0.0
  %1304 = vmatpush1.msra.mxu0 %v65
  %1305 = vmatprep.subr.mxu0 0.0
  %1306 = vmatpush1.msra.mxu0 %v64
  %1307 = vmatprep.subr.mxu0 0.0
  %1308 = vmatpush1.msra.mxu0 %v63
  %1309 = vmatprep.subr.mxu0 0.0
  %1310 = vmatpush2.msra.mxu0 0.0
  %1311 = vmatprep.subr.mxu0 0.0
  %1312 = vmatpush2.msra.mxu0 0.0
  %1313 = vmatprep.subr.mxu0 0.0
  %1314 = vmatpush2.msra.mxu0 0.0
  %1315 = vmatprep.subr.mxu0 0.0
  %1316 = vmatpush2.msra.mxu0 0.0
  %1317 = vmatprep.subr.mxu0 0.0
  %1318 = vmatpush2.msra.mxu0 0.0
  %1319 = vmatprep.subr.mxu0 0.0
  %1320 = vmatpush2.msra.mxu0 0.0
  %1321 = vmatprep.subr.mxu0 0.0
  %1322 = vmatpush2.msra.mxu0 0.0
  %1323 = vmatprep.subr.mxu0 0.0
  %1324 = vmatpush2.msra.mxu0 0.0
  %1325 = vmatprep.subr.mxu0 0.0
  %1326 = vmatpush2.msra.mxu0 0.0
  %1327 = vmatprep.subr.mxu0 0.0
  %1328 = vmatpush2.msra.mxu0 0.0
  %1329 = vmatprep.subr.mxu0 0.0
  %1330 = vmatpush2.msra.mxu0 0.0
  %1331 = vmatprep.subr.mxu0 0.0
  %1332 = vmatpush2.msra.mxu0 0.0
  %1333 = vmatprep.subr.mxu0 0.0
  %1334 = vmatpush2.msra.mxu0 0.0
  %1335 = vmatprep.subr.mxu0 0.0
  %1336 = vmatpush2.msra.mxu0 0.0
  %1337 = vmatprep.subr.mxu0 0.0
  %1338 = vmatpush2.msra.mxu0 0.0
  %1339 = vmatprep.subr.mxu0 0.0
  %1340 = vmatpush2.msra.mxu0 0.0
  %1341 = vmatprep.mubr.f32.mxu0 0.0
  %1342 = vmatmul.mubr.f32.gmra.mxu0 %v1275
  %v1343 = vpop.f32.mrf.mxu0
  %v1344 = vadd.f32 %v162, %v1343
  %v1345 = vpop.f32.mrf.mxu0
  %1346 = vmatprep.mubr.f32.mxu0 0.0
  %1347 = vmatmul.mubr.f32.gmra.mxu0 %v1276
  %v1348 = vpop.f32.mrf.mxu0
  %v1349 = vadd.f32 %v162, %v1348
  %v1350 = vpop.f32.mrf.mxu0
  %1351 = vdwg.mxu0
  %v1352 = vmax.f32 %v1344, 0.0
  %v1353 = vmax.f32 %v1349, 0.0
  %v1355 = vsel %vm344, %v1352, 0
  %v1358 = vsel %vm344, %v1353, 0
  %1360 = vmatprep.subr.mxu0 0.0
  %1361 = vmatpush1.msra.mxu0 0.0
  %1362 = vmatprep.subr.mxu0 0.0
  %1363 = vmatpush1.msra.mxu0 0.0
  %1364 = vmatprep.subr.mxu0 0.0
  %1365 = vmatpush1.msra.mxu0 0.0
  %1366 = vmatprep.subr.mxu0 0.0
  %1367 = vmatpush1.msra.mxu0 0.0
  %1368 = vmatprep.subr.mxu0 0.0
  %1369 = vmatpush1.msra.mxu0 0.0
  %1370 = vmatprep.subr.mxu0 0.0
  %1371 = vmatpush1.msra.mxu0 0.0
  %1372 = vmatprep.subr.mxu0 0.0
  %1373 = vmatpush1.msra.mxu0 0.0
  %1374 = vmatprep.subr.mxu0 0.0
  %1375 = vmatpush1.msra.mxu0 0.0
  %1376 = vmatprep.subr.mxu0 0.0
  %1377 = vmatpush1.msra.mxu0 0.0
  %1378 = vmatprep.subr.mxu0 0.0
  %1379 = vmatpush1.msra.mxu0 0.0
  %1380 = vmatprep.subr.mxu0 0.0
  %1381 = vmatpush1.msra.mxu0 0.0
  %1382 = vmatprep.subr.mxu0 0.0
  %1383 = vmatpush1.msra.mxu0 0.0
  %1384 = vmatprep.subr.mxu0 0.0
  %1385 = vmatpush1.msra.mxu0 0.0
  %1386 = vmatprep.subr.mxu0 0.0
  %1387 = vmatpush1.msra.mxu0 0.0
  %1388 = vmatprep.subr.mxu0 0.0
  %1389 = vmatpush1.msra.mxu0 0.0
  %1390 = vmatprep.subr.mxu0 0.0
  %1391 = vmatpush1.msra.mxu0 %v86
  %1392 = vmatprep.subr.mxu0 0.0
  %1393 = vmatpush2.msra.mxu0 0.0
  %1394 = vmatprep.subr.mxu0 0.0
  %1395 = vmatpush2.msra.mxu0 0.0
  %1396 = vmatprep.subr.mxu0 0.0
  %1397 = vmatpush2.msra.mxu0 0.0
  %1398 = vmatprep.subr.mxu0 0.0
  %1399 = vmatpush2.msra.mxu0 0.0
  %1400 = vmatprep.subr.mxu0 0.0
  %1401 = vmatpush2.msra.mxu0 0.0
  %1402 = vmatprep.subr.mxu0 0.0
  %1403 = vmatpush2.msra.mxu0 0.0
  %1404 = vmatprep.subr.mxu0 0.0
  %1405 = vmatpush2.msra.mxu0 0.0
  %1406 = vmatprep.subr.mxu0 0.0
  %1407 = vmatpush2.msra.mxu0 0.0
  %1408 = vmatprep.subr.mxu0 0.0
  %1409 = vmatpush2.msra.mxu0 0.0
  %1410 = vmatprep.subr.mxu0 0.0
  %1411 = vmatpush2.msra.mxu0 0.0
  %1412 = vmatprep.subr.mxu0 0.0
  %1413 = vmatpush2.msra.mxu0 0.0
  %1414 = vmatprep.subr.mxu0 0.0
  %1415 = vmatpush2.msra.mxu0 0.0
  %1416 = vmatprep.subr.mxu0 0.0
  %1417 = vmatpush2.msra.mxu0 0.0
  %1418 = vmatprep.subr.mxu0 0.0
  %1419 = vmatpush2.msra.mxu0 0.0
  %1420 = vmatprep.subr.mxu0 0.0
  %1421 = vmatpush2.msra.mxu0 0.0
  %1422 = vmatprep.subr.mxu0 0.0
  %1423 = vmatpush2.msra.mxu0 0.0
  %1424 = vmatprep.mubr.f32.mxu0 0.0
  %1425 = vmatmul.mubr.f32.gmra.mxu0 %v1355
  %v1426 = vpop.f32.mrf.mxu0
  %v1427 = vadd.f32 0.0, %v1426
  %v1428 = vpop.f32.mrf.mxu0
  %1429 = vmatprep.mubr.f32.mxu0 0.0
  %1430 = vmatmul.mubr.f32.gmra.mxu0 %v1358
  %v1431 = vpop.f32.mrf.mxu0
  %v1432 = vadd.f32 0.0, %v1431
  %v1433 = vpop.f32.mrf.mxu0
  %1434 = vdwg.mxu0
  %v1435 = vadd.f32 %v1249, %v1427
  %v1436 = vadd.f32 %v1250, %v1432
  %1437 = vset.pattern.permute.xlu0 7
  %1438 = vperm.xlu0 %1437, %v56
  %v1439 = vpop.permute.xlu0 %1438
  %1441 = vset.pattern.permute.xlu0 7
  %1442 = vperm.xlu0 %1441, %v57
  %v1443 = vpop.permute.xlu0 %1442
  %v1445 = vmul.f32 %v1439, %v124
  %v1446 = vmul.f32 %v1443, %v124
  %1447 = vset.pattern.permute.xlu0 7
  %1448 = vperm.xlu0 %1447, %v58
  %v1449 = vpop.permute.xlu0 %1448
  %1451 = vset.pattern.permute.xlu0 7
  %1452 = vperm.xlu0 %1451, %v59
  %v1453 = vpop.permute.xlu0 %1452
  %v1455 = vmul.f32 %v1449, %v142
  %v1456 = vmul.f32 %v1453, %v142
  %v1457 = vadd.f32 %v1445, %v1455
  %v1458 = vadd.f32 %v1446, %v1456
  %v1459 = vadd.f32 %v1457, %v152
  %v1460 = vadd.f32 %v1458, %v152
  %v1461 = vmax.f32 %v1459, 0.0
  %v1462 = vmax.f32 %v1460, 0.0
  %1463 = vmatprep.subr.mxu0 0.0
  %1464 = vmatpush1.msra.mxu0 %v78
  %1465 = vmatprep.subr.mxu0 0.0
  %1466 = vmatpush1.msra.mxu0 %v77
  %1467 = vmatprep.subr.mxu0 0.0
  %1468 = vmatpush1.msra.mxu0 %v76
  %1469 = vmatprep.subr.mxu0 0.0
  %1470 = vmatpush1.msra.mxu0 %v75
  %1471 = vmatprep.subr.mxu0 0.0
  %1472 = vmatpush1.msra.mxu0 %v74
  %1473 = vmatprep.subr.mxu0 0.0
  %1474 = vmatpush1.msra.mxu0 %v73
  %1475 = vmatprep.subr.mxu0 0.0
  %1476 = vmatpush1.msra.mxu0 %v72
  %1477 = vmatprep.subr.mxu0 0.0
  %1478 = vmatpush1.msra.mxu0 %v71
  %1479 = vmatprep.subr.mxu0 0.0
  %1480 = vmatpush1.msra.mxu0 %v70
  %1481 = vmatprep.subr.mxu0 0.0
  %1482 = vmatpush1.msra.mxu0 %v69
  %1483 = vmatprep.subr.mxu0 0.0
  %1484 = vmatpush1.msra.mxu0 %v68
  %1485 = vmatprep.subr.mxu0 0.0
  %1486 = vmatpush1.msra.mxu0 %v67
  %1487 = vmatprep.subr.mxu0 0.0
  %1488 = vmatpush1.msra.mxu0 %v66
  %1489 = vmatprep.subr.mxu0 0.0
  %1490 = vmatpush1.msra.mxu0 %v65
  %1491 = vmatprep.subr.mxu0 0.0
  %1492 = vmatpush1.msra.mxu0 %v64
  %1493 = vmatprep.subr.mxu0 0.0
  %1494 = vmatpush1.msra.mxu0 %v63
  %1495 = vmatprep.subr.mxu0 0.0
  %1496 = vmatpush2.msra.mxu0 0.0
  %1497 = vmatprep.subr.mxu0 0.0
  %1498 = vmatpush2.msra.mxu0 0.0
  %1499 = vmatprep.subr.mxu0 0.0
  %1500 = vmatpush2.msra.mxu0 0.0
  %1501 = vmatprep.subr.mxu0 0.0
  %1502 = vmatpush2.msra.mxu0 0.0
  %1503 = vmatprep.subr.mxu0 0.0
  %1504 = vmatpush2.msra.mxu0 0.0
  %1505 = vmatprep.subr.mxu0 0.0
  %1506 = vmatpush2.msra.mxu0 0.0
  %1507 = vmatprep.subr.mxu0 0.0
  %1508 = vmatpush2.msra.mxu0 0.0
  %1509 = vmatprep.subr.mxu0 0.0
  %1510 = vmatpush2.msra.mxu0 0.0
  %1511 = vmatprep.subr.mxu0 0.0
  %1512 = vmatpush2.msra.mxu0 0.0
  %1513 = vmatprep.subr.mxu0 0.0
  %1514 = vmatpush2.msra.mxu0 0.0
  %1515 = vmatprep.subr.mxu0 0.0
  %1516 = vmatpush2.msra.mxu0 0.0
  %1517 = vmatprep.subr.mxu0 0.0
  %1518 = vmatpush2.msra.mxu0 0.0
  %1519 = vmatprep.subr.mxu0 0.0
  %1520 = vmatpush2.msra.mxu0 0.0
  %1521 = vmatprep.subr.mxu0 0.0
  %1522 = vmatpush2.msra.mxu0 0.0
  %1523 = vmatprep.subr.mxu0 0.0
  %1524 = vmatpush2.msra.mxu0 0.0
  %1525 = vmatprep.subr.mxu0 0.0
  %1526 = vmatpush2.msra.mxu0 0.0
  %1527 = vmatprep.mubr.f32.mxu0 0.0
  %1528 = vmatmul.mubr.f32.gmra.mxu0 %v1461
  %v1529 = vpop.f32.mrf.mxu0
  %v1530 = vadd.f32 %v162, %v1529
  %v1531 = vpop.f32.mrf.mxu0
  %1532 = vmatprep.mubr.f32.mxu0 0.0
  %1533 = vmatmul.mubr.f32.gmra.mxu0 %v1462
  %v1534 = vpop.f32.mrf.mxu0
  %v1535 = vadd.f32 %v162, %v1534
  %v1536 = vpop.f32.mrf.mxu0
  %1537 = vdwg.mxu0
  %v1538 = vmax.f32 %v1530, 0.0
  %v1539 = vmax.f32 %v1535, 0.0
  %v1541 = vsel %vm344, %v1538, 0
  %v1544 = vsel %vm344, %v1539, 0
  %1546 = vmatprep.subr.mxu0 0.0
  %1547 = vmatpush1.msra.mxu0 0.0
  %1548 = vmatprep.subr.mxu0 0.0
  %1549 = vmatpush1.msra.mxu0 0.0
  %1550 = vmatprep.subr.mxu0 0.0
  %1551 = vmatpush1.msra.mxu0 0.0
  %1552 = vmatprep.subr.mxu0 0.0
  %1553 = vmatpush1.msra.mxu0 0.0
  %1554 = vmatprep.subr.mxu0 0.0
  %1555 = vmatpush1.msra.mxu0 0.0
  %1556 = vmatprep.subr.mxu0 0.0
  %1557 = vmatpush1.msra.mxu0 0.0
  %1558 = vmatprep.subr.mxu0 0.0
  %1559 = vmatpush1.msra.mxu0 0.0
  %1560 = vmatprep.subr.mxu0 0.0
  %1561 = vmatpush1.msra.mxu0 0.0
  %1562 = vmatprep.subr.mxu0 0.0
  %1563 = vmatpush1.msra.mxu0 0.0
  %1564 = vmatprep.subr.mxu0 0.0
  %1565 = vmatpush1.msra.mxu0 0.0
  %1566 = vmatprep.subr.mxu0 0.0
  %1567 = vmatpush1.msra.mxu0 0.0
  %1568 = vmatprep.subr.mxu0 0.0
  %1569 = vmatpush1.msra.mxu0 0.0
  %1570 = vmatprep.subr.mxu0 0.0
  %1571 = vmatpush1.msra.mxu0 0.0
  %1572 = vmatprep.subr.mxu0 0.0
  %1573 = vmatpush1.msra.mxu0 0.0
  %1574 = vmatprep.subr.mxu0 0.0
  %1575 = vmatpush1.msra.mxu0 0.0
  %1576 = vmatprep.subr.mxu0 0.0
  %1577 = vmatpush1.msra.mxu0 %v87
  %1578 = vmatprep.subr.mxu0 0.0
  %1579 = vmatpush2.msra.mxu0 0.0
  %1580 = vmatprep.subr.mxu0 0.0
  %1581 = vmatpush2.msra.mxu0 0.0
  %1582 = vmatprep.subr.mxu0 0.0
  %1583 = vmatpush2.msra.mxu0 0.0
  %1584 = vmatprep.subr.mxu0 0.0
  %1585 = vmatpush2.msra.mxu0 0.0
  %1586 = vmatprep.subr.mxu0 0.0
  %1587 = vmatpush2.msra.mxu0 0.0
  %1588 = vmatprep.subr.mxu0 0.0
  %1589 = vmatpush2.msra.mxu0 0.0
  %1590 = vmatprep.subr.mxu0 0.0
  %1591 = vmatpush2.msra.mxu0 0.0
  %1592 = vmatprep.subr.mxu0 0.0
  %1593 = vmatpush2.msra.mxu0 0.0
  %1594 = vmatprep.subr.mxu0 0.0
  %1595 = vmatpush2.msra.mxu0 0.0
  %1596 = vmatprep.subr.mxu0 0.0
  %1597 = vmatpush2.msra.mxu0 0.0
  %1598 = vmatprep.subr.mxu0 0.0
  %1599 = vmatpush2.msra.mxu0 0.0
  %1600 = vmatprep.subr.mxu0 0.0
  %1601 = vmatpush2.msra.mxu0 0.0
  %1602 = vmatprep.subr.mxu0 0.0
  %1603 = vmatpush2.msra.mxu0 0.0
  %1604 = vmatprep.subr.mxu0 0.0
  %1605 = vmatpush2.msra.mxu0 0.0
  %1606 = vmatprep.subr.mxu0 0.0
  %1607 = vmatpush2.msra.mxu0 0.0
  %1608 = vmatprep.subr.mxu0 0.0
  %1609 = vmatpush2.msra.mxu0 0.0
  %1610 = vmatprep.mubr.f32.mxu0 0.0
  %1611 = vmatmul.mubr.f32.gmra.mxu0 %v1541
  %v1612 = vpop.f32.mrf.mxu0
  %v1613 = vadd.f32 0.0, %v1612
  %v1614 = vpop.f32.mrf.mxu0
  %1615 = vmatprep.mubr.f32.mxu0 0.0
  %1616 = vmatmul.mubr.f32.gmra.mxu0 %v1544
  %v1617 = vpop.f32.mrf.mxu0
  %v1618 = vadd.f32 0.0, %v1617
  %v1619 = vpop.f32.mrf.mxu0
  %1620 = vdwg.mxu0
  %v1621 = vadd.f32 %v1435, %v1613
  %v1622 = vadd.f32 %v1436, %v1618
  %1623 = vset.pattern.permute.xlu0 8
  %1624 = vperm.xlu0 %1623, %v56
  %v1625 = vpop.permute.xlu0 %1624
  %1627 = vset.pattern.permute.xlu0 8
  %1628 = vperm.xlu0 %1627, %v57
  %v1629 = vpop.permute.xlu0 %1628
  %v1631 = vmul.f32 %v1625, %v124
  %v1632 = vmul.f32 %v1629, %v124
  %1633 = vset.pattern.permute.xlu0 8
  %1634 = vperm.xlu0 %1633, %v58
  %v1635 = vpop.permute.xlu0 %1634
  %1637 = vset.pattern.permute.xlu0 8
  %1638 = vperm.xlu0 %1637, %v59
  %v1639 = vpop.permute.xlu0 %1638
  %v1641 = vmul.f32 %v1635, %v142
  %v1642 = vmul.f32 %v1639, %v142
  %v1643 = vadd.f32 %v1631, %v1641
  %v1644 = vadd.f32 %v1632, %v1642
  %v1645 = vadd.f32 %v1643, %v152
  %v1646 = vadd.f32 %v1644, %v152
  %v1647 = vmax.f32 %v1645, 0.0
  %v1648 = vmax.f32 %v1646, 0.0
  %1649 = vmatprep.subr.mxu0 0.0
  %1650 = vmatpush1.msra.mxu0 %v78
  %1651 = vmatprep.subr.mxu0 0.0
  %1652 = vmatpush1.msra.mxu0 %v77
  %1653 = vmatprep.subr.mxu0 0.0
  %1654 = vmatpush1.msra.mxu0 %v76
  %1655 = vmatprep.subr.mxu0 0.0
  %1656 = vmatpush1.msra.mxu0 %v75
  %1657 = vmatprep.subr.mxu0 0.0
  %1658 = vmatpush1.msra.mxu0 %v74
  %1659 = vmatprep.subr.mxu0 0.0
  %1660 = vmatpush1.msra.mxu0 %v73
  %1661 = vmatprep.subr.mxu0 0.0
  %1662 = vmatpush1.msra.mxu0 %v72
  %1663 = vmatprep.subr.mxu0 0.0
  %1664 = vmatpush1.msra.mxu0 %v71
  %1665 = vmatprep.subr.mxu0 0.0
  %1666 = vmatpush1.msra.mxu0 %v70
  %1667 = vmatprep.subr.mxu0 0.0
  %1668 = vmatpush1.msra.mxu0 %v69
  %1669 = vmatprep.subr.mxu0 0.0
  %1670 = vmatpush1.msra.mxu0 %v68
  %1671 = vmatprep.subr.mxu0 0.0
  %1672 = vmatpush1.msra.mxu0 %v67
  %1673 = vmatprep.subr.mxu0 0.0
  %1674 = vmatpush1.msra.mxu0 %v66
  %1675 = vmatprep.subr.mxu0 0.0
  %1676 = vmatpush1.msra.mxu0 %v65
  %1677 = vmatprep.subr.mxu0 0.0
  %1678 = vmatpush1.msra.mxu0 %v64
  %1679 = vmatprep.subr.mxu0 0.0
  %1680 = vmatpush1.msra.mxu0 %v63
  %1681 = vmatprep.subr.mxu0 0.0
  %1682 = vmatpush2.msra.mxu0 0.0
  %1683 = vmatprep.subr.mxu0 0.0
  %1684 = vmatpush2.msra.mxu0 0.0
  %1685 = vmatprep.subr.mxu0 0.0
  %1686 = vmatpush2.msra.mxu0 0.0
  %1687 = vmatprep.subr.mxu0 0.0
  %1688 = vmatpush2.msra.mxu0 0.0
  %1689 = vmatprep.subr.mxu0 0.0
  %1690 = vmatpush2.msra.mxu0 0.0
  %1691 = vmatprep.subr.mxu0 0.0
  %1692 = vmatpush2.msra.mxu0 0.0
  %1693 = vmatprep.subr.mxu0 0.0
  %1694 = vmatpush2.msra.mxu0 0.0
  %1695 = vmatprep.subr.mxu0 0.0
  %1696 = vmatpush2.msra.mxu0 0.0
  %1697 = vmatprep.subr.mxu0 0.0
  %1698 = vmatpush2.msra.mxu0 0.0
  %1699 = vmatprep.subr.mxu0 0.0
  %1700 = vmatpush2.msra.mxu0 0.0
  %1701 = vmatprep.subr.mxu0 0.0
  %1702 = vmatpush2.msra.mxu0 0.0
  %1703 = vmatprep.subr.mxu0 0.0
  %1704 = vmatpush2.msra.mxu0 0.0
  %1705 = vmatprep.subr.mxu0 0.0
  %1706 = vmatpush2.msra.mxu0 0.0
  %1707 = vmatprep.subr.mxu0 0.0
  %1708 = vmatpush2.msra.mxu0 0.0
  %1709 = vmatprep.subr.mxu0 0.0
  %1710 = vmatpush2.msra.mxu0 0.0
  %1711 = vmatprep.subr.mxu0 0.0
  %1712 = vmatpush2.msra.mxu0 0.0
  %1713 = vmatprep.mubr.f32.mxu0 0.0
  %1714 = vmatmul.mubr.f32.gmra.mxu0 %v1647
  %v1715 = vpop.f32.mrf.mxu0
  %v1716 = vadd.f32 %v162, %v1715
  %v1717 = vpop.f32.mrf.mxu0
  %1718 = vmatprep.mubr.f32.mxu0 0.0
  %1719 = vmatmul.mubr.f32.gmra.mxu0 %v1648
  %v1720 = vpop.f32.mrf.mxu0
  %v1721 = vadd.f32 %v162, %v1720
  %v1722 = vpop.f32.mrf.mxu0
  %1723 = vdwg.mxu0
  %v1724 = vmax.f32 %v1716, 0.0
  %v1725 = vmax.f32 %v1721, 0.0
  %v1727 = vsel %vm344, %v1724, 0
  %v1730 = vsel %vm344, %v1725, 0
  %1732 = vmatprep.subr.mxu0 0.0
  %1733 = vmatpush1.msra.mxu0 0.0
  %1734 = vmatprep.subr.mxu0 0.0
  %1735 = vmatpush1.msra.mxu0 0.0
  %1736 = vmatprep.subr.mxu0 0.0
  %1737 = vmatpush1.msra.mxu0 0.0
  %1738 = vmatprep.subr.mxu0 0.0
  %1739 = vmatpush1.msra.mxu0 0.0
  %1740 = vmatprep.subr.mxu0 0.0
  %1741 = vmatpush1.msra.mxu0 0.0
  %1742 = vmatprep.subr.mxu0 0.0
  %1743 = vmatpush1.msra.mxu0 0.0
  %1744 = vmatprep.subr.mxu0 0.0
  %1745 = vmatpush1.msra.mxu0 0.0
  %1746 = vmatprep.subr.mxu0 0.0
  %1747 = vmatpush1.msra.mxu0 0.0
  %1748 = vmatprep.subr.mxu0 0.0
  %1749 = vmatpush1.msra.mxu0 0.0
  %1750 = vmatprep.subr.mxu0 0.0
  %1751 = vmatpush1.msra.mxu0 0.0
  %1752 = vmatprep.subr.mxu0 0.0
  %1753 = vmatpush1.msra.mxu0 0.0
  %1754 = vmatprep.subr.mxu0 0.0
  %1755 = vmatpush1.msra.mxu0 0.0
  %1756 = vmatprep.subr.mxu0 0.0
  %1757 = vmatpush1.msra.mxu0 0.0
  %1758 = vmatprep.subr.mxu0 0.0
  %1759 = vmatpush1.msra.mxu0 0.0
  %1760 = vmatprep.subr.mxu0 0.0
  %1761 = vmatpush1.msra.mxu0 0.0
  %1762 = vmatprep.subr.mxu0 0.0
  %1763 = vmatpush1.msra.mxu0 %v88
  %1764 = vmatprep.subr.mxu0 0.0
  %1765 = vmatpush2.msra.mxu0 0.0
  %1766 = vmatprep.subr.mxu0 0.0
  %1767 = vmatpush2.msra.mxu0 0.0
  %1768 = vmatprep.subr.mxu0 0.0
  %1769 = vmatpush2.msra.mxu0 0.0
  %1770 = vmatprep.subr.mxu0 0.0
  %1771 = vmatpush2.msra.mxu0 0.0
  %1772 = vmatprep.subr.mxu0 0.0
  %1773 = vmatpush2.msra.mxu0 0.0
  %1774 = vmatprep.subr.mxu0 0.0
  %1775 = vmatpush2.msra.mxu0 0.0
  %1776 = vmatprep.subr.mxu0 0.0
  %1777 = vmatpush2.msra.mxu0 0.0
  %1778 = vmatprep.subr.mxu0 0.0
  %1779 = vmatpush2.msra.mxu0 0.0
  %1780 = vmatprep.subr.mxu0 0.0
  %1781 = vmatpush2.msra.mxu0 0.0
  %1782 = vmatprep.subr.mxu0 0.0
  %1783 = vmatpush2.msra.mxu0 0.0
  %1784 = vmatprep.subr.mxu0 0.0
  %1785 = vmatpush2.msra.mxu0 0.0
  %1786 = vmatprep.subr.mxu0 0.0
  %1787 = vmatpush2.msra.mxu0 0.0
  %1788 = vmatprep.subr.mxu0 0.0
  %1789 = vmatpush2.msra.mxu0 0.0
  %1790 = vmatprep.subr.mxu0 0.0
  %1791 = vmatpush2.msra.mxu0 0.0
  %1792 = vmatprep.subr.mxu0 0.0
  %1793 = vmatpush2.msra.mxu0 0.0
  %1794 = vmatprep.subr.mxu0 0.0
  %1795 = vmatpush2.msra.mxu0 0.0
  %1796 = vmatprep.mubr.f32.mxu0 0.0
  %1797 = vmatmul.mubr.f32.gmra.mxu0 %v1727
  %v1798 = vpop.f32.mrf.mxu0
  %v1799 = vadd.f32 0.0, %v1798
  %v1800 = vpop.f32.mrf.mxu0
  %1801 = vmatprep.mubr.f32.mxu0 0.0
  %1802 = vmatmul.mubr.f32.gmra.mxu0 %v1730
  %v1803 = vpop.f32.mrf.mxu0
  %v1804 = vadd.f32 0.0, %v1803
  %v1805 = vpop.f32.mrf.mxu0
  %1806 = vdwg.mxu0
  %v1807 = vadd.f32 %v1621, %v1799
  %v1808 = vadd.f32 %v1622, %v1804
  %1809 = vset.pattern.permute.xlu0 9
  %1810 = vperm.xlu0 %1809, %v56
  %v1811 = vpop.permute.xlu0 %1810
  %1813 = vset.pattern.permute.xlu0 9
  %1814 = vperm.xlu0 %1813, %v57
  %v1815 = vpop.permute.xlu0 %1814
  %v1817 = vmul.f32 %v1811, %v124
  %v1818 = vmul.f32 %v1815, %v124
  %1819 = vset.pattern.permute.xlu0 9
  %1820 = vperm.xlu0 %1819, %v58
  %v1821 = vpop.permute.xlu0 %1820
  %1823 = vset.pattern.permute.xlu0 9
  %1824 = vperm.xlu0 %1823, %v59
  %v1825 = vpop.permute.xlu0 %1824
  %v1827 = vmul.f32 %v1821, %v142
  %v1828 = vmul.f32 %v1825, %v142
  %v1829 = vadd.f32 %v1817, %v1827
  %v1830 = vadd.f32 %v1818, %v1828
  %v1831 = vadd.f32 %v1829, %v152
  %v1832 = vadd.f32 %v1830, %v152
  %v1833 = vmax.f32 %v1831, 0.0
  %v1834 = vmax.f32 %v1832, 0.0
  %1835 = vmatprep.subr.mxu0 0.0
  %1836 = vmatpush1.msra.mxu0 %v78
  %1837 = vmatprep.subr.mxu0 0.0
  %1838 = vmatpush1.msra.mxu0 %v77
  %1839 = vmatprep.subr.mxu0 0.0
  %1840 = vmatpush1.msra.mxu0 %v76
  %1841 = vmatprep.subr.mxu0 0.0
  %1842 = vmatpush1.msra.mxu0 %v75
  %1843 = vmatprep.subr.mxu0 0.0
  %1844 = vmatpush1.msra.mxu0 %v74
  %1845 = vmatprep.subr.mxu0 0.0
  %1846 = vmatpush1.msra.mxu0 %v73
  %1847 = vmatprep.subr.mxu0 0.0
  %1848 = vmatpush1.msra.mxu0 %v72
  %1849 = vmatprep.subr.mxu0 0.0
  %1850 = vmatpush1.msra.mxu0 %v71
  %1851 = vmatprep.subr.mxu0 0.0
  %1852 = vmatpush1.msra.mxu0 %v70
  %1853 = vmatprep.subr.mxu0 0.0
  %1854 = vmatpush1.msra.mxu0 %v69
  %1855 = vmatprep.subr.mxu0 0.0
  %1856 = vmatpush1.msra.mxu0 %v68
  %1857 = vmatprep.subr.mxu0 0.0
  %1858 = vmatpush1.msra.mxu0 %v67
  %1859 = vmatprep.subr.mxu0 0.0
  %1860 = vmatpush1.msra.mxu0 %v66
  %1861 = vmatprep.subr.mxu0 0.0
  %1862 = vmatpush1.msra.mxu0 %v65
  %1863 = vmatprep.subr.mxu0 0.0
  %1864 = vmatpush1.msra.mxu0 %v64
  %1865 = vmatprep.subr.mxu0 0.0
  %1866 = vmatpush1.msra.mxu0 %v63
  %1867 = vmatprep.subr.mxu0 0.0
  %1868 = vmatpush2.msra.mxu0 0.0
  %1869 = vmatprep.subr.mxu0 0.0
  %1870 = vmatpush2.msra.mxu0 0.0
  %1871 = vmatprep.subr.mxu0 0.0
  %1872 = vmatpush2.msra.mxu0 0.0
  %1873 = vmatprep.subr.mxu0 0.0
  %1874 = vmatpush2.msra.mxu0 0.0
  %1875 = vmatprep.subr.mxu0 0.0
  %1876 = vmatpush2.msra.mxu0 0.0
  %1877 = vmatprep.subr.mxu0 0.0
  %1878 = vmatpush2.msra.mxu0 0.0
  %1879 = vmatprep.subr.mxu0 0.0
  %1880 = vmatpush2.msra.mxu0 0.0
  %1881 = vmatprep.subr.mxu0 0.0
  %1882 = vmatpush2.msra.mxu0 0.0
  %1883 = vmatprep.subr.mxu0 0.0
  %1884 = vmatpush2.msra.mxu0 0.0
  %1885 = vmatprep.subr.mxu0 0.0
  %1886 = vmatpush2.msra.mxu0 0.0
  %1887 = vmatprep.subr.mxu0 0.0
  %1888 = vmatpush2.msra.mxu0 0.0
  %1889 = vmatprep.subr.mxu0 0.0
  %1890 = vmatpush2.msra.mxu0 0.0
  %1891 = vmatprep.subr.mxu0 0.0
  %1892 = vmatpush2.msra.mxu0 0.0
  %1893 = vmatprep.subr.mxu0 0.0
  %1894 = vmatpush2.msra.mxu0 0.0
  %1895 = vmatprep.subr.mxu0 0.0
  %1896 = vmatpush2.msra.mxu0 0.0
  %1897 = vmatprep.subr.mxu0 0.0
  %1898 = vmatpush2.msra.mxu0 0.0
  %1899 = vmatprep.mubr.f32.mxu0 0.0
  %1900 = vmatmul.mubr.f32.gmra.mxu0 %v1833
  %v1901 = vpop.f32.mrf.mxu0
  %v1902 = vadd.f32 %v162, %v1901
  %v1903 = vpop.f32.mrf.mxu0
  %1904 = vmatprep.mubr.f32.mxu0 0.0
  %1905 = vmatmul.mubr.f32.gmra.mxu0 %v1834
  %v1906 = vpop.f32.mrf.mxu0
  %v1907 = vadd.f32 %v162, %v1906
  %v1908 = vpop.f32.mrf.mxu0
  %1909 = vdwg.mxu0
  %v1910 = vmax.f32 %v1902, 0.0
  %v1911 = vmax.f32 %v1907, 0.0
  %v1913 = vsel %vm344, %v1910, 0
  %v1916 = vsel %vm344, %v1911, 0
  %1918 = vmatprep.subr.mxu0 0.0
  %1919 = vmatpush1.msra.mxu0 0.0
  %1920 = vmatprep.subr.mxu0 0.0
  %1921 = vmatpush1.msra.mxu0 0.0
  %1922 = vmatprep.subr.mxu0 0.0
  %1923 = vmatpush1.msra.mxu0 0.0
  %1924 = vmatprep.subr.mxu0 0.0
  %1925 = vmatpush1.msra.mxu0 0.0
  %1926 = vmatprep.subr.mxu0 0.0
  %1927 = vmatpush1.msra.mxu0 0.0
  %1928 = vmatprep.subr.mxu0 0.0
  %1929 = vmatpush1.msra.mxu0 0.0
  %1930 = vmatprep.subr.mxu0 0.0
  %1931 = vmatpush1.msra.mxu0 0.0
  %1932 = vmatprep.subr.mxu0 0.0
  %1933 = vmatpush1.msra.mxu0 0.0
  %1934 = vmatprep.subr.mxu0 0.0
  %1935 = vmatpush1.msra.mxu0 0.0
  %1936 = vmatprep.subr.mxu0 0.0
  %1937 = vmatpush1.msra.mxu0 0.0
  %1938 = vmatprep.subr.mxu0 0.0
  %1939 = vmatpush1.msra.mxu0 0.0
  %1940 = vmatprep.subr.mxu0 0.0
  %1941 = vmatpush1.msra.mxu0 0.0
  %1942 = vmatprep.subr.mxu0 0.0
  %1943 = vmatpush1.msra.mxu0 0.0
  %1944 = vmatprep.subr.mxu0 0.0
  %1945 = vmatpush1.msra.mxu0 0.0
  %1946 = vmatprep.subr.mxu0 0.0
  %1947 = vmatpush1.msra.mxu0 0.0
  %1948 = vmatprep.subr.mxu0 0.0
  %1949 = vmatpush1.msra.mxu0 %v89
  %1950 = vmatprep.subr.mxu0 0.0
  %1951 = vmatpush2.msra.mxu0 0.0
  %1952 = vmatprep.subr.mxu0 0.0
  %1953 = vmatpush2.msra.mxu0 0.0
  %1954 = vmatprep.subr.mxu0 0.0
  %1955 = vmatpush2.msra.mxu0 0.0
  %1956 = vmatprep.subr.mxu0 0.0
  %1957 = vmatpush2.msra.mxu0 0.0
  %1958 = vmatprep.subr.mxu0 0.0
  %1959 = vmatpush2.msra.mxu0 0.0
  %1960 = vmatprep.subr.mxu0 0.0
  %1961 = vmatpush2.msra.mxu0 0.0
  %1962 = vmatprep.subr.mxu0 0.0
  %1963 = vmatpush2.msra.mxu0 0.0
  %1964 = vmatprep.subr.mxu0 0.0
  %1965 = vmatpush2.msra.mxu0 0.0
  %1966 = vmatprep.subr.mxu0 0.0
  %1967 = vmatpush2.msra.mxu0 0.0
  %1968 = vmatprep.subr.mxu0 0.0
  %1969 = vmatpush2.msra.mxu0 0.0
  %1970 = vmatprep.subr.mxu0 0.0
  %1971 = vmatpush2.msra.mxu0 0.0
  %1972 = vmatprep.subr.mxu0 0.0
  %1973 = vmatpush2.msra.mxu0 0.0
  %1974 = vmatprep.subr.mxu0 0.0
  %1975 = vmatpush2.msra.mxu0 0.0
  %1976 = vmatprep.subr.mxu0 0.0
  %1977 = vmatpush2.msra.mxu0 0.0
  %1978 = vmatprep.subr.mxu0 0.0
  %1979 = vmatpush2.msra.mxu0 0.0
  %1980 = vmatprep.subr.mxu0 0.0
  %1981 = vmatpush2.msra.mxu0 0.0
  %1982 = vmatprep.mubr.f32.mxu0 0.0
  %1983 = vmatmul.mubr.f32.gmra.mxu0 %v1913
  %v1984 = vpop.f32.mrf.mxu0
  %v1985 = vadd.f32 0.0, %v1984
  %v1986 = vpop.f32.mrf.mxu0
  %1987 = vmatprep.mubr.f32.mxu0 0.0
  %1988 = vmatmul.mubr.f32.gmra.mxu0 %v1916
  %v1989 = vpop.f32.mrf.mxu0
  %v1990 = vadd.f32 0.0, %v1989
  %v1991 = vpop.f32.mrf.mxu0
  %1992 = vdwg.mxu0
  %v1993 = vadd.f32 %v1807, %v1985
  %v1994 = vadd.f32 %v1808, %v1990
  %1995 = vset.pattern.permute.xlu0 10
  %1996 = vperm.xlu0 %1995, %v56
  %v1997 = vpop.permute.xlu0 %1996
  %1999 = vset.pattern.permute.xlu0 10
  %2000 = vperm.xlu0 %1999, %v57
  %v2001 = vpop.permute.xlu0 %2000
  %v2003 = vmul.f32 %v1997, %v124
  %v2004 = vmul.f32 %v2001, %v124
  %2005 = vset.pattern.permute.xlu0 10
  %2006 = vperm.xlu0 %2005, %v58
  %v2007 = vpop.permute.xlu0 %2006
  %2009 = vset.pattern.permute.xlu0 10
  %2010 = vperm.xlu0 %2009, %v59
  %v2011 = vpop.permute.xlu0 %2010
  %v2013 = vmul.f32 %v2007, %v142
  %v2014 = vmul.f32 %v2011, %v142
  %v2015 = vadd.f32 %v2003, %v2013
  %v2016 = vadd.f32 %v2004, %v2014
  %v2017 = vadd.f32 %v2015, %v152
  %v2018 = vadd.f32 %v2016, %v152
  %v2019 = vmax.f32 %v2017, 0.0
  %v2020 = vmax.f32 %v2018, 0.0
  %2021 = vmatprep.subr.mxu0 0.0
  %2022 = vmatpush1.msra.mxu0 %v78
  %2023 = vmatprep.subr.mxu0 0.0
  %2024 = vmatpush1.msra.mxu0 %v77
  %2025 = vmatprep.subr.mxu0 0.0
  %2026 = vmatpush1.msra.mxu0 %v76
  %2027 = vmatprep.subr.mxu0 0.0
  %2028 = vmatpush1.msra.mxu0 %v75
  %2029 = vmatprep.subr.mxu0 0.0
  %2030 = vmatpush1.msra.mxu0 %v74
  %2031 = vmatprep.subr.mxu0 0.0
  %2032 = vmatpush1.msra.mxu0 %v73
  %2033 = vmatprep.subr.mxu0 0.0
  %2034 = vmatpush1.msra.mxu0 %v72
  %2035 = vmatprep.subr.mxu0 0.0
  %2036 = vmatpush1.msra.mxu0 %v71
  %2037 = vmatprep.subr.mxu0 0.0
  %2038 = vmatpush1.msra.mxu0 %v70
  %2039 = vmatprep.subr.mxu0 0.0
  %2040 = vmatpush1.msra.mxu0 %v69
  %2041 = vmatprep.subr.mxu0 0.0
  %2042 = vmatpush1.msra.mxu0 %v68
  %2043 = vmatprep.subr.mxu0 0.0
  %2044 = vmatpush1.msra.mxu0 %v67
  %2045 = vmatprep.subr.mxu0 0.0
  %2046 = vmatpush1.msra.mxu0 %v66
  %2047 = vmatprep.subr.mxu0 0.0
  %2048 = vmatpush1.msra.mxu0 %v65
  %2049 = vmatprep.subr.mxu0 0.0
  %2050 = vmatpush1.msra.mxu0 %v64
  %2051 = vmatprep.subr.mxu0 0.0
  %2052 = vmatpush1.msra.mxu0 %v63
  %2053 = vmatprep.subr.mxu0 0.0
  %2054 = vmatpush2.msra.mxu0 0.0
  %2055 = vmatprep.subr.mxu0 0.0
  %2056 = vmatpush2.msra.mxu0 0.0
  %2057 = vmatprep.subr.mxu0 0.0
  %2058 = vmatpush2.msra.mxu0 0.0
  %2059 = vmatprep.subr.mxu0 0.0
  %2060 = vmatpush2.msra.mxu0 0.0
  %2061 = vmatprep.subr.mxu0 0.0
  %2062 = vmatpush2.msra.mxu0 0.0
  %2063 = vmatprep.subr.mxu0 0.0
  %2064 = vmatpush2.msra.mxu0 0.0
  %2065 = vmatprep.subr.mxu0 0.0
  %2066 = vmatpush2.msra.mxu0 0.0
  %2067 = vmatprep.subr.mxu0 0.0
  %2068 = vmatpush2.msra.mxu0 0.0
  %2069 = vmatprep.subr.mxu0 0.0
  %2070 = vmatpush2.msra.mxu0 0.0
  %2071 = vmatprep.subr.mxu0 0.0
  %2072 = vmatpush2.msra.mxu0 0.0
  %2073 = vmatprep.subr.mxu0 0.0
  %2074 = vmatpush2.msra.mxu0 0.0
  %2075 = vmatprep.subr.mxu0 0.0
  %2076 = vmatpush2.msra.mxu0 0.0
  %2077 = vmatprep.subr.mxu0 0.0
  %2078 = vmatpush2.msra.mxu0 0.0
  %2079 = vmatprep.subr.mxu0 0.0
  %2080 = vmatpush2.msra.mxu0 0.0
  %2081 = vmatprep.subr.mxu0 0.0
  %2082 = vmatpush2.msra.mxu0 0.0
  %2083 = vmatprep.subr.mxu0 0.0
  %2084 = vmatpush2.msra.mxu0 0.0
  %2085 = vmatprep.mubr.f32.mxu0 0.0
  %2086 = vmatmul.mubr.f32.gmra.mxu0 %v2019
  %v2087 = vpop.f32.mrf.mxu0
  %v2088 = vadd.f32 %v162, %v2087
  %v2089 = vpop.f32.mrf.mxu0
  %2090 = vmatprep.mubr.f32.mxu0 0.0
  %2091 = vmatmul.mubr.f32.gmra.mxu0 %v2020
  %v2092 = vpop.f32.mrf.mxu0
  %v2093 = vadd.f32 %v162, %v2092
  %v2094 = vpop.f32.mrf.mxu0
  %2095 = vdwg.mxu0
  %v2096 = vmax.f32 %v2088, 0.0
  %v2097 = vmax.f32 %v2093, 0.0
  %v2099 = vsel %vm344, %v2096, 0
  %v2102 = vsel %vm344, %v2097, 0
  %2104 = vmatprep.subr.mxu0 0.0
  %2105 = vmatpush1.msra.mxu0 0.0
  %2106 = vmatprep.subr.mxu0 0.0
  %2107 = vmatpush1.msra.mxu0 0.0
  %2108 = vmatprep.subr.mxu0 0.0
  %2109 = vmatpush1.msra.mxu0 0.0
  %2110 = vmatprep.subr.mxu0 0.0
  %2111 = vmatpush1.msra.mxu0 0.0
  %2112 = vmatprep.subr.mxu0 0.0
  %2113 = vmatpush1.msra.mxu0 0.0
  %2114 = vmatprep.subr.mxu0 0.0
  %2115 = vmatpush1.msra.mxu0 0.0
  %2116 = vmatprep.subr.mxu0 0.0
  %2117 = vmatpush1.msra.mxu0 0.0
  %2118 = vmatprep.subr.mxu0 0.0
  %2119 = vmatpush1.msra.mxu0 0.0
  %2120 = vmatprep.subr.mxu0 0.0
  %2121 = vmatpush1.msra.mxu0 0.0
  %2122 = vmatprep.subr.mxu0 0.0
  %2123 = vmatpush1.msra.mxu0 0.0
  %2124 = vmatprep.subr.mxu0 0.0
  %2125 = vmatpush1.msra.mxu0 0.0
  %2126 = vmatprep.subr.mxu0 0.0
  %2127 = vmatpush1.msra.mxu0 0.0
  %2128 = vmatprep.subr.mxu0 0.0
  %2129 = vmatpush1.msra.mxu0 0.0
  %2130 = vmatprep.subr.mxu0 0.0
  %2131 = vmatpush1.msra.mxu0 0.0
  %2132 = vmatprep.subr.mxu0 0.0
  %2133 = vmatpush1.msra.mxu0 0.0
  %2134 = vmatprep.subr.mxu0 0.0
  %2135 = vmatpush1.msra.mxu0 %v90
  %2136 = vmatprep.subr.mxu0 0.0
  %2137 = vmatpush2.msra.mxu0 0.0
  %2138 = vmatprep.subr.mxu0 0.0
  %2139 = vmatpush2.msra.mxu0 0.0
  %2140 = vmatprep.subr.mxu0 0.0
  %2141 = vmatpush2.msra.mxu0 0.0
  %2142 = vmatprep.subr.mxu0 0.0
  %2143 = vmatpush2.msra.mxu0 0.0
  %2144 = vmatprep.subr.mxu0 0.0
  %2145 = vmatpush2.msra.mxu0 0.0
  %2146 = vmatprep.subr.mxu0 0.0
  %2147 = vmatpush2.msra.mxu0 0.0
  %2148 = vmatprep.subr.mxu0 0.0
  %2149 = vmatpush2.msra.mxu0 0.0
  %2150 = vmatprep.subr.mxu0 0.0
  %2151 = vmatpush2.msra.mxu0 0.0
  %2152 = vmatprep.subr.mxu0 0.0
  %2153 = vmatpush2.msra.mxu0 0.0
  %2154 = vmatprep.subr.mxu0 0.0
  %2155 = vmatpush2.msra.mxu0 0.0
  %2156 = vmatprep.subr.mxu0 0.0
  %2157 = vmatpush2.msra.mxu0 0.0
  %2158 = vmatprep.subr.mxu0 0.0
  %2159 = vmatpush2.msra.mxu0 0.0
  %2160 = vmatprep.subr.mxu0 0.0
  %2161 = vmatpush2.msra.mxu0 0.0
  %2162 = vmatprep.subr.mxu0 0.0
  %2163 = vmatpush2.msra.mxu0 0.0
  %2164 = vmatprep.subr.mxu0 0.0
  %2165 = vmatpush2.msra.mxu0 0.0
  %2166 = vmatprep.subr.mxu0 0.0
  %2167 = vmatpush2.msra.mxu0 0.0
  %2168 = vmatprep.mubr.f32.mxu0 0.0
  %2169 = vmatmul.mubr.f32.gmra.mxu0 %v2099
  %v2170 = vpop.f32.mrf.mxu0
  %v2171 = vadd.f32 0.0, %v2170
  %v2172 = vpop.f32.mrf.mxu0
  %2173 = vmatprep.mubr.f32.mxu0 0.0
  %2174 = vmatmul.mubr.f32.gmra.mxu0 %v2102
  %v2175 = vpop.f32.mrf.mxu0
  %v2176 = vadd.f32 0.0, %v2175
  %v2177 = vpop.f32.mrf.mxu0
  %2178 = vdwg.mxu0
  %v2179 = vadd.f32 %v1993, %v2171
  %v2180 = vadd.f32 %v1994, %v2176
  %2181 = vset.pattern.permute.xlu0 11
  %2182 = vperm.xlu0 %2181, %v56
  %v2183 = vpop.permute.xlu0 %2182
  %2185 = vset.pattern.permute.xlu0 11
  %2186 = vperm.xlu0 %2185, %v57
  %v2187 = vpop.permute.xlu0 %2186
  %v2189 = vmul.f32 %v2183, %v124
  %v2190 = vmul.f32 %v2187, %v124
  %2191 = vset.pattern.permute.xlu0 11
  %2192 = vperm.xlu0 %2191, %v58
  %v2193 = vpop.permute.xlu0 %2192
  %2195 = vset.pattern.permute.xlu0 11
  %2196 = vperm.xlu0 %2195, %v59
  %v2197 = vpop.permute.xlu0 %2196
  %v2199 = vmul.f32 %v2193, %v142
  %v2200 = vmul.f32 %v2197, %v142
  %v2201 = vadd.f32 %v2189, %v2199
  %v2202 = vadd.f32 %v2190, %v2200
  %v2203 = vadd.f32 %v2201, %v152
  %v2204 = vadd.f32 %v2202, %v152
  %v2205 = vmax.f32 %v2203, 0.0
  %v2206 = vmax.f32 %v2204, 0.0
  %2207 = vmatprep.subr.mxu0 0.0
  %2208 = vmatpush1.msra.mxu0 %v78
  %2209 = vmatprep.subr.mxu0 0.0
  %2210 = vmatpush1.msra.mxu0 %v77
  %2211 = vmatprep.subr.mxu0 0.0
  %2212 = vmatpush1.msra.mxu0 %v76
  %2213 = vmatprep.subr.mxu0 0.0
  %2214 = vmatpush1.msra.mxu0 %v75
  %2215 = vmatprep.subr.mxu0 0.0
  %2216 = vmatpush1.msra.mxu0 %v74
  %2217 = vmatprep.subr.mxu0 0.0
  %2218 = vmatpush1.msra.mxu0 %v73
  %2219 = vmatprep.subr.mxu0 0.0
  %2220 = vmatpush1.msra.mxu0 %v72
  %2221 = vmatprep.subr.mxu0 0.0
  %2222 = vmatpush1.msra.mxu0 %v71
  %2223 = vmatprep.subr.mxu0 0.0
  %2224 = vmatpush1.msra.mxu0 %v70
  %2225 = vmatprep.subr.mxu0 0.0
  %2226 = vmatpush1.msra.mxu0 %v69
  %2227 = vmatprep.subr.mxu0 0.0
  %2228 = vmatpush1.msra.mxu0 %v68
  %2229 = vmatprep.subr.mxu0 0.0
  %2230 = vmatpush1.msra.mxu0 %v67
  %2231 = vmatprep.subr.mxu0 0.0
  %2232 = vmatpush1.msra.mxu0 %v66
  %2233 = vmatprep.subr.mxu0 0.0
  %2234 = vmatpush1.msra.mxu0 %v65
  %2235 = vmatprep.subr.mxu0 0.0
  %2236 = vmatpush1.msra.mxu0 %v64
  %2237 = vmatprep.subr.mxu0 0.0
  %2238 = vmatpush1.msra.mxu0 %v63
  %2239 = vmatprep.subr.mxu0 0.0
  %2240 = vmatpush2.msra.mxu0 0.0
  %2241 = vmatprep.subr.mxu0 0.0
  %2242 = vmatpush2.msra.mxu0 0.0
  %2243 = vmatprep.subr.mxu0 0.0
  %2244 = vmatpush2.msra.mxu0 0.0
  %2245 = vmatprep.subr.mxu0 0.0
  %2246 = vmatpush2.msra.mxu0 0.0
  %2247 = vmatprep.subr.mxu0 0.0
  %2248 = vmatpush2.msra.mxu0 0.0
  %2249 = vmatprep.subr.mxu0 0.0
  %2250 = vmatpush2.msra.mxu0 0.0
  %2251 = vmatprep.subr.mxu0 0.0
  %2252 = vmatpush2.msra.mxu0 0.0
  %2253 = vmatprep.subr.mxu0 0.0
  %2254 = vmatpush2.msra.mxu0 0.0
  %2255 = vmatprep.subr.mxu0 0.0
  %2256 = vmatpush2.msra.mxu0 0.0
  %2257 = vmatprep.subr.mxu0 0.0
  %2258 = vmatpush2.msra.mxu0 0.0
  %2259 = vmatprep.subr.mxu0 0.0
  %2260 = vmatpush2.msra.mxu0 0.0
  %2261 = vmatprep.subr.mxu0 0.0
  %2262 = vmatpush2.msra.mxu0 0.0
  %2263 = vmatprep.subr.mxu0 0.0
  %2264 = vmatpush2.msra.mxu0 0.0
  %2265 = vmatprep.subr.mxu0 0.0
  %2266 = vmatpush2.msra.mxu0 0.0
  %2267 = vmatprep.subr.mxu0 0.0
  %2268 = vmatpush2.msra.mxu0 0.0
  %2269 = vmatprep.subr.mxu0 0.0
  %2270 = vmatpush2.msra.mxu0 0.0
  %2271 = vmatprep.mubr.f32.mxu0 0.0
  %2272 = vmatmul.mubr.f32.gmra.mxu0 %v2205
  %v2273 = vpop.f32.mrf.mxu0
  %v2274 = vadd.f32 %v162, %v2273
  %v2275 = vpop.f32.mrf.mxu0
  %2276 = vmatprep.mubr.f32.mxu0 0.0
  %2277 = vmatmul.mubr.f32.gmra.mxu0 %v2206
  %v2278 = vpop.f32.mrf.mxu0
  %v2279 = vadd.f32 %v162, %v2278
  %v2280 = vpop.f32.mrf.mxu0
  %2281 = vdwg.mxu0
  %v2282 = vmax.f32 %v2274, 0.0
  %v2283 = vmax.f32 %v2279, 0.0
  %v2285 = vsel %vm344, %v2282, 0
  %v2288 = vsel %vm344, %v2283, 0
  %2290 = vmatprep.subr.mxu0 0.0
  %2291 = vmatpush1.msra.mxu0 0.0
  %2292 = vmatprep.subr.mxu0 0.0
  %2293 = vmatpush1.msra.mxu0 0.0
  %2294 = vmatprep.subr.mxu0 0.0
  %2295 = vmatpush1.msra.mxu0 0.0
  %2296 = vmatprep.subr.mxu0 0.0
  %2297 = vmatpush1.msra.mxu0 0.0
  %2298 = vmatprep.subr.mxu0 0.0
  %2299 = vmatpush1.msra.mxu0 0.0
  %2300 = vmatprep.subr.mxu0 0.0
  %2301 = vmatpush1.msra.mxu0 0.0
  %2302 = vmatprep.subr.mxu0 0.0
  %2303 = vmatpush1.msra.mxu0 0.0
  %2304 = vmatprep.subr.mxu0 0.0
  %2305 = vmatpush1.msra.mxu0 0.0
  %2306 = vmatprep.subr.mxu0 0.0
  %2307 = vmatpush1.msra.mxu0 0.0
  %2308 = vmatprep.subr.mxu0 0.0
  %2309 = vmatpush1.msra.mxu0 0.0
  %2310 = vmatprep.subr.mxu0 0.0
  %2311 = vmatpush1.msra.mxu0 0.0
  %2312 = vmatprep.subr.mxu0 0.0
  %2313 = vmatpush1.msra.mxu0 0.0
  %2314 = vmatprep.subr.mxu0 0.0
  %2315 = vmatpush1.msra.mxu0 0.0
  %2316 = vmatprep.subr.mxu0 0.0
  %2317 = vmatpush1.msra.mxu0 0.0
  %2318 = vmatprep.subr.mxu0 0.0
  %2319 = vmatpush1.msra.mxu0 0.0
  %2320 = vmatprep.subr.mxu0 0.0
  %2321 = vmatpush1.msra.mxu0 %v91
  %2322 = vmatprep.subr.mxu0 0.0
  %2323 = vmatpush2.msra.mxu0 0.0
  %2324 = vmatprep.subr.mxu0 0.0
  %2325 = vmatpush2.msra.mxu0 0.0
  %2326 = vmatprep.subr.mxu0 0.0
  %2327 = vmatpush2.msra.mxu0 0.0
  %2328 = vmatprep.subr.mxu0 0.0
  %2329 = vmatpush2.msra.mxu0 0.0
  %2330 = vmatprep.subr.mxu0 0.0
  %2331 = vmatpush2.msra.mxu0 0.0
  %2332 = vmatprep.subr.mxu0 0.0
  %2333 = vmatpush2.msra.mxu0 0.0
  %2334 = vmatprep.subr.mxu0 0.0
  %2335 = vmatpush2.msra.mxu0 0.0
  %2336 = vmatprep.subr.mxu0 0.0
  %2337 = vmatpush2.msra.mxu0 0.0
  %2338 = vmatprep.subr.mxu0 0.0
  %2339 = vmatpush2.msra.mxu0 0.0
  %2340 = vmatprep.subr.mxu0 0.0
  %2341 = vmatpush2.msra.mxu0 0.0
  %2342 = vmatprep.subr.mxu0 0.0
  %2343 = vmatpush2.msra.mxu0 0.0
  %2344 = vmatprep.subr.mxu0 0.0
  %2345 = vmatpush2.msra.mxu0 0.0
  %2346 = vmatprep.subr.mxu0 0.0
  %2347 = vmatpush2.msra.mxu0 0.0
  %2348 = vmatprep.subr.mxu0 0.0
  %2349 = vmatpush2.msra.mxu0 0.0
  %2350 = vmatprep.subr.mxu0 0.0
  %2351 = vmatpush2.msra.mxu0 0.0
  %2352 = vmatprep.subr.mxu0 0.0
  %2353 = vmatpush2.msra.mxu0 0.0
  %2354 = vmatprep.mubr.f32.mxu0 0.0
  %2355 = vmatmul.mubr.f32.gmra.mxu0 %v2285
  %v2356 = vpop.f32.mrf.mxu0
  %v2357 = vadd.f32 0.0, %v2356
  %v2358 = vpop.f32.mrf.mxu0
  %2359 = vmatprep.mubr.f32.mxu0 0.0
  %2360 = vmatmul.mubr.f32.gmra.mxu0 %v2288
  %v2361 = vpop.f32.mrf.mxu0
  %v2362 = vadd.f32 0.0, %v2361
  %v2363 = vpop.f32.mrf.mxu0
  %2364 = vdwg.mxu0
  %v2365 = vadd.f32 %v2179, %v2357
  %v2366 = vadd.f32 %v2180, %v2362
  %2367 = vset.pattern.permute.xlu0 12
  %2368 = vperm.xlu0 %2367, %v56
  %v2369 = vpop.permute.xlu0 %2368
  %2371 = vset.pattern.permute.xlu0 12
  %2372 = vperm.xlu0 %2371, %v57
  %v2373 = vpop.permute.xlu0 %2372
  %v2375 = vmul.f32 %v2369, %v124
  %v2376 = vmul.f32 %v2373, %v124
  %2377 = vset.pattern.permute.xlu0 12
  %2378 = vperm.xlu0 %2377, %v58
  %v2379 = vpop.permute.xlu0 %2378
  %2381 = vset.pattern.permute.xlu0 12
  %2382 = vperm.xlu0 %2381, %v59
  %v2383 = vpop.permute.xlu0 %2382
  %v2385 = vmul.f32 %v2379, %v142
  %v2386 = vmul.f32 %v2383, %v142
  %v2387 = vadd.f32 %v2375, %v2385
  %v2388 = vadd.f32 %v2376, %v2386
  %v2389 = vadd.f32 %v2387, %v152
  %v2390 = vadd.f32 %v2388, %v152
  %v2391 = vmax.f32 %v2389, 0.0
  %v2392 = vmax.f32 %v2390, 0.0
  %2393 = vmatprep.subr.mxu0 0.0
  %2394 = vmatpush1.msra.mxu0 %v78
  %2395 = vmatprep.subr.mxu0 0.0
  %2396 = vmatpush1.msra.mxu0 %v77
  %2397 = vmatprep.subr.mxu0 0.0
  %2398 = vmatpush1.msra.mxu0 %v76
  %2399 = vmatprep.subr.mxu0 0.0
  %2400 = vmatpush1.msra.mxu0 %v75
  %2401 = vmatprep.subr.mxu0 0.0
  %2402 = vmatpush1.msra.mxu0 %v74
  %2403 = vmatprep.subr.mxu0 0.0
  %2404 = vmatpush1.msra.mxu0 %v73
  %2405 = vmatprep.subr.mxu0 0.0
  %2406 = vmatpush1.msra.mxu0 %v72
  %2407 = vmatprep.subr.mxu0 0.0
  %2408 = vmatpush1.msra.mxu0 %v71
  %2409 = vmatprep.subr.mxu0 0.0
  %2410 = vmatpush1.msra.mxu0 %v70
  %2411 = vmatprep.subr.mxu0 0.0
  %2412 = vmatpush1.msra.mxu0 %v69
  %2413 = vmatprep.subr.mxu0 0.0
  %2414 = vmatpush1.msra.mxu0 %v68
  %2415 = vmatprep.subr.mxu0 0.0
  %2416 = vmatpush1.msra.mxu0 %v67
  %2417 = vmatprep.subr.mxu0 0.0
  %2418 = vmatpush1.msra.mxu0 %v66
  %2419 = vmatprep.subr.mxu0 0.0
  %2420 = vmatpush1.msra.mxu0 %v65
  %2421 = vmatprep.subr.mxu0 0.0
  %2422 = vmatpush1.msra.mxu0 %v64
  %2423 = vmatprep.subr.mxu0 0.0
  %2424 = vmatpush1.msra.mxu0 %v63
  %2425 = vmatprep.subr.mxu0 0.0
  %2426 = vmatpush2.msra.mxu0 0.0
  %2427 = vmatprep.subr.mxu0 0.0
  %2428 = vmatpush2.msra.mxu0 0.0
  %2429 = vmatprep.subr.mxu0 0.0
  %2430 = vmatpush2.msra.mxu0 0.0
  %2431 = vmatprep.subr.mxu0 0.0
  %2432 = vmatpush2.msra.mxu0 0.0
  %2433 = vmatprep.subr.mxu0 0.0
  %2434 = vmatpush2.msra.mxu0 0.0
  %2435 = vmatprep.subr.mxu0 0.0
  %2436 = vmatpush2.msra.mxu0 0.0
  %2437 = vmatprep.subr.mxu0 0.0
  %2438 = vmatpush2.msra.mxu0 0.0
  %2439 = vmatprep.subr.mxu0 0.0
  %2440 = vmatpush2.msra.mxu0 0.0
  %2441 = vmatprep.subr.mxu0 0.0
  %2442 = vmatpush2.msra.mxu0 0.0
  %2443 = vmatprep.subr.mxu0 0.0
  %2444 = vmatpush2.msra.mxu0 0.0
  %2445 = vmatprep.subr.mxu0 0.0
  %2446 = vmatpush2.msra.mxu0 0.0
  %2447 = vmatprep.subr.mxu0 0.0
  %2448 = vmatpush2.msra.mxu0 0.0
  %2449 = vmatprep.subr.mxu0 0.0
  %2450 = vmatpush2.msra.mxu0 0.0
  %2451 = vmatprep.subr.mxu0 0.0
  %2452 = vmatpush2.msra.mxu0 0.0
  %2453 = vmatprep.subr.mxu0 0.0
  %2454 = vmatpush2.msra.mxu0 0.0
  %2455 = vmatprep.subr.mxu0 0.0
  %2456 = vmatpush2.msra.mxu0 0.0
  %2457 = vmatprep.mubr.f32.mxu0 0.0
  %2458 = vmatmul.mubr.f32.gmra.mxu0 %v2391
  %v2459 = vpop.f32.mrf.mxu0
  %v2460 = vadd.f32 %v162, %v2459
  %v2461 = vpop.f32.mrf.mxu0
  %2462 = vmatprep.mubr.f32.mxu0 0.0
  %2463 = vmatmul.mubr.f32.gmra.mxu0 %v2392
  %v2464 = vpop.f32.mrf.mxu0
  %v2465 = vadd.f32 %v162, %v2464
  %v2466 = vpop.f32.mrf.mxu0
  %2467 = vdwg.mxu0
  %v2468 = vmax.f32 %v2460, 0.0
  %v2469 = vmax.f32 %v2465, 0.0
  %v2471 = vsel %vm344, %v2468, 0
  %v2474 = vsel %vm344, %v2469, 0
  %2476 = vmatprep.subr.mxu0 0.0
  %2477 = vmatpush1.msra.mxu0 0.0
  %2478 = vmatprep.subr.mxu0 0.0
  %2479 = vmatpush1.msra.mxu0 0.0
  %2480 = vmatprep.subr.mxu0 0.0
  %2481 = vmatpush1.msra.mxu0 0.0
  %2482 = vmatprep.subr.mxu0 0.0
  %2483 = vmatpush1.msra.mxu0 0.0
  %2484 = vmatprep.subr.mxu0 0.0
  %2485 = vmatpush1.msra.mxu0 0.0
  %2486 = vmatprep.subr.mxu0 0.0
  %2487 = vmatpush1.msra.mxu0 0.0
  %2488 = vmatprep.subr.mxu0 0.0
  %2489 = vmatpush1.msra.mxu0 0.0
  %2490 = vmatprep.subr.mxu0 0.0
  %2491 = vmatpush1.msra.mxu0 0.0
  %2492 = vmatprep.subr.mxu0 0.0
  %2493 = vmatpush1.msra.mxu0 0.0
  %2494 = vmatprep.subr.mxu0 0.0
  %2495 = vmatpush1.msra.mxu0 0.0
  %2496 = vmatprep.subr.mxu0 0.0
  %2497 = vmatpush1.msra.mxu0 0.0
  %2498 = vmatprep.subr.mxu0 0.0
  %2499 = vmatpush1.msra.mxu0 0.0
  %2500 = vmatprep.subr.mxu0 0.0
  %2501 = vmatpush1.msra.mxu0 0.0
  %2502 = vmatprep.subr.mxu0 0.0
  %2503 = vmatpush1.msra.mxu0 0.0
  %2504 = vmatprep.subr.mxu0 0.0
  %2505 = vmatpush1.msra.mxu0 0.0
  %2506 = vmatprep.subr.mxu0 0.0
  %2507 = vmatpush1.msra.mxu0 %v92
  %2508 = vmatprep.subr.mxu0 0.0
  %2509 = vmatpush2.msra.mxu0 0.0
  %2510 = vmatprep.subr.mxu0 0.0
  %2511 = vmatpush2.msra.mxu0 0.0
  %2512 = vmatprep.subr.mxu0 0.0
  %2513 = vmatpush2.msra.mxu0 0.0
  %2514 = vmatprep.subr.mxu0 0.0
  %2515 = vmatpush2.msra.mxu0 0.0
  %2516 = vmatprep.subr.mxu0 0.0
  %2517 = vmatpush2.msra.mxu0 0.0
  %2518 = vmatprep.subr.mxu0 0.0
  %2519 = vmatpush2.msra.mxu0 0.0
  %2520 = vmatprep.subr.mxu0 0.0
  %2521 = vmatpush2.msra.mxu0 0.0
  %2522 = vmatprep.subr.mxu0 0.0
  %2523 = vmatpush2.msra.mxu0 0.0
  %2524 = vmatprep.subr.mxu0 0.0
  %2525 = vmatpush2.msra.mxu0 0.0
  %2526 = vmatprep.subr.mxu0 0.0
  %2527 = vmatpush2.msra.mxu0 0.0
  %2528 = vmatprep.subr.mxu0 0.0
  %2529 = vmatpush2.msra.mxu0 0.0
  %2530 = vmatprep.subr.mxu0 0.0
  %2531 = vmatpush2.msra.mxu0 0.0
  %2532 = vmatprep.subr.mxu0 0.0
  %2533 = vmatpush2.msra.mxu0 0.0
  %2534 = vmatprep.subr.mxu0 0.0
  %2535 = vmatpush2.msra.mxu0 0.0
  %2536 = vmatprep.subr.mxu0 0.0
  %2537 = vmatpush2.msra.mxu0 0.0
  %2538 = vmatprep.subr.mxu0 0.0
  %2539 = vmatpush2.msra.mxu0 0.0
  %2540 = vmatprep.mubr.f32.mxu0 0.0
  %2541 = vmatmul.mubr.f32.gmra.mxu0 %v2471
  %v2542 = vpop.f32.mrf.mxu0
  %v2543 = vadd.f32 0.0, %v2542
  %v2544 = vpop.f32.mrf.mxu0
  %2545 = vmatprep.mubr.f32.mxu0 0.0
  %2546 = vmatmul.mubr.f32.gmra.mxu0 %v2474
  %v2547 = vpop.f32.mrf.mxu0
  %v2548 = vadd.f32 0.0, %v2547
  %v2549 = vpop.f32.mrf.mxu0
  %2550 = vdwg.mxu0
  %v2551 = vadd.f32 %v2365, %v2543
  %v2552 = vadd.f32 %v2366, %v2548
  %2553 = vset.pattern.permute.xlu0 13
  %2554 = vperm.xlu0 %2553, %v56
  %v2555 = vpop.permute.xlu0 %2554
  %2557 = vset.pattern.permute.xlu0 13
  %2558 = vperm.xlu0 %2557, %v57
  %v2559 = vpop.permute.xlu0 %2558
  %v2561 = vmul.f32 %v2555, %v124
  %v2562 = vmul.f32 %v2559, %v124
  %2563 = vset.pattern.permute.xlu0 13
  %2564 = vperm.xlu0 %2563, %v58
  %v2565 = vpop.permute.xlu0 %2564
  %2567 = vset.pattern.permute.xlu0 13
  %2568 = vperm.xlu0 %2567, %v59
  %v2569 = vpop.permute.xlu0 %2568
  %v2571 = vmul.f32 %v2565, %v142
  %v2572 = vmul.f32 %v2569, %v142
  %v2573 = vadd.f32 %v2561, %v2571
  %v2574 = vadd.f32 %v2562, %v2572
  %v2575 = vadd.f32 %v2573, %v152
  %v2576 = vadd.f32 %v2574, %v152
  %v2577 = vmax.f32 %v2575, 0.0
  %v2578 = vmax.f32 %v2576, 0.0
  %2579 = vmatprep.subr.mxu0 0.0
  %2580 = vmatpush1.msra.mxu0 %v78
  %2581 = vmatprep.subr.mxu0 0.0
  %2582 = vmatpush1.msra.mxu0 %v77
  %2583 = vmatprep.subr.mxu0 0.0
  %2584 = vmatpush1.msra.mxu0 %v76
  %2585 = vmatprep.subr.mxu0 0.0
  %2586 = vmatpush1.msra.mxu0 %v75
  %2587 = vmatprep.subr.mxu0 0.0
  %2588 = vmatpush1.msra.mxu0 %v74
  %2589 = vmatprep.subr.mxu0 0.0
  %2590 = vmatpush1.msra.mxu0 %v73
  %2591 = vmatprep.subr.mxu0 0.0
  %2592 = vmatpush1.msra.mxu0 %v72
  %2593 = vmatprep.subr.mxu0 0.0
  %2594 = vmatpush1.msra.mxu0 %v71
  %2595 = vmatprep.subr.mxu0 0.0
  %2596 = vmatpush1.msra.mxu0 %v70
  %2597 = vmatprep.subr.mxu0 0.0
  %2598 = vmatpush1.msra.mxu0 %v69
  %2599 = vmatprep.subr.mxu0 0.0
  %2600 = vmatpush1.msra.mxu0 %v68
  %2601 = vmatprep.subr.mxu0 0.0
  %2602 = vmatpush1.msra.mxu0 %v67
  %2603 = vmatprep.subr.mxu0 0.0
  %2604 = vmatpush1.msra.mxu0 %v66
  %2605 = vmatprep.subr.mxu0 0.0
  %2606 = vmatpush1.msra.mxu0 %v65
  %2607 = vmatprep.subr.mxu0 0.0
  %2608 = vmatpush1.msra.mxu0 %v64
  %2609 = vmatprep.subr.mxu0 0.0
  %2610 = vmatpush1.msra.mxu0 %v63
  %2611 = vmatprep.subr.mxu0 0.0
  %2612 = vmatpush2.msra.mxu0 0.0
  %2613 = vmatprep.subr.mxu0 0.0
  %2614 = vmatpush2.msra.mxu0 0.0
  %2615 = vmatprep.subr.mxu0 0.0
  %2616 = vmatpush2.msra.mxu0 0.0
  %2617 = vmatprep.subr.mxu0 0.0
  %2618 = vmatpush2.msra.mxu0 0.0
  %2619 = vmatprep.subr.mxu0 0.0
  %2620 = vmatpush2.msra.mxu0 0.0
  %2621 = vmatprep.subr.mxu0 0.0
  %2622 = vmatpush2.msra.mxu0 0.0
  %2623 = vmatprep.subr.mxu0 0.0
  %2624 = vmatpush2.msra.mxu0 0.0
  %2625 = vmatprep.subr.mxu0 0.0
  %2626 = vmatpush2.msra.mxu0 0.0
  %2627 = vmatprep.subr.mxu0 0.0
  %2628 = vmatpush2.msra.mxu0 0.0
  %2629 = vmatprep.subr.mxu0 0.0
  %2630 = vmatpush2.msra.mxu0 0.0
  %2631 = vmatprep.subr.mxu0 0.0
  %2632 = vmatpush2.msra.mxu0 0.0
  %2633 = vmatprep.subr.mxu0 0.0
  %2634 = vmatpush2.msra.mxu0 0.0
  %2635 = vmatprep.subr.mxu0 0.0
  %2636 = vmatpush2.msra.mxu0 0.0
  %2637 = vmatprep.subr.mxu0 0.0
  %2638 = vmatpush2.msra.mxu0 0.0
  %2639 = vmatprep.subr.mxu0 0.0
  %2640 = vmatpush2.msra.mxu0 0.0
  %2641 = vmatprep.subr.mxu0 0.0
  %2642 = vmatpush2.msra.mxu0 0.0
  %2643 = vmatprep.mubr.f32.mxu0 0.0
  %2644 = vmatmul.mubr.f32.gmra.mxu0 %v2577
  %v2645 = vpop.f32.mrf.mxu0
  %v2646 = vadd.f32 %v162, %v2645
  %v2647 = vpop.f32.mrf.mxu0
  %2648 = vmatprep.mubr.f32.mxu0 0.0
  %2649 = vmatmul.mubr.f32.gmra.mxu0 %v2578
  %v2650 = vpop.f32.mrf.mxu0
  %v2651 = vadd.f32 %v162, %v2650
  %v2652 = vpop.f32.mrf.mxu0
  %2653 = vdwg.mxu0
  %v2654 = vmax.f32 %v2646, 0.0
  %v2655 = vmax.f32 %v2651, 0.0
  %v2657 = vsel %vm344, %v2654, 0
  %v2660 = vsel %vm344, %v2655, 0
  %2662 = vmatprep.subr.mxu0 0.0
  %2663 = vmatpush1.msra.mxu0 0.0
  %2664 = vmatprep.subr.mxu0 0.0
  %2665 = vmatpush1.msra.mxu0 0.0
  %2666 = vmatprep.subr.mxu0 0.0
  %2667 = vmatpush1.msra.mxu0 0.0
  %2668 = vmatprep.subr.mxu0 0.0
  %2669 = vmatpush1.msra.mxu0 0.0
  %2670 = vmatprep.subr.mxu0 0.0
  %2671 = vmatpush1.msra.mxu0 0.0
  %2672 = vmatprep.subr.mxu0 0.0
  %2673 = vmatpush1.msra.mxu0 0.0
  %2674 = vmatprep.subr.mxu0 0.0
  %2675 = vmatpush1.msra.mxu0 0.0
  %2676 = vmatprep.subr.mxu0 0.0
  %2677 = vmatpush1.msra.mxu0 0.0
  %2678 = vmatprep.subr.mxu0 0.0
  %2679 = vmatpush1.msra.mxu0 0.0
  %2680 = vmatprep.subr.mxu0 0.0
  %2681 = vmatpush1.msra.mxu0 0.0
  %2682 = vmatprep.subr.mxu0 0.0
  %2683 = vmatpush1.msra.mxu0 0.0
  %2684 = vmatprep.subr.mxu0 0.0
  %2685 = vmatpush1.msra.mxu0 0.0
  %2686 = vmatprep.subr.mxu0 0.0
  %2687 = vmatpush1.msra.mxu0 0.0
  %2688 = vmatprep.subr.mxu0 0.0
  %2689 = vmatpush1.msra.mxu0 0.0
  %2690 = vmatprep.subr.mxu0 0.0
  %2691 = vmatpush1.msra.mxu0 0.0
  %2692 = vmatprep.subr.mxu0 0.0
  %2693 = vmatpush1.msra.mxu0 %v93
  %2694 = vmatprep.subr.mxu0 0.0
  %2695 = vmatpush2.msra.mxu0 0.0
  %2696 = vmatprep.subr.mxu0 0.0
  %2697 = vmatpush2.msra.mxu0 0.0
  %2698 = vmatprep.subr.mxu0 0.0
  %2699 = vmatpush2.msra.mxu0 0.0
  %2700 = vmatprep.subr.mxu0 0.0
  %2701 = vmatpush2.msra.mxu0 0.0
  %2702 = vmatprep.subr.mxu0 0.0
  %2703 = vmatpush2.msra.mxu0 0.0
  %2704 = vmatprep.subr.mxu0 0.0
  %2705 = vmatpush2.msra.mxu0 0.0
  %2706 = vmatprep.subr.mxu0 0.0
  %2707 = vmatpush2.msra.mxu0 0.0
  %2708 = vmatprep.subr.mxu0 0.0
  %2709 = vmatpush2.msra.mxu0 0.0
  %2710 = vmatprep.subr.mxu0 0.0
  %2711 = vmatpush2.msra.mxu0 0.0
  %2712 = vmatprep.subr.mxu0 0.0
  %2713 = vmatpush2.msra.mxu0 0.0
  %2714 = vmatprep.subr.mxu0 0.0
  %2715 = vmatpush2.msra.mxu0 0.0
  %2716 = vmatprep.subr.mxu0 0.0
  %2717 = vmatpush2.msra.mxu0 0.0
  %2718 = vmatprep.subr.mxu0 0.0
  %2719 = vmatpush2.msra.mxu0 0.0
  %2720 = vmatprep.subr.mxu0 0.0
  %2721 = vmatpush2.msra.mxu0 0.0
  %2722 = vmatprep.subr.mxu0 0.0
  %2723 = vmatpush2.msra.mxu0 0.0
  %2724 = vmatprep.subr.mxu0 0.0
  %2725 = vmatpush2.msra.mxu0 0.0
  %2726 = vmatprep.mubr.f32.mxu0 0.0
  %2727 = vmatmul.mubr.f32.gmra.mxu0 %v2657
  %v2728 = vpop.f32.mrf.mxu0
  %v2729 = vadd.f32 0.0, %v2728
  %v2730 = vpop.f32.mrf.mxu0
  %2731 = vmatprep.mubr.f32.mxu0 0.0
  %2732 = vmatmul.mubr.f32.gmra.mxu0 %v2660
  %v2733 = vpop.f32.mrf.mxu0
  %v2734 = vadd.f32 0.0, %v2733
  %v2735 = vpop.f32.mrf.mxu0
  %2736 = vdwg.mxu0
  %v2737 = vadd.f32 %v2551, %v2729
  %v2738 = vadd.f32 %v2552, %v2734
  %2739 = vset.pattern.permute.xlu0 14
  %2740 = vperm.xlu0 %2739, %v56
  %v2741 = vpop.permute.xlu0 %2740
  %2743 = vset.pattern.permute.xlu0 14
  %2744 = vperm.xlu0 %2743, %v57
  %v2745 = vpop.permute.xlu0 %2744
  %v2747 = vmul.f32 %v2741, %v124
  %v2748 = vmul.f32 %v2745, %v124
  %2749 = vset.pattern.permute.xlu0 14
  %2750 = vperm.xlu0 %2749, %v58
  %v2751 = vpop.permute.xlu0 %2750
  %2753 = vset.pattern.permute.xlu0 14
  %2754 = vperm.xlu0 %2753, %v59
  %v2755 = vpop.permute.xlu0 %2754
  %v2757 = vmul.f32 %v2751, %v142
  %v2758 = vmul.f32 %v2755, %v142
  %v2759 = vadd.f32 %v2747, %v2757
  %v2760 = vadd.f32 %v2748, %v2758
  %v2761 = vadd.f32 %v2759, %v152
  %v2762 = vadd.f32 %v2760, %v152
  %v2763 = vmax.f32 %v2761, 0.0
  %v2764 = vmax.f32 %v2762, 0.0
  %2765 = vmatprep.subr.mxu0 0.0
  %2766 = vmatpush1.msra.mxu0 %v78
  %2767 = vmatprep.subr.mxu0 0.0
  %2768 = vmatpush1.msra.mxu0 %v77
  %2769 = vmatprep.subr.mxu0 0.0
  %2770 = vmatpush1.msra.mxu0 %v76
  %2771 = vmatprep.subr.mxu0 0.0
  %2772 = vmatpush1.msra.mxu0 %v75
  %2773 = vmatprep.subr.mxu0 0.0
  %2774 = vmatpush1.msra.mxu0 %v74
  %2775 = vmatprep.subr.mxu0 0.0
  %2776 = vmatpush1.msra.mxu0 %v73
  %2777 = vmatprep.subr.mxu0 0.0
  %2778 = vmatpush1.msra.mxu0 %v72
  %2779 = vmatprep.subr.mxu0 0.0
  %2780 = vmatpush1.msra.mxu0 %v71
  %2781 = vmatprep.subr.mxu0 0.0
  %2782 = vmatpush1.msra.mxu0 %v70
  %2783 = vmatprep.subr.mxu0 0.0
  %2784 = vmatpush1.msra.mxu0 %v69
  %2785 = vmatprep.subr.mxu0 0.0
  %2786 = vmatpush1.msra.mxu0 %v68
  %2787 = vmatprep.subr.mxu0 0.0
  %2788 = vmatpush1.msra.mxu0 %v67
  %2789 = vmatprep.subr.mxu0 0.0
  %2790 = vmatpush1.msra.mxu0 %v66
  %2791 = vmatprep.subr.mxu0 0.0
  %2792 = vmatpush1.msra.mxu0 %v65
  %2793 = vmatprep.subr.mxu0 0.0
  %2794 = vmatpush1.msra.mxu0 %v64
  %2795 = vmatprep.subr.mxu0 0.0
  %2796 = vmatpush1.msra.mxu0 %v63
  %2797 = vmatprep.subr.mxu0 0.0
  %2798 = vmatpush2.msra.mxu0 0.0
  %2799 = vmatprep.subr.mxu0 0.0
  %2800 = vmatpush2.msra.mxu0 0.0
  %2801 = vmatprep.subr.mxu0 0.0
  %2802 = vmatpush2.msra.mxu0 0.0
  %2803 = vmatprep.subr.mxu0 0.0
  %2804 = vmatpush2.msra.mxu0 0.0
  %2805 = vmatprep.subr.mxu0 0.0
  %2806 = vmatpush2.msra.mxu0 0.0
  %2807 = vmatprep.subr.mxu0 0.0
  %2808 = vmatpush2.msra.mxu0 0.0
  %2809 = vmatprep.subr.mxu0 0.0
  %2810 = vmatpush2.msra.mxu0 0.0
  %2811 = vmatprep.subr.mxu0 0.0
  %2812 = vmatpush2.msra.mxu0 0.0
  %2813 = vmatprep.subr.mxu0 0.0
  %2814 = vmatpush2.msra.mxu0 0.0
  %2815 = vmatprep.subr.mxu0 0.0
  %2816 = vmatpush2.msra.mxu0 0.0
  %2817 = vmatprep.subr.mxu0 0.0
  %2818 = vmatpush2.msra.mxu0 0.0
  %2819 = vmatprep.subr.mxu0 0.0
  %2820 = vmatpush2.msra.mxu0 0.0
  %2821 = vmatprep.subr.mxu0 0.0
  %2822 = vmatpush2.msra.mxu0 0.0
  %2823 = vmatprep.subr.mxu0 0.0
  %2824 = vmatpush2.msra.mxu0 0.0
  %2825 = vmatprep.subr.mxu0 0.0
  %2826 = vmatpush2.msra.mxu0 0.0
  %2827 = vmatprep.subr.mxu0 0.0
  %2828 = vmatpush2.msra.mxu0 0.0
  %2829 = vmatprep.mubr.f32.mxu0 0.0
  %2830 = vmatmul.mubr.f32.gmra.mxu0 %v2763
  %v2831 = vpop.f32.mrf.mxu0
  %v2832 = vadd.f32 %v162, %v2831
  %v2833 = vpop.f32.mrf.mxu0
  %2834 = vmatprep.mubr.f32.mxu0 0.0
  %2835 = vmatmul.mubr.f32.gmra.mxu0 %v2764
  %v2836 = vpop.f32.mrf.mxu0
  %v2837 = vadd.f32 %v162, %v2836
  %v2838 = vpop.f32.mrf.mxu0
  %2839 = vdwg.mxu0
  %v2840 = vmax.f32 %v2832, 0.0
  %v2841 = vmax.f32 %v2837, 0.0
  %v2843 = vsel %vm344, %v2840, 0
  %v2846 = vsel %vm344, %v2841, 0
  %2848 = vmatprep.subr.mxu0 0.0
  %2849 = vmatpush1.msra.mxu0 0.0
  %2850 = vmatprep.subr.mxu0 0.0
  %2851 = vmatpush1.msra.mxu0 0.0
  %2852 = vmatprep.subr.mxu0 0.0
  %2853 = vmatpush1.msra.mxu0 0.0
  %2854 = vmatprep.subr.mxu0 0.0
  %2855 = vmatpush1.msra.mxu0 0.0
  %2856 = vmatprep.subr.mxu0 0.0
  %2857 = vmatpush1.msra.mxu0 0.0
  %2858 = vmatprep.subr.mxu0 0.0
  %2859 = vmatpush1.msra.mxu0 0.0
  %2860 = vmatprep.subr.mxu0 0.0
  %2861 = vmatpush1.msra.mxu0 0.0
  %2862 = vmatprep.subr.mxu0 0.0
  %2863 = vmatpush1.msra.mxu0 0.0
  %2864 = vmatprep.subr.mxu0 0.0
  %2865 = vmatpush1.msra.mxu0 0.0
  %2866 = vmatprep.subr.mxu0 0.0
  %2867 = vmatpush1.msra.mxu0 0.0
  %2868 = vmatprep.subr.mxu0 0.0
  %2869 = vmatpush1.msra.mxu0 0.0
  %2870 = vmatprep.subr.mxu0 0.0
  %2871 = vmatpush1.msra.mxu0 0.0
  %2872 = vmatprep.subr.mxu0 0.0
  %2873 = vmatpush1.msra.mxu0 0.0
  %2874 = vmatprep.subr.mxu0 0.0
  %2875 = vmatpush1.msra.mxu0 0.0
  %2876 = vmatprep.subr.mxu0 0.0
  %2877 = vmatpush1.msra.mxu0 0.0
  %2878 = vmatprep.subr.mxu0 0.0
  %2879 = vmatpush1.msra.mxu0 %v94
  %2880 = vmatprep.subr.mxu0 0.0
  %2881 = vmatpush2.msra.mxu0 0.0
  %2882 = vmatprep.subr.mxu0 0.0
  %2883 = vmatpush2.msra.mxu0 0.0
  %2884 = vmatprep.subr.mxu0 0.0
  %2885 = vmatpush2.msra.mxu0 0.0
  %2886 = vmatprep.subr.mxu0 0.0
  %2887 = vmatpush2.msra.mxu0 0.0
  %2888 = vmatprep.subr.mxu0 0.0
  %2889 = vmatpush2.msra.mxu0 0.0
  %2890 = vmatprep.subr.mxu0 0.0
  %2891 = vmatpush2.msra.mxu0 0.0
  %2892 = vmatprep.subr.mxu0 0.0
  %2893 = vmatpush2.msra.mxu0 0.0
  %2894 = vmatprep.subr.mxu0 0.0
  %2895 = vmatpush2.msra.mxu0 0.0
  %2896 = vmatprep.subr.mxu0 0.0
  %2897 = vmatpush2.msra.mxu0 0.0
  %2898 = vmatprep.subr.mxu0 0.0
  %2899 = vmatpush2.msra.mxu0 0.0
  %2900 = vmatprep.subr.mxu0 0.0
  %2901 = vmatpush2.msra.mxu0 0.0
  %2902 = vmatprep.subr.mxu0 0.0
  %2903 = vmatpush2.msra.mxu0 0.0
  %2904 = vmatprep.subr.mxu0 0.0
  %2905 = vmatpush2.msra.mxu0 0.0
  %2906 = vmatprep.subr.mxu0 0.0
  %2907 = vmatpush2.msra.mxu0 0.0
  %2908 = vmatprep.subr.mxu0 0.0
  %2909 = vmatpush2.msra.mxu0 0.0
  %2910 = vmatprep.subr.mxu0 0.0
  %2911 = vmatpush2.msra.mxu0 0.0
  %2912 = vmatprep.mubr.f32.mxu0 0.0
  %2913 = vmatmul.mubr.f32.gmra.mxu0 %v2843
  %v2914 = vpop.f32.mrf.mxu0
  %v2915 = vadd.f32 0.0, %v2914
  %v2916 = vpop.f32.mrf.mxu0
  %2917 = vmatprep.mubr.f32.mxu0 0.0
  %2918 = vmatmul.mubr.f32.gmra.mxu0 %v2846
  %v2919 = vpop.f32.mrf.mxu0
  %v2920 = vadd.f32 0.0, %v2919
  %v2921 = vpop.f32.mrf.mxu0
  %2922 = vdwg.mxu0
  %v2923 = vadd.f32 %v2737, %v2915
  %v2924 = vadd.f32 %v2738, %v2920
  %2925 = vset.pattern.permute.xlu0 15
  %2926 = vperm.xlu0 %2925, %v56
  %v2927 = vpop.permute.xlu0 %2926
  %2929 = vset.pattern.permute.xlu0 15
  %2930 = vperm.xlu0 %2929, %v57
  %v2931 = vpop.permute.xlu0 %2930
  %v2933 = vmul.f32 %v2927, %v124
  %v2934 = vmul.f32 %v2931, %v124
  %2935 = vset.pattern.permute.xlu0 15
  %2936 = vperm.xlu0 %2935, %v58
  %v2937 = vpop.permute.xlu0 %2936
  %2939 = vset.pattern.permute.xlu0 15
  %2940 = vperm.xlu0 %2939, %v59
  %v2941 = vpop.permute.xlu0 %2940
  %v2943 = vmul.f32 %v2937, %v142
  %v2944 = vmul.f32 %v2941, %v142
  %v2945 = vadd.f32 %v2933, %v2943
  %v2946 = vadd.f32 %v2934, %v2944
  %v2947 = vadd.f32 %v2945, %v152
  %v2948 = vadd.f32 %v2946, %v152
  %v2949 = vmax.f32 %v2947, 0.0
  %v2950 = vmax.f32 %v2948, 0.0
  %2951 = vmatprep.subr.mxu0 0.0
  %2952 = vmatpush1.msra.mxu0 %v78
  %2953 = vmatprep.subr.mxu0 0.0
  %2954 = vmatpush1.msra.mxu0 %v77
  %2955 = vmatprep.subr.mxu0 0.0
  %2956 = vmatpush1.msra.mxu0 %v76
  %2957 = vmatprep.subr.mxu0 0.0
  %2958 = vmatpush1.msra.mxu0 %v75
  %2959 = vmatprep.subr.mxu0 0.0
  %2960 = vmatpush1.msra.mxu0 %v74
  %2961 = vmatprep.subr.mxu0 0.0
  %2962 = vmatpush1.msra.mxu0 %v73
  %2963 = vmatprep.subr.mxu0 0.0
  %2964 = vmatpush1.msra.mxu0 %v72
  %2965 = vmatprep.subr.mxu0 0.0
  %2966 = vmatpush1.msra.mxu0 %v71
  %2967 = vmatprep.subr.mxu0 0.0
  %2968 = vmatpush1.msra.mxu0 %v70
  %2969 = vmatprep.subr.mxu0 0.0
  %2970 = vmatpush1.msra.mxu0 %v69
  %2971 = vmatprep.subr.mxu0 0.0
  %2972 = vmatpush1.msra.mxu0 %v68
  %2973 = vmatprep.subr.mxu0 0.0
  %2974 = vmatpush1.msra.mxu0 %v67
  %2975 = vmatprep.subr.mxu0 0.0
  %2976 = vmatpush1.msra.mxu0 %v66
  %2977 = vmatprep.subr.mxu0 0.0
  %2978 = vmatpush1.msra.mxu0 %v65
  %2979 = vmatprep.subr.mxu0 0.0
  %2980 = vmatpush1.msra.mxu0 %v64
  %2981 = vmatprep.subr.mxu0 0.0
  %2982 = vmatpush1.msra.mxu0 %v63
  %2983 = vmatprep.subr.mxu0 0.0
  %2984 = vmatpush2.msra.mxu0 0.0
  %2985 = vmatprep.subr.mxu0 0.0
  %2986 = vmatpush2.msra.mxu0 0.0
  %2987 = vmatprep.subr.mxu0 0.0
  %2988 = vmatpush2.msra.mxu0 0.0
  %2989 = vmatprep.subr.mxu0 0.0
  %2990 = vmatpush2.msra.mxu0 0.0
  %2991 = vmatprep.subr.mxu0 0.0
  %2992 = vmatpush2.msra.mxu0 0.0
  %2993 = vmatprep.subr.mxu0 0.0
  %2994 = vmatpush2.msra.mxu0 0.0
  %2995 = vmatprep.subr.mxu0 0.0
  %2996 = vmatpush2.msra.mxu0 0.0
  %2997 = vmatprep.subr.mxu0 0.0
  %2998 = vmatpush2.msra.mxu0 0.0
  %2999 = vmatprep.subr.mxu0 0.0
  %3000 = vmatpush2.msra.mxu0 0.0
  %3001 = vmatprep.subr.mxu0 0.0
  %3002 = vmatpush2.msra.mxu0 0.0
  %3003 = vmatprep.subr.mxu0 0.0
  %3004 = vmatpush2.msra.mxu0 0.0
  %3005 = vmatprep.subr.mxu0 0.0
  %3006 = vmatpush2.msra.mxu0 0.0
  %3007 = vmatprep.subr.mxu0 0.0
  %3008 = vmatpush2.msra.mxu0 0.0
  %3009 = vmatprep.subr.mxu0 0.0
  %3010 = vmatpush2.msra.mxu0 0.0
  %3011 = vmatprep.subr.mxu0 0.0
  %3012 = vmatpush2.msra.mxu0 0.0
  %3013 = vmatprep.subr.mxu0 0.0
  %3014 = vmatpush2.msra.mxu0 0.0
  %3015 = vmatprep.mubr.f32.mxu0 0.0
  %3016 = vmatmul.mubr.f32.gmra.mxu0 %v2949
  %v3017 = vpop.f32.mrf.mxu0
  %v3018 = vadd.f32 %v162, %v3017
  %v3019 = vpop.f32.mrf.mxu0
  %3020 = vmatprep.mubr.f32.mxu0 0.0
  %3021 = vmatmul.mubr.f32.gmra.mxu0 %v2950
  %v3022 = vpop.f32.mrf.mxu0
  %v3023 = vadd.f32 %v162, %v3022
  %v3024 = vpop.f32.mrf.mxu0
  %3025 = vdwg.mxu0
  %v3026 = vmax.f32 %v3018, 0.0
  %v3027 = vmax.f32 %v3023, 0.0
  %v3029 = vsel %vm344, %v3026, 0
  %v3032 = vsel %vm344, %v3027, 0
  %3034 = vmatprep.subr.mxu0 0.0
  %3035 = vmatpush1.msra.mxu0 0.0
  %3036 = vmatprep.subr.mxu0 0.0
  %3037 = vmatpush1.msra.mxu0 0.0
  %3038 = vmatprep.subr.mxu0 0.0
  %3039 = vmatpush1.msra.mxu0 0.0
  %3040 = vmatprep.subr.mxu0 0.0
  %3041 = vmatpush1.msra.mxu0 0.0
  %3042 = vmatprep.subr.mxu0 0.0
  %3043 = vmatpush1.msra.mxu0 0.0
  %3044 = vmatprep.subr.mxu0 0.0
  %3045 = vmatpush1.msra.mxu0 0.0
  %3046 = vmatprep.subr.mxu0 0.0
  %3047 = vmatpush1.msra.mxu0 0.0
  %3048 = vmatprep.subr.mxu0 0.0
  %3049 = vmatpush1.msra.mxu0 0.0
  %3050 = vmatprep.subr.mxu0 0.0
  %3051 = vmatpush1.msra.mxu0 0.0
  %3052 = vmatprep.subr.mxu0 0.0
  %3053 = vmatpush1.msra.mxu0 0.0
  %3054 = vmatprep.subr.mxu0 0.0
  %3055 = vmatpush1.msra.mxu0 0.0
  %3056 = vmatprep.subr.mxu0 0.0
  %3057 = vmatpush1.msra.mxu0 0.0
  %3058 = vmatprep.subr.mxu0 0.0
  %3059 = vmatpush1.msra.mxu0 0.0
  %3060 = vmatprep.subr.mxu0 0.0
  %3061 = vmatpush1.msra.mxu0 0.0
  %3062 = vmatprep.subr.mxu0 0.0
  %3063 = vmatpush1.msra.mxu0 0.0
  %3064 = vmatprep.subr.mxu0 0.0
  %3065 = vmatpush1.msra.mxu0 %v95
  %3066 = vmatprep.subr.mxu0 0.0
  %3067 = vmatpush2.msra.mxu0 0.0
  %3068 = vmatprep.subr.mxu0 0.0
  %3069 = vmatpush2.msra.mxu0 0.0
  %3070 = vmatprep.subr.mxu0 0.0
  %3071 = vmatpush2.msra.mxu0 0.0
  %3072 = vmatprep.subr.mxu0 0.0
  %3073 = vmatpush2.msra.mxu0 0.0
  %3074 = vmatprep.subr.mxu0 0.0
  %3075 = vmatpush2.msra.mxu0 0.0
  %3076 = vmatprep.subr.mxu0 0.0
  %3077 = vmatpush2.msra.mxu0 0.0
  %3078 = vmatprep.subr.mxu0 0.0
  %3079 = vmatpush2.msra.mxu0 0.0
  %3080 = vmatprep.subr.mxu0 0.0
  %3081 = vmatpush2.msra.mxu0 0.0
  %3082 = vmatprep.subr.mxu0 0.0
  %3083 = vmatpush2.msra.mxu0 0.0
  %3084 = vmatprep.subr.mxu0 0.0
  %3085 = vmatpush2.msra.mxu0 0.0
  %3086 = vmatprep.subr.mxu0 0.0
  %3087 = vmatpush2.msra.mxu0 0.0
  %3088 = vmatprep.subr.mxu0 0.0
  %3089 = vmatpush2.msra.mxu0 0.0
  %3090 = vmatprep.subr.mxu0 0.0
  %3091 = vmatpush2.msra.mxu0 0.0
  %3092 = vmatprep.subr.mxu0 0.0
  %3093 = vmatpush2.msra.mxu0 0.0
  %3094 = vmatprep.subr.mxu0 0.0
  %3095 = vmatpush2.msra.mxu0 0.0
  %3096 = vmatprep.subr.mxu0 0.0
  %3097 = vmatpush2.msra.mxu0 0.0
  %3098 = vmatprep.mubr.f32.mxu0 0.0
  %3099 = vmatmul.mubr.f32.gmra.mxu0 %v3029
  %v3100 = vpop.f32.mrf.mxu0
  %v3101 = vadd.f32 0.0, %v3100
  %v3102 = vpop.f32.mrf.mxu0
  %3103 = vmatprep.mubr.f32.mxu0 0.0
  %3104 = vmatmul.mubr.f32.gmra.mxu0 %v3032
  %v3105 = vpop.f32.mrf.mxu0
  %v3106 = vadd.f32 0.0, %v3105
  %v3107 = vpop.f32.mrf.mxu0
  %3108 = vdwg.mxu0
  %v3109 = vadd.f32 %v2923, %v3101
  %v3110 = vadd.f32 %v2924, %v3106
  %3111 = vset.pattern.permute.xlu0 16
  %3112 = vperm.xlu0 %3111, %v56
  %v3113 = vpop.permute.xlu0 %3112
  %3115 = vset.pattern.permute.xlu0 16
  %3116 = vperm.xlu0 %3115, %v57
  %v3117 = vpop.permute.xlu0 %3116
  %v3119 = vmul.f32 %v3113, %v124
  %v3120 = vmul.f32 %v3117, %v124
  %3121 = vset.pattern.permute.xlu0 16
  %3122 = vperm.xlu0 %3121, %v58
  %v3123 = vpop.permute.xlu0 %3122
  %3125 = vset.pattern.permute.xlu0 16
  %3126 = vperm.xlu0 %3125, %v59
  %v3127 = vpop.permute.xlu0 %3126
  %v3129 = vmul.f32 %v3123, %v142
  %v3130 = vmul.f32 %v3127, %v142
  %v3131 = vadd.f32 %v3119, %v3129
  %v3132 = vadd.f32 %v3120, %v3130
  %v3133 = vadd.f32 %v3131, %v152
  %v3134 = vadd.f32 %v3132, %v152
  %v3135 = vmax.f32 %v3133, 0.0
  %v3136 = vmax.f32 %v3134, 0.0
  %3137 = vmatprep.subr.mxu0 0.0
  %3138 = vmatpush1.msra.mxu0 %v78
  %3139 = vmatprep.subr.mxu0 0.0
  %3140 = vmatpush1.msra.mxu0 %v77
  %3141 = vmatprep.subr.mxu0 0.0
  %3142 = vmatpush1.msra.mxu0 %v76
  %3143 = vmatprep.subr.mxu0 0.0
  %3144 = vmatpush1.msra.mxu0 %v75
  %3145 = vmatprep.subr.mxu0 0.0
  %3146 = vmatpush1.msra.mxu0 %v74
  %3147 = vmatprep.subr.mxu0 0.0
  %3148 = vmatpush1.msra.mxu0 %v73
  %3149 = vmatprep.subr.mxu0 0.0
  %3150 = vmatpush1.msra.mxu0 %v72
  %3151 = vmatprep.subr.mxu0 0.0
  %3152 = vmatpush1.msra.mxu0 %v71
  %3153 = vmatprep.subr.mxu0 0.0
  %3154 = vmatpush1.msra.mxu0 %v70
  %3155 = vmatprep.subr.mxu0 0.0
  %3156 = vmatpush1.msra.mxu0 %v69
  %3157 = vmatprep.subr.mxu0 0.0
  %3158 = vmatpush1.msra.mxu0 %v68
  %3159 = vmatprep.subr.mxu0 0.0
  %3160 = vmatpush1.msra.mxu0 %v67
  %3161 = vmatprep.subr.mxu0 0.0
  %3162 = vmatpush1.msra.mxu0 %v66
  %3163 = vmatprep.subr.mxu0 0.0
  %3164 = vmatpush1.msra.mxu0 %v65
  %3165 = vmatprep.subr.mxu0 0.0
  %3166 = vmatpush1.msra.mxu0 %v64
  %3167 = vmatprep.subr.mxu0 0.0
  %3168 = vmatpush1.msra.mxu0 %v63
  %3169 = vmatprep.subr.mxu0 0.0
  %3170 = vmatpush2.msra.mxu0 0.0
  %3171 = vmatprep.subr.mxu0 0.0
  %3172 = vmatpush2.msra.mxu0 0.0
  %3173 = vmatprep.subr.mxu0 0.0
  %3174 = vmatpush2.msra.mxu0 0.0
  %3175 = vmatprep.subr.mxu0 0.0
  %3176 = vmatpush2.msra.mxu0 0.0
  %3177 = vmatprep.subr.mxu0 0.0
  %3178 = vmatpush2.msra.mxu0 0.0
  %3179 = vmatprep.subr.mxu0 0.0
  %3180 = vmatpush2.msra.mxu0 0.0
  %3181 = vmatprep.subr.mxu0 0.0
  %3182 = vmatpush2.msra.mxu0 0.0
  %3183 = vmatprep.subr.mxu0 0.0
  %3184 = vmatpush2.msra.mxu0 0.0
  %3185 = vmatprep.subr.mxu0 0.0
  %3186 = vmatpush2.msra.mxu0 0.0
  %3187 = vmatprep.subr.mxu0 0.0
  %3188 = vmatpush2.msra.mxu0 0.0
  %3189 = vmatprep.subr.mxu0 0.0
  %3190 = vmatpush2.msra.mxu0 0.0
  %3191 = vmatprep.subr.mxu0 0.0
  %3192 = vmatpush2.msra.mxu0 0.0
  %3193 = vmatprep.subr.mxu0 0.0
  %3194 = vmatpush2.msra.mxu0 0.0
  %3195 = vmatprep.subr.mxu0 0.0
  %3196 = vmatpush2.msra.mxu0 0.0
  %3197 = vmatprep.subr.mxu0 0.0
  %3198 = vmatpush2.msra.mxu0 0.0
  %3199 = vmatprep.subr.mxu0 0.0
  %3200 = vmatpush2.msra.mxu0 0.0
  %3201 = vmatprep.mubr.f32.mxu0 0.0
  %3202 = vmatmul.mubr.f32.gmra.mxu0 %v3135
  %v3203 = vpop.f32.mrf.mxu0
  %v3204 = vadd.f32 %v162, %v3203
  %v3205 = vpop.f32.mrf.mxu0
  %3206 = vmatprep.mubr.f32.mxu0 0.0
  %3207 = vmatmul.mubr.f32.gmra.mxu0 %v3136
  %v3208 = vpop.f32.mrf.mxu0
  %v3209 = vadd.f32 %v162, %v3208
  %v3210 = vpop.f32.mrf.mxu0
  %3211 = vdwg.mxu0
  %v3212 = vmax.f32 %v3204, 0.0
  %v3213 = vmax.f32 %v3209, 0.0
  %v3215 = vsel %vm344, %v3212, 0
  %v3218 = vsel %vm344, %v3213, 0
  %3220 = vmatprep.subr.mxu0 0.0
  %3221 = vmatpush1.msra.mxu0 0.0
  %3222 = vmatprep.subr.mxu0 0.0
  %3223 = vmatpush1.msra.mxu0 0.0
  %3224 = vmatprep.subr.mxu0 0.0
  %3225 = vmatpush1.msra.mxu0 0.0
  %3226 = vmatprep.subr.mxu0 0.0
  %3227 = vmatpush1.msra.mxu0 0.0
  %3228 = vmatprep.subr.mxu0 0.0
  %3229 = vmatpush1.msra.mxu0 0.0
  %3230 = vmatprep.subr.mxu0 0.0
  %3231 = vmatpush1.msra.mxu0 0.0
  %3232 = vmatprep.subr.mxu0 0.0
  %3233 = vmatpush1.msra.mxu0 0.0
  %3234 = vmatprep.subr.mxu0 0.0
  %3235 = vmatpush1.msra.mxu0 0.0
  %3236 = vmatprep.subr.mxu0 0.0
  %3237 = vmatpush1.msra.mxu0 0.0
  %3238 = vmatprep.subr.mxu0 0.0
  %3239 = vmatpush1.msra.mxu0 0.0
  %3240 = vmatprep.subr.mxu0 0.0
  %3241 = vmatpush1.msra.mxu0 0.0
  %3242 = vmatprep.subr.mxu0 0.0
  %3243 = vmatpush1.msra.mxu0 0.0
  %3244 = vmatprep.subr.mxu0 0.0
  %3245 = vmatpush1.msra.mxu0 0.0
  %3246 = vmatprep.subr.mxu0 0.0
  %3247 = vmatpush1.msra.mxu0 0.0
  %3248 = vmatprep.subr.mxu0 0.0
  %3249 = vmatpush1.msra.mxu0 0.0
  %3250 = vmatprep.subr.mxu0 0.0
  %3251 = vmatpush1.msra.mxu0 %v96
  %3252 = vmatprep.subr.mxu0 0.0
  %3253 = vmatpush2.msra.mxu0 0.0
  %3254 = vmatprep.subr.mxu0 0.0
  %3255 = vmatpush2.msra.mxu0 0.0
  %3256 = vmatprep.subr.mxu0 0.0
  %3257 = vmatpush2.msra.mxu0 0.0
  %3258 = vmatprep.subr.mxu0 0.0
  %3259 = vmatpush2.msra.mxu0 0.0
  %3260 = vmatprep.subr.mxu0 0.0
  %3261 = vmatpush2.msra.mxu0 0.0
  %3262 = vmatprep.subr.mxu0 0.0
  %3263 = vmatpush2.msra.mxu0 0.0
  %3264 = vmatprep.subr.mxu0 0.0
  %3265 = vmatpush2.msra.mxu0 0.0
  %3266 = vmatprep.subr.mxu0 0.0
  %3267 = vmatpush2.msra.mxu0 0.0
  %3268 = vmatprep.subr.mxu0 0.0
  %3269 = vmatpush2.msra.mxu0 0.0
  %3270 = vmatprep.subr.mxu0 0.0
  %3271 = vmatpush2.msra.mxu0 0.0
  %3272 = vmatprep.subr.mxu0 0.0
  %3273 = vmatpush2.msra.mxu0 0.0
  %3274 = vmatprep.subr.mxu0 0.0
  %3275 = vmatpush2.msra.mxu0 0.0
  %3276 = vmatprep.subr.mxu0 0.0
  %3277 = vmatpush2.msra.mxu0 0.0
  %3278 = vmatprep.subr.mxu0 0.0
  %3279 = vmatpush2.msra.mxu0 0.0
  %3280 = vmatprep.subr.mxu0 0.0
  %3281 = vmatpush2.msra.mxu0 0.0
  %3282 = vmatprep.subr.mxu0 0.0
  %3283 = vmatpush2.msra.mxu0 0.0
  %3284 = vmatprep.mubr.f32.mxu0 0.0
  %3285 = vmatmul.mubr.f32.gmra.mxu0 %v3215
  %v3286 = vpop.f32.mrf.mxu0
  %v3287 = vadd.f32 0.0, %v3286
  %v3288 = vpop.f32.mrf.mxu0
  %3289 = vmatprep.mubr.f32.mxu0 0.0
  %3290 = vmatmul.mubr.f32.gmra.mxu0 %v3218
  %v3291 = vpop.f32.mrf.mxu0
  %v3292 = vadd.f32 0.0, %v3291
  %v3293 = vpop.f32.mrf.mxu0
  %3294 = vdwg.mxu0
  %v3295 = vadd.f32 %v3109, %v3287
  %v3296 = vadd.f32 %v3110, %v3292
  %3297 = vset.pattern.permute.xlu0 17
  %3298 = vperm.xlu0 %3297, %v56
  %v3299 = vpop.permute.xlu0 %3298
  %3301 = vset.pattern.permute.xlu0 17
  %3302 = vperm.xlu0 %3301, %v57
  %v3303 = vpop.permute.xlu0 %3302
  %v3305 = vmul.f32 %v3299, %v124
  %v3306 = vmul.f32 %v3303, %v124
  %3307 = vset.pattern.permute.xlu0 17
  %3308 = vperm.xlu0 %3307, %v58
  %v3309 = vpop.permute.xlu0 %3308
  %3311 = vset.pattern.permute.xlu0 17
  %3312 = vperm.xlu0 %3311, %v59
  %v3313 = vpop.permute.xlu0 %3312
  %v3315 = vmul.f32 %v3309, %v142
  %v3316 = vmul.f32 %v3313, %v142
  %v3317 = vadd.f32 %v3305, %v3315
  %v3318 = vadd.f32 %v3306, %v3316
  %v3319 = vadd.f32 %v3317, %v152
  %v3320 = vadd.f32 %v3318, %v152
  %v3321 = vmax.f32 %v3319, 0.0
  %v3322 = vmax.f32 %v3320, 0.0
  %3323 = vmatprep.subr.mxu0 0.0
  %3324 = vmatpush1.msra.mxu0 %v78
  %3325 = vmatprep.subr.mxu0 0.0
  %3326 = vmatpush1.msra.mxu0 %v77
  %3327 = vmatprep.subr.mxu0 0.0
  %3328 = vmatpush1.msra.mxu0 %v76
  %3329 = vmatprep.subr.mxu0 0.0
  %3330 = vmatpush1.msra.mxu0 %v75
  %3331 = vmatprep.subr.mxu0 0.0
  %3332 = vmatpush1.msra.mxu0 %v74
  %3333 = vmatprep.subr.mxu0 0.0
  %3334 = vmatpush1.msra.mxu0 %v73
  %3335 = vmatprep.subr.mxu0 0.0
  %3336 = vmatpush1.msra.mxu0 %v72
  %3337 = vmatprep.subr.mxu0 0.0
  %3338 = vmatpush1.msra.mxu0 %v71
  %3339 = vmatprep.subr.mxu0 0.0
  %3340 = vmatpush1.msra.mxu0 %v70
  %3341 = vmatprep.subr.mxu0 0.0
  %3342 = vmatpush1.msra.mxu0 %v69
  %3343 = vmatprep.subr.mxu0 0.0
  %3344 = vmatpush1.msra.mxu0 %v68
  %3345 = vmatprep.subr.mxu0 0.0
  %3346 = vmatpush1.msra.mxu0 %v67
  %3347 = vmatprep.subr.mxu0 0.0
  %3348 = vmatpush1.msra.mxu0 %v66
  %3349 = vmatprep.subr.mxu0 0.0
  %3350 = vmatpush1.msra.mxu0 %v65
  %3351 = vmatprep.subr.mxu0 0.0
  %3352 = vmatpush1.msra.mxu0 %v64
  %3353 = vmatprep.subr.mxu0 0.0
  %3354 = vmatpush1.msra.mxu0 %v63
  %3355 = vmatprep.subr.mxu0 0.0
  %3356 = vmatpush2.msra.mxu0 0.0
  %3357 = vmatprep.subr.mxu0 0.0
  %3358 = vmatpush2.msra.mxu0 0.0
  %3359 = vmatprep.subr.mxu0 0.0
  %3360 = vmatpush2.msra.mxu0 0.0
  %3361 = vmatprep.subr.mxu0 0.0
  %3362 = vmatpush2.msra.mxu0 0.0
  %3363 = vmatprep.subr.mxu0 0.0
  %3364 = vmatpush2.msra.mxu0 0.0
  %3365 = vmatprep.subr.mxu0 0.0
  %3366 = vmatpush2.msra.mxu0 0.0
  %3367 = vmatprep.subr.mxu0 0.0
  %3368 = vmatpush2.msra.mxu0 0.0
  %3369 = vmatprep.subr.mxu0 0.0
  %3370 = vmatpush2.msra.mxu0 0.0
  %3371 = vmatprep.subr.mxu0 0.0
  %3372 = vmatpush2.msra.mxu0 0.0
  %3373 = vmatprep.subr.mxu0 0.0
  %3374 = vmatpush2.msra.mxu0 0.0
  %3375 = vmatprep.subr.mxu0 0.0
  %3376 = vmatpush2.msra.mxu0 0.0
  %3377 = vmatprep.subr.mxu0 0.0
  %3378 = vmatpush2.msra.mxu0 0.0
  %3379 = vmatprep.subr.mxu0 0.0
  %3380 = vmatpush2.msra.mxu0 0.0
  %3381 = vmatprep.subr.mxu0 0.0
  %3382 = vmatpush2.msra.mxu0 0.0
  %3383 = vmatprep.subr.mxu0 0.0
  %3384 = vmatpush2.msra.mxu0 0.0
  %3385 = vmatprep.subr.mxu0 0.0
  %3386 = vmatpush2.msra.mxu0 0.0
  %3387 = vmatprep.mubr.f32.mxu0 0.0
  %3388 = vmatmul.mubr.f32.gmra.mxu0 %v3321
  %v3389 = vpop.f32.mrf.mxu0
  %v3390 = vadd.f32 %v162, %v3389
  %v3391 = vpop.f32.mrf.mxu0
  %3392 = vmatprep.mubr.f32.mxu0 0.0
  %3393 = vmatmul.mubr.f32.gmra.mxu0 %v3322
  %v3394 = vpop.f32.mrf.mxu0
  %v3395 = vadd.f32 %v162, %v3394
  %v3396 = vpop.f32.mrf.mxu0
  %3397 = vdwg.mxu0
  %v3398 = vmax.f32 %v3390, 0.0
  %v3399 = vmax.f32 %v3395, 0.0
  %v3401 = vsel %vm344, %v3398, 0
  %v3404 = vsel %vm344, %v3399, 0
  %3406 = vmatprep.subr.mxu0 0.0
  %3407 = vmatpush1.msra.mxu0 0.0
  %3408 = vmatprep.subr.mxu0 0.0
  %3409 = vmatpush1.msra.mxu0 0.0
  %3410 = vmatprep.subr.mxu0 0.0
  %3411 = vmatpush1.msra.mxu0 0.0
  %3412 = vmatprep.subr.mxu0 0.0
  %3413 = vmatpush1.msra.mxu0 0.0
  %3414 = vmatprep.subr.mxu0 0.0
  %3415 = vmatpush1.msra.mxu0 0.0
  %3416 = vmatprep.subr.mxu0 0.0
  %3417 = vmatpush1.msra.mxu0 0.0
  %3418 = vmatprep.subr.mxu0 0.0
  %3419 = vmatpush1.msra.mxu0 0.0
  %3420 = vmatprep.subr.mxu0 0.0
  %3421 = vmatpush1.msra.mxu0 0.0
  %3422 = vmatprep.subr.mxu0 0.0
  %3423 = vmatpush1.msra.mxu0 0.0
  %3424 = vmatprep.subr.mxu0 0.0
  %3425 = vmatpush1.msra.mxu0 0.0
  %3426 = vmatprep.subr.mxu0 0.0
  %3427 = vmatpush1.msra.mxu0 0.0
  %3428 = vmatprep.subr.mxu0 0.0
  %3429 = vmatpush1.msra.mxu0 0.0
  %3430 = vmatprep.subr.mxu0 0.0
  %3431 = vmatpush1.msra.mxu0 0.0
  %3432 = vmatprep.subr.mxu0 0.0
  %3433 = vmatpush1.msra.mxu0 0.0
  %3434 = vmatprep.subr.mxu0 0.0
  %3435 = vmatpush1.msra.mxu0 0.0
  %3436 = vmatprep.subr.mxu0 0.0
  %3437 = vmatpush1.msra.mxu0 %v97
  %3438 = vmatprep.subr.mxu0 0.0
  %3439 = vmatpush2.msra.mxu0 0.0
  %3440 = vmatprep.subr.mxu0 0.0
  %3441 = vmatpush2.msra.mxu0 0.0
  %3442 = vmatprep.subr.mxu0 0.0
  %3443 = vmatpush2.msra.mxu0 0.0
  %3444 = vmatprep.subr.mxu0 0.0
  %3445 = vmatpush2.msra.mxu0 0.0
  %3446 = vmatprep.subr.mxu0 0.0
  %3447 = vmatpush2.msra.mxu0 0.0
  %3448 = vmatprep.subr.mxu0 0.0
  %3449 = vmatpush2.msra.mxu0 0.0
  %3450 = vmatprep.subr.mxu0 0.0
  %3451 = vmatpush2.msra.mxu0 0.0
  %3452 = vmatprep.subr.mxu0 0.0
  %3453 = vmatpush2.msra.mxu0 0.0
  %3454 = vmatprep.subr.mxu0 0.0
  %3455 = vmatpush2.msra.mxu0 0.0
  %3456 = vmatprep.subr.mxu0 0.0
  %3457 = vmatpush2.msra.mxu0 0.0
  %3458 = vmatprep.subr.mxu0 0.0
  %3459 = vmatpush2.msra.mxu0 0.0
  %3460 = vmatprep.subr.mxu0 0.0
  %3461 = vmatpush2.msra.mxu0 0.0
  %3462 = vmatprep.subr.mxu0 0.0
  %3463 = vmatpush2.msra.mxu0 0.0
  %3464 = vmatprep.subr.mxu0 0.0
  %3465 = vmatpush2.msra.mxu0 0.0
  %3466 = vmatprep.subr.mxu0 0.0
  %3467 = vmatpush2.msra.mxu0 0.0
  %3468 = vmatprep.subr.mxu0 0.0
  %3469 = vmatpush2.msra.mxu0 0.0
  %3470 = vmatprep.mubr.f32.mxu0 0.0
  %3471 = vmatmul.mubr.f32.gmra.mxu0 %v3401
  %v3472 = vpop.f32.mrf.mxu0
  %v3473 = vadd.f32 0.0, %v3472
  %v3474 = vpop.f32.mrf.mxu0
  %3475 = vmatprep.mubr.f32.mxu0 0.0
  %3476 = vmatmul.mubr.f32.gmra.mxu0 %v3404
  %v3477 = vpop.f32.mrf.mxu0
  %v3478 = vadd.f32 0.0, %v3477
  %v3479 = vpop.f32.mrf.mxu0
  %3480 = vdwg.mxu0
  %v3481 = vadd.f32 %v3295, %v3473
  %v3482 = vadd.f32 %v3296, %v3478
  %3483 = vset.pattern.permute.xlu0 18
  %3484 = vperm.xlu0 %3483, %v56
  %v3485 = vpop.permute.xlu0 %3484
  %3487 = vset.pattern.permute.xlu0 18
  %3488 = vperm.xlu0 %3487, %v57
  %v3489 = vpop.permute.xlu0 %3488
  %v3491 = vmul.f32 %v3485, %v124
  %v3492 = vmul.f32 %v3489, %v124
  %3493 = vset.pattern.permute.xlu0 18
  %3494 = vperm.xlu0 %3493, %v58
  %v3495 = vpop.permute.xlu0 %3494
  %3497 = vset.pattern.permute.xlu0 18
  %3498 = vperm.xlu0 %3497, %v59
  %v3499 = vpop.permute.xlu0 %3498
  %v3501 = vmul.f32 %v3495, %v142
  %v3502 = vmul.f32 %v3499, %v142
  %v3503 = vadd.f32 %v3491, %v3501
  %v3504 = vadd.f32 %v3492, %v3502
  %v3505 = vadd.f32 %v3503, %v152
  %v3506 = vadd.f32 %v3504, %v152
  %v3507 = vmax.f32 %v3505, 0.0
  %v3508 = vmax.f32 %v3506, 0.0
  %3509 = vmatprep.subr.mxu0 0.0
  %3510 = vmatpush1.msra.mxu0 %v78
  %3511 = vmatprep.subr.mxu0 0.0
  %3512 = vmatpush1.msra.mxu0 %v77
  %3513 = vmatprep.subr.mxu0 0.0
  %3514 = vmatpush1.msra.mxu0 %v76
  %3515 = vmatprep.subr.mxu0 0.0
  %3516 = vmatpush1.msra.mxu0 %v75
  %3517 = vmatprep.subr.mxu0 0.0
  %3518 = vmatpush1.msra.mxu0 %v74
  %3519 = vmatprep.subr.mxu0 0.0
  %3520 = vmatpush1.msra.mxu0 %v73
  %3521 = vmatprep.subr.mxu0 0.0
  %3522 = vmatpush1.msra.mxu0 %v72
  %3523 = vmatprep.subr.mxu0 0.0
  %3524 = vmatpush1.msra.mxu0 %v71
  %3525 = vmatprep.subr.mxu0 0.0
  %3526 = vmatpush1.msra.mxu0 %v70
  %3527 = vmatprep.subr.mxu0 0.0
  %3528 = vmatpush1.msra.mxu0 %v69
  %3529 = vmatprep.subr.mxu0 0.0
  %3530 = vmatpush1.msra.mxu0 %v68
  %3531 = vmatprep.subr.mxu0 0.0
  %3532 = vmatpush1.msra.mxu0 %v67
  %3533 = vmatprep.subr.mxu0 0.0
  %3534 = vmatpush1.msra.mxu0 %v66
  %3535 = vmatprep.subr.mxu0 0.0
  %3536 = vmatpush1.msra.mxu0 %v65
  %3537 = vmatprep.subr.mxu0 0.0
  %3538 = vmatpush1.msra.mxu0 %v64
  %3539 = vmatprep.subr.mxu0 0.0
  %3540 = vmatpush1.msra.mxu0 %v63
  %3541 = vmatprep.subr.mxu0 0.0
  %3542 = vmatpush2.msra.mxu0 0.0
  %3543 = vmatprep.subr.mxu0 0.0
  %3544 = vmatpush2.msra.mxu0 0.0
  %3545 = vmatprep.subr.mxu0 0.0
  %3546 = vmatpush2.msra.mxu0 0.0
  %3547 = vmatprep.subr.mxu0 0.0
  %3548 = vmatpush2.msra.mxu0 0.0
  %3549 = vmatprep.subr.mxu0 0.0
  %3550 = vmatpush2.msra.mxu0 0.0
  %3551 = vmatprep.subr.mxu0 0.0
  %3552 = vmatpush2.msra.mxu0 0.0
  %3553 = vmatprep.subr.mxu0 0.0
  %3554 = vmatpush2.msra.mxu0 0.0
  %3555 = vmatprep.subr.mxu0 0.0
  %3556 = vmatpush2.msra.mxu0 0.0
  %3557 = vmatprep.subr.mxu0 0.0
  %3558 = vmatpush2.msra.mxu0 0.0
  %3559 = vmatprep.subr.mxu0 0.0
  %3560 = vmatpush2.msra.mxu0 0.0
  %3561 = vmatprep.subr.mxu0 0.0
  %3562 = vmatpush2.msra.mxu0 0.0
  %3563 = vmatprep.subr.mxu0 0.0
  %3564 = vmatpush2.msra.mxu0 0.0
  %3565 = vmatprep.subr.mxu0 0.0
  %3566 = vmatpush2.msra.mxu0 0.0
  %3567 = vmatprep.subr.mxu0 0.0
  %3568 = vmatpush2.msra.mxu0 0.0
  %3569 = vmatprep.subr.mxu0 0.0
  %3570 = vmatpush2.msra.mxu0 0.0
  %3571 = vmatprep.subr.mxu0 0.0
  %3572 = vmatpush2.msra.mxu0 0.0
  %3573 = vmatprep.mubr.f32.mxu0 0.0
  %3574 = vmatmul.mubr.f32.gmra.mxu0 %v3507
  %v3575 = vpop.f32.mrf.mxu0
  %v3576 = vadd.f32 %v162, %v3575
  %v3577 = vpop.f32.mrf.mxu0
  %3578 = vmatprep.mubr.f32.mxu0 0.0
  %3579 = vmatmul.mubr.f32.gmra.mxu0 %v3508
  %v3580 = vpop.f32.mrf.mxu0
  %v3581 = vadd.f32 %v162, %v3580
  %v3582 = vpop.f32.mrf.mxu0
  %3583 = vdwg.mxu0
  %v3584 = vmax.f32 %v3576, 0.0
  %v3585 = vmax.f32 %v3581, 0.0
  %v3587 = vsel %vm344, %v3584, 0
  %v3590 = vsel %vm344, %v3585, 0
  %3592 = vmatprep.subr.mxu0 0.0
  %3593 = vmatpush1.msra.mxu0 0.0
  %3594 = vmatprep.subr.mxu0 0.0
  %3595 = vmatpush1.msra.mxu0 0.0
  %3596 = vmatprep.subr.mxu0 0.0
  %3597 = vmatpush1.msra.mxu0 0.0
  %3598 = vmatprep.subr.mxu0 0.0
  %3599 = vmatpush1.msra.mxu0 0.0
  %3600 = vmatprep.subr.mxu0 0.0
  %3601 = vmatpush1.msra.mxu0 0.0
  %3602 = vmatprep.subr.mxu0 0.0
  %3603 = vmatpush1.msra.mxu0 0.0
  %3604 = vmatprep.subr.mxu0 0.0
  %3605 = vmatpush1.msra.mxu0 0.0
  %3606 = vmatprep.subr.mxu0 0.0
  %3607 = vmatpush1.msra.mxu0 0.0
  %3608 = vmatprep.subr.mxu0 0.0
  %3609 = vmatpush1.msra.mxu0 0.0
  %3610 = vmatprep.subr.mxu0 0.0
  %3611 = vmatpush1.msra.mxu0 0.0
  %3612 = vmatprep.subr.mxu0 0.0
  %3613 = vmatpush1.msra.mxu0 0.0
  %3614 = vmatprep.subr.mxu0 0.0
  %3615 = vmatpush1.msra.mxu0 0.0
  %3616 = vmatprep.subr.mxu0 0.0
  %3617 = vmatpush1.msra.mxu0 0.0
  %3618 = vmatprep.subr.mxu0 0.0
  %3619 = vmatpush1.msra.mxu0 0.0
  %3620 = vmatprep.subr.mxu0 0.0
  %3621 = vmatpush1.msra.mxu0 0.0
  %3622 = vmatprep.subr.mxu0 0.0
  %3623 = vmatpush1.msra.mxu0 %v98
  %3624 = vmatprep.subr.mxu0 0.0
  %3625 = vmatpush2.msra.mxu0 0.0
  %3626 = vmatprep.subr.mxu0 0.0
  %3627 = vmatpush2.msra.mxu0 0.0
  %3628 = vmatprep.subr.mxu0 0.0
  %3629 = vmatpush2.msra.mxu0 0.0
  %3630 = vmatprep.subr.mxu0 0.0
  %3631 = vmatpush2.msra.mxu0 0.0
  %3632 = vmatprep.subr.mxu0 0.0
  %3633 = vmatpush2.msra.mxu0 0.0
  %3634 = vmatprep.subr.mxu0 0.0
  %3635 = vmatpush2.msra.mxu0 0.0
  %3636 = vmatprep.subr.mxu0 0.0
  %3637 = vmatpush2.msra.mxu0 0.0
  %3638 = vmatprep.subr.mxu0 0.0
  %3639 = vmatpush2.msra.mxu0 0.0
  %3640 = vmatprep.subr.mxu0 0.0
  %3641 = vmatpush2.msra.mxu0 0.0
  %3642 = vmatprep.subr.mxu0 0.0
  %3643 = vmatpush2.msra.mxu0 0.0
  %3644 = vmatprep.subr.mxu0 0.0
  %3645 = vmatpush2.msra.mxu0 0.0
  %3646 = vmatprep.subr.mxu0 0.0
  %3647 = vmatpush2.msra.mxu0 0.0
  %3648 = vmatprep.subr.mxu0 0.0
  %3649 = vmatpush2.msra.mxu0 0.0
  %3650 = vmatprep.subr.mxu0 0.0
  %3651 = vmatpush2.msra.mxu0 0.0
  %3652 = vmatprep.subr.mxu0 0.0
  %3653 = vmatpush2.msra.mxu0 0.0
  %3654 = vmatprep.subr.mxu0 0.0
  %3655 = vmatpush2.msra.mxu0 0.0
  %3656 = vmatprep.mubr.f32.mxu0 0.0
  %3657 = vmatmul.mubr.f32.gmra.mxu0 %v3587
  %v3658 = vpop.f32.mrf.mxu0
  %v3659 = vadd.f32 0.0, %v3658
  %v3660 = vpop.f32.mrf.mxu0
  %3661 = vmatprep.mubr.f32.mxu0 0.0
  %3662 = vmatmul.mubr.f32.gmra.mxu0 %v3590
  %v3663 = vpop.f32.mrf.mxu0
  %v3664 = vadd.f32 0.0, %v3663
  %v3665 = vpop.f32.mrf.mxu0
  %3666 = vdwg.mxu0
  %v3667 = vadd.f32 %v3481, %v3659
  %v3668 = vadd.f32 %v3482, %v3664
  %3669 = vset.pattern.permute.xlu0 19
  %3670 = vperm.xlu0 %3669, %v56
  %v3671 = vpop.permute.xlu0 %3670
  %3673 = vset.pattern.permute.xlu0 19
  %3674 = vperm.xlu0 %3673, %v57
  %v3675 = vpop.permute.xlu0 %3674
  %v3677 = vmul.f32 %v3671, %v124
  %v3678 = vmul.f32 %v3675, %v124
  %3679 = vset.pattern.permute.xlu0 19
  %3680 = vperm.xlu0 %3679, %v58
  %v3681 = vpop.permute.xlu0 %3680
  %3683 = vset.pattern.permute.xlu0 19
  %3684 = vperm.xlu0 %3683, %v59
  %v3685 = vpop.permute.xlu0 %3684
  %v3687 = vmul.f32 %v3681, %v142
  %v3688 = vmul.f32 %v3685, %v142
  %v3689 = vadd.f32 %v3677, %v3687
  %v3690 = vadd.f32 %v3678, %v3688
  %v3691 = vadd.f32 %v3689, %v152
  %v3692 = vadd.f32 %v3690, %v152
  %v3693 = vmax.f32 %v3691, 0.0
  %v3694 = vmax.f32 %v3692, 0.0
  %3695 = vmatprep.subr.mxu0 0.0
  %3696 = vmatpush1.msra.mxu0 %v78
  %3697 = vmatprep.subr.mxu0 0.0
  %3698 = vmatpush1.msra.mxu0 %v77
  %3699 = vmatprep.subr.mxu0 0.0
  %3700 = vmatpush1.msra.mxu0 %v76
  %3701 = vmatprep.subr.mxu0 0.0
  %3702 = vmatpush1.msra.mxu0 %v75
  %3703 = vmatprep.subr.mxu0 0.0
  %3704 = vmatpush1.msra.mxu0 %v74
  %3705 = vmatprep.subr.mxu0 0.0
  %3706 = vmatpush1.msra.mxu0 %v73
  %3707 = vmatprep.subr.mxu0 0.0
  %3708 = vmatpush1.msra.mxu0 %v72
  %3709 = vmatprep.subr.mxu0 0.0
  %3710 = vmatpush1.msra.mxu0 %v71
  %3711 = vmatprep.subr.mxu0 0.0
  %3712 = vmatpush1.msra.mxu0 %v70
  %3713 = vmatprep.subr.mxu0 0.0
  %3714 = vmatpush1.msra.mxu0 %v69
  %3715 = vmatprep.subr.mxu0 0.0
  %3716 = vmatpush1.msra.mxu0 %v68
  %3717 = vmatprep.subr.mxu0 0.0
  %3718 = vmatpush1.msra.mxu0 %v67
  %3719 = vmatprep.subr.mxu0 0.0
  %3720 = vmatpush1.msra.mxu0 %v66
  %3721 = vmatprep.subr.mxu0 0.0
  %3722 = vmatpush1.msra.mxu0 %v65
  %3723 = vmatprep.subr.mxu0 0.0
  %3724 = vmatpush1.msra.mxu0 %v64
  %3725 = vmatprep.subr.mxu0 0.0
  %3726 = vmatpush1.msra.mxu0 %v63
  %3727 = vmatprep.subr.mxu0 0.0
  %3728 = vmatpush2.msra.mxu0 0.0
  %3729 = vmatprep.subr.mxu0 0.0
  %3730 = vmatpush2.msra.mxu0 0.0
  %3731 = vmatprep.subr.mxu0 0.0
  %3732 = vmatpush2.msra.mxu0 0.0
  %3733 = vmatprep.subr.mxu0 0.0
  %3734 = vmatpush2.msra.mxu0 0.0
  %3735 = vmatprep.subr.mxu0 0.0
  %3736 = vmatpush2.msra.mxu0 0.0
  %3737 = vmatprep.subr.mxu0 0.0
  %3738 = vmatpush2.msra.mxu0 0.0
  %3739 = vmatprep.subr.mxu0 0.0
  %3740 = vmatpush2.msra.mxu0 0.0
  %3741 = vmatprep.subr.mxu0 0.0
  %3742 = vmatpush2.msra.mxu0 0.0
  %3743 = vmatprep.subr.mxu0 0.0
  %3744 = vmatpush2.msra.mxu0 0.0
  %3745 = vmatprep.subr.mxu0 0.0
  %3746 = vmatpush2.msra.mxu0 0.0
  %3747 = vmatprep.subr.mxu0 0.0
  %3748 = vmatpush2.msra.mxu0 0.0
  %3749 = vmatprep.subr.mxu0 0.0
  %3750 = vmatpush2.msra.mxu0 0.0
  %3751 = vmatprep.subr.mxu0 0.0
  %3752 = vmatpush2.msra.mxu0 0.0
  %3753 = vmatprep.subr.mxu0 0.0
  %3754 = vmatpush2.msra.mxu0 0.0
  %3755 = vmatprep.subr.mxu0 0.0
  %3756 = vmatpush2.msra.mxu0 0.0
  %3757 = vmatprep.subr.mxu0 0.0
  %3758 = vmatpush2.msra.mxu0 0.0
  %3759 = vmatprep.mubr.f32.mxu0 0.0
  %3760 = vmatmul.mubr.f32.gmra.mxu0 %v3693
  %v3761 = vpop.f32.mrf.mxu0
  %v3762 = vadd.f32 %v162, %v3761
  %v3763 = vpop.f32.mrf.mxu0
  %3764 = vmatprep.mubr.f32.mxu0 0.0
  %3765 = vmatmul.mubr.f32.gmra.mxu0 %v3694
  %v3766 = vpop.f32.mrf.mxu0
  %v3767 = vadd.f32 %v162, %v3766
  %v3768 = vpop.f32.mrf.mxu0
  %3769 = vdwg.mxu0
  %v3770 = vmax.f32 %v3762, 0.0
  %v3771 = vmax.f32 %v3767, 0.0
  %v3773 = vsel %vm344, %v3770, 0
  %v3776 = vsel %vm344, %v3771, 0
  %3778 = vmatprep.subr.mxu0 0.0
  %3779 = vmatpush1.msra.mxu0 0.0
  %3780 = vmatprep.subr.mxu0 0.0
  %3781 = vmatpush1.msra.mxu0 0.0
  %3782 = vmatprep.subr.mxu0 0.0
  %3783 = vmatpush1.msra.mxu0 0.0
  %3784 = vmatprep.subr.mxu0 0.0
  %3785 = vmatpush1.msra.mxu0 0.0
  %3786 = vmatprep.subr.mxu0 0.0
  %3787 = vmatpush1.msra.mxu0 0.0
  %3788 = vmatprep.subr.mxu0 0.0
  %3789 = vmatpush1.msra.mxu0 0.0
  %3790 = vmatprep.subr.mxu0 0.0
  %3791 = vmatpush1.msra.mxu0 0.0
  %3792 = vmatprep.subr.mxu0 0.0
  %3793 = vmatpush1.msra.mxu0 0.0
  %3794 = vmatprep.subr.mxu0 0.0
  %3795 = vmatpush1.msra.mxu0 0.0
  %3796 = vmatprep.subr.mxu0 0.0
  %3797 = vmatpush1.msra.mxu0 0.0
  %3798 = vmatprep.subr.mxu0 0.0
  %3799 = vmatpush1.msra.mxu0 0.0
  %3800 = vmatprep.subr.mxu0 0.0
  %3801 = vmatpush1.msra.mxu0 0.0
  %3802 = vmatprep.subr.mxu0 0.0
  %3803 = vmatpush1.msra.mxu0 0.0
  %3804 = vmatprep.subr.mxu0 0.0
  %3805 = vmatpush1.msra.mxu0 0.0
  %3806 = vmatprep.subr.mxu0 0.0
  %3807 = vmatpush1.msra.mxu0 0.0
  %3808 = vmatprep.subr.mxu0 0.0
  %3809 = vmatpush1.msra.mxu0 %v99
  %3810 = vmatprep.subr.mxu0 0.0
  %3811 = vmatpush2.msra.mxu0 0.0
  %3812 = vmatprep.subr.mxu0 0.0
  %3813 = vmatpush2.msra.mxu0 0.0
  %3814 = vmatprep.subr.mxu0 0.0
  %3815 = vmatpush2.msra.mxu0 0.0
  %3816 = vmatprep.subr.mxu0 0.0
  %3817 = vmatpush2.msra.mxu0 0.0
  %3818 = vmatprep.subr.mxu0 0.0
  %3819 = vmatpush2.msra.mxu0 0.0
  %3820 = vmatprep.subr.mxu0 0.0
  %3821 = vmatpush2.msra.mxu0 0.0
  %3822 = vmatprep.subr.mxu0 0.0
  %3823 = vmatpush2.msra.mxu0 0.0
  %3824 = vmatprep.subr.mxu0 0.0
  %3825 = vmatpush2.msra.mxu0 0.0
  %3826 = vmatprep.subr.mxu0 0.0
  %3827 = vmatpush2.msra.mxu0 0.0
  %3828 = vmatprep.subr.mxu0 0.0
  %3829 = vmatpush2.msra.mxu0 0.0
  %3830 = vmatprep.subr.mxu0 0.0
  %3831 = vmatpush2.msra.mxu0 0.0
  %3832 = vmatprep.subr.mxu0 0.0
  %3833 = vmatpush2.msra.mxu0 0.0
  %3834 = vmatprep.subr.mxu0 0.0
  %3835 = vmatpush2.msra.mxu0 0.0
  %3836 = vmatprep.subr.mxu0 0.0
  %3837 = vmatpush2.msra.mxu0 0.0
  %3838 = vmatprep.subr.mxu0 0.0
  %3839 = vmatpush2.msra.mxu0 0.0
  %3840 = vmatprep.subr.mxu0 0.0
  %3841 = vmatpush2.msra.mxu0 0.0
  %3842 = vmatprep.mubr.f32.mxu0 0.0
  %3843 = vmatmul.mubr.f32.gmra.mxu0 %v3773
  %v3844 = vpop.f32.mrf.mxu0
  %v3845 = vadd.f32 0.0, %v3844
  %v3846 = vpop.f32.mrf.mxu0
  %3847 = vmatprep.mubr.f32.mxu0 0.0
  %3848 = vmatmul.mubr.f32.gmra.mxu0 %v3776
  %v3849 = vpop.f32.mrf.mxu0
  %v3850 = vadd.f32 0.0, %v3849
  %v3851 = vpop.f32.mrf.mxu0
  %3852 = vdwg.mxu0
  %v3853 = vadd.f32 %v3667, %v3845
  %v3854 = vadd.f32 %v3668, %v3850
  %3855 = vset.pattern.permute.xlu0 20
  %3856 = vperm.xlu0 %3855, %v56
  %v3857 = vpop.permute.xlu0 %3856
  %3859 = vset.pattern.permute.xlu0 20
  %3860 = vperm.xlu0 %3859, %v57
  %v3861 = vpop.permute.xlu0 %3860
  %v3863 = vmul.f32 %v3857, %v124
  %v3864 = vmul.f32 %v3861, %v124
  %3865 = vset.pattern.permute.xlu0 20
  %3866 = vperm.xlu0 %3865, %v58
  %v3867 = vpop.permute.xlu0 %3866
  %3869 = vset.pattern.permute.xlu0 20
  %3870 = vperm.xlu0 %3869, %v59
  %v3871 = vpop.permute.xlu0 %3870
  %v3873 = vmul.f32 %v3867, %v142
  %v3874 = vmul.f32 %v3871, %v142
  %v3875 = vadd.f32 %v3863, %v3873
  %v3876 = vadd.f32 %v3864, %v3874
  %v3877 = vadd.f32 %v3875, %v152
  %v3878 = vadd.f32 %v3876, %v152
  %v3879 = vmax.f32 %v3877, 0.0
  %v3880 = vmax.f32 %v3878, 0.0
  %3881 = vmatprep.subr.mxu0 0.0
  %3882 = vmatpush1.msra.mxu0 %v78
  %3883 = vmatprep.subr.mxu0 0.0
  %3884 = vmatpush1.msra.mxu0 %v77
  %3885 = vmatprep.subr.mxu0 0.0
  %3886 = vmatpush1.msra.mxu0 %v76
  %3887 = vmatprep.subr.mxu0 0.0
  %3888 = vmatpush1.msra.mxu0 %v75
  %3889 = vmatprep.subr.mxu0 0.0
  %3890 = vmatpush1.msra.mxu0 %v74
  %3891 = vmatprep.subr.mxu0 0.0
  %3892 = vmatpush1.msra.mxu0 %v73
  %3893 = vmatprep.subr.mxu0 0.0
  %3894 = vmatpush1.msra.mxu0 %v72
  %3895 = vmatprep.subr.mxu0 0.0
  %3896 = vmatpush1.msra.mxu0 %v71
  %3897 = vmatprep.subr.mxu0 0.0
  %3898 = vmatpush1.msra.mxu0 %v70
  %3899 = vmatprep.subr.mxu0 0.0
  %3900 = vmatpush1.msra.mxu0 %v69
  %3901 = vmatprep.subr.mxu0 0.0
  %3902 = vmatpush1.msra.mxu0 %v68
  %3903 = vmatprep.subr.mxu0 0.0
  %3904 = vmatpush1.msra.mxu0 %v67
  %3905 = vmatprep.subr.mxu0 0.0
  %3906 = vmatpush1.msra.mxu0 %v66
  %3907 = vmatprep.subr.mxu0 0.0
  %3908 = vmatpush1.msra.mxu0 %v65
  %3909 = vmatprep.subr.mxu0 0.0
  %3910 = vmatpush1.msra.mxu0 %v64
  %3911 = vmatprep.subr.mxu0 0.0
  %3912 = vmatpush1.msra.mxu0 %v63
  %3913 = vmatprep.subr.mxu0 0.0
  %3914 = vmatpush2.msra.mxu0 0.0
  %3915 = vmatprep.subr.mxu0 0.0
  %3916 = vmatpush2.msra.mxu0 0.0
  %3917 = vmatprep.subr.mxu0 0.0
  %3918 = vmatpush2.msra.mxu0 0.0
  %3919 = vmatprep.subr.mxu0 0.0
  %3920 = vmatpush2.msra.mxu0 0.0
  %3921 = vmatprep.subr.mxu0 0.0
  %3922 = vmatpush2.msra.mxu0 0.0
  %3923 = vmatprep.subr.mxu0 0.0
  %3924 = vmatpush2.msra.mxu0 0.0
  %3925 = vmatprep.subr.mxu0 0.0
  %3926 = vmatpush2.msra.mxu0 0.0
  %3927 = vmatprep.subr.mxu0 0.0
  %3928 = vmatpush2.msra.mxu0 0.0
  %3929 = vmatprep.subr.mxu0 0.0
  %3930 = vmatpush2.msra.mxu0 0.0
  %3931 = vmatprep.subr.mxu0 0.0
  %3932 = vmatpush2.msra.mxu0 0.0
  %3933 = vmatprep.subr.mxu0 0.0
  %3934 = vmatpush2.msra.mxu0 0.0
  %3935 = vmatprep.subr.mxu0 0.0
  %3936 = vmatpush2.msra.mxu0 0.0
  %3937 = vmatprep.subr.mxu0 0.0
  %3938 = vmatpush2.msra.mxu0 0.0
  %3939 = vmatprep.subr.mxu0 0.0
  %3940 = vmatpush2.msra.mxu0 0.0
  %3941 = vmatprep.subr.mxu0 0.0
  %3942 = vmatpush2.msra.mxu0 0.0
  %3943 = vmatprep.subr.mxu0 0.0
  %3944 = vmatpush2.msra.mxu0 0.0
  %3945 = vmatprep.mubr.f32.mxu0 0.0
  %3946 = vmatmul.mubr.f32.gmra.mxu0 %v3879
  %v3947 = vpop.f32.mrf.mxu0
  %v3948 = vadd.f32 %v162, %v3947
  %v3949 = vpop.f32.mrf.mxu0
  %3950 = vmatprep.mubr.f32.mxu0 0.0
  %3951 = vmatmul.mubr.f32.gmra.mxu0 %v3880
  %v3952 = vpop.f32.mrf.mxu0
  %v3953 = vadd.f32 %v162, %v3952
  %v3954 = vpop.f32.mrf.mxu0
  %3955 = vdwg.mxu0
  %v3956 = vmax.f32 %v3948, 0.0
  %v3957 = vmax.f32 %v3953, 0.0
  %v3959 = vsel %vm344, %v3956, 0
  %v3962 = vsel %vm344, %v3957, 0
  %3964 = vmatprep.subr.mxu0 0.0
  %3965 = vmatpush1.msra.mxu0 0.0
  %3966 = vmatprep.subr.mxu0 0.0
  %3967 = vmatpush1.msra.mxu0 0.0
  %3968 = vmatprep.subr.mxu0 0.0
  %3969 = vmatpush1.msra.mxu0 0.0
  %3970 = vmatprep.subr.mxu0 0.0
  %3971 = vmatpush1.msra.mxu0 0.0
  %3972 = vmatprep.subr.mxu0 0.0
  %3973 = vmatpush1.msra.mxu0 0.0
  %3974 = vmatprep.subr.mxu0 0.0
  %3975 = vmatpush1.msra.mxu0 0.0
  %3976 = vmatprep.subr.mxu0 0.0
  %3977 = vmatpush1.msra.mxu0 0.0
  %3978 = vmatprep.subr.mxu0 0.0
  %3979 = vmatpush1.msra.mxu0 0.0
  %3980 = vmatprep.subr.mxu0 0.0
  %3981 = vmatpush1.msra.mxu0 0.0
  %3982 = vmatprep.subr.mxu0 0.0
  %3983 = vmatpush1.msra.mxu0 0.0
  %3984 = vmatprep.subr.mxu0 0.0
  %3985 = vmatpush1.msra.mxu0 0.0
  %3986 = vmatprep.subr.mxu0 0.0
  %3987 = vmatpush1.msra.mxu0 0.0
  %3988 = vmatprep.subr.mxu0 0.0
  %3989 = vmatpush1.msra.mxu0 0.0
  %3990 = vmatprep.subr.mxu0 0.0
  %3991 = vmatpush1.msra.mxu0 0.0
  %3992 = vmatprep.subr.mxu0 0.0
  %3993 = vmatpush1.msra.mxu0 0.0
  %3994 = vmatprep.subr.mxu0 0.0
  %3995 = vmatpush1.msra.mxu0 %v100
  %3996 = vmatprep.subr.mxu0 0.0
  %3997 = vmatpush2.msra.mxu0 0.0
  %3998 = vmatprep.subr.mxu0 0.0
  %3999 = vmatpush2.msra.mxu0 0.0
  %4000 = vmatprep.subr.mxu0 0.0
  %4001 = vmatpush2.msra.mxu0 0.0
  %4002 = vmatprep.subr.mxu0 0.0
  %4003 = vmatpush2.msra.mxu0 0.0
  %4004 = vmatprep.subr.mxu0 0.0
  %4005 = vmatpush2.msra.mxu0 0.0
  %4006 = vmatprep.subr.mxu0 0.0
  %4007 = vmatpush2.msra.mxu0 0.0
  %4008 = vmatprep.subr.mxu0 0.0
  %4009 = vmatpush2.msra.mxu0 0.0
  %4010 = vmatprep.subr.mxu0 0.0
  %4011 = vmatpush2.msra.mxu0 0.0
  %4012 = vmatprep.subr.mxu0 0.0
  %4013 = vmatpush2.msra.mxu0 0.0
  %4014 = vmatprep.subr.mxu0 0.0
  %4015 = vmatpush2.msra.mxu0 0.0
  %4016 = vmatprep.subr.mxu0 0.0
  %4017 = vmatpush2.msra.mxu0 0.0
  %4018 = vmatprep.subr.mxu0 0.0
  %4019 = vmatpush2.msra.mxu0 0.0
  %4020 = vmatprep.subr.mxu0 0.0
  %4021 = vmatpush2.msra.mxu0 0.0
  %4022 = vmatprep.subr.mxu0 0.0
  %4023 = vmatpush2.msra.mxu0 0.0
  %4024 = vmatprep.subr.mxu0 0.0
  %4025 = vmatpush2.msra.mxu0 0.0
  %4026 = vmatprep.subr.mxu0 0.0
  %4027 = vmatpush2.msra.mxu0 0.0
  %4028 = vmatprep.mubr.f32.mxu0 0.0
  %4029 = vmatmul.mubr.f32.gmra.mxu0 %v3959
  %v4030 = vpop.f32.mrf.mxu0
  %v4031 = vadd.f32 0.0, %v4030
  %v4032 = vpop.f32.mrf.mxu0
  %4033 = vmatprep.mubr.f32.mxu0 0.0
  %4034 = vmatmul.mubr.f32.gmra.mxu0 %v3962
  %v4035 = vpop.f32.mrf.mxu0
  %v4036 = vadd.f32 0.0, %v4035
  %v4037 = vpop.f32.mrf.mxu0
  %4038 = vdwg.mxu0
  %v4039 = vadd.f32 %v3853, %v4031
  %v4040 = vadd.f32 %v3854, %v4036
  %v4042 = vlaneseq
  %v4043 = vshrl.u32 %v4042, 7
  %v4044 = vsub.s32 0, %v4043
  %v4045 = vrot.slane %v101, %v4044
  %v4047 = vadd.f32 %v4039, %v4045
  %v4048 = vadd.f32 %v4040, %v4045
  %v4049 = vlaneseq
  %v4050 = vshrl.u32 %v4049, 7
  %v4051 = vsub.s32 0, %v4050
  %v4052 = vrot.slane %v102, %v4051
  %v4053 = vmul.f32 %v4052, 0.0
  %v4054 = vlaneseq
  %v4055 = vshrl.u32 %v4054, 7
  %v4056 = vsub.s32 1, %v4055
  %v4057 = vrot.slane %v102, %v4056
  %v4058 = vmul.f32 %v4057, 0.0
  %v4059 = vadd.f32 %v4053, %v4058
  %v4060 = vlaneseq
  %v4061 = vshrl.u32 %v4060, 7
  %v4062 = vsub.s32 2, %v4061
  %v4063 = vrot.slane %v102, %v4062
  %v4064 = vmul.f32 %v4063, 0.0
  %v4065 = vadd.f32 %v4059, %v4064
  %v4066 = vlaneseq
  %v4067 = vshrl.u32 %v4066, 7
  %v4068 = vsub.s32 3, %v4067
  %v4069 = vrot.slane %v102, %v4068
  %v4070 = vmul.f32 %v4069, 0.0
  %v4071 = vadd.f32 %v4065, %v4070
  %v4073 = vlaneseq
  %v4074 = vshrl.u32 %v4073, 7
  %v4075 = vsub.s32 0, %v4074
  %v4076 = vrot.slane %v103, %v4075
  %v4078 = vadd.f32 %v4071, %v4076
  %v4079 = vadd.f32 %v4047, %v4078
  %v4080 = vxor.u32 %v4079, 2147483648
  %v4081 = vmul.f32 %v4080, 1.442695
  %v4082 = vpow.pop %v4081
  %v4083 = vadd.f32 %v4082, 1.0
  %v4084 = vrcp.pop %v4083
  %v4085 = vmul.f32 1.0, %v4084
  %4087 = vrot.lane.b32.xlu0 %v4078, 120
  %v4088 = vpop.permute.xlu0 %4087
  %v4090 = vmul.f32 %v4085, %v4088
  %4092 = vrot.lane.b32.xlu0 %v4090, 8
  %v4093 = vpop.permute.xlu0 %4092
  %v4095 = vadd.f32 %v4047, %v4093
  %v4096 = vtanh.pop %v4095
  %v4097 = vsub.f32 1.0, %v4085
  %4099 = vrot.lane.b32.xlu0 %v4096, 124
  %v4100 = vpop.permute.xlu0 %4099
  %v4102 = vmul.f32 %v4097, %v4100
  %v4103 = vmul.f32 %v4085, 0.0
  %v4104 = vadd.f32 %v4102, %v4103
  %4106 = vset.pattern.permute.xlu0 4
  %4107 = vperm.xlu0 %4106, %v4104
  %v4108 = vpop.permute.xlu0 %4107
  %v4110 = vlaneseq
  %v4111 = vshrl.u32 %v4110, 7
  %v4112 = vsub.s32 0, %v4111
  %v4113 = vrot.slane %v104, %v4112
  %v4114 = vmul.f32 %v4108, %v4113
  %4115 = vset.pattern.permute.xlu0 5
  %4116 = vperm.xlu0 %4115, %v4104
  %v4117 = vpop.permute.xlu0 %4116
  %v4119 = vlaneseq
  %v4120 = vshrl.u32 %v4119, 7
  %v4121 = vsub.s32 1, %v4120
  %v4122 = vrot.slane %v104, %v4121
  %v4123 = vmul.f32 %v4117, %v4122
  %v4124 = vadd.f32 %v4114, %v4123
  %4125 = vset.pattern.permute.xlu0 6
  %4126 = vperm.xlu0 %4125, %v4104
  %v4127 = vpop.permute.xlu0 %4126
  %v4129 = vlaneseq
  %v4130 = vshrl.u32 %v4129, 7
  %v4131 = vsub.s32 2, %v4130
  %v4132 = vrot.slane %v104, %v4131
  %v4133 = vmul.f32 %v4127, %v4132
  %v4134 = vadd.f32 %v4124, %v4133
  %4135 = vset.pattern.permute.xlu0 7
  %4136 = vperm.xlu0 %4135, %v4104
  %v4137 = vpop.permute.xlu0 %4136
  %v4139 = vlaneseq
  %v4140 = vshrl.u32 %v4139, 7
  %v4141 = vsub.s32 3, %v4140
  %v4142 = vrot.slane %v104, %v4141
  %v4143 = vmul.f32 %v4137, %v4142
  %v4144 = vadd.f32 %v4134, %v4143
  %v4146 = vlaneseq
  %v4147 = vshrl.u32 %v4146, 7
  %v4148 = vsub.s32 0, %v4147
  %v4149 = vrot.slane %v105, %v4148
  %v4151 = vadd.f32 %v4144, %v4149
  %v4152 = vlaneseq
  %v4153 = vshrl.u32 %v4152, 7
  %v4154 = vsub.s32 0, %v4153
  %v4155 = vrot.slane %v106, %v4154
  %v4156 = vmul.f32 %v4155, 0.0
  %v4157 = vlaneseq
  %v4158 = vshrl.u32 %v4157, 7
  %v4159 = vsub.s32 1, %v4158
  %v4160 = vrot.slane %v106, %v4159
  %v4161 = vmul.f32 %v4160, 0.0
  %v4162 = vadd.f32 %v4156, %v4161
  %v4163 = vlaneseq
  %v4164 = vshrl.u32 %v4163, 7
  %v4165 = vsub.s32 2, %v4164
  %v4166 = vrot.slane %v106, %v4165
  %v4167 = vmul.f32 %v4166, 0.0
  %v4168 = vadd.f32 %v4162, %v4167
  %v4169 = vlaneseq
  %v4170 = vshrl.u32 %v4169, 7
  %v4171 = vsub.s32 3, %v4170
  %v4172 = vrot.slane %v106, %v4171
  %v4173 = vmul.f32 %v4172, 0.0
  %v4174 = vadd.f32 %v4168, %v4173
  %v4176 = vlaneseq
  %v4177 = vshrl.u32 %v4176, 7
  %v4178 = vsub.s32 0, %v4177
  %v4179 = vrot.slane %v107, %v4178
  %v4181 = vadd.f32 %v4174, %v4179
  %v4182 = vadd.f32 %v4151, %v4181
  %v4183 = vxor.u32 %v4182, 2147483648
  %v4184 = vmul.f32 %v4183, 1.442695
  %v4185 = vpow.pop %v4184
  %v4186 = vadd.f32 %v4185, 1.0
  %v4187 = vrcp.pop %v4186
  %v4188 = vmul.f32 1.0, %v4187
  %4190 = vrot.lane.b32.xlu0 %v4181, 120
  %v4191 = vpop.permute.xlu0 %4190
  %v4193 = vmul.f32 %v4188, %v4191
  %4195 = vrot.lane.b32.xlu0 %v4193, 8
  %v4196 = vpop.permute.xlu0 %4195
  %v4198 = vadd.f32 %v4151, %v4196
  %v4199 = vtanh.pop %v4198
  %v4200 = vsub.f32 1.0, %v4188
  %4202 = vrot.lane.b32.xlu0 %v4199, 124
  %v4203 = vpop.permute.xlu0 %4202
  %v4205 = vmul.f32 %v4200, %v4203
  %v4206 = vmul.f32 %v4188, 0.0
  %v4207 = vadd.f32 %v4205, %v4206
  %4209 = vset.pattern.permute.xlu0 4
  %4210 = vperm.xlu0 %4209, %v4207
  %v4211 = vpop.permute.xlu0 %4210
  %v4213 = vlaneseq
  %v4214 = vshrl.u32 %v4213, 7
  %v4215 = vsub.s32 0, %v4214
  %v4216 = vrot.slane %v108, %v4215
  %v4217 = vmul.f32 %v4211, %v4216
  %4218 = vset.pattern.permute.xlu0 5
  %4219 = vperm.xlu0 %4218, %v4207
  %v4220 = vpop.permute.xlu0 %4219
  %v4222 = vlaneseq
  %v4223 = vshrl.u32 %v4222, 7
  %v4224 = vsub.s32 1, %v4223
  %v4225 = vrot.slane %v108, %v4224
  %v4226 = vmul.f32 %v4220, %v4225
  %v4227 = vadd.f32 %v4217, %v4226
  %4228 = vset.pattern.permute.xlu0 6
  %4229 = vperm.xlu0 %4228, %v4207
  %v4230 = vpop.permute.xlu0 %4229
  %v4232 = vlaneseq
  %v4233 = vshrl.u32 %v4232, 7
  %v4234 = vsub.s32 2, %v4233
  %v4235 = vrot.slane %v108, %v4234
  %v4236 = vmul.f32 %v4230, %v4235
  %v4237 = vadd.f32 %v4227, %v4236
  %4238 = vset.pattern.permute.xlu0 7
  %4239 = vperm.xlu0 %4238, %v4207
  %v4240 = vpop.permute.xlu0 %4239
  %v4242 = vlaneseq
  %v4243 = vshrl.u32 %v4242, 7
  %v4244 = vsub.s32 3, %v4243
  %v4245 = vrot.slane %v108, %v4244
  %v4246 = vmul.f32 %v4240, %v4245
  %v4247 = vadd.f32 %v4237, %v4246
  %v4249 = vlaneseq
  %v4250 = vshrl.u32 %v4249, 7
  %v4251 = vsub.s32 0, %v4250
  %v4252 = vrot.slane %v109, %v4251
  %v4254 = vadd.f32 %v4247, %v4252
  %4255 = vst [vmem:[%s17] sm:$0x3] %v4254
  %v4256 = vmul.f32 %v4108, %v4052
  %v4257 = vmul.f32 %v4117, %v4057
  %v4258 = vadd.f32 %v4256, %v4257
  %v4259 = vmul.f32 %v4127, %v4063
  %v4260 = vadd.f32 %v4258, %v4259
  %v4261 = vmul.f32 %v4137, %v4069
  %v4262 = vadd.f32 %v4260, %v4261
  %v4263 = vadd.f32 %v4262, %v4076
  %v4265 = vrot.slane %v4263, 6
  %v4267 = vadd.f32 %v4047, %v4265
  %v4268 = vxor.u32 %v4267, 2147483648
  %v4269 = vmul.f32 %v4268, 1.442695
  %v4270 = vpow.pop %v4269
  %v4271 = vadd.f32 %v4270, 1.0
  %v4272 = vrcp.pop %v4271
  %v4273 = vmul.f32 1.0, %v4272
  %4274 = vrot.lane.b32.xlu0 %v4265, 120
  %v4275 = vpop.permute.xlu0 %4274
  %v4277 = vmul.f32 %v4273, %v4275
  %4279 = vrot.lane.b32.xlu0 %v4277, 8
  %v4280 = vpop.permute.xlu0 %4279
  %v4282 = vadd.f32 %v4047, %v4280
  %v4283 = vtanh.pop %v4282
  %v4284 = vsub.f32 1.0, %v4273
  %4286 = vrot.lane.b32.xlu0 %v4283, 124
  %v4287 = vpop.permute.xlu0 %4286
  %v4289 = vmul.f32 %v4284, %v4287
  %v4290 = vrot.slane %v4104, 6
  %v4292 = vmul.f32 %v4273, %v4290
  %v4293 = vadd.f32 %v4289, %v4292
  %4295 = vset.pattern.permute.xlu0 4
  %4296 = vperm.xlu0 %4295, %v4293
  %v4297 = vpop.permute.xlu0 %4296
  %v4299 = vmul.f32 %v4297, %v4113
  %4300 = vset.pattern.permute.xlu0 5
  %4301 = vperm.xlu0 %4300, %v4293
  %v4302 = vpop.permute.xlu0 %4301
  %v4304 = vmul.f32 %v4302, %v4122
  %v4305 = vadd.f32 %v4299, %v4304
  %4306 = vset.pattern.permute.xlu0 6
  %4307 = vperm.xlu0 %4306, %v4293
  %v4308 = vpop.permute.xlu0 %4307
  %v4310 = vmul.f32 %v4308, %v4132
  %v4311 = vadd.f32 %v4305, %v4310
  %4312 = vset.pattern.permute.xlu0 7
  %4313 = vperm.xlu0 %4312, %v4293
  %v4314 = vpop.permute.xlu0 %4313
  %v4316 = vmul.f32 %v4314, %v4142
  %v4317 = vadd.f32 %v4311, %v4316
  %v4318 = vadd.f32 %v4317, %v4149
  %v4319 = vmul.f32 %v4211, %v4155
  %v4320 = vmul.f32 %v4220, %v4160
  %v4321 = vadd.f32 %v4319, %v4320
  %v4322 = vmul.f32 %v4230, %v4166
  %v4323 = vadd.f32 %v4321, %v4322
  %v4324 = vmul.f32 %v4240, %v4172
  %v4325 = vadd.f32 %v4323, %v4324
  %v4326 = vadd.f32 %v4325, %v4179
  %v4328 = vrot.slane %v4326, 6
  %v4330 = vadd.f32 %v4318, %v4328
  %v4331 = vxor.u32 %v4330, 2147483648
  %v4332 = vmul.f32 %v4331, 1.442695
  %v4333 = vpow.pop %v4332
  %v4334 = vadd.f32 %v4333, 1.0
  %v4335 = vrcp.pop %v4334
  %v4336 = vmul.f32 1.0, %v4335
  %4337 = vrot.lane.b32.xlu0 %v4328, 120
  %v4338 = vpop.permute.xlu0 %4337
  %v4340 = vmul.f32 %v4336, %v4338
  %4342 = vrot.lane.b32.xlu0 %v4340, 8
  %v4343 = vpop.permute.xlu0 %4342
  %v4345 = vadd.f32 %v4318, %v4343
  %v4346 = vtanh.pop %v4345
  %v4347 = vsub.f32 1.0, %v4336
  %4349 = vrot.lane.b32.xlu0 %v4346, 124
  %v4350 = vpop.permute.xlu0 %4349
  %v4352 = vmul.f32 %v4347, %v4350
  %v4353 = vrot.slane %v4207, 6
  %v4355 = vmul.f32 %v4336, %v4353
  %v4356 = vadd.f32 %v4352, %v4355
  %4358 = vset.pattern.permute.xlu0 4
  %4359 = vperm.xlu0 %4358, %v4356
  %v4360 = vpop.permute.xlu0 %4359
  %v4362 = vmul.f32 %v4360, %v4216
  %4363 = vset.pattern.permute.xlu0 5
  %4364 = vperm.xlu0 %4363, %v4356
  %v4365 = vpop.permute.xlu0 %4364
  %v4367 = vmul.f32 %v4365, %v4225
  %v4368 = vadd.f32 %v4362, %v4367
  %4369 = vset.pattern.permute.xlu0 6
  %4370 = vperm.xlu0 %4369, %v4356
  %v4371 = vpop.permute.xlu0 %4370
  %v4373 = vmul.f32 %v4371, %v4235
  %v4374 = vadd.f32 %v4368, %v4373
  %4375 = vset.pattern.permute.xlu0 7
  %4376 = vperm.xlu0 %4375, %v4356
  %v4377 = vpop.permute.xlu0 %4376
  %v4379 = vmul.f32 %v4377, %v4245
  %v4380 = vadd.f32 %v4374, %v4379
  %v4381 = vadd.f32 %v4380, %v4252
  %4382 = vst [vmem:[%s17] sm:$0xc] %v4381
  %v4383 = vmul.f32 %v4297, %v4052
  %v4384 = vmul.f32 %v4302, %v4057
  %v4385 = vadd.f32 %v4383, %v4384
  %v4386 = vmul.f32 %v4308, %v4063
  %v4387 = vadd.f32 %v4385, %v4386
  %v4388 = vmul.f32 %v4314, %v4069
  %v4389 = vadd.f32 %v4387, %v4388
  %v4390 = vadd.f32 %v4389, %v4076
  %v4392 = vrot.slane %v4390, 6
  %v4394 = vadd.f32 %v4047, %v4392
  %v4395 = vxor.u32 %v4394, 2147483648
  %v4396 = vmul.f32 %v4395, 1.442695
  %v4397 = vpow.pop %v4396
  %v4398 = vadd.f32 %v4397, 1.0
  %v4399 = vrcp.pop %v4398
  %v4400 = vmul.f32 1.0, %v4399
  %4401 = vrot.lane.b32.xlu0 %v4392, 120
  %v4402 = vpop.permute.xlu0 %4401
  %v4404 = vmul.f32 %v4400, %v4402
  %4406 = vrot.lane.b32.xlu0 %v4404, 8
  %v4407 = vpop.permute.xlu0 %4406
  %v4409 = vadd.f32 %v4047, %v4407
  %v4410 = vtanh.pop %v4409
  %v4411 = vsub.f32 1.0, %v4400
  %4413 = vrot.lane.b32.xlu0 %v4410, 124
  %v4414 = vpop.permute.xlu0 %4413
  %v4416 = vmul.f32 %v4411, %v4414
  %v4417 = vrot.slane %v4293, 6
  %v4419 = vmul.f32 %v4400, %v4417
  %v4420 = vadd.f32 %v4416, %v4419
  %4422 = vset.pattern.permute.xlu0 4
  %4423 = vperm.xlu0 %4422, %v4420
  %v4424 = vpop.permute.xlu0 %4423
  %v4426 = vmul.f32 %v4424, %v4113
  %4427 = vset.pattern.permute.xlu0 5
  %4428 = vperm.xlu0 %4427, %v4420
  %v4429 = vpop.permute.xlu0 %4428
  %v4431 = vmul.f32 %v4429, %v4122
  %v4432 = vadd.f32 %v4426, %v4431
  %4433 = vset.pattern.permute.xlu0 6
  %4434 = vperm.xlu0 %4433, %v4420
  %v4435 = vpop.permute.xlu0 %4434
  %v4437 = vmul.f32 %v4435, %v4132
  %v4438 = vadd.f32 %v4432, %v4437
  %4439 = vset.pattern.permute.xlu0 7
  %4440 = vperm.xlu0 %4439, %v4420
  %v4441 = vpop.permute.xlu0 %4440
  %v4443 = vmul.f32 %v4441, %v4142
  %v4444 = vadd.f32 %v4438, %v4443
  %v4445 = vadd.f32 %v4444, %v4149
  %v4446 = vmul.f32 %v4360, %v4155
  %v4447 = vmul.f32 %v4365, %v4160
  %v4448 = vadd.f32 %v4446, %v4447
  %v4449 = vmul.f32 %v4371, %v4166
  %v4450 = vadd.f32 %v4448, %v4449
  %v4451 = vmul.f32 %v4377, %v4172
  %v4452 = vadd.f32 %v4450, %v4451
  %v4453 = vadd.f32 %v4452, %v4179
  %v4455 = vrot.slane %v4453, 6
  %v4457 = vadd.f32 %v4445, %v4455
  %v4458 = vxor.u32 %v4457, 2147483648
  %v4459 = vmul.f32 %v4458, 1.442695
  %v4460 = vpow.pop %v4459
  %v4461 = vadd.f32 %v4460, 1.0
  %v4462 = vrcp.pop %v4461
  %v4463 = vmul.f32 1.0, %v4462
  %4464 = vrot.lane.b32.xlu0 %v4455, 120
  %v4465 = vpop.permute.xlu0 %4464
  %v4467 = vmul.f32 %v4463, %v4465
  %4469 = vrot.lane.b32.xlu0 %v4467, 8
  %v4470 = vpop.permute.xlu0 %4469
  %v4472 = vadd.f32 %v4445, %v4470
  %v4473 = vtanh.pop %v4472
  %v4474 = vsub.f32 1.0, %v4463
  %4476 = vrot.lane.b32.xlu0 %v4473, 124
  %v4477 = vpop.permute.xlu0 %4476
  %v4479 = vmul.f32 %v4474, %v4477
  %v4480 = vrot.slane %v4356, 6
  %v4482 = vmul.f32 %v4463, %v4480
  %v4483 = vadd.f32 %v4479, %v4482
  %4485 = vset.pattern.permute.xlu0 4
  %4486 = vperm.xlu0 %4485, %v4483
  %v4487 = vpop.permute.xlu0 %4486
  %v4489 = vmul.f32 %v4487, %v4216
  %4490 = vset.pattern.permute.xlu0 5
  %4491 = vperm.xlu0 %4490, %v4483
  %v4492 = vpop.permute.xlu0 %4491
  %v4494 = vmul.f32 %v4492, %v4225
  %v4495 = vadd.f32 %v4489, %v4494
  %4496 = vset.pattern.permute.xlu0 6
  %4497 = vperm.xlu0 %4496, %v4483
  %v4498 = vpop.permute.xlu0 %4497
  %v4500 = vmul.f32 %v4498, %v4235
  %v4501 = vadd.f32 %v4495, %v4500
  %4502 = vset.pattern.permute.xlu0 7
  %4503 = vperm.xlu0 %4502, %v4483
  %v4504 = vpop.permute.xlu0 %4503
  %v4506 = vmul.f32 %v4504, %v4245
  %v4507 = vadd.f32 %v4501, %v4506
  %v4508 = vadd.f32 %v4507, %v4252
  %4509 = vst [vmem:[%s17] sm:$0x30] %v4508
  %v4510 = vmul.f32 %v4424, %v4052
  %v4511 = vmul.f32 %v4429, %v4057
  %v4512 = vadd.f32 %v4510, %v4511
  %v4513 = vmul.f32 %v4435, %v4063
  %v4514 = vadd.f32 %v4512, %v4513
  %v4515 = vmul.f32 %v4441, %v4069
  %v4516 = vadd.f32 %v4514, %v4515
  %v4517 = vadd.f32 %v4516, %v4076
  %v4519 = vrot.slane %v4517, 6
  %v4521 = vadd.f32 %v4047, %v4519
  %v4522 = vxor.u32 %v4521, 2147483648
  %v4523 = vmul.f32 %v4522, 1.442695
  %v4524 = vpow.pop %v4523
  %v4525 = vadd.f32 %v4524, 1.0
  %v4526 = vrcp.pop %v4525
  %v4527 = vmul.f32 1.0, %v4526
  %4528 = vrot.lane.b32.xlu0 %v4519, 120
  %v4529 = vpop.permute.xlu0 %4528
  %v4531 = vmul.f32 %v4527, %v4529
  %4533 = vrot.lane.b32.xlu0 %v4531, 8
  %v4534 = vpop.permute.xlu0 %4533
  %v4536 = vadd.f32 %v4047, %v4534
  %v4537 = vtanh.pop %v4536
  %v4538 = vsub.f32 1.0, %v4527
  %4540 = vrot.lane.b32.xlu0 %v4537, 124
  %v4541 = vpop.permute.xlu0 %4540
  %v4543 = vmul.f32 %v4538, %v4541
  %v4544 = vrot.slane %v4420, 6
  %v4546 = vmul.f32 %v4527, %v4544
  %v4547 = vadd.f32 %v4543, %v4546
  %4549 = vset.pattern.permute.xlu0 4
  %4550 = vperm.xlu0 %4549, %v4547
  %v4551 = vpop.permute.xlu0 %4550
  %v4553 = vmul.f32 %v4551, %v4113
  %4554 = vset.pattern.permute.xlu0 5
  %4555 = vperm.xlu0 %4554, %v4547
  %v4556 = vpop.permute.xlu0 %4555
  %v4558 = vmul.f32 %v4556, %v4122
  %v4559 = vadd.f32 %v4553, %v4558
  %4560 = vset.pattern.permute.xlu0 6
  %4561 = vperm.xlu0 %4560, %v4547
  %v4562 = vpop.permute.xlu0 %4561
  %v4564 = vmul.f32 %v4562, %v4132
  %v4565 = vadd.f32 %v4559, %v4564
  %4566 = vset.pattern.permute.xlu0 7
  %4567 = vperm.xlu0 %4566, %v4547
  %v4568 = vpop.permute.xlu0 %4567
  %v4570 = vmul.f32 %v4568, %v4142
  %v4571 = vadd.f32 %v4565, %v4570
  %v4572 = vadd.f32 %v4571, %v4149
  %v4573 = vmul.f32 %v4487, %v4155
  %v4574 = vmul.f32 %v4492, %v4160
  %v4575 = vadd.f32 %v4573, %v4574
  %v4576 = vmul.f32 %v4498, %v4166
  %v4577 = vadd.f32 %v4575, %v4576
  %v4578 = vmul.f32 %v4504, %v4172
  %v4579 = vadd.f32 %v4577, %v4578
  %v4580 = vadd.f32 %v4579, %v4179
  %v4582 = vrot.slane %v4580, 6
  %v4584 = vadd.f32 %v4572, %v4582
  %v4585 = vxor.u32 %v4584, 2147483648
  %v4586 = vmul.f32 %v4585, 1.442695
  %v4587 = vpow.pop %v4586
  %v4588 = vadd.f32 %v4587, 1.0
  %v4589 = vrcp.pop %v4588
  %v4590 = vmul.f32 1.0, %v4589
  %4591 = vrot.lane.b32.xlu0 %v4582, 120
  %v4592 = vpop.permute.xlu0 %4591
  %v4594 = vmul.f32 %v4590, %v4592
  %4596 = vrot.lane.b32.xlu0 %v4594, 8
  %v4597 = vpop.permute.xlu0 %4596
  %v4599 = vadd.f32 %v4572, %v4597
  %v4600 = vtanh.pop %v4599
  %v4601 = vsub.f32 1.0, %v4590
  %4603 = vrot.lane.b32.xlu0 %v4600, 124
  %v4604 = vpop.permute.xlu0 %4603
  %v4606 = vmul.f32 %v4601, %v4604
  %v4607 = vrot.slane %v4483, 6
  %v4609 = vmul.f32 %v4590, %v4607
  %v4610 = vadd.f32 %v4606, %v4609
  %4612 = vset.pattern.permute.xlu0 4
  %4613 = vperm.xlu0 %4612, %v4610
  %v4614 = vpop.permute.xlu0 %4613
  %v4616 = vmul.f32 %v4614, %v4216
  %4617 = vset.pattern.permute.xlu0 5
  %4618 = vperm.xlu0 %4617, %v4610
  %v4619 = vpop.permute.xlu0 %4618
  %v4621 = vmul.f32 %v4619, %v4225
  %v4622 = vadd.f32 %v4616, %v4621
  %4623 = vset.pattern.permute.xlu0 6
  %4624 = vperm.xlu0 %4623, %v4610
  %v4625 = vpop.permute.xlu0 %4624
  %v4627 = vmul.f32 %v4625, %v4235
  %v4628 = vadd.f32 %v4622, %v4627
  %4629 = vset.pattern.permute.xlu0 7
  %4630 = vperm.xlu0 %4629, %v4610
  %v4631 = vpop.permute.xlu0 %4630
  %v4633 = vmul.f32 %v4631, %v4245
  %v4634 = vadd.f32 %v4628, %v4633
  %v4635 = vadd.f32 %v4634, %v4252
  %4636 = vst [vmem:[%s17] sm:$0xc0] %v4635
  %v4637 = vmul.f32 %v4551, %v4052
  %v4638 = vmul.f32 %v4556, %v4057
  %v4639 = vadd.f32 %v4637, %v4638
  %v4640 = vmul.f32 %v4562, %v4063
  %v4641 = vadd.f32 %v4639, %v4640
  %v4642 = vmul.f32 %v4568, %v4069
  %v4643 = vadd.f32 %v4641, %v4642
  %v4644 = vadd.f32 %v4643, %v4076
  %v4646 = vrot.slane %v4644, 6
  %v4648 = vadd.f32 %v4048, %v4646
  %v4649 = vxor.u32 %v4648, 2147483648
  %v4650 = vmul.f32 %v4649, 1.442695
  %v4651 = vpow.pop %v4650
  %v4652 = vadd.f32 %v4651, 1.0
  %v4653 = vrcp.pop %v4652
  %v4654 = vmul.f32 1.0, %v4653
  %4655 = vrot.lane.b32.xlu0 %v4646, 120
  %v4656 = vpop.permute.xlu0 %4655
  %v4658 = vmul.f32 %v4654, %v4656
  %4660 = vrot.lane.b32.xlu0 %v4658, 8
  %v4661 = vpop.permute.xlu0 %4660
  %v4663 = vadd.f32 %v4048, %v4661
  %v4664 = vtanh.pop %v4663
  %v4665 = vsub.f32 1.0, %v4654
  %4667 = vrot.lane.b32.xlu0 %v4664, 124
  %v4668 = vpop.permute.xlu0 %4667
  %v4670 = vmul.f32 %v4665, %v4668
  %v4671 = vrot.slane %v4547, 6
  %v4673 = vmul.f32 %v4654, %v4671
  %v4674 = vadd.f32 %v4670, %v4673
  %4676 = vset.pattern.permute.xlu0 4
  %4677 = vperm.xlu0 %4676, %v4674
  %v4678 = vpop.permute.xlu0 %4677
  %v4680 = vmul.f32 %v4678, %v4113
  %4681 = vset.pattern.permute.xlu0 5
  %4682 = vperm.xlu0 %4681, %v4674
  %v4683 = vpop.permute.xlu0 %4682
  %v4685 = vmul.f32 %v4683, %v4122
  %v4686 = vadd.f32 %v4680, %v4685
  %4687 = vset.pattern.permute.xlu0 6
  %4688 = vperm.xlu0 %4687, %v4674
  %v4689 = vpop.permute.xlu0 %4688
  %v4691 = vmul.f32 %v4689, %v4132
  %v4692 = vadd.f32 %v4686, %v4691
  %4693 = vset.pattern.permute.xlu0 7
  %4694 = vperm.xlu0 %4693, %v4674
  %v4695 = vpop.permute.xlu0 %4694
  %v4697 = vmul.f32 %v4695, %v4142
  %v4698 = vadd.f32 %v4692, %v4697
  %v4699 = vadd.f32 %v4698, %v4149
  %v4700 = vmul.f32 %v4614, %v4155
  %v4701 = vmul.f32 %v4619, %v4160
  %v4702 = vadd.f32 %v4700, %v4701
  %v4703 = vmul.f32 %v4625, %v4166
  %v4704 = vadd.f32 %v4702, %v4703
  %v4705 = vmul.f32 %v4631, %v4172
  %v4706 = vadd.f32 %v4704, %v4705
  %v4707 = vadd.f32 %v4706, %v4179
  %v4709 = vrot.slane %v4707, 6
  %v4711 = vadd.f32 %v4699, %v4709
  %v4712 = vxor.u32 %v4711, 2147483648
  %v4713 = vmul.f32 %v4712, 1.442695
  %v4714 = vpow.pop %v4713
  %v4715 = vadd.f32 %v4714, 1.0
  %v4716 = vrcp.pop %v4715
  %v4717 = vmul.f32 1.0, %v4716
  %4718 = vrot.lane.b32.xlu0 %v4709, 120
  %v4719 = vpop.permute.xlu0 %4718
  %v4721 = vmul.f32 %v4717, %v4719
  %4723 = vrot.lane.b32.xlu0 %v4721, 8
  %v4724 = vpop.permute.xlu0 %4723
  %v4726 = vadd.f32 %v4699, %v4724
  %v4727 = vtanh.pop %v4726
  %v4728 = vsub.f32 1.0, %v4717
  %4730 = vrot.lane.b32.xlu0 %v4727, 124
  %v4731 = vpop.permute.xlu0 %4730
  %v4733 = vmul.f32 %v4728, %v4731
  %v4734 = vrot.slane %v4610, 6
  %v4736 = vmul.f32 %v4717, %v4734
  %v4737 = vadd.f32 %v4733, %v4736
  %4739 = vset.pattern.permute.xlu0 4
  %4740 = vperm.xlu0 %4739, %v4737
  %v4741 = vpop.permute.xlu0 %4740
  %v4743 = vmul.f32 %v4741, %v4216
  %4744 = vset.pattern.permute.xlu0 5
  %4745 = vperm.xlu0 %4744, %v4737
  %v4746 = vpop.permute.xlu0 %4745
  %v4748 = vmul.f32 %v4746, %v4225
  %v4749 = vadd.f32 %v4743, %v4748
  %4750 = vset.pattern.permute.xlu0 6
  %4751 = vperm.xlu0 %4750, %v4737
  %v4752 = vpop.permute.xlu0 %4751
  %v4754 = vmul.f32 %v4752, %v4235
  %v4755 = vadd.f32 %v4749, %v4754
  %4756 = vset.pattern.permute.xlu0 7
  %4757 = vperm.xlu0 %4756, %v4737
  %v4758 = vpop.permute.xlu0 %4757
  %v4760 = vmul.f32 %v4758, %v4245
  %v4761 = vadd.f32 %v4755, %v4760
  %v4762 = vadd.f32 %v4761, %v4252
  %4763 = vst [vmem:[%s17 + $0x8] sm:$0x3] %v4762
  %v4764 = vmul.f32 %v4678, %v4052
  %v4765 = vmul.f32 %v4683, %v4057
  %v4766 = vadd.f32 %v4764, %v4765
  %v4767 = vmul.f32 %v4689, %v4063
  %v4768 = vadd.f32 %v4766, %v4767
  %v4769 = vmul.f32 %v4695, %v4069
  %v4770 = vadd.f32 %v4768, %v4769
  %v4771 = vadd.f32 %v4770, %v4076
  %v4773 = vrot.slane %v4771, 6
  %v4775 = vadd.f32 %v4048, %v4773
  %v4776 = vxor.u32 %v4775, 2147483648
  %v4777 = vmul.f32 %v4776, 1.442695
  %v4778 = vpow.pop %v4777
  %v4779 = vadd.f32 %v4778, 1.0
  %v4780 = vrcp.pop %v4779
  %v4781 = vmul.f32 1.0, %v4780
  %4782 = vrot.lane.b32.xlu0 %v4773, 120
  %v4783 = vpop.permute.xlu0 %4782
  %v4785 = vmul.f32 %v4781, %v4783
  %4787 = vrot.lane.b32.xlu0 %v4785, 8
  %v4788 = vpop.permute.xlu0 %4787
  %v4790 = vadd.f32 %v4048, %v4788
  %v4791 = vtanh.pop %v4790
  %v4792 = vsub.f32 1.0, %v4781
  %4794 = vrot.lane.b32.xlu0 %v4791, 124
  %v4795 = vpop.permute.xlu0 %4794
  %v4797 = vmul.f32 %v4792, %v4795
  %v4798 = vrot.slane %v4674, 6
  %v4800 = vmul.f32 %v4781, %v4798
  %v4801 = vadd.f32 %v4797, %v4800
  %4803 = vset.pattern.permute.xlu0 4
  %4804 = vperm.xlu0 %4803, %v4801
  %v4805 = vpop.permute.xlu0 %4804
  %v4807 = vmul.f32 %v4805, %v4113
  %4808 = vset.pattern.permute.xlu0 5
  %4809 = vperm.xlu0 %4808, %v4801
  %v4810 = vpop.permute.xlu0 %4809
  %v4812 = vmul.f32 %v4810, %v4122
  %v4813 = vadd.f32 %v4807, %v4812
  %4814 = vset.pattern.permute.xlu0 6
  %4815 = vperm.xlu0 %4814, %v4801
  %v4816 = vpop.permute.xlu0 %4815
  %v4818 = vmul.f32 %v4816, %v4132
  %v4819 = vadd.f32 %v4813, %v4818
  %4820 = vset.pattern.permute.xlu0 7
  %4821 = vperm.xlu0 %4820, %v4801
  %v4822 = vpop.permute.xlu0 %4821
  %v4824 = vmul.f32 %v4822, %v4142
  %v4825 = vadd.f32 %v4819, %v4824
  %v4826 = vadd.f32 %v4825, %v4149
  %v4827 = vmul.f32 %v4741, %v4155
  %v4828 = vmul.f32 %v4746, %v4160
  %v4829 = vadd.f32 %v4827, %v4828
  %v4830 = vmul.f32 %v4752, %v4166
  %v4831 = vadd.f32 %v4829, %v4830
  %v4832 = vmul.f32 %v4758, %v4172
  %v4833 = vadd.f32 %v4831, %v4832
  %v4834 = vadd.f32 %v4833, %v4179
  %v4836 = vrot.slane %v4834, 6
  %v4838 = vadd.f32 %v4826, %v4836
  %v4839 = vxor.u32 %v4838, 2147483648
  %v4840 = vmul.f32 %v4839, 1.442695
  %v4841 = vpow.pop %v4840
  %v4842 = vadd.f32 %v4841, 1.0
  %v4843 = vrcp.pop %v4842
  %v4844 = vmul.f32 1.0, %v4843
  %4845 = vrot.lane.b32.xlu0 %v4836, 120
  %v4846 = vpop.permute.xlu0 %4845
  %v4848 = vmul.f32 %v4844, %v4846
  %4850 = vrot.lane.b32.xlu0 %v4848, 8
  %v4851 = vpop.permute.xlu0 %4850
  %v4853 = vadd.f32 %v4826, %v4851
  %v4854 = vtanh.pop %v4853
  %v4855 = vsub.f32 1.0, %v4844
  %4857 = vrot.lane.b32.xlu0 %v4854, 124
  %v4858 = vpop.permute.xlu0 %4857
  %v4860 = vmul.f32 %v4855, %v4858
  %v4861 = vrot.slane %v4737, 6
  %v4863 = vmul.f32 %v4844, %v4861
  %v4864 = vadd.f32 %v4860, %v4863
  %4866 = vset.pattern.permute.xlu0 4
  %4867 = vperm.xlu0 %4866, %v4864
  %v4868 = vpop.permute.xlu0 %4867
  %v4870 = vmul.f32 %v4868, %v4216
  %4871 = vset.pattern.permute.xlu0 5
  %4872 = vperm.xlu0 %4871, %v4864
  %v4873 = vpop.permute.xlu0 %4872
  %v4875 = vmul.f32 %v4873, %v4225
  %v4876 = vadd.f32 %v4870, %v4875
  %4877 = vset.pattern.permute.xlu0 6
  %4878 = vperm.xlu0 %4877, %v4864
  %v4879 = vpop.permute.xlu0 %4878
  %v4881 = vmul.f32 %v4879, %v4235
  %v4882 = vadd.f32 %v4876, %v4881
  %4883 = vset.pattern.permute.xlu0 7
  %4884 = vperm.xlu0 %4883, %v4864
  %v4885 = vpop.permute.xlu0 %4884
  %v4887 = vmul.f32 %v4885, %v4245
  %v4888 = vadd.f32 %v4882, %v4887
  %v4889 = vadd.f32 %v4888, %v4252
  %4890 = vst [vmem:[%s17 + $0x8] sm:$0xc] %v4889
  %v4891 = vmul.f32 %v4805, %v4052
  %v4892 = vmul.f32 %v4810, %v4057
  %v4893 = vadd.f32 %v4891, %v4892
  %v4894 = vmul.f32 %v4816, %v4063
  %v4895 = vadd.f32 %v4893, %v4894
  %v4896 = vmul.f32 %v4822, %v4069
  %v4897 = vadd.f32 %v4895, %v4896
  %v4898 = vadd.f32 %v4897, %v4076
  %v4900 = vrot.slane %v4898, 6
  %v4902 = vadd.f32 %v4048, %v4900
  %v4903 = vxor.u32 %v4902, 2147483648
  %v4904 = vmul.f32 %v4903, 1.442695
  %v4905 = vpow.pop %v4904
  %v4906 = vadd.f32 %v4905, 1.0
  %v4907 = vrcp.pop %v4906
  %v4908 = vmul.f32 1.0, %v4907
  %4909 = vrot.lane.b32.xlu0 %v4900, 120
  %v4910 = vpop.permute.xlu0 %4909
  %v4912 = vmul.f32 %v4908, %v4910
  %4914 = vrot.lane.b32.xlu0 %v4912, 8
  %v4915 = vpop.permute.xlu0 %4914
  %v4917 = vadd.f32 %v4048, %v4915
  %v4918 = vtanh.pop %v4917
  %v4919 = vsub.f32 1.0, %v4908
  %4921 = vrot.lane.b32.xlu0 %v4918, 124
  %v4922 = vpop.permute.xlu0 %4921
  %v4924 = vmul.f32 %v4919, %v4922
  %v4925 = vrot.slane %v4801, 6
  %v4927 = vmul.f32 %v4908, %v4925
  %v4928 = vadd.f32 %v4924, %v4927
  %4930 = vset.pattern.permute.xlu0 4
  %4931 = vperm.xlu0 %4930, %v4928
  %v4932 = vpop.permute.xlu0 %4931
  %v4934 = vmul.f32 %v4932, %v4113
  %4935 = vset.pattern.permute.xlu0 5
  %4936 = vperm.xlu0 %4935, %v4928
  %v4937 = vpop.permute.xlu0 %4936
  %v4939 = vmul.f32 %v4937, %v4122
  %v4940 = vadd.f32 %v4934, %v4939
  %4941 = vset.pattern.permute.xlu0 6
  %4942 = vperm.xlu0 %4941, %v4928
  %v4943 = vpop.permute.xlu0 %4942
  %v4945 = vmul.f32 %v4943, %v4132
  %v4946 = vadd.f32 %v4940, %v4945
  %4947 = vset.pattern.permute.xlu0 7
  %4948 = vperm.xlu0 %4947, %v4928
  %v4949 = vpop.permute.xlu0 %4948
  %v4951 = vmul.f32 %v4949, %v4142
  %v4952 = vadd.f32 %v4946, %v4951
  %v4953 = vadd.f32 %v4952, %v4149
  %v4954 = vmul.f32 %v4868, %v4155
  %v4955 = vmul.f32 %v4873, %v4160
  %v4956 = vadd.f32 %v4954, %v4955
  %v4957 = vmul.f32 %v4879, %v4166
  %v4958 = vadd.f32 %v4956, %v4957
  %v4959 = vmul.f32 %v4885, %v4172
  %v4960 = vadd.f32 %v4958, %v4959
  %v4961 = vadd.f32 %v4960, %v4179
  %v4963 = vrot.slane %v4961, 6
  %v4965 = vadd.f32 %v4953, %v4963
  %v4966 = vxor.u32 %v4965, 2147483648
  %v4967 = vmul.f32 %v4966, 1.442695
  %v4968 = vpow.pop %v4967
  %v4969 = vadd.f32 %v4968, 1.0
  %v4970 = vrcp.pop %v4969
  %v4971 = vmul.f32 1.0, %v4970
  %4972 = vrot.lane.b32.xlu0 %v4963, 120
  %v4973 = vpop.permute.xlu0 %4972
  %v4975 = vmul.f32 %v4971, %v4973
  %4977 = vrot.lane.b32.xlu0 %v4975, 8
  %v4978 = vpop.permute.xlu0 %4977
  %v4980 = vadd.f32 %v4953, %v4978
  %v4981 = vtanh.pop %v4980
  %v4982 = vsub.f32 1.0, %v4971
  %4984 = vrot.lane.b32.xlu0 %v4981, 124
  %v4985 = vpop.permute.xlu0 %4984
  %v4987 = vmul.f32 %v4982, %v4985
  %v4988 = vrot.slane %v4864, 6
  %v4990 = vmul.f32 %v4971, %v4988
  %v4991 = vadd.f32 %v4987, %v4990
  %4993 = vset.pattern.permute.xlu0 4
  %4994 = vperm.xlu0 %4993, %v4991
  %v4995 = vpop.permute.xlu0 %4994
  %v4997 = vmul.f32 %v4995, %v4216
  %4998 = vset.pattern.permute.xlu0 5
  %4999 = vperm.xlu0 %4998, %v4991
  %v5000 = vpop.permute.xlu0 %4999
  %v5002 = vmul.f32 %v5000, %v4225
  %v5003 = vadd.f32 %v4997, %v5002
  %5004 = vset.pattern.permute.xlu0 6
  %5005 = vperm.xlu0 %5004, %v4991
  %v5006 = vpop.permute.xlu0 %5005
  %v5008 = vmul.f32 %v5006, %v4235
  %v5009 = vadd.f32 %v5003, %v5008
  %5010 = vset.pattern.permute.xlu0 7
  %5011 = vperm.xlu0 %5010, %v4991
  %v5012 = vpop.permute.xlu0 %5011
  %v5014 = vmul.f32 %v5012, %v4245
  %v5015 = vadd.f32 %v5009, %v5014
  %v5016 = vadd.f32 %v5015, %v4252
  %5017 = vst [vmem:[%s17 + $0x8] sm:$0x30] %v5016
  %v5018 = vmul.f32 %v4932, %v4052
  %v5019 = vmul.f32 %v4937, %v4057
  %v5020 = vadd.f32 %v5018, %v5019
  %v5021 = vmul.f32 %v4943, %v4063
  %v5022 = vadd.f32 %v5020, %v5021
  %v5023 = vmul.f32 %v4949, %v4069
  %v5024 = vadd.f32 %v5022, %v5023
  %v5025 = vadd.f32 %v5024, %v4076
  %v5027 = vrot.slane %v5025, 6
  %v5029 = vadd.f32 %v4048, %v5027
  %v5030 = vxor.u32 %v5029, 2147483648
  %v5031 = vmul.f32 %v5030, 1.442695
  %v5032 = vpow.pop %v5031
  %v5033 = vadd.f32 %v5032, 1.0
  %v5034 = vrcp.pop %v5033
  %v5035 = vmul.f32 1.0, %v5034
  %5036 = vrot.lane.b32.xlu0 %v5027, 120
  %v5037 = vpop.permute.xlu0 %5036
  %v5039 = vmul.f32 %v5035, %v5037
  %5041 = vrot.lane.b32.xlu0 %v5039, 8
  %v5042 = vpop.permute.xlu0 %5041
  %v5044 = vadd.f32 %v4048, %v5042
  %v5045 = vtanh.pop %v5044
  %v5046 = vsub.f32 1.0, %v5035
  %5048 = vrot.lane.b32.xlu0 %v5045, 124
  %v5049 = vpop.permute.xlu0 %5048
  %v5051 = vmul.f32 %v5046, %v5049
  %v5052 = vrot.slane %v4928, 6
  %v5054 = vmul.f32 %v5035, %v5052
  %v5055 = vadd.f32 %v5051, %v5054
  %5057 = vset.pattern.permute.xlu0 4
  %5058 = vperm.xlu0 %5057, %v5055
  %v5059 = vpop.permute.xlu0 %5058
  %v5061 = vmul.f32 %v5059, %v4113
  %5062 = vset.pattern.permute.xlu0 5
  %5063 = vperm.xlu0 %5062, %v5055
  %v5064 = vpop.permute.xlu0 %5063
  %v5066 = vmul.f32 %v5064, %v4122
  %v5067 = vadd.f32 %v5061, %v5066
  %5068 = vset.pattern.permute.xlu0 6
  %5069 = vperm.xlu0 %5068, %v5055
  %v5070 = vpop.permute.xlu0 %5069
  %v5072 = vmul.f32 %v5070, %v4132
  %v5073 = vadd.f32 %v5067, %v5072
  %5074 = vset.pattern.permute.xlu0 7
  %5075 = vperm.xlu0 %5074, %v5055
  %v5076 = vpop.permute.xlu0 %5075
  %v5078 = vmul.f32 %v5076, %v4142
  %v5079 = vadd.f32 %v5073, %v5078
  %v5080 = vadd.f32 %v5079, %v4149
  %v5081 = vmul.f32 %v4995, %v4155
  %v5082 = vmul.f32 %v5000, %v4160
  %v5083 = vadd.f32 %v5081, %v5082
  %v5084 = vmul.f32 %v5006, %v4166
  %v5085 = vadd.f32 %v5083, %v5084
  %v5086 = vmul.f32 %v5012, %v4172
  %v5087 = vadd.f32 %v5085, %v5086
  %v5088 = vadd.f32 %v5087, %v4179
  %v5090 = vrot.slane %v5088, 6
  %v5092 = vadd.f32 %v5080, %v5090
  %v5093 = vxor.u32 %v5092, 2147483648
  %v5094 = vmul.f32 %v5093, 1.442695
  %v5095 = vpow.pop %v5094
  %v5096 = vadd.f32 %v5095, 1.0
  %v5097 = vrcp.pop %v5096
  %v5098 = vmul.f32 1.0, %v5097
  %5099 = vrot.lane.b32.xlu0 %v5090, 120
  %v5100 = vpop.permute.xlu0 %5099
  %v5102 = vmul.f32 %v5098, %v5100
  %5104 = vrot.lane.b32.xlu0 %v5102, 8
  %v5105 = vpop.permute.xlu0 %5104
  %v5107 = vadd.f32 %v5080, %v5105
  %v5108 = vtanh.pop %v5107
  %v5109 = vsub.f32 1.0, %v5098
  %5111 = vrot.lane.b32.xlu0 %v5108, 124
  %v5112 = vpop.permute.xlu0 %5111
  %v5114 = vmul.f32 %v5109, %v5112
  %v5115 = vrot.slane %v4991, 6
  %v5117 = vmul.f32 %v5098, %v5115
  %v5118 = vadd.f32 %v5114, %v5117
  %5120 = vset.pattern.permute.xlu0 4
  %5121 = vperm.xlu0 %5120, %v5118
  %v5122 = vpop.permute.xlu0 %5121
  %v5124 = vmul.f32 %v5122, %v4216
  %5125 = vset.pattern.permute.xlu0 5
  %5126 = vperm.xlu0 %5125, %v5118
  %v5127 = vpop.permute.xlu0 %5126
  %v5129 = vmul.f32 %v5127, %v4225
  %v5130 = vadd.f32 %v5124, %v5129
  %5131 = vset.pattern.permute.xlu0 6
  %5132 = vperm.xlu0 %5131, %v5118
  %v5133 = vpop.permute.xlu0 %5132
  %v5135 = vmul.f32 %v5133, %v4235
  %v5136 = vadd.f32 %v5130, %v5135
  %5137 = vset.pattern.permute.xlu0 7
  %5138 = vperm.xlu0 %5137, %v5118
  %v5139 = vpop.permute.xlu0 %5138
  %v5141 = vmul.f32 %v5139, %v4245
  %v5142 = vadd.f32 %v5136, %v5141
  %v5143 = vadd.f32 %v5142, %v4252
  %5144 = vst [vmem:[%s17 + $0x8] sm:$0xc0] %v5143
  // Predicated region
  $region70: #{crnn_forward.1} parent=0 // pred_check
    _
  $region71: #{crnn_forward.1} parent=0 // pred_check_branch
    %5146 = sbr.rel (0) target = $region73
  $region72: #{crnn_forward.1} parent=0 // pred_region
    _
  $region73: #{crnn_forward.1} parent=0 // pred_fallthru
    _
  // Predicated region
  $region74: #{crnn_forward.1} parent=0 // pred_check
    _
  $region75: #{crnn_forward.1} parent=0 // pred_check_branch
    %5148 = sbr.rel (0) target = $region77
  $region76: #{crnn_forward.1} parent=0 // pred_region
    _
  $region77: #{crnn_forward.1} parent=0 // pred_fallthru
    _

</llo_original>
